<compile_context>
chip_gen: v6e
topology: v6e:2x2x1
jax: 0.10.0
libtpu: 0.0.40
codegen_flags: <defaults>
</compile_context>

<pallas_src>
import numpy as np
import jax
import jax.numpy as jnp
from jax.experimental import pallas as pl
from jax.experimental.pallas import tpu as pltpu

LATENT = 128                 # self.latent_size == self.rep_size == 128
CPAD = 128                   # every internal channel dim padded to a full lane tile
CH_REAL = (8, 16, 32, 64)    # real encoder channel widths (synthetic encoder)
SPATIAL = 32                 # small test spatial size (module uses 128x128 patches)
K1_PAD = 32                  # layer-1 im2col K (3*3*3 = 27) padded to 32
ACT_DTYPE = jnp.float32      # flip to jnp.bfloat16 for training-scale batches


def _lblk(s_in):
    """Rows of the dense (stride-1) conv accumulator for an s_in x s_in input."""
    return (s_in - 1) * (s_in + 2) + s_in


# ----------------------------------------------------------------------------
# Fully fused forward kernel (encoder + normalize + projector), grid = samples.
# ----------------------------------------------------------------------------
def make_forward(spatial, n_total):
    s1, s2, s3 = spatial // 2, spatial // 4, spatial // 8
    assert spatial % 16 == 0 and s3 >= 2
    k_rows = s1 * s1

    def kernel(patches_ref, w1_ref, conv_w_ref, scales_ref, shifts_ref, alphas_ref,
               pad1_ref, pad2_ref, pad3_ref, pool4_ref, lin_w_ref, lin_b_ref,
               v_ref, z_ref, act_ref):
        f32 = jnp.float32

        def bn_prelu(y, l):
            y = y * scales_ref[l:l + 1, :] + shifts_ref[l:l + 1, :]
            return jnp.where(y > 0, y, alphas_ref[l:l + 1, :] * y)

        # ---- conv1: im2col patches (built outside) -> matmul + BN + PReLU ----
        a1 = jnp.dot(patches_ref[...], w1_ref[...], preferred_element_type=f32)
        y1 = bn_prelu(a1, 0)                                    # (s1*s1, 128)
        # scatter into the zero-padded, flattened (s1+2)^2 input of conv2
        act_ref[...] = jnp.dot(pad1_ref[...], y1,
                               preferred_element_type=f32).astype(ACT_DTYPE)

        # ---- conv2..conv4: shift-and-matmul over the VMEM-resident activation
        def conv_stage(l, s_in, scatter_ref):
            wp = s_in + 2
            lblk = (s_in - 1) * wp + s_in                       # dense stride-1 rows
            acc = jnp.zeros((lblk, CPAD), f32)
            for di in range(3):
                for dj in range(3):
                    xs = act_ref[pl.ds(di * wp + dj, lblk), :]
                    acc = acc + jnp.dot(xs, conv_w_ref[l - 1, di * 3 + dj],
                                        preferred_element_type=f32)
            y = bn_prelu(acc, l)                                # junk rows never selected
            # 0/1 scatter matmul = stride-2 subsample + zero-pad relayout (or pooling)
            return jnp.dot(scatter_ref[...], y, preferred_element_type=f32)

        x3 = conv_stage(1, s1, pad2_ref)                        # ((s2+2)^2, 128)
        act_ref[pl.ds(0, (s2 + 2) ** 2), :] = x3.astype(ACT_DTYPE)
        x4 = conv_stage(2, s2, pad3_ref)                        # ((s3+2)^2, 128)
        act_ref[pl.ds(0, (s3 + 2) ** 2), :] = x4.astype(ACT_DTYPE)
        pooled = conv_stage(3, s3, pool4_ref)                   # (1, 128) global avg pool

        # ---- encoder head: Linear + ReLU, then F.normalize(dim=-1) ----------
        h = jnp.dot(pooled, lin_w_ref[0], preferred_element_type=f32) + lin_b_ref[0:1, :]
        h = jnp.maximum(h, 0.0)
        ss = jnp.sum(h * h, axis=-1, keepdims=True)
        v = h * jax.lax.rsqrt(jnp.maximum(ss, 1e-24))           # == x / clamp_min(||x||, 1e-12)
        v_ref[...] = v

        # ---- projector: Linear -> PReLU -> Linear ----------------------------
        g = jnp.dot(v, lin_w_ref[1], preferred_element_type=f32) + lin_b_ref[1:2, :]
        g = jnp.where(g > 0, g, alphas_ref[4:5, :] * g)
        z = jnp.dot(g, lin_w_ref[2], preferred_element_type=f32) + lin_b_ref[2:3, :]
        z_ref[...] = z

    def _const(shape):
        nd = len(shape)
        return pl.BlockSpec(shape, lambda s, _n=nd: (0,) * _n)

    return pl.pallas_call(
        kernel,
        out_shape=(jax.ShapeDtypeStruct((n_total, 1, LATENT), jnp.float32),
                   jax.ShapeDtypeStruct((n_total, 1, LATENT), jnp.float32)),
        grid=(n_total,),
        in_specs=[
            pl.BlockSpec((None, k_rows, K1_PAD), lambda s: (s, 0, 0)),   # per-sample patches
            _const((K1_PAD, CPAD)),                                      # w1
            _const((3, 9, CPAD, CPAD)),                                  # conv2..4 weights
            _const((4, CPAD)),                                           # BN scales
            _const((4, CPAD)),                                           # BN shifts
            _const((5, CPAD)),                                           # PReLU alphas
            _const(((s1 + 2) ** 2, s1 * s1)),                            # pad1
            _const(((s2 + 2) ** 2, _lblk(s1))),                          # pad2
            _const(((s3 + 2) ** 2, _lblk(s2))),                          # pad3
            _const((1, _lblk(s3))),                                      # pool4
            _const((3, CPAD, LATENT)),                                   # fc / proj weights
            _const((3, LATENT)),                                         # fc / proj biases
        ],
        out_specs=(pl.BlockSpec((None, 1, LATENT), lambda s: (s, 0, 0)),
                   pl.BlockSpec((None, 1, LATENT), lambda s: (s, 0, 0))),
        scratch_shapes=[pltpu.VMEM(((s1 + 2) ** 2, CPAD), ACT_DTYPE)],
        compiler_params=pltpu.CompilerParams(
            dimension_semantics=("parallel",)),
    )


# ----------------------------------------------------------------------------
# Glue: layer-1 im2col on the raw input (boundary layout plumbing only)
# ----------------------------------------------------------------------------
def _im2col_first_layer(x_nchw):
    x = jnp.transpose(x_nchw, (0, 2, 3, 1)).astype(jnp.float32)   # NCHW -> NHWC
    n, h, w, c = x.shape
    ho, wo = h // 2, w // 2
    xp = jnp.pad(x, ((0, 0), (1, 1), (1, 1), (0, 0)))
    cols = [xp[:, di:di + h:2, dj:dj + w:2, :] for di in range(3) for dj in range(3)]
    patches = jnp.concatenate(cols, axis=-1).reshape(n, ho * wo, 9 * c)
    return jnp.pad(patches, ((0, 0), (0, 0), (0, K1_PAD - 9 * c)))


def sterling_forward(patch1, patch2, operands):
    x = jnp.concatenate([patch1, patch2], axis=0)                 # batch both views
    n_total, spatial = x.shape[0], x.shape[-1]
    patches = _im2col_first_layer(x).astype(ACT_DTYPE)
    fwd = make_forward(spatial, n_total)
    v_out, z_out = fwd(patches, operands["w1"], operands["conv_w"],
                       operands["scales"], operands["shifts"], operands["alphas"],
                       operands["pad1"], operands["pad2"], operands["pad3"],
                       operands["pool4"], operands["lin_w"], operands["lin_b"])
    v = v_out.reshape(n_total, LATENT)
    z = z_out.reshape(n_total, LATENT)
    b = patch1.shape[0]
    return z[:b], z[b:], v[:b], v[b:]


# ----------------------------------------------------------------------------
# Deterministic synthetic parameters + kernel-operand construction
# ----------------------------------------------------------------------------
def make_params(key):
    ks = iter(jax.random.split(key, 40))
    p = {"conv_w": [], "conv_b": [], "bn_g": [], "bn_b": [], "bn_m": [], "bn_v": [],
         "alpha": []}
    cin = 3
    for cout in CH_REAL:
        p["conv_w"].append(jax.random.normal(next(ks), (3, 3, cin, cout), jnp.float32)
                           * (1.0 / float(np.sqrt(9 * cin))))
        p["conv_b"].append(jax.random.normal(next(ks), (cout,), jnp.float32) * 0.05)
        p["bn_g"].append(1.0 + 0.1 * jax.random.normal(next(ks), (cout,), jnp.float32))
        p["bn_b"].append(0.05 * jax.random.normal(next(ks), (cout,), jnp.float32))
        p["bn_m"].append(0.05 * jax.random.normal(next(ks), (cout,), jnp.float32))
        p["bn_v"].append(jnp.abs(jax.random.normal(next(ks), (cout,), jnp.float32)) * 0.3 + 0.7)
        p["alpha"].append(jnp.float32(0.25))                      # nn.PReLU() default
        cin = cout
    p["fc_w"] = jax.random.normal(next(ks), (CH_REAL[-1], LATENT), jnp.float32) * 0.1
    p["fc_b"] = jax.random.normal(next(ks), (LATENT,), jnp.float32) * 0.05
    p["pj_w1"] = jax.random.normal(next(ks), (LATENT, LATENT), jnp.float32) * 0.08
    p["pj_b1"] = jax.random.normal(next(ks), (LATENT,), jnp.float32) * 0.05
    p["pj_a"] = jnp.float32(0.25)
    p["pj_w2"] = jax.random.normal(next(ks), (LATENT, LATENT), jnp.float32) * 0.08
    p["pj_b2"] = jax.random.normal(next(ks), (LATENT,), jnp.float32) * 0.05
    return p


def build_kernel_operands(p, spatial):
    s1, s2, s3 = spatial // 2, spatial // 4, spatial // 8

    # layer-1 flattened (kh,kw,cin)->cout weight, padded to (32, 128)
    w1r = p["conv_w"][0].reshape(9 * 3, CH_REAL[0])
    w1 = jnp.zeros((K1_PAD, CPAD), jnp.float32).at[:9 * 3, :CH_REAL[0]].set(w1r)

    conv_w = jnp.zeros((3, 9, CPAD, CPAD), jnp.float32)
    for l in range(1, 4):
        cin, cout = CH_REAL[l - 1], CH_REAL[l]
        conv_w = conv_w.at[l - 1, :, :cin, :cout].set(p["conv_w"][l].reshape(9, cin, cout))

    scales = jnp.zeros((4, CPAD), jnp.float32)
    shifts = jnp.zeros((4, CPAD), jnp.float32)
    alphas = jnp.zeros((5, CPAD), jnp.float32)
    for l in range(4):
        cout = CH_REAL[l]
        s = p["bn_g"][l] / jnp.sqrt(p["bn_v"][l] + 1e-5)
        scales = scales.at[l, :cout].set(s)
        shifts = shifts.at[l, :cout].set((p["conv_b"][l] - p["bn_m"][l]) * s + p["bn_b"][l])
        alphas = alphas.at[l, :].set(p["alpha"][l])
    alphas = alphas.at[4, :].set(p["pj_a"])

    def scatter_mat_first(s_out):      # conv1 output rows -> padded flat input of conv2
        m = np.zeros(((s_out + 2) ** 2, s_out * s_out), np.float32)
        for i in range(s_out):
            for j in range(s_out):
                m[(i + 1) * (s_out + 2) + (j + 1), i * s_out + j] = 1.0
        return jnp.asarray(m)

    def scatter_mat(s_in):             # dense rows -> next layer's padded flat input
        s_out, wp = s_in // 2, s_in + 2
        m = np.zeros(((s_out + 2) ** 2, _lblk(s_in)), np.float32)
        for i in range(s_out):
            for j in range(s_out):
                m[(i + 1) * (s_out + 2) + (j + 1), 2 * i * wp + 2 * j] = 1.0
        return jnp.asarray(m)

    def pool_mat(s_in):                # dense rows -> global average pool
        s_out, wp = s_in // 2, s_in + 2
        m = np.zeros((1, _lblk(s_in)), np.float32)
        for i in range(s_out):
            for j in range(s_out):
                m[0, 2 * i * wp + 2 * j] = 1.0 / (s_out * s_out)
        return jnp.asarray(m)

    lin_w = jnp.zeros((3, CPAD, LATENT), jnp.float32)
    lin_w = lin_w.at[0, :CH_REAL[-1], :].set(p["fc_w"])
    lin_w = lin_w.at[1].set(p["pj_w1"])
    lin_w = lin_w.at[2].set(p["pj_w2"])
    lin_b = jnp.stack([p["fc_b"], p["pj_b1"], p["pj_b2"]], axis=0)

    return dict(w1=w1.astype(ACT_DTYPE), conv_w=conv_w.astype(ACT_DTYPE),
                scales=scales, shifts=shifts, alphas=alphas,
                pad1=scatter_mat_first(s1), pad2=scatter_mat(s1),
                pad3=scatter_mat(s2), pool4=pool_mat(s3),
                lin_w=lin_w, lin_b=lin_b)


# ----------------------------------------------------------------------------
# Pure-JAX reference (independent of the Pallas data path) for validation
# ----------------------------------------------------------------------------
def reference_forward(x_nchw, p):
    hp = jax.lax.Precision.HIGHEST
    x = jnp.transpose(x_nchw, (0, 2, 3, 1)).astype(jnp.float32)
    for l in range(4):
        x = jax.lax.conv_general_dilated(
            x, p["conv_w"][l], window_strides=(2, 2), padding=((1, 1), (1, 1)),
            dimension_numbers=("NHWC", "HWIO", "NHWC"), precision=hp)
        x = x + p["conv_b"][l]
        x = (x - p["bn_m"][l]) * (p["bn_g"][l] / jnp.sqrt(p["bn_v"][l] + 1e-5)) + p["bn_b"][l]
        x = jnp.where(x > 0, x, p["alpha"][l] * x)
    x = jnp.mean(x, axis=(1, 2))
    h = jnp.maximum(jnp.dot(x, p["fc_w"], precision=hp) + p["fc_b"], 0.0)
    v = h / jnp.maximum(jnp.linalg.norm(h, axis=-1, keepdims=True), 1e-12)
    g = jnp.dot(v, p["pj_w1"], precision=hp) + p["pj_b1"]
    g = jnp.where(g > 0, g, p["pj_a"] * g)
    z = jnp.dot(g, p["pj_w2"], precision=hp) + p["pj_b2"]
    return z, v


# ----------------------------------------------------------------------------
if __name__ == "__main__":
    key = jax.random.PRNGKey(0)
    k1, k2, kp = jax.random.split(key, 3)
    B = 2
    patch1 = jax.random.normal(k1, (B, 3, SPATIAL, SPATIAL), jnp.float32)
    patch2 = jax.random.normal(k2, (B, 3, SPATIAL, SPATIAL), jnp.float32)
    params = make_params(kp)
    operands = build_kernel_operands(params, SPATIAL)

    fwd = jax.jit(sterling_forward)
    z1, z2, v1, v2 = jax.block_until_ready(fwd(patch1, patch2, operands))

    assert z1.shape == (B, LATENT) and z2.shape == (B, LATENT)
    assert v1.shape == (B, LATENT) and v2.shape == (B, LATENT)
    # normalized encodings must have unit L2 norm
    assert bool(jnp.allclose(jnp.linalg.norm(v1, axis=-1), 1.0, atol=1e-3))
    assert bool(jnp.allclose(jnp.linalg.norm(v2, axis=-1), 1.0, atol=1e-3))
    assert bool(jnp.all(jnp.isfinite(z1))) and bool(jnp.all(jnp.isfinite(z2)))

    # compare against an independent pure-JAX implementation of the same network
    zr1, vr1 = reference_forward(patch1, params)
    zr2, vr2 = reference_forward(patch2, params)
    for got, ref in ((z1, zr1), (z2, zr2), (v1, vr1), (v2, vr2)):
        err = float(jnp.max(jnp.abs(got - ref)))
        scale = float(jnp.max(jnp.abs(ref))) + 1e-6
        assert err < 5e-2 * scale + 1e-4, (err, scale)

    print("KERNEL_OK")
</pallas_src>

<mosaic_0001>
module attributes {stable_mosaic.version = 11 : i64} {
  func.func @kernel(%arg0: i32, %arg1: memref<1x256x32xf32, #tpu.memory_space<vmem>>, %arg2: memref<32x128xf32, #tpu.memory_space<vmem>>, %arg3: memref<3x9x128x128xf32, #tpu.memory_space<vmem>>, %arg4: memref<4x128xf32, #tpu.memory_space<vmem>>, %arg5: memref<4x128xf32, #tpu.memory_space<vmem>>, %arg6: memref<5x128xf32, #tpu.memory_space<vmem>>, %arg7: memref<324x256xf32, #tpu.memory_space<vmem>>, %arg8: memref<100x286xf32, #tpu.memory_space<vmem>>, %arg9: memref<36x78xf32, #tpu.memory_space<vmem>>, %arg10: memref<1x22xf32, #tpu.memory_space<vmem>>, %arg11: memref<3x128x128xf32, #tpu.memory_space<vmem>>, %arg12: memref<3x128xf32, #tpu.memory_space<vmem>>, %arg13: memref<1x1x128xf32, #tpu.memory_space<vmem>>, %arg14: memref<1x1x128xf32, #tpu.memory_space<vmem>>, %arg15: memref<324x128xf32, #tpu.memory_space<vmem>>) attributes {dimension_semantics = [#tpu.dimension_semantics<parallel>], iteration_bounds = array<i64: 4>, scalar_prefetch = 0 : i64, scratch_operands = 1 : i64, tpu.core_type = #tpu.core_type<tc>, window_params = [{transform_indices = @transform_0, window_bounds = array<i64: 1, 256, 32>}, {pipeline_mode = #tpu.pipeline_mode<synchronous>, transform_indices = @transform_1, window_bounds = array<i64: 32, 128>}, {pipeline_mode = #tpu.pipeline_mode<synchronous>, transform_indices = @transform_2, window_bounds = array<i64: 3, 9, 128, 128>}, {pipeline_mode = #tpu.pipeline_mode<synchronous>, transform_indices = @transform_3, window_bounds = array<i64: 4, 128>}, {pipeline_mode = #tpu.pipeline_mode<synchronous>, transform_indices = @transform_4, window_bounds = array<i64: 4, 128>}, {pipeline_mode = #tpu.pipeline_mode<synchronous>, transform_indices = @transform_5, window_bounds = array<i64: 5, 128>}, {pipeline_mode = #tpu.pipeline_mode<synchronous>, transform_indices = @transform_6, window_bounds = array<i64: 324, 256>}, {pipeline_mode = #tpu.pipeline_mode<synchronous>, transform_indices = @transform_7, window_bounds = array<i64: 100, 286>}, {pipeline_mode = #tpu.pipeline_mode<synchronous>, transform_indices = @transform_8, window_bounds = array<i64: 36, 78>}, {pipeline_mode = #tpu.pipeline_mode<synchronous>, transform_indices = @transform_9, window_bounds = array<i64: 1, 22>}, {pipeline_mode = #tpu.pipeline_mode<synchronous>, transform_indices = @transform_10, window_bounds = array<i64: 3, 128, 128>}, {pipeline_mode = #tpu.pipeline_mode<synchronous>, transform_indices = @transform_11, window_bounds = array<i64: 3, 128>}, {transform_indices = @transform_12, window_bounds = array<i64: 1, 1, 128>}, {transform_indices = @transform_13, window_bounds = array<i64: 1, 1, 128>}]} {
    %c0 = arith.constant 0 : index
    %c0_0 = arith.constant 0 : index
    %c0_1 = arith.constant 0 : index
    %0 = vector.load %arg1[%c0, %c0_0, %c0_1] : memref<1x256x32xf32, #tpu.memory_space<vmem>>, vector<1x256x32xf32>
    %1 = vector.shape_cast %0 : vector<1x256x32xf32> to vector<256x32xf32>
    %c0_2 = arith.constant 0 : index
    %c0_3 = arith.constant 0 : index
    %2 = vector.load %arg2[%c0_2, %c0_3] : memref<32x128xf32, #tpu.memory_space<vmem>>, vector<32x128xf32>
    %cst = arith.constant dense<0.000000e+00> : vector<256x128xf32>
    %3 = tpu.matmul %1, %2, %cst {dimension_numbers = #tpu.dot_dimension_numbers<[1], [0], [0], [1], [0, 0, 1, 1], [], []>} : vector<256x32xf32>, vector<32x128xf32>, vector<256x128xf32> -> vector<256x128xf32>
    %c0_4 = arith.constant 0 : index
    %c0_5 = arith.constant 0 : index
    %4 = vector.load %arg4[%c0_4, %c0_5] : memref<4x128xf32, #tpu.memory_space<vmem>>, vector<1x128xf32>
    %5 = vector.broadcast %4 : vector<1x128xf32> to vector<256x128xf32>
    %6 = arith.mulf %3, %5 : vector<256x128xf32>
    %c0_6 = arith.constant 0 : index
    %c0_7 = arith.constant 0 : index
    %7 = vector.load %arg5[%c0_6, %c0_7] : memref<4x128xf32, #tpu.memory_space<vmem>>, vector<1x128xf32>
    %8 = vector.broadcast %7 : vector<1x128xf32> to vector<256x128xf32>
    %9 = arith.addf %6, %8 : vector<256x128xf32>
    %cst_8 = arith.constant 0.000000e+00 : f32
    %10 = vector.broadcast %cst_8 : f32 to vector<256x128xf32>
    %11 = arith.cmpf ogt, %9, %10 : vector<256x128xf32>
    %c0_9 = arith.constant 0 : index
    %c0_10 = arith.constant 0 : index
    %12 = vector.load %arg6[%c0_9, %c0_10] : memref<5x128xf32, #tpu.memory_space<vmem>>, vector<1x128xf32>
    %13 = vector.broadcast %12 : vector<1x128xf32> to vector<256x128xf32>
    %14 = arith.mulf %13, %9 : vector<256x128xf32>
    %15 = arith.select %11, %9, %14 : vector<256x128xi1>, vector<256x128xf32>
    %c0_11 = arith.constant 0 : index
    %c0_12 = arith.constant 0 : index
    %16 = vector.load %arg7[%c0_11, %c0_12] : memref<324x256xf32, #tpu.memory_space<vmem>>, vector<324x256xf32>
    %cst_13 = arith.constant dense<0.000000e+00> : vector<324x128xf32>
    %17 = tpu.matmul %16, %15, %cst_13 {dimension_numbers = #tpu.dot_dimension_numbers<[1], [0], [0], [1], [0, 0, 1, 1], [], []>} : vector<324x256xf32>, vector<256x128xf32>, vector<324x128xf32> -> vector<324x128xf32>
    %c0_14 = arith.constant 0 : index
    %c0_15 = arith.constant 0 : index
    %18 = vector.load %arg15[%c0_14, %c0_15] : memref<324x128xf32, #tpu.memory_space<vmem>>, vector<324x128xf32>
    tpu.vector_store %arg15[%c0_14, %c0_15], %17 {strides = array<i32>} : memref<324x128xf32, #tpu.memory_space<vmem>>, vector<324x128xf32>,
    %cst_16 = arith.constant 0.000000e+00 : f32
    %19 = vector.broadcast %cst_16 : f32 to vector<286x128xf32>
    %c0_17 = arith.constant 0 : index
    %c0_18 = arith.constant 0 : index
    %20 = vector.load %arg15[%c0_17, %c0_18] : memref<324x128xf32, #tpu.memory_space<vmem>>, vector<286x128xf32>
    %c0_19 = arith.constant 0 : index
    %c0_20 = arith.constant 0 : index
    %c0_21 = arith.constant 0 : index
    %c0_22 = arith.constant 0 : index
    %21 = vector.load %arg3[%c0_19, %c0_20, %c0_21, %c0_22] : memref<3x9x128x128xf32, #tpu.memory_space<vmem>>, vector<1x1x128x128xf32>
    %22 = vector.shape_cast %21 : vector<1x1x128x128xf32> to vector<128x128xf32>
    %cst_23 = arith.constant dense<0.000000e+00> : vector<286x128xf32>
    %23 = tpu.matmul %20, %22, %cst_23 {dimension_numbers = #tpu.dot_dimension_numbers<[1], [0], [0], [1], [0, 0, 1, 1], [], []>} : vector<286x128xf32>, vector<128x128xf32>, vector<286x128xf32> -> vector<286x128xf32>
    %24 = arith.addf %19, %23 : vector<286x128xf32>
    %c1 = arith.constant 1 : index
    %c0_24 = arith.constant 0 : index
    %25 = vector.load %arg15[%c1, %c0_24] : memref<324x128xf32, #tpu.memory_space<vmem>>, vector<286x128xf32>
    %c0_25 = arith.constant 0 : index
    %c1_26 = arith.constant 1 : index
    %c0_27 = arith.constant 0 : index
    %c0_28 = arith.constant 0 : index
    %26 = vector.load %arg3[%c0_25, %c1_26, %c0_27, %c0_28] : memref<3x9x128x128xf32, #tpu.memory_space<vmem>>, vector<1x1x128x128xf32>
    %27 = vector.shape_cast %26 : vector<1x1x128x128xf32> to vector<128x128xf32>
    %cst_29 = arith.constant dense<0.000000e+00> : vector<286x128xf32>
    %28 = tpu.matmul %25, %27, %cst_29 {dimension_numbers = #tpu.dot_dimension_numbers<[1], [0], [0], [1], [0, 0, 1, 1], [], []>} : vector<286x128xf32>, vector<128x128xf32>, vector<286x128xf32> -> vector<286x128xf32>
    %29 = arith.addf %24, %28 : vector<286x128xf32>
    %c2 = arith.constant 2 : index
    %c0_30 = arith.constant 0 : index
    %30 = vector.load %arg15[%c2, %c0_30] : memref<324x128xf32, #tpu.memory_space<vmem>>, vector<286x128xf32>
    %c0_31 = arith.constant 0 : index
    %c2_32 = arith.constant 2 : index
    %c0_33 = arith.constant 0 : index
    %c0_34 = arith.constant 0 : index
    %31 = vector.load %arg3[%c0_31, %c2_32, %c0_33, %c0_34] : memref<3x9x128x128xf32, #tpu.memory_space<vmem>>, vector<1x1x128x128xf32>
    %32 = vector.shape_cast %31 : vector<1x1x128x128xf32> to vector<128x128xf32>
    %cst_35 = arith.constant dense<0.000000e+00> : vector<286x128xf32>
    %33 = tpu.matmul %30, %32, %cst_35 {dimension_numbers = #tpu.dot_dimension_numbers<[1], [0], [0], [1], [0, 0, 1, 1], [], []>} : vector<286x128xf32>, vector<128x128xf32>, vector<286x128xf32> -> vector<286x128xf32>
    %34 = arith.addf %29, %33 : vector<286x128xf32>
    %c18 = arith.constant 18 : index
    %c0_36 = arith.constant 0 : index
    %35 = vector.load %arg15[%c18, %c0_36] : memref<324x128xf32, #tpu.memory_space<vmem>>, vector<286x128xf32>
    %c0_37 = arith.constant 0 : index
    %c3 = arith.constant 3 : index
    %c0_38 = arith.constant 0 : index
    %c0_39 = arith.constant 0 : index
    %36 = vector.load %arg3[%c0_37, %c3, %c0_38, %c0_39] : memref<3x9x128x128xf32, #tpu.memory_space<vmem>>, vector<1x1x128x128xf32>
    %37 = vector.shape_cast %36 : vector<1x1x128x128xf32> to vector<128x128xf32>
    %cst_40 = arith.constant dense<0.000000e+00> : vector<286x128xf32>
    %38 = tpu.matmul %35, %37, %cst_40 {dimension_numbers = #tpu.dot_dimension_numbers<[1], [0], [0], [1], [0, 0, 1, 1], [], []>} : vector<286x128xf32>, vector<128x128xf32>, vector<286x128xf32> -> vector<286x128xf32>
    %39 = arith.addf %34, %38 : vector<286x128xf32>
    %c19 = arith.constant 19 : index
    %c0_41 = arith.constant 0 : index
    %40 = vector.load %arg15[%c19, %c0_41] : memref<324x128xf32, #tpu.memory_space<vmem>>, vector<286x128xf32>
    %c0_42 = arith.constant 0 : index
    %c4 = arith.constant 4 : index
    %c0_43 = arith.constant 0 : index
    %c0_44 = arith.constant 0 : index
    %41 = vector.load %arg3[%c0_42, %c4, %c0_43, %c0_44] : memref<3x9x128x128xf32, #tpu.memory_space<vmem>>, vector<1x1x128x128xf32>
    %42 = vector.shape_cast %41 : vector<1x1x128x128xf32> to vector<128x128xf32>
    %cst_45 = arith.constant dense<0.000000e+00> : vector<286x128xf32>
    %43 = tpu.matmul %40, %42, %cst_45 {dimension_numbers = #tpu.dot_dimension_numbers<[1], [0], [0], [1], [0, 0, 1, 1], [], []>} : vector<286x128xf32>, vector<128x128xf32>, vector<286x128xf32> -> vector<286x128xf32>
    %44 = arith.addf %39, %43 : vector<286x128xf32>
    %c20 = arith.constant 20 : index
    %c0_46 = arith.constant 0 : index
    %45 = vector.load %arg15[%c20, %c0_46] : memref<324x128xf32, #tpu.memory_space<vmem>>, vector<286x128xf32>
    %c0_47 = arith.constant 0 : index
    %c5 = arith.constant 5 : index
    %c0_48 = arith.constant 0 : index
    %c0_49 = arith.constant 0 : index
    %46 = vector.load %arg3[%c0_47, %c5, %c0_48, %c0_49] : memref<3x9x128x128xf32, #tpu.memory_space<vmem>>, vector<1x1x128x128xf32>
    %47 = vector.shape_cast %46 : vector<1x1x128x128xf32> to vector<128x128xf32>
    %cst_50 = arith.constant dense<0.000000e+00> : vector<286x128xf32>
    %48 = tpu.matmul %45, %47, %cst_50 {dimension_numbers = #tpu.dot_dimension_numbers<[1], [0], [0], [1], [0, 0, 1, 1], [], []>} : vector<286x128xf32>, vector<128x128xf32>, vector<286x128xf32> -> vector<286x128xf32>
    %49 = arith.addf %44, %48 : vector<286x128xf32>
    %c36 = arith.constant 36 : index
    %c0_51 = arith.constant 0 : index
    %50 = vector.load %arg15[%c36, %c0_51] : memref<324x128xf32, #tpu.memory_space<vmem>>, vector<286x128xf32>
    %c0_52 = arith.constant 0 : index
    %c6 = arith.constant 6 : index
    %c0_53 = arith.constant 0 : index
    %c0_54 = arith.constant 0 : index
    %51 = vector.load %arg3[%c0_52, %c6, %c0_53, %c0_54] : memref<3x9x128x128xf32, #tpu.memory_space<vmem>>, vector<1x1x128x128xf32>
    %52 = vector.shape_cast %51 : vector<1x1x128x128xf32> to vector<128x128xf32>
    %cst_55 = arith.constant dense<0.000000e+00> : vector<286x128xf32>
    %53 = tpu.matmul %50, %52, %cst_55 {dimension_numbers = #tpu.dot_dimension_numbers<[1], [0], [0], [1], [0, 0, 1, 1], [], []>} : vector<286x128xf32>, vector<128x128xf32>, vector<286x128xf32> -> vector<286x128xf32>
    %54 = arith.addf %49, %53 : vector<286x128xf32>
    %c37 = arith.constant 37 : index
    %c0_56 = arith.constant 0 : index
    %55 = vector.load %arg15[%c37, %c0_56] : memref<324x128xf32, #tpu.memory_space<vmem>>, vector<286x128xf32>
    %c0_57 = arith.constant 0 : index
    %c7 = arith.constant 7 : index
    %c0_58 = arith.constant 0 : index
    %c0_59 = arith.constant 0 : index
    %56 = vector.load %arg3[%c0_57, %c7, %c0_58, %c0_59] : memref<3x9x128x128xf32, #tpu.memory_space<vmem>>, vector<1x1x128x128xf32>
    %57 = vector.shape_cast %56 : vector<1x1x128x128xf32> to vector<128x128xf32>
    %cst_60 = arith.constant dense<0.000000e+00> : vector<286x128xf32>
    %58 = tpu.matmul %55, %57, %cst_60 {dimension_numbers = #tpu.dot_dimension_numbers<[1], [0], [0], [1], [0, 0, 1, 1], [], []>} : vector<286x128xf32>, vector<128x128xf32>, vector<286x128xf32> -> vector<286x128xf32>
    %59 = arith.addf %54, %58 : vector<286x128xf32>
    %c38 = arith.constant 38 : index
    %c0_61 = arith.constant 0 : index
    %60 = vector.load %arg15[%c38, %c0_61] : memref<324x128xf32, #tpu.memory_space<vmem>>, vector<286x128xf32>
    %c0_62 = arith.constant 0 : index
    %c8 = arith.constant 8 : index
    %c0_63 = arith.constant 0 : index
    %c0_64 = arith.constant 0 : index
    %61 = vector.load %arg3[%c0_62, %c8, %c0_63, %c0_64] : memref<3x9x128x128xf32, #tpu.memory_space<vmem>>, vector<1x1x128x128xf32>
    %62 = vector.shape_cast %61 : vector<1x1x128x128xf32> to vector<128x128xf32>
    %cst_65 = arith.constant dense<0.000000e+00> : vector<286x128xf32>
    %63 = tpu.matmul %60, %62, %cst_65 {dimension_numbers = #tpu.dot_dimension_numbers<[1], [0], [0], [1], [0, 0, 1, 1], [], []>} : vector<286x128xf32>, vector<128x128xf32>, vector<286x128xf32> -> vector<286x128xf32>
    %64 = arith.addf %59, %63 : vector<286x128xf32>
    %c1_66 = arith.constant 1 : index
    %c0_67 = arith.constant 0 : index
    %65 = vector.load %arg4[%c1_66, %c0_67] : memref<4x128xf32, #tpu.memory_space<vmem>>, vector<1x128xf32>
    %66 = vector.broadcast %65 : vector<1x128xf32> to vector<286x128xf32>
    %67 = arith.mulf %64, %66 : vector<286x128xf32>
    %c1_68 = arith.constant 1 : index
    %c0_69 = arith.constant 0 : index
    %68 = vector.load %arg5[%c1_68, %c0_69] : memref<4x128xf32, #tpu.memory_space<vmem>>, vector<1x128xf32>
    %69 = vector.broadcast %68 : vector<1x128xf32> to vector<286x128xf32>
    %70 = arith.addf %67, %69 : vector<286x128xf32>
    %cst_70 = arith.constant 0.000000e+00 : f32
    %71 = vector.broadcast %cst_70 : f32 to vector<286x128xf32>
    %72 = arith.cmpf ogt, %70, %71 : vector<286x128xf32>
    %c1_71 = arith.constant 1 : index
    %c0_72 = arith.constant 0 : index
    %73 = vector.load %arg6[%c1_71, %c0_72] : memref<5x128xf32, #tpu.memory_space<vmem>>, vector<1x128xf32>
    %74 = vector.broadcast %73 : vector<1x128xf32> to vector<286x128xf32>
    %75 = arith.mulf %74, %70 : vector<286x128xf32>
    %76 = arith.select %72, %70, %75 : vector<286x128xi1>, vector<286x128xf32>
    %c0_73 = arith.constant 0 : index
    %c0_74 = arith.constant 0 : index
    %77 = vector.load %arg8[%c0_73, %c0_74] : memref<100x286xf32, #tpu.memory_space<vmem>>, vector<100x286xf32>
    %cst_75 = arith.constant dense<0.000000e+00> : vector<100x128xf32>
    %78 = tpu.matmul %77, %76, %cst_75 {dimension_numbers = #tpu.dot_dimension_numbers<[1], [0], [0], [1], [0, 0, 1, 1], [], []>} : vector<100x286xf32>, vector<286x128xf32>, vector<100x128xf32> -> vector<100x128xf32>
    %c0_76 = arith.constant 0 : index
    %c0_77 = arith.constant 0 : index
    %79 = vector.load %arg15[%c0_76, %c0_77] : memref<324x128xf32, #tpu.memory_space<vmem>>, vector<100x128xf32>
    tpu.vector_store %arg15[%c0_76, %c0_77], %78 {strides = array<i32>} : memref<324x128xf32, #tpu.memory_space<vmem>>, vector<100x128xf32>,
    %cst_78 = arith.constant 0.000000e+00 : f32
    %80 = vector.broadcast %cst_78 : f32 to vector<78x128xf32>
    %c0_79 = arith.constant 0 : index
    %c0_80 = arith.constant 0 : index
    %81 = vector.load %arg15[%c0_79, %c0_80] : memref<324x128xf32, #tpu.memory_space<vmem>>, vector<78x128xf32>
    %c1_81 = arith.constant 1 : index
    %c0_82 = arith.constant 0 : index
    %c0_83 = arith.constant 0 : index
    %c0_84 = arith.constant 0 : index
    %82 = vector.load %arg3[%c1_81, %c0_82, %c0_83, %c0_84] : memref<3x9x128x128xf32, #tpu.memory_space<vmem>>, vector<1x1x128x128xf32>
    %83 = vector.shape_cast %82 : vector<1x1x128x128xf32> to vector<128x128xf32>
    %cst_85 = arith.constant dense<0.000000e+00> : vector<78x128xf32>
    %84 = tpu.matmul %81, %83, %cst_85 {dimension_numbers = #tpu.dot_dimension_numbers<[1], [0], [0], [1], [0, 0, 1, 1], [], []>} : vector<78x128xf32>, vector<128x128xf32>, vector<78x128xf32> -> vector<78x128xf32>
    %85 = arith.addf %80, %84 : vector<78x128xf32>
    %c1_86 = arith.constant 1 : index
    %c0_87 = arith.constant 0 : index
    %86 = vector.load %arg15[%c1_86, %c0_87] : memref<324x128xf32, #tpu.memory_space<vmem>>, vector<78x128xf32>
    %c1_88 = arith.constant 1 : index
    %c1_89 = arith.constant 1 : index
    %c0_90 = arith.constant 0 : index
    %c0_91 = arith.constant 0 : index
    %87 = vector.load %arg3[%c1_88, %c1_89, %c0_90, %c0_91] : memref<3x9x128x128xf32, #tpu.memory_space<vmem>>, vector<1x1x128x128xf32>
    %88 = vector.shape_cast %87 : vector<1x1x128x128xf32> to vector<128x128xf32>
    %cst_92 = arith.constant dense<0.000000e+00> : vector<78x128xf32>
    %89 = tpu.matmul %86, %88, %cst_92 {dimension_numbers = #tpu.dot_dimension_numbers<[1], [0], [0], [1], [0, 0, 1, 1], [], []>} : vector<78x128xf32>, vector<128x128xf32>, vector<78x128xf32> -> vector<78x128xf32>
    %90 = arith.addf %85, %89 : vector<78x128xf32>
    %c2_93 = arith.constant 2 : index
    %c0_94 = arith.constant 0 : index
    %91 = vector.load %arg15[%c2_93, %c0_94] : memref<324x128xf32, #tpu.memory_space<vmem>>, vector<78x128xf32>
    %c1_95 = arith.constant 1 : index
    %c2_96 = arith.constant 2 : index
    %c0_97 = arith.constant 0 : index
    %c0_98 = arith.constant 0 : index
    %92 = vector.load %arg3[%c1_95, %c2_96, %c0_97, %c0_98] : memref<3x9x128x128xf32, #tpu.memory_space<vmem>>, vector<1x1x128x128xf32>
    %93 = vector.shape_cast %92 : vector<1x1x128x128xf32> to vector<128x128xf32>
    %cst_99 = arith.constant dense<0.000000e+00> : vector<78x128xf32>
    %94 = tpu.matmul %91, %93, %cst_99 {dimension_numbers = #tpu.dot_dimension_numbers<[1], [0], [0], [1], [0, 0, 1, 1], [], []>} : vector<78x128xf32>, vector<128x128xf32>, vector<78x128xf32> -> vector<78x128xf32>
    %95 = arith.addf %90, %94 : vector<78x128xf32>
    %c10 = arith.constant 10 : index
    %c0_100 = arith.constant 0 : index
    %96 = vector.load %arg15[%c10, %c0_100] : memref<324x128xf32, #tpu.memory_space<vmem>>, vector<78x128xf32>
    %c1_101 = arith.constant 1 : index
    %c3_102 = arith.constant 3 : index
    %c0_103 = arith.constant 0 : index
    %c0_104 = arith.constant 0 : index
    %97 = vector.load %arg3[%c1_101, %c3_102, %c0_103, %c0_104] : memref<3x9x128x128xf32, #tpu.memory_space<vmem>>, vector<1x1x128x128xf32>
    %98 = vector.shape_cast %97 : vector<1x1x128x128xf32> to vector<128x128xf32>
    %cst_105 = arith.constant dense<0.000000e+00> : vector<78x128xf32>
    %99 = tpu.matmul %96, %98, %cst_105 {dimension_numbers = #tpu.dot_dimension_numbers<[1], [0], [0], [1], [0, 0, 1, 1], [], []>} : vector<78x128xf32>, vector<128x128xf32>, vector<78x128xf32> -> vector<78x128xf32>
    %100 = arith.addf %95, %99 : vector<78x128xf32>
    %c11 = arith.constant 11 : index
    %c0_106 = arith.constant 0 : index
    %101 = vector.load %arg15[%c11, %c0_106] : memref<324x128xf32, #tpu.memory_space<vmem>>, vector<78x128xf32>
    %c1_107 = arith.constant 1 : index
    %c4_108 = arith.constant 4 : index
    %c0_109 = arith.constant 0 : index
    %c0_110 = arith.constant 0 : index
    %102 = vector.load %arg3[%c1_107, %c4_108, %c0_109, %c0_110] : memref<3x9x128x128xf32, #tpu.memory_space<vmem>>, vector<1x1x128x128xf32>
    %103 = vector.shape_cast %102 : vector<1x1x128x128xf32> to vector<128x128xf32>
    %cst_111 = arith.constant dense<0.000000e+00> : vector<78x128xf32>
    %104 = tpu.matmul %101, %103, %cst_111 {dimension_numbers = #tpu.dot_dimension_numbers<[1], [0], [0], [1], [0, 0, 1, 1], [], []>} : vector<78x128xf32>, vector<128x128xf32>, vector<78x128xf32> -> vector<78x128xf32>
    %105 = arith.addf %100, %104 : vector<78x128xf32>
    %c12 = arith.constant 12 : index
    %c0_112 = arith.constant 0 : index
    %106 = vector.load %arg15[%c12, %c0_112] : memref<324x128xf32, #tpu.memory_space<vmem>>, vector<78x128xf32>
    %c1_113 = arith.constant 1 : index
    %c5_114 = arith.constant 5 : index
    %c0_115 = arith.constant 0 : index
    %c0_116 = arith.constant 0 : index
    %107 = vector.load %arg3[%c1_113, %c5_114, %c0_115, %c0_116] : memref<3x9x128x128xf32, #tpu.memory_space<vmem>>, vector<1x1x128x128xf32>
    %108 = vector.shape_cast %107 : vector<1x1x128x128xf32> to vector<128x128xf32>
    %cst_117 = arith.constant dense<0.000000e+00> : vector<78x128xf32>
    %109 = tpu.matmul %106, %108, %cst_117 {dimension_numbers = #tpu.dot_dimension_numbers<[1], [0], [0], [1], [0, 0, 1, 1], [], []>} : vector<78x128xf32>, vector<128x128xf32>, vector<78x128xf32> -> vector<78x128xf32>
    %110 = arith.addf %105, %109 : vector<78x128xf32>
    %c20_118 = arith.constant 20 : index
    %c0_119 = arith.constant 0 : index
    %111 = vector.load %arg15[%c20_118, %c0_119] : memref<324x128xf32, #tpu.memory_space<vmem>>, vector<78x128xf32>
    %c1_120 = arith.constant 1 : index
    %c6_121 = arith.constant 6 : index
    %c0_122 = arith.constant 0 : index
    %c0_123 = arith.constant 0 : index
    %112 = vector.load %arg3[%c1_120, %c6_121, %c0_122, %c0_123] : memref<3x9x128x128xf32, #tpu.memory_space<vmem>>, vector<1x1x128x128xf32>
    %113 = vector.shape_cast %112 : vector<1x1x128x128xf32> to vector<128x128xf32>
    %cst_124 = arith.constant dense<0.000000e+00> : vector<78x128xf32>
    %114 = tpu.matmul %111, %113, %cst_124 {dimension_numbers = #tpu.dot_dimension_numbers<[1], [0], [0], [1], [0, 0, 1, 1], [], []>} : vector<78x128xf32>, vector<128x128xf32>, vector<78x128xf32> -> vector<78x128xf32>
    %115 = arith.addf %110, %114 : vector<78x128xf32>
    %c21 = arith.constant 21 : index
    %c0_125 = arith.constant 0 : index
    %116 = vector.load %arg15[%c21, %c0_125] : memref<324x128xf32, #tpu.memory_space<vmem>>, vector<78x128xf32>
    %c1_126 = arith.constant 1 : index
    %c7_127 = arith.constant 7 : index
    %c0_128 = arith.constant 0 : index
    %c0_129 = arith.constant 0 : index
    %117 = vector.load %arg3[%c1_126, %c7_127, %c0_128, %c0_129] : memref<3x9x128x128xf32, #tpu.memory_space<vmem>>, vector<1x1x128x128xf32>
    %118 = vector.shape_cast %117 : vector<1x1x128x128xf32> to vector<128x128xf32>
    %cst_130 = arith.constant dense<0.000000e+00> : vector<78x128xf32>
    %119 = tpu.matmul %116, %118, %cst_130 {dimension_numbers = #tpu.dot_dimension_numbers<[1], [0], [0], [1], [0, 0, 1, 1], [], []>} : vector<78x128xf32>, vector<128x128xf32>, vector<78x128xf32> -> vector<78x128xf32>
    %120 = arith.addf %115, %119 : vector<78x128xf32>
    %c22 = arith.constant 22 : index
    %c0_131 = arith.constant 0 : index
    %121 = vector.load %arg15[%c22, %c0_131] : memref<324x128xf32, #tpu.memory_space<vmem>>, vector<78x128xf32>
    %c1_132 = arith.constant 1 : index
    %c8_133 = arith.constant 8 : index
    %c0_134 = arith.constant 0 : index
    %c0_135 = arith.constant 0 : index
    %122 = vector.load %arg3[%c1_132, %c8_133, %c0_134, %c0_135] : memref<3x9x128x128xf32, #tpu.memory_space<vmem>>, vector<1x1x128x128xf32>
    %123 = vector.shape_cast %122 : vector<1x1x128x128xf32> to vector<128x128xf32>
    %cst_136 = arith.constant dense<0.000000e+00> : vector<78x128xf32>
    %124 = tpu.matmul %121, %123, %cst_136 {dimension_numbers = #tpu.dot_dimension_numbers<[1], [0], [0], [1], [0, 0, 1, 1], [], []>} : vector<78x128xf32>, vector<128x128xf32>, vector<78x128xf32> -> vector<78x128xf32>
    %125 = arith.addf %120, %124 : vector<78x128xf32>
    %c2_137 = arith.constant 2 : index
    %c0_138 = arith.constant 0 : index
    %126 = vector.load %arg4[%c2_137, %c0_138] : memref<4x128xf32, #tpu.memory_space<vmem>>, vector<1x128xf32>
    %127 = vector.broadcast %126 : vector<1x128xf32> to vector<78x128xf32>
    %128 = arith.mulf %125, %127 : vector<78x128xf32>
    %c2_139 = arith.constant 2 : index
    %c0_140 = arith.constant 0 : index
    %129 = vector.load %arg5[%c2_139, %c0_140] : memref<4x128xf32, #tpu.memory_space<vmem>>, vector<1x128xf32>
    %130 = vector.broadcast %129 : vector<1x128xf32> to vector<78x128xf32>
    %131 = arith.addf %128, %130 : vector<78x128xf32>
    %cst_141 = arith.constant 0.000000e+00 : f32
    %132 = vector.broadcast %cst_141 : f32 to vector<78x128xf32>
    %133 = arith.cmpf ogt, %131, %132 : vector<78x128xf32>
    %c2_142 = arith.constant 2 : index
    %c0_143 = arith.constant 0 : index
    %134 = vector.load %arg6[%c2_142, %c0_143] : memref<5x128xf32, #tpu.memory_space<vmem>>, vector<1x128xf32>
    %135 = vector.broadcast %134 : vector<1x128xf32> to vector<78x128xf32>
    %136 = arith.mulf %135, %131 : vector<78x128xf32>
    %137 = arith.select %133, %131, %136 : vector<78x128xi1>, vector<78x128xf32>
    %c0_144 = arith.constant 0 : index
    %c0_145 = arith.constant 0 : index
    %138 = vector.load %arg9[%c0_144, %c0_145] : memref<36x78xf32, #tpu.memory_space<vmem>>, vector<36x78xf32>
    %cst_146 = arith.constant dense<0.000000e+00> : vector<36x128xf32>
    %139 = tpu.matmul %138, %137, %cst_146 {dimension_numbers = #tpu.dot_dimension_numbers<[1], [0], [0], [1], [0, 0, 1, 1], [], []>} : vector<36x78xf32>, vector<78x128xf32>, vector<36x128xf32> -> vector<36x128xf32>
    %c0_147 = arith.constant 0 : index
    %c0_148 = arith.constant 0 : index
    %140 = vector.load %arg15[%c0_147, %c0_148] : memref<324x128xf32, #tpu.memory_space<vmem>>, vector<36x128xf32>
    tpu.vector_store %arg15[%c0_147, %c0_148], %139 {strides = array<i32>} : memref<324x128xf32, #tpu.memory_space<vmem>>, vector<36x128xf32>,
    %cst_149 = arith.constant 0.000000e+00 : f32
    %141 = vector.broadcast %cst_149 : f32 to vector<22x128xf32>
    %c0_150 = arith.constant 0 : index
    %c0_151 = arith.constant 0 : index
    %142 = vector.load %arg15[%c0_150, %c0_151] : memref<324x128xf32, #tpu.memory_space<vmem>>, vector<22x128xf32>
    %c2_152 = arith.constant 2 : index
    %c0_153 = arith.constant 0 : index
    %c0_154 = arith.constant 0 : index
    %c0_155 = arith.constant 0 : index
    %143 = vector.load %arg3[%c2_152, %c0_153, %c0_154, %c0_155] : memref<3x9x128x128xf32, #tpu.memory_space<vmem>>, vector<1x1x128x128xf32>
    %144 = vector.shape_cast %143 : vector<1x1x128x128xf32> to vector<128x128xf32>
    %cst_156 = arith.constant dense<0.000000e+00> : vector<22x128xf32>
    %145 = tpu.matmul %142, %144, %cst_156 {dimension_numbers = #tpu.dot_dimension_numbers<[1], [0], [0], [1], [0, 0, 1, 1], [], []>} : vector<22x128xf32>, vector<128x128xf32>, vector<22x128xf32> -> vector<22x128xf32>
    %146 = arith.addf %141, %145 : vector<22x128xf32>
    %c1_157 = arith.constant 1 : index
    %c0_158 = arith.constant 0 : index
    %147 = vector.load %arg15[%c1_157, %c0_158] : memref<324x128xf32, #tpu.memory_space<vmem>>, vector<22x128xf32>
    %c2_159 = arith.constant 2 : index
    %c1_160 = arith.constant 1 : index
    %c0_161 = arith.constant 0 : index
    %c0_162 = arith.constant 0 : index
    %148 = vector.load %arg3[%c2_159, %c1_160, %c0_161, %c0_162] : memref<3x9x128x128xf32, #tpu.memory_space<vmem>>, vector<1x1x128x128xf32>
    %149 = vector.shape_cast %148 : vector<1x1x128x128xf32> to vector<128x128xf32>
    %cst_163 = arith.constant dense<0.000000e+00> : vector<22x128xf32>
    %150 = tpu.matmul %147, %149, %cst_163 {dimension_numbers = #tpu.dot_dimension_numbers<[1], [0], [0], [1], [0, 0, 1, 1], [], []>} : vector<22x128xf32>, vector<128x128xf32>, vector<22x128xf32> -> vector<22x128xf32>
    %151 = arith.addf %146, %150 : vector<22x128xf32>
    %c2_164 = arith.constant 2 : index
    %c0_165 = arith.constant 0 : index
    %152 = vector.load %arg15[%c2_164, %c0_165] : memref<324x128xf32, #tpu.memory_space<vmem>>, vector<22x128xf32>
    %c2_166 = arith.constant 2 : index
    %c2_167 = arith.constant 2 : index
    %c0_168 = arith.constant 0 : index
    %c0_169 = arith.constant 0 : index
    %153 = vector.load %arg3[%c2_166, %c2_167, %c0_168, %c0_169] : memref<3x9x128x128xf32, #tpu.memory_space<vmem>>, vector<1x1x128x128xf32>
    %154 = vector.shape_cast %153 : vector<1x1x128x128xf32> to vector<128x128xf32>
    %cst_170 = arith.constant dense<0.000000e+00> : vector<22x128xf32>
    %155 = tpu.matmul %152, %154, %cst_170 {dimension_numbers = #tpu.dot_dimension_numbers<[1], [0], [0], [1], [0, 0, 1, 1], [], []>} : vector<22x128xf32>, vector<128x128xf32>, vector<22x128xf32> -> vector<22x128xf32>
    %156 = arith.addf %151, %155 : vector<22x128xf32>
    %c6_171 = arith.constant 6 : index
    %c0_172 = arith.constant 0 : index
    %157 = vector.load %arg15[%c6_171, %c0_172] : memref<324x128xf32, #tpu.memory_space<vmem>>, vector<22x128xf32>
    %c2_173 = arith.constant 2 : index
    %c3_174 = arith.constant 3 : index
    %c0_175 = arith.constant 0 : index
    %c0_176 = arith.constant 0 : index
    %158 = vector.load %arg3[%c2_173, %c3_174, %c0_175, %c0_176] : memref<3x9x128x128xf32, #tpu.memory_space<vmem>>, vector<1x1x128x128xf32>
    %159 = vector.shape_cast %158 : vector<1x1x128x128xf32> to vector<128x128xf32>
    %cst_177 = arith.constant dense<0.000000e+00> : vector<22x128xf32>
    %160 = tpu.matmul %157, %159, %cst_177 {dimension_numbers = #tpu.dot_dimension_numbers<[1], [0], [0], [1], [0, 0, 1, 1], [], []>} : vector<22x128xf32>, vector<128x128xf32>, vector<22x128xf32> -> vector<22x128xf32>
    %161 = arith.addf %156, %160 : vector<22x128xf32>
    %c7_178 = arith.constant 7 : index
    %c0_179 = arith.constant 0 : index
    %162 = vector.load %arg15[%c7_178, %c0_179] : memref<324x128xf32, #tpu.memory_space<vmem>>, vector<22x128xf32>
    %c2_180 = arith.constant 2 : index
    %c4_181 = arith.constant 4 : index
    %c0_182 = arith.constant 0 : index
    %c0_183 = arith.constant 0 : index
    %163 = vector.load %arg3[%c2_180, %c4_181, %c0_182, %c0_183] : memref<3x9x128x128xf32, #tpu.memory_space<vmem>>, vector<1x1x128x128xf32>
    %164 = vector.shape_cast %163 : vector<1x1x128x128xf32> to vector<128x128xf32>
    %cst_184 = arith.constant dense<0.000000e+00> : vector<22x128xf32>
    %165 = tpu.matmul %162, %164, %cst_184 {dimension_numbers = #tpu.dot_dimension_numbers<[1], [0], [0], [1], [0, 0, 1, 1], [], []>} : vector<22x128xf32>, vector<128x128xf32>, vector<22x128xf32> -> vector<22x128xf32>
    %166 = arith.addf %161, %165 : vector<22x128xf32>
    %c8_185 = arith.constant 8 : index
    %c0_186 = arith.constant 0 : index
    %167 = vector.load %arg15[%c8_185, %c0_186] : memref<324x128xf32, #tpu.memory_space<vmem>>, vector<22x128xf32>
    %c2_187 = arith.constant 2 : index
    %c5_188 = arith.constant 5 : index
    %c0_189 = arith.constant 0 : index
    %c0_190 = arith.constant 0 : index
    %168 = vector.load %arg3[%c2_187, %c5_188, %c0_189, %c0_190] : memref<3x9x128x128xf32, #tpu.memory_space<vmem>>, vector<1x1x128x128xf32>
    %169 = vector.shape_cast %168 : vector<1x1x128x128xf32> to vector<128x128xf32>
    %cst_191 = arith.constant dense<0.000000e+00> : vector<22x128xf32>
    %170 = tpu.matmul %167, %169, %cst_191 {dimension_numbers = #tpu.dot_dimension_numbers<[1], [0], [0], [1], [0, 0, 1, 1], [], []>} : vector<22x128xf32>, vector<128x128xf32>, vector<22x128xf32> -> vector<22x128xf32>
    %171 = arith.addf %166, %170 : vector<22x128xf32>
    %c12_192 = arith.constant 12 : index
    %c0_193 = arith.constant 0 : index
    %172 = vector.load %arg15[%c12_192, %c0_193] : memref<324x128xf32, #tpu.memory_space<vmem>>, vector<22x128xf32>
    %c2_194 = arith.constant 2 : index
    %c6_195 = arith.constant 6 : index
    %c0_196 = arith.constant 0 : index
    %c0_197 = arith.constant 0 : index
    %173 = vector.load %arg3[%c2_194, %c6_195, %c0_196, %c0_197] : memref<3x9x128x128xf32, #tpu.memory_space<vmem>>, vector<1x1x128x128xf32>
    %174 = vector.shape_cast %173 : vector<1x1x128x128xf32> to vector<128x128xf32>
    %cst_198 = arith.constant dense<0.000000e+00> : vector<22x128xf32>
    %175 = tpu.matmul %172, %174, %cst_198 {dimension_numbers = #tpu.dot_dimension_numbers<[1], [0], [0], [1], [0, 0, 1, 1], [], []>} : vector<22x128xf32>, vector<128x128xf32>, vector<22x128xf32> -> vector<22x128xf32>
    %176 = arith.addf %171, %175 : vector<22x128xf32>
    %c13 = arith.constant 13 : index
    %c0_199 = arith.constant 0 : index
    %177 = vector.load %arg15[%c13, %c0_199] : memref<324x128xf32, #tpu.memory_space<vmem>>, vector<22x128xf32>
    %c2_200 = arith.constant 2 : index
    %c7_201 = arith.constant 7 : index
    %c0_202 = arith.constant 0 : index
    %c0_203 = arith.constant 0 : index
    %178 = vector.load %arg3[%c2_200, %c7_201, %c0_202, %c0_203] : memref<3x9x128x128xf32, #tpu.memory_space<vmem>>, vector<1x1x128x128xf32>
    %179 = vector.shape_cast %178 : vector<1x1x128x128xf32> to vector<128x128xf32>
    %cst_204 = arith.constant dense<0.000000e+00> : vector<22x128xf32>
    %180 = tpu.matmul %177, %179, %cst_204 {dimension_numbers = #tpu.dot_dimension_numbers<[1], [0], [0], [1], [0, 0, 1, 1], [], []>} : vector<22x128xf32>, vector<128x128xf32>, vector<22x128xf32> -> vector<22x128xf32>
    %181 = arith.addf %176, %180 : vector<22x128xf32>
    %c14 = arith.constant 14 : index
    %c0_205 = arith.constant 0 : index
    %182 = vector.load %arg15[%c14, %c0_205] : memref<324x128xf32, #tpu.memory_space<vmem>>, vector<22x128xf32>
    %c2_206 = arith.constant 2 : index
    %c8_207 = arith.constant 8 : index
    %c0_208 = arith.constant 0 : index
    %c0_209 = arith.constant 0 : index
    %183 = vector.load %arg3[%c2_206, %c8_207, %c0_208, %c0_209] : memref<3x9x128x128xf32, #tpu.memory_space<vmem>>, vector<1x1x128x128xf32>
    %184 = vector.shape_cast %183 : vector<1x1x128x128xf32> to vector<128x128xf32>
    %cst_210 = arith.constant dense<0.000000e+00> : vector<22x128xf32>
    %185 = tpu.matmul %182, %184, %cst_210 {dimension_numbers = #tpu.dot_dimension_numbers<[1], [0], [0], [1], [0, 0, 1, 1], [], []>} : vector<22x128xf32>, vector<128x128xf32>, vector<22x128xf32> -> vector<22x128xf32>
    %186 = arith.addf %181, %185 : vector<22x128xf32>
    %c3_211 = arith.constant 3 : index
    %c0_212 = arith.constant 0 : index
    %187 = vector.load %arg4[%c3_211, %c0_212] : memref<4x128xf32, #tpu.memory_space<vmem>>, vector<1x128xf32>
    %188 = vector.broadcast %187 : vector<1x128xf32> to vector<22x128xf32>
    %189 = arith.mulf %186, %188 : vector<22x128xf32>
    %c3_213 = arith.constant 3 : index
    %c0_214 = arith.constant 0 : index
    %190 = vector.load %arg5[%c3_213, %c0_214] : memref<4x128xf32, #tpu.memory_space<vmem>>, vector<1x128xf32>
    %191 = vector.broadcast %190 : vector<1x128xf32> to vector<22x128xf32>
    %192 = arith.addf %189, %191 : vector<22x128xf32>
    %cst_215 = arith.constant 0.000000e+00 : f32
    %193 = vector.broadcast %cst_215 : f32 to vector<22x128xf32>
    %194 = arith.cmpf ogt, %192, %193 : vector<22x128xf32>
    %c3_216 = arith.constant 3 : index
    %c0_217 = arith.constant 0 : index
    %195 = vector.load %arg6[%c3_216, %c0_217] : memref<5x128xf32, #tpu.memory_space<vmem>>, vector<1x128xf32>
    %196 = vector.broadcast %195 : vector<1x128xf32> to vector<22x128xf32>
    %197 = arith.mulf %196, %192 : vector<22x128xf32>
    %198 = arith.select %194, %192, %197 : vector<22x128xi1>, vector<22x128xf32>
    %c0_218 = arith.constant 0 : index
    %c0_219 = arith.constant 0 : index
    %199 = vector.load %arg10[%c0_218, %c0_219] : memref<1x22xf32, #tpu.memory_space<vmem>>, vector<1x22xf32>
    %cst_220 = arith.constant dense<0.000000e+00> : vector<1x128xf32>
    %200 = tpu.matmul %199, %198, %cst_220 {dimension_numbers = #tpu.dot_dimension_numbers<[1], [0], [0], [1], [0, 0, 1, 1], [], []>} : vector<1x22xf32>, vector<22x128xf32>, vector<1x128xf32> -> vector<1x128xf32>
    %c0_221 = arith.constant 0 : index
    %c0_222 = arith.constant 0 : index
    %c0_223 = arith.constant 0 : index
    %201 = vector.load %arg11[%c0_221, %c0_222, %c0_223] : memref<3x128x128xf32, #tpu.memory_space<vmem>>, vector<1x128x128xf32>
    %202 = vector.shape_cast %201 : vector<1x128x128xf32> to vector<128x128xf32>
    %cst_224 = arith.constant dense<0.000000e+00> : vector<1x128xf32>
    %203 = tpu.matmul %200, %202, %cst_224 {dimension_numbers = #tpu.dot_dimension_numbers<[1], [0], [0], [1], [0, 0, 1, 1], [], []>} : vector<1x128xf32>, vector<128x128xf32>, vector<1x128xf32> -> vector<1x128xf32>
    %c0_225 = arith.constant 0 : index
    %c0_226 = arith.constant 0 : index
    %204 = vector.load %arg12[%c0_225, %c0_226] : memref<3x128xf32, #tpu.memory_space<vmem>>, vector<1x128xf32>
    %205 = arith.addf %203, %204 : vector<1x128xf32>
    %cst_227 = arith.constant 0.000000e+00 : f32
    %206 = vector.broadcast %cst_227 : f32 to vector<1x128xf32>
    %207 = arith.maximumf %205, %206 : vector<1x128xf32>
    %208 = arith.mulf %207, %207 : vector<1x128xf32>
    %cst_228 = arith.constant dense<0.000000e+00> : vector<1xf32>
    %209 = vector.multi_reduction <add>, %208, %cst_228 [1] : vector<1x128xf32> to vector<1xf32>
    %210 = vector.shape_cast %209 : vector<1xf32> to vector<1x1xf32>
    %cst_229 = arith.constant 1.000000e-24 : f32
    %211 = vector.broadcast %cst_229 : f32 to vector<1x1xf32>
    %212 = arith.maximumf %210, %211 : vector<1x1xf32>
    %213 = math.rsqrt %212 : vector<1x1xf32>
    %214 = vector.broadcast %213 : vector<1x1xf32> to vector<1x128xf32>
    %215 = arith.mulf %207, %214 : vector<1x128xf32>
    %c0_230 = arith.constant 0 : index
    %c0_231 = arith.constant 0 : index
    %c0_232 = arith.constant 0 : index
    %216 = vector.load %arg13[%c0_230, %c0_231, %c0_232] : memref<1x1x128xf32, #tpu.memory_space<vmem>>, vector<1x1x128xf32>
    %217 = vector.shape_cast %216 : vector<1x1x128xf32> to vector<1x128xf32>
    %218 = vector.shape_cast %215 : vector<1x128xf32> to vector<1x1x128xf32>
    tpu.vector_store %arg13[%c0_230, %c0_231, %c0_232], %218 {strides = array<i32>} : memref<1x1x128xf32, #tpu.memory_space<vmem>>, vector<1x1x128xf32>,
    %c1_233 = arith.constant 1 : index
    %c0_234 = arith.constant 0 : index
    %c0_235 = arith.constant 0 : index
    %219 = vector.load %arg11[%c1_233, %c0_234, %c0_235] : memref<3x128x128xf32, #tpu.memory_space<vmem>>, vector<1x128x128xf32>
    %220 = vector.shape_cast %219 : vector<1x128x128xf32> to vector<128x128xf32>
    %cst_236 = arith.constant dense<0.000000e+00> : vector<1x128xf32>
    %221 = tpu.matmul %215, %220, %cst_236 {dimension_numbers = #tpu.dot_dimension_numbers<[1], [0], [0], [1], [0, 0, 1, 1], [], []>} : vector<1x128xf32>, vector<128x128xf32>, vector<1x128xf32> -> vector<1x128xf32>
    %c1_237 = arith.constant 1 : index
    %c0_238 = arith.constant 0 : index
    %222 = vector.load %arg12[%c1_237, %c0_238] : memref<3x128xf32, #tpu.memory_space<vmem>>, vector<1x128xf32>
    %223 = arith.addf %221, %222 : vector<1x128xf32>
    %cst_239 = arith.constant 0.000000e+00 : f32
    %224 = vector.broadcast %cst_239 : f32 to vector<1x128xf32>
    %225 = arith.cmpf ogt, %223, %224 : vector<1x128xf32>
    %c4_240 = arith.constant 4 : index
    %c0_241 = arith.constant 0 : index
    %226 = vector.load %arg6[%c4_240, %c0_241] : memref<5x128xf32, #tpu.memory_space<vmem>>, vector<1x128xf32>
    %227 = arith.mulf %226, %223 : vector<1x128xf32>
    %228 = arith.select %225, %223, %227 : vector<1x128xi1>, vector<1x128xf32>
    %c2_242 = arith.constant 2 : index
    %c0_243 = arith.constant 0 : index
    %c0_244 = arith.constant 0 : index
    %229 = vector.load %arg11[%c2_242, %c0_243, %c0_244] : memref<3x128x128xf32, #tpu.memory_space<vmem>>, vector<1x128x128xf32>
    %230 = vector.shape_cast %229 : vector<1x128x128xf32> to vector<128x128xf32>
    %cst_245 = arith.constant dense<0.000000e+00> : vector<1x128xf32>
    %231 = tpu.matmul %228, %230, %cst_245 {dimension_numbers = #tpu.dot_dimension_numbers<[1], [0], [0], [1], [0, 0, 1, 1], [], []>} : vector<1x128xf32>, vector<128x128xf32>, vector<1x128xf32> -> vector<1x128xf32>
    %c2_246 = arith.constant 2 : index
    %c0_247 = arith.constant 0 : index
    %232 = vector.load %arg12[%c2_246, %c0_247] : memref<3x128xf32, #tpu.memory_space<vmem>>, vector<1x128xf32>
    %233 = arith.addf %231, %232 : vector<1x128xf32>
    %c0_248 = arith.constant 0 : index
    %c0_249 = arith.constant 0 : index
    %c0_250 = arith.constant 0 : index
    %234 = vector.load %arg14[%c0_248, %c0_249, %c0_250] : memref<1x1x128xf32, #tpu.memory_space<vmem>>, vector<1x1x128xf32>
    %235 = vector.shape_cast %234 : vector<1x1x128xf32> to vector<1x128xf32>
    %236 = vector.shape_cast %233 : vector<1x128xf32> to vector<1x1x128xf32>
    tpu.vector_store %arg14[%c0_248, %c0_249, %c0_250], %236 {strides = array<i32>} : memref<1x1x128xf32, #tpu.memory_space<vmem>>, vector<1x1x128xf32>,
    return
  }
  func.func @transform_0(%arg0: i32) -> (i32, i32, i32) {
    %c0_i32 = arith.constant 0 : i32
    %c0_i32_0 = arith.constant 0 : i32
    %c0_i32_1 = arith.constant 0 : i32
    return %arg0, %c0_i32, %c0_i32_0 : i32, i32, i32
  }
  func.func @transform_1(%arg0: i32) -> (i32, i32) {
    %c0_i32 = arith.constant 0 : i32
    %c0_i32_0 = arith.constant 0 : i32
    %c0_i32_1 = arith.constant 0 : i32
    return %c0_i32, %c0_i32_0 : i32, i32
  }
  func.func @transform_2(%arg0: i32) -> (i32, i32, i32, i32) {
    %c0_i32 = arith.constant 0 : i32
    %c0_i32_0 = arith.constant 0 : i32
    %c0_i32_1 = arith.constant 0 : i32
    %c0_i32_2 = arith.constant 0 : i32
    %c0_i32_3 = arith.constant 0 : i32
    return %c0_i32, %c0_i32_0, %c0_i32_1, %c0_i32_2 : i32, i32, i32, i32
  }
  func.func @transform_3(%arg0: i32) -> (i32, i32) {
    %c0_i32 = arith.constant 0 : i32
    %c0_i32_0 = arith.constant 0 : i32
    %c0_i32_1 = arith.constant 0 : i32
    return %c0_i32, %c0_i32_0 : i32, i32
  }
  func.func @transform_4(%arg0: i32) -> (i32, i32) {
    %c0_i32 = arith.constant 0 : i32
    %c0_i32_0 = arith.constant 0 : i32
    %c0_i32_1 = arith.constant 0 : i32
    return %c0_i32, %c0_i32_0 : i32, i32
  }
  func.func @transform_5(%arg0: i32) -> (i32, i32) {
    %c0_i32 = arith.constant 0 : i32
    %c0_i32_0 = arith.constant 0 : i32
    %c0_i32_1 = arith.constant 0 : i32
    return %c0_i32, %c0_i32_0 : i32, i32
  }
  func.func @transform_6(%arg0: i32) -> (i32, i32) {
    %c0_i32 = arith.constant 0 : i32
    %c0_i32_0 = arith.constant 0 : i32
    %c0_i32_1 = arith.constant 0 : i32
    return %c0_i32, %c0_i32_0 : i32, i32
  }
  func.func @transform_7(%arg0: i32) -> (i32, i32) {
    %c0_i32 = arith.constant 0 : i32
    %c0_i32_0 = arith.constant 0 : i32
    %c0_i32_1 = arith.constant 0 : i32
    return %c0_i32, %c0_i32_0 : i32, i32
  }
  func.func @transform_8(%arg0: i32) -> (i32, i32) {
    %c0_i32 = arith.constant 0 : i32
    %c0_i32_0 = arith.constant 0 : i32
    %c0_i32_1 = arith.constant 0 : i32
    return %c0_i32, %c0_i32_0 : i32, i32
  }
  func.func @transform_9(%arg0: i32) -> (i32, i32) {
    %c0_i32 = arith.constant 0 : i32
    %c0_i32_0 = arith.constant 0 : i32
    %c0_i32_1 = arith.constant 0 : i32
    return %c0_i32, %c0_i32_0 : i32, i32
  }
  func.func @transform_10(%arg0: i32) -> (i32, i32, i32) {
    %c0_i32 = arith.constant 0 : i32
    %c0_i32_0 = arith.constant 0 : i32
    %c0_i32_1 = arith.constant 0 : i32
    %c0_i32_2 = arith.constant 0 : i32
    return %c0_i32, %c0_i32_0, %c0_i32_1 : i32, i32, i32
  }
  func.func @transform_11(%arg0: i32) -> (i32, i32) {
    %c0_i32 = arith.constant 0 : i32
    %c0_i32_0 = arith.constant 0 : i32
    %c0_i32_1 = arith.constant 0 : i32
    return %c0_i32, %c0_i32_0 : i32, i32
  }
  func.func @transform_12(%arg0: i32) -> (i32, i32, i32) {
    %c0_i32 = arith.constant 0 : i32
    %c0_i32_0 = arith.constant 0 : i32
    %c0_i32_1 = arith.constant 0 : i32
    return %arg0, %c0_i32, %c0_i32_0 : i32, i32, i32
  }
  func.func @transform_13(%arg0: i32) -> (i32, i32, i32) {
    %c0_i32 = arith.constant 0 : i32
    %c0_i32_0 = arith.constant 0 : i32
    %c0_i32_1 = arith.constant 0 : i32
    return %arg0, %c0_i32, %c0_i32_0 : i32, i32, i32
  }
}

</mosaic_0001>

<llo_original>
// kernel: sterling_forward.1
$region0: #{sterling_forward.1}
  #allocation0 [shape = 'u32[]', space=smem, size = 0x4, offset = 0x4, fixed_abs, tag = 'smem constant byte address 0x4 - core index']
  #allocation1 [shape = 'u32[144,128]{1,0:T(1,128)}', space=vmem, size = 0x12000, scoped, tag = 'internal scratch']
  #allocation2 [shape = 'f32[324,128]{1,0:T(8,128)}', space=vmem, size = 0x29000, scoped, tag = 'scratch operand']
  %s0 = inlined_call_operand.vmem [shape: f32[4,256,32], index: 0, kind: input, shape index: {}]
  %s1 = inlined_call_operand.vmem [shape: f32[32,128], index: 1, kind: input, shape index: {}]
  %s2 = inlined_call_operand.vmem [shape: f32[3,9,128,128], index: 2, kind: input, shape index: {}]
  %s3 = inlined_call_operand.vmem [shape: f32[4,128], index: 3, kind: input, shape index: {}]
  %s4 = inlined_call_operand.vmem [shape: f32[4,128], index: 4, kind: input, shape index: {}]
  %s5 = inlined_call_operand.vmem [shape: f32[5,128], index: 5, kind: input, shape index: {}]
  %s6 = inlined_call_operand.vmem [shape: f32[324,256], index: 6, kind: input, shape index: {}]
  %s7 = inlined_call_operand.vmem [shape: f32[100,286], index: 7, kind: input, shape index: {}]
  %s8 = inlined_call_operand.vmem [shape: f32[36,78], index: 8, kind: input, shape index: {}]
  %s9 = inlined_call_operand.vmem [shape: f32[1,22], index: 9, kind: input, shape index: {}]
  %s10 = inlined_call_operand.vmem [shape: f32[3,128,128], index: 10, kind: input, shape index: {}]
  %s11 = inlined_call_operand.vmem [shape: f32[3,128], index: 11, kind: input, shape index: {}]
  %s12 = inlined_call_operand.vmem [shape: f32[4,1,128], index: 12, kind: output, shape index: {0}]
  %s13 = inlined_call_operand.vmem [shape: f32[4,1,128], index: 13, kind: output, shape index: {1}]
  %14 = xla_tuple %s12, %s13
  %s15 = sld [smem:[#allocation0]]
  $region89: #{sterling_forward.1} parent=0
    _
  %s17 = ssub.s32 1, %s15
  %s18 = scalar_select 0, %s17, %s15
  loop: start=0, step=1, limit=6
  $region2: #{sterling_forward.1} parent=0 // loop_pre_header
    _
  $region3: #{sterling_forward.1} parent=0 // loop_header
    %s20 = sphi 0, %s24
    %p21 = scmp.ge.s32.totalorder %s20, 6
    %s30 = sphi 0, %s32
    %s33 = sphi 0, %s30
    %s34 = sphi 0, %s33
    %s50 = sphi 0, %s34
    %s54 = sphi 0, %s54
    %s56 = sphi 0, %s54
    %s57 = sphi 0, %s56
    %s71 = sphi 0, %s57
    %s75 = sphi 0, %s75
    %s77 = sphi 0, %s75
    %s78 = sphi 0, %s77
    %s92 = sphi 0, %s78
    %s96 = sphi 0, %s96
    %s98 = sphi 0, %s96
    %s99 = sphi 0, %s98
    %s113 = sphi 0, %s99
    %s117 = sphi 0, %s117
    %s119 = sphi 0, %s117
    %s120 = sphi 0, %s119
    %s134 = sphi 0, %s120
    %s138 = sphi 0, %s138
    %s140 = sphi 0, %s138
    %s141 = sphi 0, %s140
    %s155 = sphi 0, %s141
    %s159 = sphi 0, %s159
    %s161 = sphi 0, %s159
    %s162 = sphi 0, %s161
    %s176 = sphi 0, %s162
    %s180 = sphi 0, %s180
    %s182 = sphi 0, %s180
    %s183 = sphi 0, %s182
    %s197 = sphi 0, %s183
    %s201 = sphi 0, %s201
    %s203 = sphi 0, %s201
    %s204 = sphi 0, %s203
    %s218 = sphi 0, %s204
    %s222 = sphi 0, %s222
    %s224 = sphi 0, %s222
    %s225 = sphi 0, %s224
    %s239 = sphi 0, %s225
    %s243 = sphi 0, %s243
    %s245 = sphi 0, %s243
    %s246 = sphi 0, %s245
    %s260 = sphi 0, %s246
    %s264 = sphi 0, %s264
    %s266 = sphi 0, %s264
    %s267 = sphi 0, %s266
    %s281 = sphi 0, %s267
    %s287 = sphi 0, %s289
    %s290 = sphi 0, %s287
    %s291 = sphi 0, %s290
    %s307 = sphi 0, %s291
    %s313 = sphi 0, %s315
    %s316 = sphi 0, %s313
    %s317 = sphi 0, %s316
    %s333 = sphi 0, %s317
  $region4: #{sterling_forward.1} parent=0 // loop_header_branch
    %23 = sbr.rel (%p21) target = $region8
  $region5: #{sterling_forward.1} parent=0 // loop_body
    %s25 = ssub.s32 %s20, 1
    %s26 = ssub.s32 %s20, 2
    %s27 = sadd.s32 %s20, 1
    %s28 = ssub.s32 %s20, %s27
    %p29 = scmp.eq.s32.totalorder %s28, 0
    %s31 = sadd.s32 %s30, 1
    %s32 = scalar_select %p29, %s30, %s31
    %p35 = pneg %p29
    %p36 = scmp.eq.s32.totalorder %s20, 3
    %p37 = por %p35, %p36
    %p38 = scmp.ne.s32.totalorder %s30, %s33
    %p39 = scmp.eq.s32.totalorder %s20, 0
    %p40 = por %p38, %p39
    %p41 = scmp.ne.s32.totalorder %s30, %s33
    %p42 = scmp.eq.s32.totalorder %s25, 3
    %p43 = por %p41, %p42
    %p44 = scmp.ne.s32.totalorder %s33, %s34
    %p45 = scmp.eq.s32.totalorder %s25, 0
    %p46 = por %p44, %p45
    %p47 = scmp.ne.s32.totalorder %s33, %s34
    %p48 = scmp.eq.s32.totalorder %s26, 3
    %p49 = por %p47, %p48
    %p51 = scmp.ne.s32.totalorder %s34, %s50
    %p52 = scmp.eq.s32.totalorder %s26, 0
    %p53 = por %p51, %p52
    %s55 = sadd.s32 %s54, 1
    %p58 = scmp.eq.s32.totalorder %s20, 3
    %p59 = scmp.ne.s32.totalorder %s54, %s56
    %p60 = scmp.eq.s32.totalorder %s20, 0
    %p61 = por %p59, %p60
    %p62 = scmp.ne.s32.totalorder %s54, %s56
    %p63 = scmp.eq.s32.totalorder %s25, 3
    %p64 = por %p62, %p63
    %p65 = scmp.ne.s32.totalorder %s56, %s57
    %p66 = scmp.eq.s32.totalorder %s25, 0
    %p67 = por %p65, %p66
    %p68 = scmp.ne.s32.totalorder %s56, %s57
    %p69 = scmp.eq.s32.totalorder %s26, 3
    %p70 = por %p68, %p69
    %p72 = scmp.ne.s32.totalorder %s57, %s71
    %p73 = scmp.eq.s32.totalorder %s26, 0
    %p74 = por %p72, %p73
    %s76 = sadd.s32 %s75, 1
    %p79 = scmp.eq.s32.totalorder %s20, 3
    %p80 = scmp.ne.s32.totalorder %s75, %s77
    %p81 = scmp.eq.s32.totalorder %s20, 0
    %p82 = por %p80, %p81
    %p83 = scmp.ne.s32.totalorder %s75, %s77
    %p84 = scmp.eq.s32.totalorder %s25, 3
    %p85 = por %p83, %p84
    %p86 = scmp.ne.s32.totalorder %s77, %s78
    %p87 = scmp.eq.s32.totalorder %s25, 0
    %p88 = por %p86, %p87
    %p89 = scmp.ne.s32.totalorder %s77, %s78
    %p90 = scmp.eq.s32.totalorder %s26, 3
    %p91 = por %p89, %p90
    %p93 = scmp.ne.s32.totalorder %s78, %s92
    %p94 = scmp.eq.s32.totalorder %s26, 0
    %p95 = por %p93, %p94
    %s97 = sadd.s32 %s96, 1
    %p100 = scmp.eq.s32.totalorder %s20, 3
    %p101 = scmp.ne.s32.totalorder %s96, %s98
    %p102 = scmp.eq.s32.totalorder %s20, 0
    %p103 = por %p101, %p102
    %p104 = scmp.ne.s32.totalorder %s96, %s98
    %p105 = scmp.eq.s32.totalorder %s25, 3
    %p106 = por %p104, %p105
    %p107 = scmp.ne.s32.totalorder %s98, %s99
    %p108 = scmp.eq.s32.totalorder %s25, 0
    %p109 = por %p107, %p108
    %p110 = scmp.ne.s32.totalorder %s98, %s99
    %p111 = scmp.eq.s32.totalorder %s26, 3
    %p112 = por %p110, %p111
    %p114 = scmp.ne.s32.totalorder %s99, %s113
    %p115 = scmp.eq.s32.totalorder %s26, 0
    %p116 = por %p114, %p115
    %s118 = sadd.s32 %s117, 1
    %p121 = scmp.eq.s32.totalorder %s20, 3
    %p122 = scmp.ne.s32.totalorder %s117, %s119
    %p123 = scmp.eq.s32.totalorder %s20, 0
    %p124 = por %p122, %p123
    %p125 = scmp.ne.s32.totalorder %s117, %s119
    %p126 = scmp.eq.s32.totalorder %s25, 3
    %p127 = por %p125, %p126
    %p128 = scmp.ne.s32.totalorder %s119, %s120
    %p129 = scmp.eq.s32.totalorder %s25, 0
    %p130 = por %p128, %p129
    %p131 = scmp.ne.s32.totalorder %s119, %s120
    %p132 = scmp.eq.s32.totalorder %s26, 3
    %p133 = por %p131, %p132
    %p135 = scmp.ne.s32.totalorder %s120, %s134
    %p136 = scmp.eq.s32.totalorder %s26, 0
    %p137 = por %p135, %p136
    %s139 = sadd.s32 %s138, 1
    %p142 = scmp.eq.s32.totalorder %s20, 3
    %p143 = scmp.ne.s32.totalorder %s138, %s140
    %p144 = scmp.eq.s32.totalorder %s20, 0
    %p145 = por %p143, %p144
    %p146 = scmp.ne.s32.totalorder %s138, %s140
    %p147 = scmp.eq.s32.totalorder %s25, 3
    %p148 = por %p146, %p147
    %p149 = scmp.ne.s32.totalorder %s140, %s141
    %p150 = scmp.eq.s32.totalorder %s25, 0
    %p151 = por %p149, %p150
    %p152 = scmp.ne.s32.totalorder %s140, %s141
    %p153 = scmp.eq.s32.totalorder %s26, 3
    %p154 = por %p152, %p153
    %p156 = scmp.ne.s32.totalorder %s141, %s155
    %p157 = scmp.eq.s32.totalorder %s26, 0
    %p158 = por %p156, %p157
    %s160 = sadd.s32 %s159, 1
    %p163 = scmp.eq.s32.totalorder %s20, 3
    %p164 = scmp.ne.s32.totalorder %s159, %s161
    %p165 = scmp.eq.s32.totalorder %s20, 0
    %p166 = por %p164, %p165
    %p167 = scmp.ne.s32.totalorder %s159, %s161
    %p168 = scmp.eq.s32.totalorder %s25, 3
    %p169 = por %p167, %p168
    %p170 = scmp.ne.s32.totalorder %s161, %s162
    %p171 = scmp.eq.s32.totalorder %s25, 0
    %p172 = por %p170, %p171
    %p173 = scmp.ne.s32.totalorder %s161, %s162
    %p174 = scmp.eq.s32.totalorder %s26, 3
    %p175 = por %p173, %p174
    %p177 = scmp.ne.s32.totalorder %s162, %s176
    %p178 = scmp.eq.s32.totalorder %s26, 0
    %p179 = por %p177, %p178
    %s181 = sadd.s32 %s180, 1
    %p184 = scmp.eq.s32.totalorder %s20, 3
    %p185 = scmp.ne.s32.totalorder %s180, %s182
    %p186 = scmp.eq.s32.totalorder %s20, 0
    %p187 = por %p185, %p186
    %p188 = scmp.ne.s32.totalorder %s180, %s182
    %p189 = scmp.eq.s32.totalorder %s25, 3
    %p190 = por %p188, %p189
    %p191 = scmp.ne.s32.totalorder %s182, %s183
    %p192 = scmp.eq.s32.totalorder %s25, 0
    %p193 = por %p191, %p192
    %p194 = scmp.ne.s32.totalorder %s182, %s183
    %p195 = scmp.eq.s32.totalorder %s26, 3
    %p196 = por %p194, %p195
    %p198 = scmp.ne.s32.totalorder %s183, %s197
    %p199 = scmp.eq.s32.totalorder %s26, 0
    %p200 = por %p198, %p199
    %s202 = sadd.s32 %s201, 1
    %p205 = scmp.eq.s32.totalorder %s20, 3
    %p206 = scmp.ne.s32.totalorder %s201, %s203
    %p207 = scmp.eq.s32.totalorder %s20, 0
    %p208 = por %p206, %p207
    %p209 = scmp.ne.s32.totalorder %s201, %s203
    %p210 = scmp.eq.s32.totalorder %s25, 3
    %p211 = por %p209, %p210
    %p212 = scmp.ne.s32.totalorder %s203, %s204
    %p213 = scmp.eq.s32.totalorder %s25, 0
    %p214 = por %p212, %p213
    %p215 = scmp.ne.s32.totalorder %s203, %s204
    %p216 = scmp.eq.s32.totalorder %s26, 3
    %p217 = por %p215, %p216
    %p219 = scmp.ne.s32.totalorder %s204, %s218
    %p220 = scmp.eq.s32.totalorder %s26, 0
    %p221 = por %p219, %p220
    %s223 = sadd.s32 %s222, 1
    %p226 = scmp.eq.s32.totalorder %s20, 3
    %p227 = scmp.ne.s32.totalorder %s222, %s224
    %p228 = scmp.eq.s32.totalorder %s20, 0
    %p229 = por %p227, %p228
    %p230 = scmp.ne.s32.totalorder %s222, %s224
    %p231 = scmp.eq.s32.totalorder %s25, 3
    %p232 = por %p230, %p231
    %p233 = scmp.ne.s32.totalorder %s224, %s225
    %p234 = scmp.eq.s32.totalorder %s25, 0
    %p235 = por %p233, %p234
    %p236 = scmp.ne.s32.totalorder %s224, %s225
    %p237 = scmp.eq.s32.totalorder %s26, 3
    %p238 = por %p236, %p237
    %p240 = scmp.ne.s32.totalorder %s225, %s239
    %p241 = scmp.eq.s32.totalorder %s26, 0
    %p242 = por %p240, %p241
    %s244 = sadd.s32 %s243, 1
    %p247 = scmp.eq.s32.totalorder %s20, 3
    %p248 = scmp.ne.s32.totalorder %s243, %s245
    %p249 = scmp.eq.s32.totalorder %s20, 0
    %p250 = por %p248, %p249
    %p251 = scmp.ne.s32.totalorder %s243, %s245
    %p252 = scmp.eq.s32.totalorder %s25, 3
    %p253 = por %p251, %p252
    %p254 = scmp.ne.s32.totalorder %s245, %s246
    %p255 = scmp.eq.s32.totalorder %s25, 0
    %p256 = por %p254, %p255
    %p257 = scmp.ne.s32.totalorder %s245, %s246
    %p258 = scmp.eq.s32.totalorder %s26, 3
    %p259 = por %p257, %p258
    %p261 = scmp.ne.s32.totalorder %s246, %s260
    %p262 = scmp.eq.s32.totalorder %s26, 0
    %p263 = por %p261, %p262
    %s265 = sadd.s32 %s264, 1
    %p268 = scmp.eq.s32.totalorder %s20, 3
    %p269 = scmp.ne.s32.totalorder %s264, %s266
    %p270 = scmp.eq.s32.totalorder %s20, 0
    %p271 = por %p269, %p270
    %p272 = scmp.ne.s32.totalorder %s264, %s266
    %p273 = scmp.eq.s32.totalorder %s25, 3
    %p274 = por %p272, %p273
    %p275 = scmp.ne.s32.totalorder %s266, %s267
    %p276 = scmp.eq.s32.totalorder %s25, 0
    %p277 = por %p275, %p276
    %p278 = scmp.ne.s32.totalorder %s266, %s267
    %p279 = scmp.eq.s32.totalorder %s26, 3
    %p280 = por %p278, %p279
    %p282 = scmp.ne.s32.totalorder %s267, %s281
    %p283 = scmp.eq.s32.totalorder %s26, 0
    %p284 = por %p282, %p283
    %s285 = ssub.s32 %s20, %s27
    %p286 = scmp.eq.s32.totalorder %s285, 0
    %s288 = sadd.s32 %s287, 1
    %s289 = scalar_select %p286, %s287, %s288
    %p292 = pneg %p286
    %p293 = scmp.eq.s32.totalorder %s20, 3
    %p294 = por %p292, %p293
    %p295 = scmp.ne.s32.totalorder %s287, %s290
    %p296 = scmp.eq.s32.totalorder %s20, 0
    %p297 = por %p295, %p296
    %p298 = scmp.ne.s32.totalorder %s287, %s290
    %p299 = scmp.eq.s32.totalorder %s25, 3
    %p300 = por %p298, %p299
    %p301 = scmp.ne.s32.totalorder %s290, %s291
    %p302 = scmp.eq.s32.totalorder %s25, 0
    %p303 = por %p301, %p302
    %p304 = scmp.ne.s32.totalorder %s290, %s291
    %p305 = scmp.eq.s32.totalorder %s26, 3
    %p306 = por %p304, %p305
    %p308 = scmp.ne.s32.totalorder %s291, %s307
    %p309 = scmp.eq.s32.totalorder %s26, 0
    %p310 = por %p308, %p309
    %s311 = ssub.s32 %s20, %s27
    %p312 = scmp.eq.s32.totalorder %s311, 0
    %s314 = sadd.s32 %s313, 1
    %s315 = scalar_select %p312, %s313, %s314
    %p318 = pneg %p312
    %p319 = scmp.eq.s32.totalorder %s20, 3
    %p320 = por %p318, %p319
    %p321 = scmp.ne.s32.totalorder %s313, %s316
    %p322 = scmp.eq.s32.totalorder %s20, 0
    %p323 = por %p321, %p322
    %p324 = scmp.ne.s32.totalorder %s313, %s316
    %p325 = scmp.eq.s32.totalorder %s25, 3
    %p326 = por %p324, %p325
    %p327 = scmp.ne.s32.totalorder %s316, %s317
    %p328 = scmp.eq.s32.totalorder %s25, 0
    %p329 = por %p327, %p328
    %p330 = scmp.ne.s32.totalorder %s316, %s317
    %p331 = scmp.eq.s32.totalorder %s26, 3
    %p332 = por %p330, %p331
    %p334 = scmp.ne.s32.totalorder %s317, %s333
    %p335 = scmp.eq.s32.totalorder %s26, 0
    %p336 = por %p334, %p335
    %p337 = scmp.le.s32.totalorder 1, %s20
    %p338 = scmp.lt.s32.totalorder %s20, 5
    %p339 = pnand %p337, %p338
    %p340 = pneg %p339
    // Predicated region
    $region9: #{sterling_forward.1} parent=5 // pred_check
      _
    $region10: #{sterling_forward.1} parent=5 // pred_check_branch
      %342 = sbr.rel (%p339) target = $region12
    $region11: #{sterling_forward.1} parent=5 // pred_region
      %s343 = ssub.s32 %s20, 1
      // Predicated region
      $region13: #{sterling_forward.1} parent=11 // pred_check
        %p344 = pneg %p67
      $region14: #{sterling_forward.1} parent=11 // pred_check_branch
        %346 = sbr.rel (%p344) target = $region16
      $region15: #{sterling_forward.1} parent=11 // pred_region
        _
      $region16: #{sterling_forward.1} parent=11 // pred_fallthru
        _
      // Predicated region
      $region17: #{sterling_forward.1} parent=11 // pred_check
        %p347 = pneg %p88
      $region18: #{sterling_forward.1} parent=11 // pred_check_branch
        %349 = sbr.rel (%p347) target = $region20
      $region19: #{sterling_forward.1} parent=11 // pred_region
        _
      $region20: #{sterling_forward.1} parent=11 // pred_fallthru
        _
      // Predicated region
      $region21: #{sterling_forward.1} parent=11 // pred_check
        %p350 = pneg %p109
      $region22: #{sterling_forward.1} parent=11 // pred_check_branch
        %352 = sbr.rel (%p350) target = $region24
      $region23: #{sterling_forward.1} parent=11 // pred_region
        _
      $region24: #{sterling_forward.1} parent=11 // pred_fallthru
        _
      // Predicated region
      $region25: #{sterling_forward.1} parent=11 // pred_check
        %p353 = pneg %p130
      $region26: #{sterling_forward.1} parent=11 // pred_check_branch
        %355 = sbr.rel (%p353) target = $region28
      $region27: #{sterling_forward.1} parent=11 // pred_region
        _
      $region28: #{sterling_forward.1} parent=11 // pred_fallthru
        _
      // Predicated region
      $region29: #{sterling_forward.1} parent=11 // pred_check
        %p356 = pneg %p151
      $region30: #{sterling_forward.1} parent=11 // pred_check_branch
        %358 = sbr.rel (%p356) target = $region32
      $region31: #{sterling_forward.1} parent=11 // pred_region
        _
      $region32: #{sterling_forward.1} parent=11 // pred_fallthru
        _
      // Predicated region
      $region33: #{sterling_forward.1} parent=11 // pred_check
        %p359 = pneg %p172
      $region34: #{sterling_forward.1} parent=11 // pred_check_branch
        %361 = sbr.rel (%p359) target = $region36
      $region35: #{sterling_forward.1} parent=11 // pred_region
        _
      $region36: #{sterling_forward.1} parent=11 // pred_fallthru
        _
      // Predicated region
      $region37: #{sterling_forward.1} parent=11 // pred_check
        %p362 = pneg %p193
      $region38: #{sterling_forward.1} parent=11 // pred_check_branch
        %364 = sbr.rel (%p362) target = $region40
      $region39: #{sterling_forward.1} parent=11 // pred_region
        _
      $region40: #{sterling_forward.1} parent=11 // pred_fallthru
        _
      // Predicated region
      $region41: #{sterling_forward.1} parent=11 // pred_check
        %p365 = pneg %p214
      $region42: #{sterling_forward.1} parent=11 // pred_check_branch
        %367 = sbr.rel (%p365) target = $region44
      $region43: #{sterling_forward.1} parent=11 // pred_region
        _
      $region44: #{sterling_forward.1} parent=11 // pred_fallthru
        _
      // Predicated region
      $region45: #{sterling_forward.1} parent=11 // pred_check
        %p368 = pneg %p235
      $region46: #{sterling_forward.1} parent=11 // pred_check_branch
        %370 = sbr.rel (%p368) target = $region48
      $region47: #{sterling_forward.1} parent=11 // pred_region
        _
      $region48: #{sterling_forward.1} parent=11 // pred_fallthru
        _
      // Predicated region
      $region49: #{sterling_forward.1} parent=11 // pred_check
        %p371 = pneg %p256
      $region50: #{sterling_forward.1} parent=11 // pred_check_branch
        %373 = sbr.rel (%p371) target = $region52
      $region51: #{sterling_forward.1} parent=11 // pred_region
        _
      $region52: #{sterling_forward.1} parent=11 // pred_fallthru
        _
      // Predicated region
      $region53: #{sterling_forward.1} parent=11 // pred_check
        %p374 = pneg %p277
      $region54: #{sterling_forward.1} parent=11 // pred_check_branch
        %376 = sbr.rel (%p374) target = $region56
      $region55: #{sterling_forward.1} parent=11 // pred_region
        _
      $region56: #{sterling_forward.1} parent=11 // pred_fallthru
        _
    $region12: #{sterling_forward.1} parent=5 // pred_fallthru
      _
    %p377 = scmp.lt.s32.totalorder %s20, 4
    // Predicated region
    $region57: #{sterling_forward.1} parent=5 // pred_check
      %p378 = pneg %p377
    $region58: #{sterling_forward.1} parent=5 // pred_check_branch
      %380 = sbr.rel (%p378) target = $region60
    $region59: #{sterling_forward.1} parent=5 // pred_region
      // Predicated region
      $region61: #{sterling_forward.1} parent=59 // pred_check
        %p381 = pneg %p40
      $region62: #{sterling_forward.1} parent=59 // pred_check_branch
        %383 = sbr.rel (%p381) target = $region64
      $region63: #{sterling_forward.1} parent=59 // pred_region
        %p384 = scmp.lt.s32.totalorder %s20, 3
        %s385 = scalar_select %p384, %s20, 3
        %s386 = smul.addr %s385, 32
        %s387 = smul.addr %s386, 8
        %s388 = scalar_lea.vmem %s0, %s387
      $region64: #{sterling_forward.1} parent=59 // pred_fallthru
        _
    $region60: #{sterling_forward.1} parent=5 // pred_fallthru
      _
    %p389 = scmp.le.s32.totalorder 1, %s20
    %p390 = scmp.lt.s32.totalorder %s20, 5
    %p391 = pnand %p389, %p390
    %p392 = pneg %p391
    // Predicated region
    $region65: #{sterling_forward.1} parent=5 // pred_check
      _
    $region66: #{sterling_forward.1} parent=5 // pred_check_branch
      %394 = sbr.rel (%p391) target = $region68
    $region67: #{sterling_forward.1} parent=5 // pred_region
      %s395 = ssub.s32 %s20, 1
      %p396 = scmp.lt.s32.totalorder %s25, 3
      %s397 = scalar_select %p396, %s25, 3
      %s398 = smul.addr %s397, 32
      %s399 = smul.addr %s398, 8
      %s400 = scalar_lea.vmem %s0, %s399
      %p401 = pneg %p46
      %p402 = pneg %p43
      %p403 = pneg %p67
      %p404 = pneg %p64
      %p405 = pneg %p88
      %p406 = pneg %p85
      %p407 = pneg %p109
      %p408 = pneg %p106
      %p409 = pneg %p130
      %p410 = pneg %p127
      %p411 = pneg %p151
      %p412 = pneg %p148
      %p413 = pneg %p172
      %p414 = pneg %p169
      %p415 = pneg %p193
      %p416 = pneg %p190
      %p417 = pneg %p214
      %p418 = pneg %p211
      %p419 = pneg %p235
      %p420 = pneg %p232
      %p421 = pneg %p256
      %p422 = pneg %p253
      %p423 = pneg %p277
      %p424 = pneg %p274
      %p425 = pneg %p303
      %p426 = pneg %p300
      %p427 = scmp.lt.s32.totalorder %s25, 3
      %s428 = scalar_select %p427, %s25, 3
      %s429 = scalar_lea.vmem %s12, %s428
      %p430 = pneg %p329
      %p431 = pneg %p326
      %p432 = scmp.lt.s32.totalorder %s25, 3
      %s433 = scalar_select %p432, %s25, 3
      %s434 = scalar_lea.vmem %s13, %s433
      %p435 = scmp.lt.s32.totalorder %s25, 3
      %s436 = scalar_select %p435, %s25, 3
      %s437 = smul.addr %s436, 32
      %s438 = smul.addr %s437, 8
      %s439 = scalar_lea.vmem %s0, %s438
      %p440 = scmp.lt.s32.totalorder %s25, 3
      %s441 = scalar_select %p440, %s25, 3
      %s442 = scalar_lea.vmem %s12, %s441
      %p443 = scmp.lt.s32.totalorder %s25, 3
      %s444 = scalar_select %p443, %s25, 3
      %s445 = scalar_lea.vmem %s13, %s444
      %v446 = vld [vmem:[%s439] sm:$0xff]
      %v447 = vld [vmem:[%s439 + $0x8] sm:$0xff]
      %v448 = vld [vmem:[%s439 + $0x10] sm:$0xff]
      %v449 = vld [vmem:[%s439 + $0x18] sm:$0xff]
      %v450 = vld [vmem:[%s439 + $0x20] sm:$0xff]
      %v451 = vld [vmem:[%s439 + $0x28] sm:$0xff]
      %v452 = vld [vmem:[%s439 + $0x30] sm:$0xff]
      %v453 = vld [vmem:[%s439 + $0x38] sm:$0xff]
      %v454 = vld [vmem:[%s439 + $0x40] sm:$0xff]
      %v455 = vld [vmem:[%s439 + $0x48] sm:$0xff]
      %v456 = vld [vmem:[%s439 + $0x50] sm:$0xff]
      %v457 = vld [vmem:[%s439 + $0x58] sm:$0xff]
      %v458 = vld [vmem:[%s439 + $0x60] sm:$0xff]
      %v459 = vld [vmem:[%s439 + $0x68] sm:$0xff]
      %v460 = vld [vmem:[%s439 + $0x70] sm:$0xff]
      %v461 = vld [vmem:[%s439 + $0x78] sm:$0xff]
      %v462 = vld [vmem:[%s439 + $0x80] sm:$0xff]
      %v463 = vld [vmem:[%s439 + $0x88] sm:$0xff]
      %v464 = vld [vmem:[%s439 + $0x90] sm:$0xff]
      %v465 = vld [vmem:[%s439 + $0x98] sm:$0xff]
      %v466 = vld [vmem:[%s439 + $0xa0] sm:$0xff]
      %v467 = vld [vmem:[%s439 + $0xa8] sm:$0xff]
      %v468 = vld [vmem:[%s439 + $0xb0] sm:$0xff]
      %v469 = vld [vmem:[%s439 + $0xb8] sm:$0xff]
      %v470 = vld [vmem:[%s439 + $0xc0] sm:$0xff]
      %v471 = vld [vmem:[%s439 + $0xc8] sm:$0xff]
      %v472 = vld [vmem:[%s439 + $0xd0] sm:$0xff]
      %v473 = vld [vmem:[%s439 + $0xd8] sm:$0xff]
      %v474 = vld [vmem:[%s439 + $0xe0] sm:$0xff]
      %v475 = vld [vmem:[%s439 + $0xe8] sm:$0xff]
      %v476 = vld [vmem:[%s439 + $0xf0] sm:$0xff]
      %v477 = vld [vmem:[%s439 + $0xf8] sm:$0xff]
      %v478 = vld [vmem:[%s1] sm:$0xff]
      %v479 = vld [vmem:[%s1 + $0x8] sm:$0xff]
      %v480 = vld [vmem:[%s1 + $0x10] sm:$0xff]
      %v481 = vld [vmem:[%s1 + $0x18] sm:$0xff]
      %vm482 = vcmask 261120
      %v484 = vsel %vm482, %v446, 0
      %v487 = vsel %vm482, %v447, 0
      %v490 = vsel %vm482, %v448, 0
      %v493 = vsel %vm482, %v449, 0
      %v496 = vsel %vm482, %v450, 0
      %v499 = vsel %vm482, %v451, 0
      %v502 = vsel %vm482, %v452, 0
      %v505 = vsel %vm482, %v453, 0
      %v508 = vsel %vm482, %v454, 0
      %v511 = vsel %vm482, %v455, 0
      %v514 = vsel %vm482, %v456, 0
      %v517 = vsel %vm482, %v457, 0
      %v520 = vsel %vm482, %v458, 0
      %v523 = vsel %vm482, %v459, 0
      %v526 = vsel %vm482, %v460, 0
      %v529 = vsel %vm482, %v461, 0
      %v532 = vsel %vm482, %v462, 0
      %v535 = vsel %vm482, %v463, 0
      %v538 = vsel %vm482, %v464, 0
      %v541 = vsel %vm482, %v465, 0
      %v544 = vsel %vm482, %v466, 0
      %v547 = vsel %vm482, %v467, 0
      %v550 = vsel %vm482, %v468, 0
      %v553 = vsel %vm482, %v469, 0
      %v556 = vsel %vm482, %v470, 0
      %v559 = vsel %vm482, %v471, 0
      %v562 = vsel %vm482, %v472, 0
      %v565 = vsel %vm482, %v473, 0
      %v568 = vsel %vm482, %v474, 0
      %v571 = vsel %vm482, %v475, 0
      %v574 = vsel %vm482, %v476, 0
      %v577 = vsel %vm482, %v477, 0
      %579 = vmatprep.subr.mxu0 0.0
      %580 = vmatpush1.msra.mxu0 0.0
      %581 = vmatprep.subr.mxu0 0.0
      %582 = vmatpush1.msra.mxu0 0.0
      %583 = vmatprep.subr.mxu0 0.0
      %584 = vmatpush1.msra.mxu0 0.0
      %585 = vmatprep.subr.mxu0 0.0
      %586 = vmatpush1.msra.mxu0 0.0
      %587 = vmatprep.subr.mxu0 0.0
      %588 = vmatpush1.msra.mxu0 0.0
      %589 = vmatprep.subr.mxu0 0.0
      %590 = vmatpush1.msra.mxu0 0.0
      %591 = vmatprep.subr.mxu0 0.0
      %592 = vmatpush1.msra.mxu0 0.0
      %593 = vmatprep.subr.mxu0 0.0
      %594 = vmatpush1.msra.mxu0 0.0
      %595 = vmatprep.subr.mxu0 0.0
      %596 = vmatpush1.msra.mxu0 0.0
      %597 = vmatprep.subr.mxu0 0.0
      %598 = vmatpush1.msra.mxu0 0.0
      %599 = vmatprep.subr.mxu0 0.0
      %600 = vmatpush1.msra.mxu0 0.0
      %601 = vmatprep.subr.mxu0 0.0
      %602 = vmatpush1.msra.mxu0 0.0
      %603 = vmatprep.subr.mxu0 0.0
      %604 = vmatpush1.msra.mxu0 %v481
      %605 = vmatprep.subr.mxu0 0.0
      %606 = vmatpush1.msra.mxu0 %v480
      %607 = vmatprep.subr.mxu0 0.0
      %608 = vmatpush1.msra.mxu0 %v479
      %609 = vmatprep.subr.mxu0 0.0
      %610 = vmatpush1.msra.mxu0 %v478
      %611 = vmatprep.subr.mxu0 0.0
      %612 = vmatpush2.msra.mxu0 0.0
      %613 = vmatprep.subr.mxu0 0.0
      %614 = vmatpush2.msra.mxu0 0.0
      %615 = vmatprep.subr.mxu0 0.0
      %616 = vmatpush2.msra.mxu0 0.0
      %617 = vmatprep.subr.mxu0 0.0
      %618 = vmatpush2.msra.mxu0 0.0
      %619 = vmatprep.subr.mxu0 0.0
      %620 = vmatpush2.msra.mxu0 0.0
      %621 = vmatprep.subr.mxu0 0.0
      %622 = vmatpush2.msra.mxu0 0.0
      %623 = vmatprep.subr.mxu0 0.0
      %624 = vmatpush2.msra.mxu0 0.0
      %625 = vmatprep.subr.mxu0 0.0
      %626 = vmatpush2.msra.mxu0 0.0
      %627 = vmatprep.subr.mxu0 0.0
      %628 = vmatpush2.msra.mxu0 0.0
      %629 = vmatprep.subr.mxu0 0.0
      %630 = vmatpush2.msra.mxu0 0.0
      %631 = vmatprep.subr.mxu0 0.0
      %632 = vmatpush2.msra.mxu0 0.0
      %633 = vmatprep.subr.mxu0 0.0
      %634 = vmatpush2.msra.mxu0 0.0
      %635 = vmatprep.subr.mxu0 0.0
      %636 = vmatpush2.msra.mxu0 0.0
      %637 = vmatprep.subr.mxu0 0.0
      %638 = vmatpush2.msra.mxu0 0.0
      %639 = vmatprep.subr.mxu0 0.0
      %640 = vmatpush2.msra.mxu0 0.0
      %641 = vmatprep.subr.mxu0 0.0
      %642 = vmatpush2.msra.mxu0 0.0
      %643 = vmatprep.mubr.f32.mxu0 0.0
      %644 = vmatmul.mubr.f32.gmra.mxu0 %v484
      %v645 = vpop.f32.mrf.mxu0
      %v646 = vadd.f32 0.0, %v645
      %v647 = vpop.f32.mrf.mxu0
      %648 = vmatprep.mubr.f32.mxu0 0.0
      %649 = vmatmul.mubr.f32.gmra.mxu0 %v487
      %v650 = vpop.f32.mrf.mxu0
      %v651 = vadd.f32 0.0, %v650
      %v652 = vpop.f32.mrf.mxu0
      %653 = vmatprep.mubr.f32.mxu0 0.0
      %654 = vmatmul.mubr.f32.gmra.mxu0 %v490
      %v655 = vpop.f32.mrf.mxu0
      %v656 = vadd.f32 0.0, %v655
      %v657 = vpop.f32.mrf.mxu0
      %658 = vmatprep.mubr.f32.mxu0 0.0
      %659 = vmatmul.mubr.f32.gmra.mxu0 %v493
      %v660 = vpop.f32.mrf.mxu0
      %v661 = vadd.f32 0.0, %v660
      %v662 = vpop.f32.mrf.mxu0
      %663 = vmatprep.mubr.f32.mxu0 0.0
      %664 = vmatmul.mubr.f32.gmra.mxu0 %v496
      %v665 = vpop.f32.mrf.mxu0
      %v666 = vadd.f32 0.0, %v665
      %v667 = vpop.f32.mrf.mxu0
      %668 = vmatprep.mubr.f32.mxu0 0.0
      %669 = vmatmul.mubr.f32.gmra.mxu0 %v499
      %v670 = vpop.f32.mrf.mxu0
      %v671 = vadd.f32 0.0, %v670
      %v672 = vpop.f32.mrf.mxu0
      %673 = vmatprep.mubr.f32.mxu0 0.0
      %674 = vmatmul.mubr.f32.gmra.mxu0 %v502
      %v675 = vpop.f32.mrf.mxu0
      %v676 = vadd.f32 0.0, %v675
      %v677 = vpop.f32.mrf.mxu0
      %678 = vmatprep.mubr.f32.mxu0 0.0
      %679 = vmatmul.mubr.f32.gmra.mxu0 %v505
      %v680 = vpop.f32.mrf.mxu0
      %v681 = vadd.f32 0.0, %v680
      %v682 = vpop.f32.mrf.mxu0
      %683 = vmatprep.mubr.f32.mxu0 0.0
      %684 = vmatmul.mubr.f32.gmra.mxu0 %v508
      %v685 = vpop.f32.mrf.mxu0
      %v686 = vadd.f32 0.0, %v685
      %v687 = vpop.f32.mrf.mxu0
      %688 = vmatprep.mubr.f32.mxu0 0.0
      %689 = vmatmul.mubr.f32.gmra.mxu0 %v511
      %v690 = vpop.f32.mrf.mxu0
      %v691 = vadd.f32 0.0, %v690
      %v692 = vpop.f32.mrf.mxu0
      %693 = vmatprep.mubr.f32.mxu0 0.0
      %694 = vmatmul.mubr.f32.gmra.mxu0 %v514
      %v695 = vpop.f32.mrf.mxu0
      %v696 = vadd.f32 0.0, %v695
      %v697 = vpop.f32.mrf.mxu0
      %698 = vmatprep.mubr.f32.mxu0 0.0
      %699 = vmatmul.mubr.f32.gmra.mxu0 %v517
      %v700 = vpop.f32.mrf.mxu0
      %v701 = vadd.f32 0.0, %v700
      %v702 = vpop.f32.mrf.mxu0
      %703 = vmatprep.mubr.f32.mxu0 0.0
      %704 = vmatmul.mubr.f32.gmra.mxu0 %v520
      %v705 = vpop.f32.mrf.mxu0
      %v706 = vadd.f32 0.0, %v705
      %v707 = vpop.f32.mrf.mxu0
      %708 = vmatprep.mubr.f32.mxu0 0.0
      %709 = vmatmul.mubr.f32.gmra.mxu0 %v523
      %v710 = vpop.f32.mrf.mxu0
      %v711 = vadd.f32 0.0, %v710
      %v712 = vpop.f32.mrf.mxu0
      %713 = vmatprep.mubr.f32.mxu0 0.0
      %714 = vmatmul.mubr.f32.gmra.mxu0 %v526
      %v715 = vpop.f32.mrf.mxu0
      %v716 = vadd.f32 0.0, %v715
      %v717 = vpop.f32.mrf.mxu0
      %718 = vmatprep.mubr.f32.mxu0 0.0
      %719 = vmatmul.mubr.f32.gmra.mxu0 %v529
      %v720 = vpop.f32.mrf.mxu0
      %v721 = vadd.f32 0.0, %v720
      %v722 = vpop.f32.mrf.mxu0
      %723 = vmatprep.mubr.f32.mxu0 0.0
      %724 = vmatmul.mubr.f32.gmra.mxu0 %v532
      %v725 = vpop.f32.mrf.mxu0
      %v726 = vadd.f32 0.0, %v725
      %v727 = vpop.f32.mrf.mxu0
      %728 = vmatprep.mubr.f32.mxu0 0.0
      %729 = vmatmul.mubr.f32.gmra.mxu0 %v535
      %v730 = vpop.f32.mrf.mxu0
      %v731 = vadd.f32 0.0, %v730
      %v732 = vpop.f32.mrf.mxu0
      %733 = vmatprep.mubr.f32.mxu0 0.0
      %734 = vmatmul.mubr.f32.gmra.mxu0 %v538
      %v735 = vpop.f32.mrf.mxu0
      %v736 = vadd.f32 0.0, %v735
      %v737 = vpop.f32.mrf.mxu0
      %738 = vmatprep.mubr.f32.mxu0 0.0
      %739 = vmatmul.mubr.f32.gmra.mxu0 %v541
      %v740 = vpop.f32.mrf.mxu0
      %v741 = vadd.f32 0.0, %v740
      %v742 = vpop.f32.mrf.mxu0
      %743 = vmatprep.mubr.f32.mxu0 0.0
      %744 = vmatmul.mubr.f32.gmra.mxu0 %v544
      %v745 = vpop.f32.mrf.mxu0
      %v746 = vadd.f32 0.0, %v745
      %v747 = vpop.f32.mrf.mxu0
      %748 = vmatprep.mubr.f32.mxu0 0.0
      %749 = vmatmul.mubr.f32.gmra.mxu0 %v547
      %v750 = vpop.f32.mrf.mxu0
      %v751 = vadd.f32 0.0, %v750
      %v752 = vpop.f32.mrf.mxu0
      %753 = vmatprep.mubr.f32.mxu0 0.0
      %754 = vmatmul.mubr.f32.gmra.mxu0 %v550
      %v755 = vpop.f32.mrf.mxu0
      %v756 = vadd.f32 0.0, %v755
      %v757 = vpop.f32.mrf.mxu0
      %758 = vmatprep.mubr.f32.mxu0 0.0
      %759 = vmatmul.mubr.f32.gmra.mxu0 %v553
      %v760 = vpop.f32.mrf.mxu0
      %v761 = vadd.f32 0.0, %v760
      %v762 = vpop.f32.mrf.mxu0
      %763 = vmatprep.mubr.f32.mxu0 0.0
      %764 = vmatmul.mubr.f32.gmra.mxu0 %v556
      %v765 = vpop.f32.mrf.mxu0
      %v766 = vadd.f32 0.0, %v765
      %v767 = vpop.f32.mrf.mxu0
      %768 = vmatprep.mubr.f32.mxu0 0.0
      %769 = vmatmul.mubr.f32.gmra.mxu0 %v559
      %v770 = vpop.f32.mrf.mxu0
      %v771 = vadd.f32 0.0, %v770
      %v772 = vpop.f32.mrf.mxu0
      %773 = vmatprep.mubr.f32.mxu0 0.0
      %774 = vmatmul.mubr.f32.gmra.mxu0 %v562
      %v775 = vpop.f32.mrf.mxu0
      %v776 = vadd.f32 0.0, %v775
      %v777 = vpop.f32.mrf.mxu0
      %778 = vmatprep.mubr.f32.mxu0 0.0
      %779 = vmatmul.mubr.f32.gmra.mxu0 %v565
      %v780 = vpop.f32.mrf.mxu0
      %v781 = vadd.f32 0.0, %v780
      %v782 = vpop.f32.mrf.mxu0
      %783 = vmatprep.mubr.f32.mxu0 0.0
      %784 = vmatmul.mubr.f32.gmra.mxu0 %v568
      %v785 = vpop.f32.mrf.mxu0
      %v786 = vadd.f32 0.0, %v785
      %v787 = vpop.f32.mrf.mxu0
      %788 = vmatprep.mubr.f32.mxu0 0.0
      %789 = vmatmul.mubr.f32.gmra.mxu0 %v571
      %v790 = vpop.f32.mrf.mxu0
      %v791 = vadd.f32 0.0, %v790
      %v792 = vpop.f32.mrf.mxu0
      %793 = vmatprep.mubr.f32.mxu0 0.0
      %794 = vmatmul.mubr.f32.gmra.mxu0 %v574
      %v795 = vpop.f32.mrf.mxu0
      %v796 = vadd.f32 0.0, %v795
      %v797 = vpop.f32.mrf.mxu0
      %798 = vmatprep.mubr.f32.mxu0 0.0
      %799 = vmatmul.mubr.f32.gmra.mxu0 %v577
      %v800 = vpop.f32.mrf.mxu0
      %v801 = vadd.f32 0.0, %v800
      %v802 = vpop.f32.mrf.mxu0
      %803 = vdwg.mxu0
      %v804 = vld [vmem:[%s3] sm:$0x1]
      %v805 = vlaneseq
      %v806 = vshrl.u32 %v805, 7
      %v807 = vsub.s32 0, %v806
      %v808 = vrot.slane %v804, %v807
      %v809 = vmul.f32 %v646, %v808
      %v810 = vmul.f32 %v651, %v808
      %v811 = vmul.f32 %v656, %v808
      %v812 = vmul.f32 %v661, %v808
      %v813 = vmul.f32 %v666, %v808
      %v814 = vmul.f32 %v671, %v808
      %v815 = vmul.f32 %v676, %v808
      %v816 = vmul.f32 %v681, %v808
      %v817 = vmul.f32 %v686, %v808
      %v818 = vmul.f32 %v691, %v808
      %v819 = vmul.f32 %v696, %v808
      %v820 = vmul.f32 %v701, %v808
      %v821 = vmul.f32 %v706, %v808
      %v822 = vmul.f32 %v711, %v808
      %v823 = vmul.f32 %v716, %v808
      %v824 = vmul.f32 %v721, %v808
      %v825 = vmul.f32 %v726, %v808
      %v826 = vmul.f32 %v731, %v808
      %v827 = vmul.f32 %v736, %v808
      %v828 = vmul.f32 %v741, %v808
      %v829 = vmul.f32 %v746, %v808
      %v830 = vmul.f32 %v751, %v808
      %v831 = vmul.f32 %v756, %v808
      %v832 = vmul.f32 %v761, %v808
      %v833 = vmul.f32 %v766, %v808
      %v834 = vmul.f32 %v771, %v808
      %v835 = vmul.f32 %v776, %v808
      %v836 = vmul.f32 %v781, %v808
      %v837 = vmul.f32 %v786, %v808
      %v838 = vmul.f32 %v791, %v808
      %v839 = vmul.f32 %v796, %v808
      %v840 = vmul.f32 %v801, %v808
      %v841 = vld [vmem:[%s4] sm:$0x1]
      %v842 = vlaneseq
      %v843 = vshrl.u32 %v842, 7
      %v844 = vsub.s32 0, %v843
      %v845 = vrot.slane %v841, %v844
      %v846 = vadd.f32 %v809, %v845
      %v847 = vadd.f32 %v810, %v845
      %v848 = vadd.f32 %v811, %v845
      %v849 = vadd.f32 %v812, %v845
      %v850 = vadd.f32 %v813, %v845
      %v851 = vadd.f32 %v814, %v845
      %v852 = vadd.f32 %v815, %v845
      %v853 = vadd.f32 %v816, %v845
      %v854 = vadd.f32 %v817, %v845
      %v855 = vadd.f32 %v818, %v845
      %v856 = vadd.f32 %v819, %v845
      %v857 = vadd.f32 %v820, %v845
      %v858 = vadd.f32 %v821, %v845
      %v859 = vadd.f32 %v822, %v845
      %v860 = vadd.f32 %v823, %v845
      %v861 = vadd.f32 %v824, %v845
      %v862 = vadd.f32 %v825, %v845
      %v863 = vadd.f32 %v826, %v845
      %v864 = vadd.f32 %v827, %v845
      %v865 = vadd.f32 %v828, %v845
      %v866 = vadd.f32 %v829, %v845
      %v867 = vadd.f32 %v830, %v845
      %v868 = vadd.f32 %v831, %v845
      %v869 = vadd.f32 %v832, %v845
      %v870 = vadd.f32 %v833, %v845
      %v871 = vadd.f32 %v834, %v845
      %v872 = vadd.f32 %v835, %v845
      %v873 = vadd.f32 %v836, %v845
      %v874 = vadd.f32 %v837, %v845
      %v875 = vadd.f32 %v838, %v845
      %v876 = vadd.f32 %v839, %v845
      %v877 = vadd.f32 %v840, %v845
      %vm878 = vcmp.gt.f32.partialorder %v846, 0.0
      %vm879 = vcmp.gt.f32.partialorder %v847, 0.0
      %vm880 = vcmp.gt.f32.partialorder %v848, 0.0
      %vm881 = vcmp.gt.f32.partialorder %v849, 0.0
      %vm882 = vcmp.gt.f32.partialorder %v850, 0.0
      %vm883 = vcmp.gt.f32.partialorder %v851, 0.0
      %vm884 = vcmp.gt.f32.partialorder %v852, 0.0
      %vm885 = vcmp.gt.f32.partialorder %v853, 0.0
      %vm886 = vcmp.gt.f32.partialorder %v854, 0.0
      %vm887 = vcmp.gt.f32.partialorder %v855, 0.0
      %vm888 = vcmp.gt.f32.partialorder %v856, 0.0
      %vm889 = vcmp.gt.f32.partialorder %v857, 0.0
      %vm890 = vcmp.gt.f32.partialorder %v858, 0.0
      %vm891 = vcmp.gt.f32.partialorder %v859, 0.0
      %vm892 = vcmp.gt.f32.partialorder %v860, 0.0
      %vm893 = vcmp.gt.f32.partialorder %v861, 0.0
      %vm894 = vcmp.gt.f32.partialorder %v862, 0.0
      %vm895 = vcmp.gt.f32.partialorder %v863, 0.0
      %vm896 = vcmp.gt.f32.partialorder %v864, 0.0
      %vm897 = vcmp.gt.f32.partialorder %v865, 0.0
      %vm898 = vcmp.gt.f32.partialorder %v866, 0.0
      %vm899 = vcmp.gt.f32.partialorder %v867, 0.0
      %vm900 = vcmp.gt.f32.partialorder %v868, 0.0
      %vm901 = vcmp.gt.f32.partialorder %v869, 0.0
      %vm902 = vcmp.gt.f32.partialorder %v870, 0.0
      %vm903 = vcmp.gt.f32.partialorder %v871, 0.0
      %vm904 = vcmp.gt.f32.partialorder %v872, 0.0
      %vm905 = vcmp.gt.f32.partialorder %v873, 0.0
      %vm906 = vcmp.gt.f32.partialorder %v874, 0.0
      %vm907 = vcmp.gt.f32.partialorder %v875, 0.0
      %vm908 = vcmp.gt.f32.partialorder %v876, 0.0
      %vm909 = vcmp.gt.f32.partialorder %v877, 0.0
      %v910 = vld [vmem:[%s5] sm:$0x1]
      %v911 = vlaneseq
      %v912 = vshrl.u32 %v911, 7
      %v913 = vsub.s32 0, %v912
      %v914 = vrot.slane %v910, %v913
      %v915 = vmul.f32 %v914, %v846
      %v916 = vmul.f32 %v914, %v847
      %v917 = vmul.f32 %v914, %v848
      %v918 = vmul.f32 %v914, %v849
      %v919 = vmul.f32 %v914, %v850
      %v920 = vmul.f32 %v914, %v851
      %v921 = vmul.f32 %v914, %v852
      %v922 = vmul.f32 %v914, %v853
      %v923 = vmul.f32 %v914, %v854
      %v924 = vmul.f32 %v914, %v855
      %v925 = vmul.f32 %v914, %v856
      %v926 = vmul.f32 %v914, %v857
      %v927 = vmul.f32 %v914, %v858
      %v928 = vmul.f32 %v914, %v859
      %v929 = vmul.f32 %v914, %v860
      %v930 = vmul.f32 %v914, %v861
      %v931 = vmul.f32 %v914, %v862
      %v932 = vmul.f32 %v914, %v863
      %v933 = vmul.f32 %v914, %v864
      %v934 = vmul.f32 %v914, %v865
      %v935 = vmul.f32 %v914, %v866
      %v936 = vmul.f32 %v914, %v867
      %v937 = vmul.f32 %v914, %v868
      %v938 = vmul.f32 %v914, %v869
      %v939 = vmul.f32 %v914, %v870
      %v940 = vmul.f32 %v914, %v871
      %v941 = vmul.f32 %v914, %v872
      %v942 = vmul.f32 %v914, %v873
      %v943 = vmul.f32 %v914, %v874
      %v944 = vmul.f32 %v914, %v875
      %v945 = vmul.f32 %v914, %v876
      %v946 = vmul.f32 %v914, %v877
      %v947 = vsel %vm878, %v846, %v915
      %v948 = vsel %vm879, %v847, %v916
      %v949 = vsel %vm880, %v848, %v917
      %v950 = vsel %vm881, %v849, %v918
      %v951 = vsel %vm882, %v850, %v919
      %v952 = vsel %vm883, %v851, %v920
      %v953 = vsel %vm884, %v852, %v921
      %v954 = vsel %vm885, %v853, %v922
      %v955 = vsel %vm886, %v854, %v923
      %v956 = vsel %vm887, %v855, %v924
      %v957 = vsel %vm888, %v856, %v925
      %v958 = vsel %vm889, %v857, %v926
      %v959 = vsel %vm890, %v858, %v927
      %v960 = vsel %vm891, %v859, %v928
      %v961 = vsel %vm892, %v860, %v929
      %v962 = vsel %vm893, %v861, %v930
      %v963 = vsel %vm894, %v862, %v931
      %v964 = vsel %vm895, %v863, %v932
      %v965 = vsel %vm896, %v864, %v933
      %v966 = vsel %vm897, %v865, %v934
      %v967 = vsel %vm898, %v866, %v935
      %v968 = vsel %vm899, %v867, %v936
      %v969 = vsel %vm900, %v868, %v937
      %v970 = vsel %vm901, %v869, %v938
      %v971 = vsel %vm902, %v870, %v939
      %v972 = vsel %vm903, %v871, %v940
      %v973 = vsel %vm904, %v872, %v941
      %v974 = vsel %vm905, %v873, %v942
      %v975 = vsel %vm906, %v874, %v943
      %v976 = vsel %vm907, %v875, %v944
      %v977 = vsel %vm908, %v876, %v945
      %v978 = vsel %vm909, %v877, %v946
      %v979 = vld [vmem:[%s6] sm:$0xff]
      %v980 = vld [vmem:[%s6 + $0x8] sm:$0xff]
      %v981 = vld [vmem:[%s6 + $0x10] sm:$0xff]
      %v982 = vld [vmem:[%s6 + $0x18] sm:$0xff]
      %v983 = vld [vmem:[%s6 + $0x20] sm:$0xff]
      %v984 = vld [vmem:[%s6 + $0x28] sm:$0xff]
      %v985 = vld [vmem:[%s6 + $0x30] sm:$0xff]
      %v986 = vld [vmem:[%s6 + $0x38] sm:$0xff]
      %v987 = vld [vmem:[%s6 + $0x40] sm:$0xff]
      %v988 = vld [vmem:[%s6 + $0x48] sm:$0xff]
      %v989 = vld [vmem:[%s6 + $0x50] sm:$0xff]
      %v990 = vld [vmem:[%s6 + $0x58] sm:$0xff]
      %v991 = vld [vmem:[%s6 + $0x60] sm:$0xff]
      %v992 = vld [vmem:[%s6 + $0x68] sm:$0xff]
      %v993 = vld [vmem:[%s6 + $0x70] sm:$0xff]
      %v994 = vld [vmem:[%s6 + $0x78] sm:$0xff]
      %v995 = vld [vmem:[%s6 + $0x80] sm:$0xff]
      %v996 = vld [vmem:[%s6 + $0x88] sm:$0xff]
      %v997 = vld [vmem:[%s6 + $0x90] sm:$0xff]
      %v998 = vld [vmem:[%s6 + $0x98] sm:$0xff]
      %v999 = vld [vmem:[%s6 + $0xa0] sm:$0xff]
      %v1000 = vld [vmem:[%s6 + $0xa8] sm:$0xff]
      %v1001 = vld [vmem:[%s6 + $0xb0] sm:$0xff]
      %v1002 = vld [vmem:[%s6 + $0xb8] sm:$0xff]
      %v1003 = vld [vmem:[%s6 + $0xc0] sm:$0xff]
      %v1004 = vld [vmem:[%s6 + $0xc8] sm:$0xff]
      %v1005 = vld [vmem:[%s6 + $0xd0] sm:$0xff]
      %v1006 = vld [vmem:[%s6 + $0xd8] sm:$0xff]
      %v1007 = vld [vmem:[%s6 + $0xe0] sm:$0xff]
      %v1008 = vld [vmem:[%s6 + $0xe8] sm:$0xff]
      %v1009 = vld [vmem:[%s6 + $0xf0] sm:$0xff]
      %v1010 = vld [vmem:[%s6 + $0xf8] sm:$0xff]
      %v1011 = vld [vmem:[%s6 + $0x100] sm:$0xff]
      %v1012 = vld [vmem:[%s6 + $0x108] sm:$0xff]
      %v1013 = vld [vmem:[%s6 + $0x110] sm:$0xff]
      %v1014 = vld [vmem:[%s6 + $0x118] sm:$0xff]
      %v1015 = vld [vmem:[%s6 + $0x120] sm:$0xff]
      %v1016 = vld [vmem:[%s6 + $0x128] sm:$0xff]
      %v1017 = vld [vmem:[%s6 + $0x130] sm:$0xff]
      %v1018 = vld [vmem:[%s6 + $0x138] sm:$0xff]
      %v1019 = vld [vmem:[%s6 + $0x140] sm:$0xff]
      %v1020 = vld [vmem:[%s6 + $0x148] sm:$0xff]
      %v1021 = vld [vmem:[%s6 + $0x150] sm:$0xff]
      %v1022 = vld [vmem:[%s6 + $0x158] sm:$0xff]
      %v1023 = vld [vmem:[%s6 + $0x160] sm:$0xff]
      %v1024 = vld [vmem:[%s6 + $0x168] sm:$0xff]
      %v1025 = vld [vmem:[%s6 + $0x170] sm:$0xff]
      %v1026 = vld [vmem:[%s6 + $0x178] sm:$0xff]
      %v1027 = vld [vmem:[%s6 + $0x180] sm:$0xff]
      %v1028 = vld [vmem:[%s6 + $0x188] sm:$0xff]
      %v1029 = vld [vmem:[%s6 + $0x190] sm:$0xff]
      %v1030 = vld [vmem:[%s6 + $0x198] sm:$0xff]
      %v1031 = vld [vmem:[%s6 + $0x1a0] sm:$0xff]
      %v1032 = vld [vmem:[%s6 + $0x1a8] sm:$0xff]
      %v1033 = vld [vmem:[%s6 + $0x1b0] sm:$0xff]
      %v1034 = vld [vmem:[%s6 + $0x1b8] sm:$0xff]
      %v1035 = vld [vmem:[%s6 + $0x1c0] sm:$0xff]
      %v1036 = vld [vmem:[%s6 + $0x1c8] sm:$0xff]
      %v1037 = vld [vmem:[%s6 + $0x1d0] sm:$0xff]
      %v1038 = vld [vmem:[%s6 + $0x1d8] sm:$0xff]
      %v1039 = vld [vmem:[%s6 + $0x1e0] sm:$0xff]
      %v1040 = vld [vmem:[%s6 + $0x1e8] sm:$0xff]
      %v1041 = vld [vmem:[%s6 + $0x1f0] sm:$0xff]
      %v1042 = vld [vmem:[%s6 + $0x1f8] sm:$0xff]
      %v1043 = vld [vmem:[%s6 + $0x200] sm:$0xff]
      %v1044 = vld [vmem:[%s6 + $0x208] sm:$0xff]
      %v1045 = vld [vmem:[%s6 + $0x210] sm:$0xff]
      %v1046 = vld [vmem:[%s6 + $0x218] sm:$0xff]
      %v1047 = vld [vmem:[%s6 + $0x220] sm:$0xff]
      %v1048 = vld [vmem:[%s6 + $0x228] sm:$0xff]
      %v1049 = vld [vmem:[%s6 + $0x230] sm:$0xff]
      %v1050 = vld [vmem:[%s6 + $0x238] sm:$0xff]
      %v1051 = vld [vmem:[%s6 + $0x240] sm:$0xff]
      %v1052 = vld [vmem:[%s6 + $0x248] sm:$0xff]
      %v1053 = vld [vmem:[%s6 + $0x250] sm:$0xff]
      %v1054 = vld [vmem:[%s6 + $0x258] sm:$0xff]
      %v1055 = vld [vmem:[%s6 + $0x260] sm:$0xff]
      %v1056 = vld [vmem:[%s6 + $0x268] sm:$0xff]
      %v1057 = vld [vmem:[%s6 + $0x270] sm:$0xff]
      %v1058 = vld [vmem:[%s6 + $0x278] sm:$0xff]
      %v1059 = vld [vmem:[%s6 + $0x280] sm:$0xf]
      %v1060 = vld [vmem:[%s6 + $0x288] sm:$0xf]
      %1061 = vmatprep.subr.mxu0 0.0
      %1062 = vmatpush1.msra.mxu0 %v962
      %1063 = vmatprep.subr.mxu0 0.0
      %1064 = vmatpush1.msra.mxu0 %v961
      %1065 = vmatprep.subr.mxu0 0.0
      %1066 = vmatpush1.msra.mxu0 %v960
      %1067 = vmatprep.subr.mxu0 0.0
      %1068 = vmatpush1.msra.mxu0 %v959
      %1069 = vmatprep.subr.mxu0 0.0
      %1070 = vmatpush1.msra.mxu0 %v958
      %1071 = vmatprep.subr.mxu0 0.0
      %1072 = vmatpush1.msra.mxu0 %v957
      %1073 = vmatprep.subr.mxu0 0.0
      %1074 = vmatpush1.msra.mxu0 %v956
      %1075 = vmatprep.subr.mxu0 0.0
      %1076 = vmatpush1.msra.mxu0 %v955
      %1077 = vmatprep.subr.mxu0 0.0
      %1078 = vmatpush1.msra.mxu0 %v954
      %1079 = vmatprep.subr.mxu0 0.0
      %1080 = vmatpush1.msra.mxu0 %v953
      %1081 = vmatprep.subr.mxu0 0.0
      %1082 = vmatpush1.msra.mxu0 %v952
      %1083 = vmatprep.subr.mxu0 0.0
      %1084 = vmatpush1.msra.mxu0 %v951
      %1085 = vmatprep.subr.mxu0 0.0
      %1086 = vmatpush1.msra.mxu0 %v950
      %1087 = vmatprep.subr.mxu0 0.0
      %1088 = vmatpush1.msra.mxu0 %v949
      %1089 = vmatprep.subr.mxu0 0.0
      %1090 = vmatpush1.msra.mxu0 %v948
      %1091 = vmatprep.subr.mxu0 0.0
      %1092 = vmatpush1.msra.mxu0 %v947
      %1093 = vmatprep.subr.mxu0 0.0
      %1094 = vmatpush2.msra.mxu0 %v978
      %1095 = vmatprep.subr.mxu0 0.0
      %1096 = vmatpush2.msra.mxu0 %v977
      %1097 = vmatprep.subr.mxu0 0.0
      %1098 = vmatpush2.msra.mxu0 %v976
      %1099 = vmatprep.subr.mxu0 0.0
      %1100 = vmatpush2.msra.mxu0 %v975
      %1101 = vmatprep.subr.mxu0 0.0
      %1102 = vmatpush2.msra.mxu0 %v974
      %1103 = vmatprep.subr.mxu0 0.0
      %1104 = vmatpush2.msra.mxu0 %v973
      %1105 = vmatprep.subr.mxu0 0.0
      %1106 = vmatpush2.msra.mxu0 %v972
      %1107 = vmatprep.subr.mxu0 0.0
      %1108 = vmatpush2.msra.mxu0 %v971
      %1109 = vmatprep.subr.mxu0 0.0
      %1110 = vmatpush2.msra.mxu0 %v970
      %1111 = vmatprep.subr.mxu0 0.0
      %1112 = vmatpush2.msra.mxu0 %v969
      %1113 = vmatprep.subr.mxu0 0.0
      %1114 = vmatpush2.msra.mxu0 %v968
      %1115 = vmatprep.subr.mxu0 0.0
      %1116 = vmatpush2.msra.mxu0 %v967
      %1117 = vmatprep.subr.mxu0 0.0
      %1118 = vmatpush2.msra.mxu0 %v966
      %1119 = vmatprep.subr.mxu0 0.0
      %1120 = vmatpush2.msra.mxu0 %v965
      %1121 = vmatprep.subr.mxu0 0.0
      %1122 = vmatpush2.msra.mxu0 %v964
      %1123 = vmatprep.subr.mxu0 0.0
      %1124 = vmatpush2.msra.mxu0 %v963
      %1125 = vmatprep.mubr.f32.mxu0 %v980
      %1126 = vmatmul.mubr.f32.gmra.mxu0 %v979
      %v1127 = vpop.f32.mrf.mxu0
      %v1128 = vadd.f32 0.0, %v1127
      %v1129 = vpop.f32.mrf.mxu0
      %1130 = vmatprep.mubr.f32.mxu0 %v982
      %1131 = vmatmul.mubr.f32.gmra.mxu0 %v981
      %v1132 = vpop.f32.mrf.mxu0
      %v1133 = vadd.f32 0.0, %v1132
      %v1134 = vpop.f32.mrf.mxu0
      %1135 = vmatprep.mubr.f32.mxu0 %v984
      %1136 = vmatmul.mubr.f32.gmra.mxu0 %v983
      %v1137 = vpop.f32.mrf.mxu0
      %v1138 = vadd.f32 0.0, %v1137
      %v1139 = vpop.f32.mrf.mxu0
      %1140 = vmatprep.mubr.f32.mxu0 %v986
      %1141 = vmatmul.mubr.f32.gmra.mxu0 %v985
      %v1142 = vpop.f32.mrf.mxu0
      %v1143 = vadd.f32 0.0, %v1142
      %v1144 = vpop.f32.mrf.mxu0
      %1145 = vmatprep.mubr.f32.mxu0 %v988
      %1146 = vmatmul.mubr.f32.gmra.mxu0 %v987
      %v1147 = vpop.f32.mrf.mxu0
      %v1148 = vadd.f32 0.0, %v1147
      %v1149 = vpop.f32.mrf.mxu0
      %1150 = vmatprep.mubr.f32.mxu0 %v990
      %1151 = vmatmul.mubr.f32.gmra.mxu0 %v989
      %v1152 = vpop.f32.mrf.mxu0
      %v1153 = vadd.f32 0.0, %v1152
      %v1154 = vpop.f32.mrf.mxu0
      %1155 = vmatprep.mubr.f32.mxu0 %v992
      %1156 = vmatmul.mubr.f32.gmra.mxu0 %v991
      %v1157 = vpop.f32.mrf.mxu0
      %v1158 = vadd.f32 0.0, %v1157
      %v1159 = vpop.f32.mrf.mxu0
      %1160 = vmatprep.mubr.f32.mxu0 %v994
      %1161 = vmatmul.mubr.f32.gmra.mxu0 %v993
      %v1162 = vpop.f32.mrf.mxu0
      %v1163 = vadd.f32 0.0, %v1162
      %v1164 = vpop.f32.mrf.mxu0
      %1165 = vmatprep.mubr.f32.mxu0 %v996
      %1166 = vmatmul.mubr.f32.gmra.mxu0 %v995
      %v1167 = vpop.f32.mrf.mxu0
      %v1168 = vadd.f32 0.0, %v1167
      %v1169 = vpop.f32.mrf.mxu0
      %1170 = vmatprep.mubr.f32.mxu0 %v998
      %1171 = vmatmul.mubr.f32.gmra.mxu0 %v997
      %v1172 = vpop.f32.mrf.mxu0
      %v1173 = vadd.f32 0.0, %v1172
      %v1174 = vpop.f32.mrf.mxu0
      %1175 = vmatprep.mubr.f32.mxu0 %v1000
      %1176 = vmatmul.mubr.f32.gmra.mxu0 %v999
      %v1177 = vpop.f32.mrf.mxu0
      %v1178 = vadd.f32 0.0, %v1177
      %v1179 = vpop.f32.mrf.mxu0
      %1180 = vmatprep.mubr.f32.mxu0 %v1002
      %1181 = vmatmul.mubr.f32.gmra.mxu0 %v1001
      %v1182 = vpop.f32.mrf.mxu0
      %v1183 = vadd.f32 0.0, %v1182
      %v1184 = vpop.f32.mrf.mxu0
      %1185 = vmatprep.mubr.f32.mxu0 %v1004
      %1186 = vmatmul.mubr.f32.gmra.mxu0 %v1003
      %v1187 = vpop.f32.mrf.mxu0
      %v1188 = vadd.f32 0.0, %v1187
      %v1189 = vpop.f32.mrf.mxu0
      %1190 = vmatprep.mubr.f32.mxu0 %v1006
      %1191 = vmatmul.mubr.f32.gmra.mxu0 %v1005
      %v1192 = vpop.f32.mrf.mxu0
      %v1193 = vadd.f32 0.0, %v1192
      %v1194 = vpop.f32.mrf.mxu0
      %1195 = vmatprep.mubr.f32.mxu0 %v1008
      %1196 = vmatmul.mubr.f32.gmra.mxu0 %v1007
      %v1197 = vpop.f32.mrf.mxu0
      %v1198 = vadd.f32 0.0, %v1197
      %v1199 = vpop.f32.mrf.mxu0
      %1200 = vmatprep.mubr.f32.mxu0 %v1010
      %1201 = vmatmul.mubr.f32.gmra.mxu0 %v1009
      %v1202 = vpop.f32.mrf.mxu0
      %v1203 = vadd.f32 0.0, %v1202
      %v1204 = vpop.f32.mrf.mxu0
      %1205 = vmatprep.mubr.f32.mxu0 %v1012
      %1206 = vmatmul.mubr.f32.gmra.mxu0 %v1011
      %v1207 = vpop.f32.mrf.mxu0
      %v1208 = vadd.f32 0.0, %v1207
      %v1209 = vpop.f32.mrf.mxu0
      %1210 = vmatprep.mubr.f32.mxu0 %v1014
      %1211 = vmatmul.mubr.f32.gmra.mxu0 %v1013
      %v1212 = vpop.f32.mrf.mxu0
      %v1213 = vadd.f32 0.0, %v1212
      %v1214 = vpop.f32.mrf.mxu0
      %1215 = vmatprep.mubr.f32.mxu0 %v1016
      %1216 = vmatmul.mubr.f32.gmra.mxu0 %v1015
      %v1217 = vpop.f32.mrf.mxu0
      %v1218 = vadd.f32 0.0, %v1217
      %v1219 = vpop.f32.mrf.mxu0
      %1220 = vmatprep.mubr.f32.mxu0 %v1018
      %1221 = vmatmul.mubr.f32.gmra.mxu0 %v1017
      %v1222 = vpop.f32.mrf.mxu0
      %v1223 = vadd.f32 0.0, %v1222
      %v1224 = vpop.f32.mrf.mxu0
      %1225 = vmatprep.mubr.f32.mxu0 %v1020
      %1226 = vmatmul.mubr.f32.gmra.mxu0 %v1019
      %v1227 = vpop.f32.mrf.mxu0
      %v1228 = vadd.f32 0.0, %v1227
      %v1229 = vpop.f32.mrf.mxu0
      %1230 = vmatprep.mubr.f32.mxu0 %v1022
      %1231 = vmatmul.mubr.f32.gmra.mxu0 %v1021
      %v1232 = vpop.f32.mrf.mxu0
      %v1233 = vadd.f32 0.0, %v1232
      %v1234 = vpop.f32.mrf.mxu0
      %1235 = vmatprep.mubr.f32.mxu0 %v1024
      %1236 = vmatmul.mubr.f32.gmra.mxu0 %v1023
      %v1237 = vpop.f32.mrf.mxu0
      %v1238 = vadd.f32 0.0, %v1237
      %v1239 = vpop.f32.mrf.mxu0
      %1240 = vmatprep.mubr.f32.mxu0 %v1026
      %1241 = vmatmul.mubr.f32.gmra.mxu0 %v1025
      %v1242 = vpop.f32.mrf.mxu0
      %v1243 = vadd.f32 0.0, %v1242
      %v1244 = vpop.f32.mrf.mxu0
      %1245 = vmatprep.mubr.f32.mxu0 %v1028
      %1246 = vmatmul.mubr.f32.gmra.mxu0 %v1027
      %v1247 = vpop.f32.mrf.mxu0
      %v1248 = vadd.f32 0.0, %v1247
      %v1249 = vpop.f32.mrf.mxu0
      %1250 = vmatprep.mubr.f32.mxu0 %v1030
      %1251 = vmatmul.mubr.f32.gmra.mxu0 %v1029
      %v1252 = vpop.f32.mrf.mxu0
      %v1253 = vadd.f32 0.0, %v1252
      %v1254 = vpop.f32.mrf.mxu0
      %1255 = vmatprep.mubr.f32.mxu0 %v1032
      %1256 = vmatmul.mubr.f32.gmra.mxu0 %v1031
      %v1257 = vpop.f32.mrf.mxu0
      %v1258 = vadd.f32 0.0, %v1257
      %v1259 = vpop.f32.mrf.mxu0
      %1260 = vmatprep.mubr.f32.mxu0 %v1034
      %1261 = vmatmul.mubr.f32.gmra.mxu0 %v1033
      %v1262 = vpop.f32.mrf.mxu0
      %v1263 = vadd.f32 0.0, %v1262
      %v1264 = vpop.f32.mrf.mxu0
      %1265 = vmatprep.mubr.f32.mxu0 %v1036
      %1266 = vmatmul.mubr.f32.gmra.mxu0 %v1035
      %v1267 = vpop.f32.mrf.mxu0
      %v1268 = vadd.f32 0.0, %v1267
      %v1269 = vpop.f32.mrf.mxu0
      %1270 = vmatprep.mubr.f32.mxu0 %v1038
      %1271 = vmatmul.mubr.f32.gmra.mxu0 %v1037
      %v1272 = vpop.f32.mrf.mxu0
      %v1273 = vadd.f32 0.0, %v1272
      %v1274 = vpop.f32.mrf.mxu0
      %1275 = vmatprep.mubr.f32.mxu0 %v1040
      %1276 = vmatmul.mubr.f32.gmra.mxu0 %v1039
      %v1277 = vpop.f32.mrf.mxu0
      %v1278 = vadd.f32 0.0, %v1277
      %v1279 = vpop.f32.mrf.mxu0
      %1280 = vmatprep.mubr.f32.mxu0 %v1042
      %1281 = vmatmul.mubr.f32.gmra.mxu0 %v1041
      %v1282 = vpop.f32.mrf.mxu0
      %v1283 = vadd.f32 0.0, %v1282
      %v1284 = vpop.f32.mrf.mxu0
      %1285 = vmatprep.mubr.f32.mxu0 %v1044
      %1286 = vmatmul.mubr.f32.gmra.mxu0 %v1043
      %v1287 = vpop.f32.mrf.mxu0
      %v1288 = vadd.f32 0.0, %v1287
      %v1289 = vpop.f32.mrf.mxu0
      %1290 = vmatprep.mubr.f32.mxu0 %v1046
      %1291 = vmatmul.mubr.f32.gmra.mxu0 %v1045
      %v1292 = vpop.f32.mrf.mxu0
      %v1293 = vadd.f32 0.0, %v1292
      %v1294 = vpop.f32.mrf.mxu0
      %1295 = vmatprep.mubr.f32.mxu0 %v1048
      %1296 = vmatmul.mubr.f32.gmra.mxu0 %v1047
      %v1297 = vpop.f32.mrf.mxu0
      %v1298 = vadd.f32 0.0, %v1297
      %v1299 = vpop.f32.mrf.mxu0
      %1300 = vmatprep.mubr.f32.mxu0 %v1050
      %1301 = vmatmul.mubr.f32.gmra.mxu0 %v1049
      %v1302 = vpop.f32.mrf.mxu0
      %v1303 = vadd.f32 0.0, %v1302
      %v1304 = vpop.f32.mrf.mxu0
      %1305 = vmatprep.mubr.f32.mxu0 %v1052
      %1306 = vmatmul.mubr.f32.gmra.mxu0 %v1051
      %v1307 = vpop.f32.mrf.mxu0
      %v1308 = vadd.f32 0.0, %v1307
      %v1309 = vpop.f32.mrf.mxu0
      %1310 = vmatprep.mubr.f32.mxu0 %v1054
      %1311 = vmatmul.mubr.f32.gmra.mxu0 %v1053
      %v1312 = vpop.f32.mrf.mxu0
      %v1313 = vadd.f32 0.0, %v1312
      %v1314 = vpop.f32.mrf.mxu0
      %1315 = vmatprep.mubr.f32.mxu0 %v1056
      %1316 = vmatmul.mubr.f32.gmra.mxu0 %v1055
      %v1317 = vpop.f32.mrf.mxu0
      %v1318 = vadd.f32 0.0, %v1317
      %v1319 = vpop.f32.mrf.mxu0
      %1320 = vmatprep.mubr.f32.mxu0 %v1058
      %1321 = vmatmul.mubr.f32.gmra.mxu0 %v1057
      %v1322 = vpop.f32.mrf.mxu0
      %v1323 = vadd.f32 0.0, %v1322
      %v1324 = vpop.f32.mrf.mxu0
      %1325 = vmatprep.mubr.f32.mxu0 %v1060
      %1326 = vmatmul.mubr.f32.gmra.mxu0 %v1059
      %v1327 = vpop.f32.mrf.mxu0
      %v1328 = vadd.f32 0.0, %v1327
      %v1329 = vpop.f32.mrf.mxu0
      %1330 = vdwg.mxu0
      %1331 = vst [vmem:[#allocation2] sm:$0xff] %v1128
      %1332 = vst [vmem:[#allocation2 + $0x8] sm:$0xff] %v1133
      %1333 = vst [vmem:[#allocation2 + $0x10] sm:$0xff] %v1138
      %1334 = vst [vmem:[#allocation2 + $0x18] sm:$0xff] %v1143
      %1335 = vst [vmem:[#allocation2 + $0x20] sm:$0xff] %v1148
      %1336 = vst [vmem:[#allocation2 + $0x28] sm:$0xff] %v1153
      %1337 = vst [vmem:[#allocation2 + $0x30] sm:$0xff] %v1158
      %1338 = vst [vmem:[#allocation2 + $0x38] sm:$0xff] %v1163
      %1339 = vst [vmem:[#allocation2 + $0x40] sm:$0xff] %v1168
      %1340 = vst [vmem:[#allocation2 + $0x48] sm:$0xff] %v1173
      %1341 = vst [vmem:[#allocation2 + $0x50] sm:$0xff] %v1178
      %1342 = vst [vmem:[#allocation2 + $0x58] sm:$0xff] %v1183
      %1343 = vst [vmem:[#allocation2 + $0x60] sm:$0xff] %v1188
      %1344 = vst [vmem:[#allocation2 + $0x68] sm:$0xff] %v1193
      %1345 = vst [vmem:[#allocation2 + $0x70] sm:$0xff] %v1198
      %1346 = vst [vmem:[#allocation2 + $0x78] sm:$0xff] %v1203
      %1347 = vst [vmem:[#allocation2 + $0x80] sm:$0xff] %v1208
      %1348 = vst [vmem:[#allocation2 + $0x88] sm:$0xff] %v1213
      %1349 = vst [vmem:[#allocation2 + $0x90] sm:$0xff] %v1218
      %1350 = vst [vmem:[#allocation2 + $0x98] sm:$0xff] %v1223
      %1351 = vst [vmem:[#allocation2 + $0xa0] sm:$0xff] %v1228
      %1352 = vst [vmem:[#allocation2 + $0xa8] sm:$0xff] %v1233
      %1353 = vst [vmem:[#allocation2 + $0xb0] sm:$0xff] %v1238
      %1354 = vst [vmem:[#allocation2 + $0xb8] sm:$0xff] %v1243
      %1355 = vst [vmem:[#allocation2 + $0xc0] sm:$0xff] %v1248
      %1356 = vst [vmem:[#allocation2 + $0xc8] sm:$0xff] %v1253
      %1357 = vst [vmem:[#allocation2 + $0xd0] sm:$0xff] %v1258
      %1358 = vst [vmem:[#allocation2 + $0xd8] sm:$0xff] %v1263
      %1359 = vst [vmem:[#allocation2 + $0xe0] sm:$0xff] %v1268
      %1360 = vst [vmem:[#allocation2 + $0xe8] sm:$0xff] %v1273
      %1361 = vst [vmem:[#allocation2 + $0xf0] sm:$0xff] %v1278
      %1362 = vst [vmem:[#allocation2 + $0xf8] sm:$0xff] %v1283
      %1363 = vst [vmem:[#allocation2 + $0x100] sm:$0xff] %v1288
      %1364 = vst [vmem:[#allocation2 + $0x108] sm:$0xff] %v1293
      %1365 = vst [vmem:[#allocation2 + $0x110] sm:$0xff] %v1298
      %1366 = vst [vmem:[#allocation2 + $0x118] sm:$0xff] %v1303
      %1367 = vst [vmem:[#allocation2 + $0x120] sm:$0xff] %v1308
      %1368 = vst [vmem:[#allocation2 + $0x128] sm:$0xff] %v1313
      %1369 = vst [vmem:[#allocation2 + $0x130] sm:$0xff] %v1318
      %1370 = vst [vmem:[#allocation2 + $0x138] sm:$0xff] %v1323
      %1371 = vst [vmem:[#allocation2 + $0x140] sm:$0xf] %v1328
      %v1372 = vld [vmem:[#allocation2] sm:$0xff]
      %v1373 = vld [vmem:[#allocation2 + $0x8] sm:$0xff]
      %v1374 = vld [vmem:[#allocation2 + $0x10] sm:$0xff]
      %v1375 = vld [vmem:[#allocation2 + $0x18] sm:$0xff]
      %v1376 = vld [vmem:[#allocation2 + $0x20] sm:$0xff]
      %v1377 = vld [vmem:[#allocation2 + $0x28] sm:$0xff]
      %v1378 = vld [vmem:[#allocation2 + $0x30] sm:$0xff]
      %v1379 = vld [vmem:[#allocation2 + $0x38] sm:$0xff]
      %v1380 = vld [vmem:[#allocation2 + $0x40] sm:$0xff]
      %v1381 = vld [vmem:[#allocation2 + $0x48] sm:$0xff]
      %v1382 = vld [vmem:[#allocation2 + $0x50] sm:$0xff]
      %v1383 = vld [vmem:[#allocation2 + $0x58] sm:$0xff]
      %v1384 = vld [vmem:[#allocation2 + $0x60] sm:$0xff]
      %v1385 = vld [vmem:[#allocation2 + $0x68] sm:$0xff]
      %v1386 = vld [vmem:[#allocation2 + $0x70] sm:$0xff]
      %v1387 = vld [vmem:[#allocation2 + $0x78] sm:$0xff]
      %v1388 = vld [vmem:[#allocation2 + $0x80] sm:$0xff]
      %v1389 = vld [vmem:[#allocation2 + $0x88] sm:$0xff]
      %v1390 = vld [vmem:[#allocation2 + $0x90] sm:$0xff]
      %v1391 = vld [vmem:[#allocation2 + $0x98] sm:$0xff]
      %v1392 = vld [vmem:[#allocation2 + $0xa0] sm:$0xff]
      %v1393 = vld [vmem:[#allocation2 + $0xa8] sm:$0xff]
      %v1394 = vld [vmem:[#allocation2 + $0xb0] sm:$0xff]
      %v1395 = vld [vmem:[#allocation2 + $0xb8] sm:$0xff]
      %v1396 = vld [vmem:[#allocation2 + $0xc0] sm:$0xff]
      %v1397 = vld [vmem:[#allocation2 + $0xc8] sm:$0xff]
      %v1398 = vld [vmem:[#allocation2 + $0xd0] sm:$0xff]
      %v1399 = vld [vmem:[#allocation2 + $0xd8] sm:$0xff]
      %v1400 = vld [vmem:[#allocation2 + $0xe0] sm:$0xff]
      %v1401 = vld [vmem:[#allocation2 + $0xe8] sm:$0xff]
      %v1402 = vld [vmem:[#allocation2 + $0xf0] sm:$0xff]
      %v1403 = vld [vmem:[#allocation2 + $0xf8] sm:$0xff]
      %v1404 = vld [vmem:[#allocation2 + $0x100] sm:$0xff]
      %v1405 = vld [vmem:[#allocation2 + $0x108] sm:$0xff]
      %v1406 = vld [vmem:[#allocation2 + $0x110] sm:$0xff]
      %v1407 = vld [vmem:[#allocation2 + $0x118] sm:$0x3f]
      %v1408 = vld [vmem:[%s2] sm:$0xff]
      %v1409 = vld [vmem:[%s2 + $0x8] sm:$0xff]
      %v1410 = vld [vmem:[%s2 + $0x10] sm:$0xff]
      %v1411 = vld [vmem:[%s2 + $0x18] sm:$0xff]
      %v1412 = vld [vmem:[%s2 + $0x20] sm:$0xff]
      %v1413 = vld [vmem:[%s2 + $0x28] sm:$0xff]
      %v1414 = vld [vmem:[%s2 + $0x30] sm:$0xff]
      %v1415 = vld [vmem:[%s2 + $0x38] sm:$0xff]
      %v1416 = vld [vmem:[%s2 + $0x40] sm:$0xff]
      %v1417 = vld [vmem:[%s2 + $0x48] sm:$0xff]
      %v1418 = vld [vmem:[%s2 + $0x50] sm:$0xff]
      %v1419 = vld [vmem:[%s2 + $0x58] sm:$0xff]
      %v1420 = vld [vmem:[%s2 + $0x60] sm:$0xff]
      %v1421 = vld [vmem:[%s2 + $0x68] sm:$0xff]
      %v1422 = vld [vmem:[%s2 + $0x70] sm:$0xff]
      %v1423 = vld [vmem:[%s2 + $0x78] sm:$0xff]
      %v1424 = vld [vmem:[#allocation2 + $0x1] sm:$0xff]
      %v1425 = vld [vmem:[#allocation2 + $0x9] sm:$0xff]
      %v1426 = vld [vmem:[#allocation2 + $0x11] sm:$0xff]
      %v1427 = vld [vmem:[#allocation2 + $0x19] sm:$0xff]
      %v1428 = vld [vmem:[#allocation2 + $0x21] sm:$0xff]
      %v1429 = vld [vmem:[#allocation2 + $0x29] sm:$0xff]
      %v1430 = vld [vmem:[#allocation2 + $0x31] sm:$0xff]
      %v1431 = vld [vmem:[#allocation2 + $0x39] sm:$0xff]
      %v1432 = vld [vmem:[#allocation2 + $0x41] sm:$0xff]
      %v1433 = vld [vmem:[#allocation2 + $0x49] sm:$0xff]
      %v1434 = vld [vmem:[#allocation2 + $0x51] sm:$0xff]
      %v1435 = vld [vmem:[#allocation2 + $0x59] sm:$0xff]
      %v1436 = vld [vmem:[#allocation2 + $0x61] sm:$0xff]
      %v1437 = vld [vmem:[#allocation2 + $0x69] sm:$0xff]
      %v1438 = vld [vmem:[#allocation2 + $0x71] sm:$0xff]
      %v1439 = vld [vmem:[#allocation2 + $0x79] sm:$0xff]
      %v1440 = vld [vmem:[#allocation2 + $0x81] sm:$0xff]
      %v1441 = vld [vmem:[#allocation2 + $0x89] sm:$0xff]
      %v1442 = vld [vmem:[#allocation2 + $0x91] sm:$0xff]
      %v1443 = vld [vmem:[#allocation2 + $0x99] sm:$0xff]
      %v1444 = vld [vmem:[#allocation2 + $0xa1] sm:$0xff]
      %v1445 = vld [vmem:[#allocation2 + $0xa9] sm:$0xff]
      %v1446 = vld [vmem:[#allocation2 + $0xb1] sm:$0xff]
      %v1447 = vld [vmem:[#allocation2 + $0xb9] sm:$0xff]
      %v1448 = vld [vmem:[#allocation2 + $0xc1] sm:$0xff]
      %v1449 = vld [vmem:[#allocation2 + $0xc9] sm:$0xff]
      %v1450 = vld [vmem:[#allocation2 + $0xd1] sm:$0xff]
      %v1451 = vld [vmem:[#allocation2 + $0xd9] sm:$0xff]
      %v1452 = vld [vmem:[#allocation2 + $0xe1] sm:$0xff]
      %v1453 = vld [vmem:[#allocation2 + $0xe9] sm:$0xff]
      %v1454 = vld [vmem:[#allocation2 + $0xf1] sm:$0xff]
      %v1455 = vld [vmem:[#allocation2 + $0xf9] sm:$0xff]
      %v1456 = vld [vmem:[#allocation2 + $0x101] sm:$0xff]
      %v1457 = vld [vmem:[#allocation2 + $0x109] sm:$0xff]
      %v1458 = vld [vmem:[#allocation2 + $0x111] sm:$0xff]
      %v1459 = vld [vmem:[#allocation2 + $0x119] sm:$0x3f]
      %s1460 = scalar_lea.vmem %s2, 128
      %v1461 = vld [vmem:[%s1460] sm:$0xff]
      %v1462 = vld [vmem:[%s1460 + $0x8] sm:$0xff]
      %v1463 = vld [vmem:[%s1460 + $0x10] sm:$0xff]
      %v1464 = vld [vmem:[%s1460 + $0x18] sm:$0xff]
      %v1465 = vld [vmem:[%s1460 + $0x20] sm:$0xff]
      %v1466 = vld [vmem:[%s1460 + $0x28] sm:$0xff]
      %v1467 = vld [vmem:[%s1460 + $0x30] sm:$0xff]
      %v1468 = vld [vmem:[%s1460 + $0x38] sm:$0xff]
      %v1469 = vld [vmem:[%s1460 + $0x40] sm:$0xff]
      %v1470 = vld [vmem:[%s1460 + $0x48] sm:$0xff]
      %v1471 = vld [vmem:[%s1460 + $0x50] sm:$0xff]
      %v1472 = vld [vmem:[%s1460 + $0x58] sm:$0xff]
      %v1473 = vld [vmem:[%s1460 + $0x60] sm:$0xff]
      %v1474 = vld [vmem:[%s1460 + $0x68] sm:$0xff]
      %v1475 = vld [vmem:[%s1460 + $0x70] sm:$0xff]
      %v1476 = vld [vmem:[%s1460 + $0x78] sm:$0xff]
      %1477 = vmatprep.subr.mxu0 0.0
      %1478 = vmatpush1.msra.mxu0 %v1476
      %1479 = vmatprep.subr.mxu0 0.0
      %1480 = vmatpush1.msra.mxu0 %v1475
      %1481 = vmatprep.subr.mxu0 0.0
      %1482 = vmatpush1.msra.mxu0 %v1474
      %1483 = vmatprep.subr.mxu0 0.0
      %1484 = vmatpush1.msra.mxu0 %v1473
      %1485 = vmatprep.subr.mxu0 0.0
      %1486 = vmatpush1.msra.mxu0 %v1472
      %1487 = vmatprep.subr.mxu0 0.0
      %1488 = vmatpush1.msra.mxu0 %v1471
      %1489 = vmatprep.subr.mxu0 0.0
      %1490 = vmatpush1.msra.mxu0 %v1470
      %1491 = vmatprep.subr.mxu0 0.0
      %1492 = vmatpush1.msra.mxu0 %v1469
      %1493 = vmatprep.subr.mxu0 0.0
      %1494 = vmatpush1.msra.mxu0 %v1468
      %1495 = vmatprep.subr.mxu0 0.0
      %1496 = vmatpush1.msra.mxu0 %v1467
      %1497 = vmatprep.subr.mxu0 0.0
      %1498 = vmatpush1.msra.mxu0 %v1466
      %1499 = vmatprep.subr.mxu0 0.0
      %1500 = vmatpush1.msra.mxu0 %v1465
      %1501 = vmatprep.subr.mxu0 0.0
      %1502 = vmatpush1.msra.mxu0 %v1464
      %1503 = vmatprep.subr.mxu0 0.0
      %1504 = vmatpush1.msra.mxu0 %v1463
      %1505 = vmatprep.subr.mxu0 0.0
      %1506 = vmatpush1.msra.mxu0 %v1462
      %1507 = vmatprep.subr.mxu0 0.0
      %1508 = vmatpush1.msra.mxu0 %v1461
      %1509 = vmatprep.subr.mxu0 0.0
      %1510 = vmatpush2.msra.mxu0 0.0
      %1511 = vmatprep.subr.mxu0 0.0
      %1512 = vmatpush2.msra.mxu0 0.0
      %1513 = vmatprep.subr.mxu0 0.0
      %1514 = vmatpush2.msra.mxu0 0.0
      %1515 = vmatprep.subr.mxu0 0.0
      %1516 = vmatpush2.msra.mxu0 0.0
      %1517 = vmatprep.subr.mxu0 0.0
      %1518 = vmatpush2.msra.mxu0 0.0
      %1519 = vmatprep.subr.mxu0 0.0
      %1520 = vmatpush2.msra.mxu0 0.0
      %1521 = vmatprep.subr.mxu0 0.0
      %1522 = vmatpush2.msra.mxu0 0.0
      %1523 = vmatprep.subr.mxu0 0.0
      %1524 = vmatpush2.msra.mxu0 0.0
      %1525 = vmatprep.subr.mxu0 0.0
      %1526 = vmatpush2.msra.mxu0 0.0
      %1527 = vmatprep.subr.mxu0 0.0
      %1528 = vmatpush2.msra.mxu0 0.0
      %1529 = vmatprep.subr.mxu0 0.0
      %1530 = vmatpush2.msra.mxu0 0.0
      %1531 = vmatprep.subr.mxu0 0.0
      %1532 = vmatpush2.msra.mxu0 0.0
      %1533 = vmatprep.subr.mxu0 0.0
      %1534 = vmatpush2.msra.mxu0 0.0
      %1535 = vmatprep.subr.mxu0 0.0
      %1536 = vmatpush2.msra.mxu0 0.0
      %1537 = vmatprep.subr.mxu0 0.0
      %1538 = vmatpush2.msra.mxu0 0.0
      %1539 = vmatprep.subr.mxu0 0.0
      %1540 = vmatpush2.msra.mxu0 0.0
      %1541 = vmatprep.mubr.f32.mxu0 0.0
      %1542 = vmatmul.mubr.f32.gmra.mxu0 %v1424
      %v1543 = vpop.f32.mrf.mxu0
      %v1544 = vadd.f32 0.0, %v1543
      %v1545 = vpop.f32.mrf.mxu0
      %1546 = vmatprep.mubr.f32.mxu0 0.0
      %1547 = vmatmul.mubr.f32.gmra.mxu0 %v1425
      %v1548 = vpop.f32.mrf.mxu0
      %v1549 = vadd.f32 0.0, %v1548
      %v1550 = vpop.f32.mrf.mxu0
      %1551 = vmatprep.mubr.f32.mxu0 0.0
      %1552 = vmatmul.mubr.f32.gmra.mxu0 %v1426
      %v1553 = vpop.f32.mrf.mxu0
      %v1554 = vadd.f32 0.0, %v1553
      %v1555 = vpop.f32.mrf.mxu0
      %1556 = vmatprep.mubr.f32.mxu0 0.0
      %1557 = vmatmul.mubr.f32.gmra.mxu0 %v1427
      %v1558 = vpop.f32.mrf.mxu0
      %v1559 = vadd.f32 0.0, %v1558
      %v1560 = vpop.f32.mrf.mxu0
      %1561 = vmatprep.mubr.f32.mxu0 0.0
      %1562 = vmatmul.mubr.f32.gmra.mxu0 %v1428
      %v1563 = vpop.f32.mrf.mxu0
      %v1564 = vadd.f32 0.0, %v1563
      %v1565 = vpop.f32.mrf.mxu0
      %1566 = vmatprep.mubr.f32.mxu0 0.0
      %1567 = vmatmul.mubr.f32.gmra.mxu0 %v1429
      %v1568 = vpop.f32.mrf.mxu0
      %v1569 = vadd.f32 0.0, %v1568
      %v1570 = vpop.f32.mrf.mxu0
      %1571 = vmatprep.mubr.f32.mxu0 0.0
      %1572 = vmatmul.mubr.f32.gmra.mxu0 %v1430
      %v1573 = vpop.f32.mrf.mxu0
      %v1574 = vadd.f32 0.0, %v1573
      %v1575 = vpop.f32.mrf.mxu0
      %1576 = vmatprep.mubr.f32.mxu0 0.0
      %1577 = vmatmul.mubr.f32.gmra.mxu0 %v1431
      %v1578 = vpop.f32.mrf.mxu0
      %v1579 = vadd.f32 0.0, %v1578
      %v1580 = vpop.f32.mrf.mxu0
      %1581 = vmatprep.mubr.f32.mxu0 0.0
      %1582 = vmatmul.mubr.f32.gmra.mxu0 %v1432
      %v1583 = vpop.f32.mrf.mxu0
      %v1584 = vadd.f32 0.0, %v1583
      %v1585 = vpop.f32.mrf.mxu0
      %1586 = vmatprep.mubr.f32.mxu0 0.0
      %1587 = vmatmul.mubr.f32.gmra.mxu0 %v1433
      %v1588 = vpop.f32.mrf.mxu0
      %v1589 = vadd.f32 0.0, %v1588
      %v1590 = vpop.f32.mrf.mxu0
      %1591 = vmatprep.mubr.f32.mxu0 0.0
      %1592 = vmatmul.mubr.f32.gmra.mxu0 %v1434
      %v1593 = vpop.f32.mrf.mxu0
      %v1594 = vadd.f32 0.0, %v1593
      %v1595 = vpop.f32.mrf.mxu0
      %1596 = vmatprep.mubr.f32.mxu0 0.0
      %1597 = vmatmul.mubr.f32.gmra.mxu0 %v1435
      %v1598 = vpop.f32.mrf.mxu0
      %v1599 = vadd.f32 0.0, %v1598
      %v1600 = vpop.f32.mrf.mxu0
      %1601 = vmatprep.mubr.f32.mxu0 0.0
      %1602 = vmatmul.mubr.f32.gmra.mxu0 %v1436
      %v1603 = vpop.f32.mrf.mxu0
      %v1604 = vadd.f32 0.0, %v1603
      %v1605 = vpop.f32.mrf.mxu0
      %1606 = vmatprep.mubr.f32.mxu0 0.0
      %1607 = vmatmul.mubr.f32.gmra.mxu0 %v1437
      %v1608 = vpop.f32.mrf.mxu0
      %v1609 = vadd.f32 0.0, %v1608
      %v1610 = vpop.f32.mrf.mxu0
      %1611 = vmatprep.mubr.f32.mxu0 0.0
      %1612 = vmatmul.mubr.f32.gmra.mxu0 %v1438
      %v1613 = vpop.f32.mrf.mxu0
      %v1614 = vadd.f32 0.0, %v1613
      %v1615 = vpop.f32.mrf.mxu0
      %1616 = vmatprep.mubr.f32.mxu0 0.0
      %1617 = vmatmul.mubr.f32.gmra.mxu0 %v1439
      %v1618 = vpop.f32.mrf.mxu0
      %v1619 = vadd.f32 0.0, %v1618
      %v1620 = vpop.f32.mrf.mxu0
      %1621 = vmatprep.mubr.f32.mxu0 0.0
      %1622 = vmatmul.mubr.f32.gmra.mxu0 %v1440
      %v1623 = vpop.f32.mrf.mxu0
      %v1624 = vadd.f32 0.0, %v1623
      %v1625 = vpop.f32.mrf.mxu0
      %1626 = vmatprep.mubr.f32.mxu0 0.0
      %1627 = vmatmul.mubr.f32.gmra.mxu0 %v1441
      %v1628 = vpop.f32.mrf.mxu0
      %v1629 = vadd.f32 0.0, %v1628
      %v1630 = vpop.f32.mrf.mxu0
      %1631 = vmatprep.mubr.f32.mxu0 0.0
      %1632 = vmatmul.mubr.f32.gmra.mxu0 %v1442
      %v1633 = vpop.f32.mrf.mxu0
      %v1634 = vadd.f32 0.0, %v1633
      %v1635 = vpop.f32.mrf.mxu0
      %1636 = vmatprep.mubr.f32.mxu0 0.0
      %1637 = vmatmul.mubr.f32.gmra.mxu0 %v1443
      %v1638 = vpop.f32.mrf.mxu0
      %v1639 = vadd.f32 0.0, %v1638
      %v1640 = vpop.f32.mrf.mxu0
      %1641 = vmatprep.mubr.f32.mxu0 0.0
      %1642 = vmatmul.mubr.f32.gmra.mxu0 %v1444
      %v1643 = vpop.f32.mrf.mxu0
      %v1644 = vadd.f32 0.0, %v1643
      %v1645 = vpop.f32.mrf.mxu0
      %1646 = vmatprep.mubr.f32.mxu0 0.0
      %1647 = vmatmul.mubr.f32.gmra.mxu0 %v1445
      %v1648 = vpop.f32.mrf.mxu0
      %v1649 = vadd.f32 0.0, %v1648
      %v1650 = vpop.f32.mrf.mxu0
      %1651 = vmatprep.mubr.f32.mxu0 0.0
      %1652 = vmatmul.mubr.f32.gmra.mxu0 %v1446
      %v1653 = vpop.f32.mrf.mxu0
      %v1654 = vadd.f32 0.0, %v1653
      %v1655 = vpop.f32.mrf.mxu0
      %1656 = vmatprep.mubr.f32.mxu0 0.0
      %1657 = vmatmul.mubr.f32.gmra.mxu0 %v1447
      %v1658 = vpop.f32.mrf.mxu0
      %v1659 = vadd.f32 0.0, %v1658
      %v1660 = vpop.f32.mrf.mxu0
      %1661 = vmatprep.mubr.f32.mxu0 0.0
      %1662 = vmatmul.mubr.f32.gmra.mxu0 %v1448
      %v1663 = vpop.f32.mrf.mxu0
      %v1664 = vadd.f32 0.0, %v1663
      %v1665 = vpop.f32.mrf.mxu0
      %1666 = vmatprep.mubr.f32.mxu0 0.0
      %1667 = vmatmul.mubr.f32.gmra.mxu0 %v1449
      %v1668 = vpop.f32.mrf.mxu0
      %v1669 = vadd.f32 0.0, %v1668
      %v1670 = vpop.f32.mrf.mxu0
      %1671 = vmatprep.mubr.f32.mxu0 0.0
      %1672 = vmatmul.mubr.f32.gmra.mxu0 %v1450
      %v1673 = vpop.f32.mrf.mxu0
      %v1674 = vadd.f32 0.0, %v1673
      %v1675 = vpop.f32.mrf.mxu0
      %1676 = vmatprep.mubr.f32.mxu0 0.0
      %1677 = vmatmul.mubr.f32.gmra.mxu0 %v1451
      %v1678 = vpop.f32.mrf.mxu0
      %v1679 = vadd.f32 0.0, %v1678
      %v1680 = vpop.f32.mrf.mxu0
      %1681 = vmatprep.mubr.f32.mxu0 0.0
      %1682 = vmatmul.mubr.f32.gmra.mxu0 %v1452
      %v1683 = vpop.f32.mrf.mxu0
      %v1684 = vadd.f32 0.0, %v1683
      %v1685 = vpop.f32.mrf.mxu0
      %1686 = vmatprep.mubr.f32.mxu0 0.0
      %1687 = vmatmul.mubr.f32.gmra.mxu0 %v1453
      %v1688 = vpop.f32.mrf.mxu0
      %v1689 = vadd.f32 0.0, %v1688
      %v1690 = vpop.f32.mrf.mxu0
      %1691 = vmatprep.mubr.f32.mxu0 0.0
      %1692 = vmatmul.mubr.f32.gmra.mxu0 %v1454
      %v1693 = vpop.f32.mrf.mxu0
      %v1694 = vadd.f32 0.0, %v1693
      %v1695 = vpop.f32.mrf.mxu0
      %1696 = vmatprep.mubr.f32.mxu0 0.0
      %1697 = vmatmul.mubr.f32.gmra.mxu0 %v1455
      %v1698 = vpop.f32.mrf.mxu0
      %v1699 = vadd.f32 0.0, %v1698
      %v1700 = vpop.f32.mrf.mxu0
      %1701 = vmatprep.mubr.f32.mxu0 0.0
      %1702 = vmatmul.mubr.f32.gmra.mxu0 %v1456
      %v1703 = vpop.f32.mrf.mxu0
      %v1704 = vadd.f32 0.0, %v1703
      %v1705 = vpop.f32.mrf.mxu0
      %1706 = vmatprep.mubr.f32.mxu0 0.0
      %1707 = vmatmul.mubr.f32.gmra.mxu0 %v1457
      %v1708 = vpop.f32.mrf.mxu0
      %v1709 = vadd.f32 0.0, %v1708
      %v1710 = vpop.f32.mrf.mxu0
      %1711 = vmatprep.mubr.f32.mxu0 0.0
      %1712 = vmatmul.mubr.f32.gmra.mxu0 %v1458
      %v1713 = vpop.f32.mrf.mxu0
      %v1714 = vadd.f32 0.0, %v1713
      %v1715 = vpop.f32.mrf.mxu0
      %1716 = vmatprep.mubr.f32.mxu0 0.0
      %1717 = vmatmul.mubr.f32.gmra.mxu0 %v1459
      %v1718 = vpop.f32.mrf.mxu0
      %v1719 = vadd.f32 0.0, %v1718
      %v1720 = vpop.f32.mrf.mxu0
      %1721 = vdwg.mxu0
      %1722 = vmatprep.subr.mxu0 0.0
      %1723 = vmatpush1.msra.mxu0 %v1423
      %1724 = vmatprep.subr.mxu0 0.0
      %1725 = vmatpush1.msra.mxu0 %v1422
      %1726 = vmatprep.subr.mxu0 0.0
      %1727 = vmatpush1.msra.mxu0 %v1421
      %1728 = vmatprep.subr.mxu0 0.0
      %1729 = vmatpush1.msra.mxu0 %v1420
      %1730 = vmatprep.subr.mxu0 0.0
      %1731 = vmatpush1.msra.mxu0 %v1419
      %1732 = vmatprep.subr.mxu0 0.0
      %1733 = vmatpush1.msra.mxu0 %v1418
      %1734 = vmatprep.subr.mxu0 0.0
      %1735 = vmatpush1.msra.mxu0 %v1417
      %1736 = vmatprep.subr.mxu0 0.0
      %1737 = vmatpush1.msra.mxu0 %v1416
      %1738 = vmatprep.subr.mxu0 0.0
      %1739 = vmatpush1.msra.mxu0 %v1415
      %1740 = vmatprep.subr.mxu0 0.0
      %1741 = vmatpush1.msra.mxu0 %v1414
      %1742 = vmatprep.subr.mxu0 0.0
      %1743 = vmatpush1.msra.mxu0 %v1413
      %1744 = vmatprep.subr.mxu0 0.0
      %1745 = vmatpush1.msra.mxu0 %v1412
      %1746 = vmatprep.subr.mxu0 0.0
      %1747 = vmatpush1.msra.mxu0 %v1411
      %1748 = vmatprep.subr.mxu0 0.0
      %1749 = vmatpush1.msra.mxu0 %v1410
      %1750 = vmatprep.subr.mxu0 0.0
      %1751 = vmatpush1.msra.mxu0 %v1409
      %1752 = vmatprep.subr.mxu0 0.0
      %1753 = vmatpush1.msra.mxu0 %v1408
      %1754 = vmatprep.subr.mxu0 0.0
      %1755 = vmatpush2.msra.mxu0 0.0
      %1756 = vmatprep.subr.mxu0 0.0
      %1757 = vmatpush2.msra.mxu0 0.0
      %1758 = vmatprep.subr.mxu0 0.0
      %1759 = vmatpush2.msra.mxu0 0.0
      %1760 = vmatprep.subr.mxu0 0.0
      %1761 = vmatpush2.msra.mxu0 0.0
      %1762 = vmatprep.subr.mxu0 0.0
      %1763 = vmatpush2.msra.mxu0 0.0
      %1764 = vmatprep.subr.mxu0 0.0
      %1765 = vmatpush2.msra.mxu0 0.0
      %1766 = vmatprep.subr.mxu0 0.0
      %1767 = vmatpush2.msra.mxu0 0.0
      %1768 = vmatprep.subr.mxu0 0.0
      %1769 = vmatpush2.msra.mxu0 0.0
      %1770 = vmatprep.subr.mxu0 0.0
      %1771 = vmatpush2.msra.mxu0 0.0
      %1772 = vmatprep.subr.mxu0 0.0
      %1773 = vmatpush2.msra.mxu0 0.0
      %1774 = vmatprep.subr.mxu0 0.0
      %1775 = vmatpush2.msra.mxu0 0.0
      %1776 = vmatprep.subr.mxu0 0.0
      %1777 = vmatpush2.msra.mxu0 0.0
      %1778 = vmatprep.subr.mxu0 0.0
      %1779 = vmatpush2.msra.mxu0 0.0
      %1780 = vmatprep.subr.mxu0 0.0
      %1781 = vmatpush2.msra.mxu0 0.0
      %1782 = vmatprep.subr.mxu0 0.0
      %1783 = vmatpush2.msra.mxu0 0.0
      %1784 = vmatprep.subr.mxu0 0.0
      %1785 = vmatpush2.msra.mxu0 0.0
      %1786 = vmatprep.mubr.f32.mxu0 0.0
      %1787 = vmatmul.mubr.f32.gmra.mxu0 %v1372
      %v1788 = vpop.f32.mrf.mxu0
      %v1789 = vadd.f32 %v1544, %v1788
      %v1790 = vpop.f32.mrf.mxu0
      %1791 = vmatprep.mubr.f32.mxu0 0.0
      %1792 = vmatmul.mubr.f32.gmra.mxu0 %v1373
      %v1793 = vpop.f32.mrf.mxu0
      %v1794 = vadd.f32 %v1549, %v1793
      %v1795 = vpop.f32.mrf.mxu0
      %1796 = vmatprep.mubr.f32.mxu0 0.0
      %1797 = vmatmul.mubr.f32.gmra.mxu0 %v1374
      %v1798 = vpop.f32.mrf.mxu0
      %v1799 = vadd.f32 %v1554, %v1798
      %v1800 = vpop.f32.mrf.mxu0
      %1801 = vmatprep.mubr.f32.mxu0 0.0
      %1802 = vmatmul.mubr.f32.gmra.mxu0 %v1375
      %v1803 = vpop.f32.mrf.mxu0
      %v1804 = vadd.f32 %v1559, %v1803
      %v1805 = vpop.f32.mrf.mxu0
      %1806 = vmatprep.mubr.f32.mxu0 0.0
      %1807 = vmatmul.mubr.f32.gmra.mxu0 %v1376
      %v1808 = vpop.f32.mrf.mxu0
      %v1809 = vadd.f32 %v1564, %v1808
      %v1810 = vpop.f32.mrf.mxu0
      %1811 = vmatprep.mubr.f32.mxu0 0.0
      %1812 = vmatmul.mubr.f32.gmra.mxu0 %v1377
      %v1813 = vpop.f32.mrf.mxu0
      %v1814 = vadd.f32 %v1569, %v1813
      %v1815 = vpop.f32.mrf.mxu0
      %1816 = vmatprep.mubr.f32.mxu0 0.0
      %1817 = vmatmul.mubr.f32.gmra.mxu0 %v1378
      %v1818 = vpop.f32.mrf.mxu0
      %v1819 = vadd.f32 %v1574, %v1818
      %v1820 = vpop.f32.mrf.mxu0
      %1821 = vmatprep.mubr.f32.mxu0 0.0
      %1822 = vmatmul.mubr.f32.gmra.mxu0 %v1379
      %v1823 = vpop.f32.mrf.mxu0
      %v1824 = vadd.f32 %v1579, %v1823
      %v1825 = vpop.f32.mrf.mxu0
      %1826 = vmatprep.mubr.f32.mxu0 0.0
      %1827 = vmatmul.mubr.f32.gmra.mxu0 %v1380
      %v1828 = vpop.f32.mrf.mxu0
      %v1829 = vadd.f32 %v1584, %v1828
      %v1830 = vpop.f32.mrf.mxu0
      %1831 = vmatprep.mubr.f32.mxu0 0.0
      %1832 = vmatmul.mubr.f32.gmra.mxu0 %v1381
      %v1833 = vpop.f32.mrf.mxu0
      %v1834 = vadd.f32 %v1589, %v1833
      %v1835 = vpop.f32.mrf.mxu0
      %1836 = vmatprep.mubr.f32.mxu0 0.0
      %1837 = vmatmul.mubr.f32.gmra.mxu0 %v1382
      %v1838 = vpop.f32.mrf.mxu0
      %v1839 = vadd.f32 %v1594, %v1838
      %v1840 = vpop.f32.mrf.mxu0
      %1841 = vmatprep.mubr.f32.mxu0 0.0
      %1842 = vmatmul.mubr.f32.gmra.mxu0 %v1383
      %v1843 = vpop.f32.mrf.mxu0
      %v1844 = vadd.f32 %v1599, %v1843
      %v1845 = vpop.f32.mrf.mxu0
      %1846 = vmatprep.mubr.f32.mxu0 0.0
      %1847 = vmatmul.mubr.f32.gmra.mxu0 %v1384
      %v1848 = vpop.f32.mrf.mxu0
      %v1849 = vadd.f32 %v1604, %v1848
      %v1850 = vpop.f32.mrf.mxu0
      %1851 = vmatprep.mubr.f32.mxu0 0.0
      %1852 = vmatmul.mubr.f32.gmra.mxu0 %v1385
      %v1853 = vpop.f32.mrf.mxu0
      %v1854 = vadd.f32 %v1609, %v1853
      %v1855 = vpop.f32.mrf.mxu0
      %1856 = vmatprep.mubr.f32.mxu0 0.0
      %1857 = vmatmul.mubr.f32.gmra.mxu0 %v1386
      %v1858 = vpop.f32.mrf.mxu0
      %v1859 = vadd.f32 %v1614, %v1858
      %v1860 = vpop.f32.mrf.mxu0
      %1861 = vmatprep.mubr.f32.mxu0 0.0
      %1862 = vmatmul.mubr.f32.gmra.mxu0 %v1387
      %v1863 = vpop.f32.mrf.mxu0
      %v1864 = vadd.f32 %v1619, %v1863
      %v1865 = vpop.f32.mrf.mxu0
      %1866 = vmatprep.mubr.f32.mxu0 0.0
      %1867 = vmatmul.mubr.f32.gmra.mxu0 %v1388
      %v1868 = vpop.f32.mrf.mxu0
      %v1869 = vadd.f32 %v1624, %v1868
      %v1870 = vpop.f32.mrf.mxu0
      %1871 = vmatprep.mubr.f32.mxu0 0.0
      %1872 = vmatmul.mubr.f32.gmra.mxu0 %v1389
      %v1873 = vpop.f32.mrf.mxu0
      %v1874 = vadd.f32 %v1629, %v1873
      %v1875 = vpop.f32.mrf.mxu0
      %1876 = vmatprep.mubr.f32.mxu0 0.0
      %1877 = vmatmul.mubr.f32.gmra.mxu0 %v1390
      %v1878 = vpop.f32.mrf.mxu0
      %v1879 = vadd.f32 %v1634, %v1878
      %v1880 = vpop.f32.mrf.mxu0
      %1881 = vmatprep.mubr.f32.mxu0 0.0
      %1882 = vmatmul.mubr.f32.gmra.mxu0 %v1391
      %v1883 = vpop.f32.mrf.mxu0
      %v1884 = vadd.f32 %v1639, %v1883
      %v1885 = vpop.f32.mrf.mxu0
      %1886 = vmatprep.mubr.f32.mxu0 0.0
      %1887 = vmatmul.mubr.f32.gmra.mxu0 %v1392
      %v1888 = vpop.f32.mrf.mxu0
      %v1889 = vadd.f32 %v1644, %v1888
      %v1890 = vpop.f32.mrf.mxu0
      %1891 = vmatprep.mubr.f32.mxu0 0.0
      %1892 = vmatmul.mubr.f32.gmra.mxu0 %v1393
      %v1893 = vpop.f32.mrf.mxu0
      %v1894 = vadd.f32 %v1649, %v1893
      %v1895 = vpop.f32.mrf.mxu0
      %1896 = vmatprep.mubr.f32.mxu0 0.0
      %1897 = vmatmul.mubr.f32.gmra.mxu0 %v1394
      %v1898 = vpop.f32.mrf.mxu0
      %v1899 = vadd.f32 %v1654, %v1898
      %v1900 = vpop.f32.mrf.mxu0
      %1901 = vmatprep.mubr.f32.mxu0 0.0
      %1902 = vmatmul.mubr.f32.gmra.mxu0 %v1395
      %v1903 = vpop.f32.mrf.mxu0
      %v1904 = vadd.f32 %v1659, %v1903
      %v1905 = vpop.f32.mrf.mxu0
      %1906 = vmatprep.mubr.f32.mxu0 0.0
      %1907 = vmatmul.mubr.f32.gmra.mxu0 %v1396
      %v1908 = vpop.f32.mrf.mxu0
      %v1909 = vadd.f32 %v1664, %v1908
      %v1910 = vpop.f32.mrf.mxu0
      %1911 = vmatprep.mubr.f32.mxu0 0.0
      %1912 = vmatmul.mubr.f32.gmra.mxu0 %v1397
      %v1913 = vpop.f32.mrf.mxu0
      %v1914 = vadd.f32 %v1669, %v1913
      %v1915 = vpop.f32.mrf.mxu0
      %1916 = vmatprep.mubr.f32.mxu0 0.0
      %1917 = vmatmul.mubr.f32.gmra.mxu0 %v1398
      %v1918 = vpop.f32.mrf.mxu0
      %v1919 = vadd.f32 %v1674, %v1918
      %v1920 = vpop.f32.mrf.mxu0
      %1921 = vmatprep.mubr.f32.mxu0 0.0
      %1922 = vmatmul.mubr.f32.gmra.mxu0 %v1399
      %v1923 = vpop.f32.mrf.mxu0
      %v1924 = vadd.f32 %v1679, %v1923
      %v1925 = vpop.f32.mrf.mxu0
      %1926 = vmatprep.mubr.f32.mxu0 0.0
      %1927 = vmatmul.mubr.f32.gmra.mxu0 %v1400
      %v1928 = vpop.f32.mrf.mxu0
      %v1929 = vadd.f32 %v1684, %v1928
      %v1930 = vpop.f32.mrf.mxu0
      %1931 = vmatprep.mubr.f32.mxu0 0.0
      %1932 = vmatmul.mubr.f32.gmra.mxu0 %v1401
      %v1933 = vpop.f32.mrf.mxu0
      %v1934 = vadd.f32 %v1689, %v1933
      %v1935 = vpop.f32.mrf.mxu0
      %1936 = vmatprep.mubr.f32.mxu0 0.0
      %1937 = vmatmul.mubr.f32.gmra.mxu0 %v1402
      %v1938 = vpop.f32.mrf.mxu0
      %v1939 = vadd.f32 %v1694, %v1938
      %v1940 = vpop.f32.mrf.mxu0
      %1941 = vmatprep.mubr.f32.mxu0 0.0
      %1942 = vmatmul.mubr.f32.gmra.mxu0 %v1403
      %v1943 = vpop.f32.mrf.mxu0
      %v1944 = vadd.f32 %v1699, %v1943
      %v1945 = vpop.f32.mrf.mxu0
      %1946 = vmatprep.mubr.f32.mxu0 0.0
      %1947 = vmatmul.mubr.f32.gmra.mxu0 %v1404
      %v1948 = vpop.f32.mrf.mxu0
      %v1949 = vadd.f32 %v1704, %v1948
      %v1950 = vpop.f32.mrf.mxu0
      %1951 = vmatprep.mubr.f32.mxu0 0.0
      %1952 = vmatmul.mubr.f32.gmra.mxu0 %v1405
      %v1953 = vpop.f32.mrf.mxu0
      %v1954 = vadd.f32 %v1709, %v1953
      %v1955 = vpop.f32.mrf.mxu0
      %1956 = vmatprep.mubr.f32.mxu0 0.0
      %1957 = vmatmul.mubr.f32.gmra.mxu0 %v1406
      %v1958 = vpop.f32.mrf.mxu0
      %v1959 = vadd.f32 %v1714, %v1958
      %v1960 = vpop.f32.mrf.mxu0
      %1961 = vmatprep.mubr.f32.mxu0 0.0
      %1962 = vmatmul.mubr.f32.gmra.mxu0 %v1407
      %v1963 = vpop.f32.mrf.mxu0
      %v1964 = vadd.f32 %v1719, %v1963
      %v1965 = vpop.f32.mrf.mxu0
      %1966 = vdwg.mxu0
      %v1967 = vld [vmem:[#allocation2 + $0x2] sm:$0xff]
      %v1968 = vld [vmem:[#allocation2 + $0xa] sm:$0xff]
      %v1969 = vld [vmem:[#allocation2 + $0x12] sm:$0xff]
      %v1970 = vld [vmem:[#allocation2 + $0x1a] sm:$0xff]
      %v1971 = vld [vmem:[#allocation2 + $0x22] sm:$0xff]
      %v1972 = vld [vmem:[#allocation2 + $0x2a] sm:$0xff]
      %v1973 = vld [vmem:[#allocation2 + $0x32] sm:$0xff]
      %v1974 = vld [vmem:[#allocation2 + $0x3a] sm:$0xff]
      %v1975 = vld [vmem:[#allocation2 + $0x42] sm:$0xff]
      %v1976 = vld [vmem:[#allocation2 + $0x4a] sm:$0xff]
      %v1977 = vld [vmem:[#allocation2 + $0x52] sm:$0xff]
      %v1978 = vld [vmem:[#allocation2 + $0x5a] sm:$0xff]
      %v1979 = vld [vmem:[#allocation2 + $0x62] sm:$0xff]
      %v1980 = vld [vmem:[#allocation2 + $0x6a] sm:$0xff]
      %v1981 = vld [vmem:[#allocation2 + $0x72] sm:$0xff]
      %v1982 = vld [vmem:[#allocation2 + $0x7a] sm:$0xff]
      %v1983 = vld [vmem:[#allocation2 + $0x82] sm:$0xff]
      %v1984 = vld [vmem:[#allocation2 + $0x8a] sm:$0xff]
      %v1985 = vld [vmem:[#allocation2 + $0x92] sm:$0xff]
      %v1986 = vld [vmem:[#allocation2 + $0x9a] sm:$0xff]
      %v1987 = vld [vmem:[#allocation2 + $0xa2] sm:$0xff]
      %v1988 = vld [vmem:[#allocation2 + $0xaa] sm:$0xff]
      %v1989 = vld [vmem:[#allocation2 + $0xb2] sm:$0xff]
      %v1990 = vld [vmem:[#allocation2 + $0xba] sm:$0xff]
      %v1991 = vld [vmem:[#allocation2 + $0xc2] sm:$0xff]
      %v1992 = vld [vmem:[#allocation2 + $0xca] sm:$0xff]
      %v1993 = vld [vmem:[#allocation2 + $0xd2] sm:$0xff]
      %v1994 = vld [vmem:[#allocation2 + $0xda] sm:$0xff]
      %v1995 = vld [vmem:[#allocation2 + $0xe2] sm:$0xff]
      %v1996 = vld [vmem:[#allocation2 + $0xea] sm:$0xff]
      %v1997 = vld [vmem:[#allocation2 + $0xf2] sm:$0xff]
      %v1998 = vld [vmem:[#allocation2 + $0xfa] sm:$0xff]
      %v1999 = vld [vmem:[#allocation2 + $0x102] sm:$0xff]
      %v2000 = vld [vmem:[#allocation2 + $0x10a] sm:$0xff]
      %v2001 = vld [vmem:[#allocation2 + $0x112] sm:$0xff]
      %v2002 = vld [vmem:[#allocation2 + $0x11a] sm:$0x3f]
      %s2003 = scalar_lea.vmem %s2, 256
      %v2004 = vld [vmem:[%s2003] sm:$0xff]
      %v2005 = vld [vmem:[%s2003 + $0x8] sm:$0xff]
      %v2006 = vld [vmem:[%s2003 + $0x10] sm:$0xff]
      %v2007 = vld [vmem:[%s2003 + $0x18] sm:$0xff]
      %v2008 = vld [vmem:[%s2003 + $0x20] sm:$0xff]
      %v2009 = vld [vmem:[%s2003 + $0x28] sm:$0xff]
      %v2010 = vld [vmem:[%s2003 + $0x30] sm:$0xff]
      %v2011 = vld [vmem:[%s2003 + $0x38] sm:$0xff]
      %v2012 = vld [vmem:[%s2003 + $0x40] sm:$0xff]
      %v2013 = vld [vmem:[%s2003 + $0x48] sm:$0xff]
      %v2014 = vld [vmem:[%s2003 + $0x50] sm:$0xff]
      %v2015 = vld [vmem:[%s2003 + $0x58] sm:$0xff]
      %v2016 = vld [vmem:[%s2003 + $0x60] sm:$0xff]
      %v2017 = vld [vmem:[%s2003 + $0x68] sm:$0xff]
      %v2018 = vld [vmem:[%s2003 + $0x70] sm:$0xff]
      %v2019 = vld [vmem:[%s2003 + $0x78] sm:$0xff]
      %2020 = vmatprep.subr.mxu0 0.0
      %2021 = vmatpush1.msra.mxu0 %v2019
      %2022 = vmatprep.subr.mxu0 0.0
      %2023 = vmatpush1.msra.mxu0 %v2018
      %2024 = vmatprep.subr.mxu0 0.0
      %2025 = vmatpush1.msra.mxu0 %v2017
      %2026 = vmatprep.subr.mxu0 0.0
      %2027 = vmatpush1.msra.mxu0 %v2016
      %2028 = vmatprep.subr.mxu0 0.0
      %2029 = vmatpush1.msra.mxu0 %v2015
      %2030 = vmatprep.subr.mxu0 0.0
      %2031 = vmatpush1.msra.mxu0 %v2014
      %2032 = vmatprep.subr.mxu0 0.0
      %2033 = vmatpush1.msra.mxu0 %v2013
      %2034 = vmatprep.subr.mxu0 0.0
      %2035 = vmatpush1.msra.mxu0 %v2012
      %2036 = vmatprep.subr.mxu0 0.0
      %2037 = vmatpush1.msra.mxu0 %v2011
      %2038 = vmatprep.subr.mxu0 0.0
      %2039 = vmatpush1.msra.mxu0 %v2010
      %2040 = vmatprep.subr.mxu0 0.0
      %2041 = vmatpush1.msra.mxu0 %v2009
      %2042 = vmatprep.subr.mxu0 0.0
      %2043 = vmatpush1.msra.mxu0 %v2008
      %2044 = vmatprep.subr.mxu0 0.0
      %2045 = vmatpush1.msra.mxu0 %v2007
      %2046 = vmatprep.subr.mxu0 0.0
      %2047 = vmatpush1.msra.mxu0 %v2006
      %2048 = vmatprep.subr.mxu0 0.0
      %2049 = vmatpush1.msra.mxu0 %v2005
      %2050 = vmatprep.subr.mxu0 0.0
      %2051 = vmatpush1.msra.mxu0 %v2004
      %2052 = vmatprep.subr.mxu0 0.0
      %2053 = vmatpush2.msra.mxu0 0.0
      %2054 = vmatprep.subr.mxu0 0.0
      %2055 = vmatpush2.msra.mxu0 0.0
      %2056 = vmatprep.subr.mxu0 0.0
      %2057 = vmatpush2.msra.mxu0 0.0
      %2058 = vmatprep.subr.mxu0 0.0
      %2059 = vmatpush2.msra.mxu0 0.0
      %2060 = vmatprep.subr.mxu0 0.0
      %2061 = vmatpush2.msra.mxu0 0.0
      %2062 = vmatprep.subr.mxu0 0.0
      %2063 = vmatpush2.msra.mxu0 0.0
      %2064 = vmatprep.subr.mxu0 0.0
      %2065 = vmatpush2.msra.mxu0 0.0
      %2066 = vmatprep.subr.mxu0 0.0
      %2067 = vmatpush2.msra.mxu0 0.0
      %2068 = vmatprep.subr.mxu0 0.0
      %2069 = vmatpush2.msra.mxu0 0.0
      %2070 = vmatprep.subr.mxu0 0.0
      %2071 = vmatpush2.msra.mxu0 0.0
      %2072 = vmatprep.subr.mxu0 0.0
      %2073 = vmatpush2.msra.mxu0 0.0
      %2074 = vmatprep.subr.mxu0 0.0
      %2075 = vmatpush2.msra.mxu0 0.0
      %2076 = vmatprep.subr.mxu0 0.0
      %2077 = vmatpush2.msra.mxu0 0.0
      %2078 = vmatprep.subr.mxu0 0.0
      %2079 = vmatpush2.msra.mxu0 0.0
      %2080 = vmatprep.subr.mxu0 0.0
      %2081 = vmatpush2.msra.mxu0 0.0
      %2082 = vmatprep.subr.mxu0 0.0
      %2083 = vmatpush2.msra.mxu0 0.0
      %2084 = vmatprep.mubr.f32.mxu0 0.0
      %2085 = vmatmul.mubr.f32.gmra.mxu0 %v1967
      %v2086 = vpop.f32.mrf.mxu0
      %v2087 = vadd.f32 0.0, %v2086
      %v2088 = vpop.f32.mrf.mxu0
      %2089 = vmatprep.mubr.f32.mxu0 0.0
      %2090 = vmatmul.mubr.f32.gmra.mxu0 %v1968
      %v2091 = vpop.f32.mrf.mxu0
      %v2092 = vadd.f32 0.0, %v2091
      %v2093 = vpop.f32.mrf.mxu0
      %2094 = vmatprep.mubr.f32.mxu0 0.0
      %2095 = vmatmul.mubr.f32.gmra.mxu0 %v1969
      %v2096 = vpop.f32.mrf.mxu0
      %v2097 = vadd.f32 0.0, %v2096
      %v2098 = vpop.f32.mrf.mxu0
      %2099 = vmatprep.mubr.f32.mxu0 0.0
      %2100 = vmatmul.mubr.f32.gmra.mxu0 %v1970
      %v2101 = vpop.f32.mrf.mxu0
      %v2102 = vadd.f32 0.0, %v2101
      %v2103 = vpop.f32.mrf.mxu0
      %2104 = vmatprep.mubr.f32.mxu0 0.0
      %2105 = vmatmul.mubr.f32.gmra.mxu0 %v1971
      %v2106 = vpop.f32.mrf.mxu0
      %v2107 = vadd.f32 0.0, %v2106
      %v2108 = vpop.f32.mrf.mxu0
      %2109 = vmatprep.mubr.f32.mxu0 0.0
      %2110 = vmatmul.mubr.f32.gmra.mxu0 %v1972
      %v2111 = vpop.f32.mrf.mxu0
      %v2112 = vadd.f32 0.0, %v2111
      %v2113 = vpop.f32.mrf.mxu0
      %2114 = vmatprep.mubr.f32.mxu0 0.0
      %2115 = vmatmul.mubr.f32.gmra.mxu0 %v1973
      %v2116 = vpop.f32.mrf.mxu0
      %v2117 = vadd.f32 0.0, %v2116
      %v2118 = vpop.f32.mrf.mxu0
      %2119 = vmatprep.mubr.f32.mxu0 0.0
      %2120 = vmatmul.mubr.f32.gmra.mxu0 %v1974
      %v2121 = vpop.f32.mrf.mxu0
      %v2122 = vadd.f32 0.0, %v2121
      %v2123 = vpop.f32.mrf.mxu0
      %2124 = vmatprep.mubr.f32.mxu0 0.0
      %2125 = vmatmul.mubr.f32.gmra.mxu0 %v1975
      %v2126 = vpop.f32.mrf.mxu0
      %v2127 = vadd.f32 0.0, %v2126
      %v2128 = vpop.f32.mrf.mxu0
      %2129 = vmatprep.mubr.f32.mxu0 0.0
      %2130 = vmatmul.mubr.f32.gmra.mxu0 %v1976
      %v2131 = vpop.f32.mrf.mxu0
      %v2132 = vadd.f32 0.0, %v2131
      %v2133 = vpop.f32.mrf.mxu0
      %2134 = vmatprep.mubr.f32.mxu0 0.0
      %2135 = vmatmul.mubr.f32.gmra.mxu0 %v1977
      %v2136 = vpop.f32.mrf.mxu0
      %v2137 = vadd.f32 0.0, %v2136
      %v2138 = vpop.f32.mrf.mxu0
      %2139 = vmatprep.mubr.f32.mxu0 0.0
      %2140 = vmatmul.mubr.f32.gmra.mxu0 %v1978
      %v2141 = vpop.f32.mrf.mxu0
      %v2142 = vadd.f32 0.0, %v2141
      %v2143 = vpop.f32.mrf.mxu0
      %2144 = vmatprep.mubr.f32.mxu0 0.0
      %2145 = vmatmul.mubr.f32.gmra.mxu0 %v1979
      %v2146 = vpop.f32.mrf.mxu0
      %v2147 = vadd.f32 0.0, %v2146
      %v2148 = vpop.f32.mrf.mxu0
      %2149 = vmatprep.mubr.f32.mxu0 0.0
      %2150 = vmatmul.mubr.f32.gmra.mxu0 %v1980
      %v2151 = vpop.f32.mrf.mxu0
      %v2152 = vadd.f32 0.0, %v2151
      %v2153 = vpop.f32.mrf.mxu0
      %2154 = vmatprep.mubr.f32.mxu0 0.0
      %2155 = vmatmul.mubr.f32.gmra.mxu0 %v1981
      %v2156 = vpop.f32.mrf.mxu0
      %v2157 = vadd.f32 0.0, %v2156
      %v2158 = vpop.f32.mrf.mxu0
      %2159 = vmatprep.mubr.f32.mxu0 0.0
      %2160 = vmatmul.mubr.f32.gmra.mxu0 %v1982
      %v2161 = vpop.f32.mrf.mxu0
      %v2162 = vadd.f32 0.0, %v2161
      %v2163 = vpop.f32.mrf.mxu0
      %2164 = vmatprep.mubr.f32.mxu0 0.0
      %2165 = vmatmul.mubr.f32.gmra.mxu0 %v1983
      %v2166 = vpop.f32.mrf.mxu0
      %v2167 = vadd.f32 0.0, %v2166
      %v2168 = vpop.f32.mrf.mxu0
      %2169 = vmatprep.mubr.f32.mxu0 0.0
      %2170 = vmatmul.mubr.f32.gmra.mxu0 %v1984
      %v2171 = vpop.f32.mrf.mxu0
      %v2172 = vadd.f32 0.0, %v2171
      %v2173 = vpop.f32.mrf.mxu0
      %2174 = vmatprep.mubr.f32.mxu0 0.0
      %2175 = vmatmul.mubr.f32.gmra.mxu0 %v1985
      %v2176 = vpop.f32.mrf.mxu0
      %v2177 = vadd.f32 0.0, %v2176
      %v2178 = vpop.f32.mrf.mxu0
      %2179 = vmatprep.mubr.f32.mxu0 0.0
      %2180 = vmatmul.mubr.f32.gmra.mxu0 %v1986
      %v2181 = vpop.f32.mrf.mxu0
      %v2182 = vadd.f32 0.0, %v2181
      %v2183 = vpop.f32.mrf.mxu0
      %2184 = vmatprep.mubr.f32.mxu0 0.0
      %2185 = vmatmul.mubr.f32.gmra.mxu0 %v1987
      %v2186 = vpop.f32.mrf.mxu0
      %v2187 = vadd.f32 0.0, %v2186
      %v2188 = vpop.f32.mrf.mxu0
      %2189 = vmatprep.mubr.f32.mxu0 0.0
      %2190 = vmatmul.mubr.f32.gmra.mxu0 %v1988
      %v2191 = vpop.f32.mrf.mxu0
      %v2192 = vadd.f32 0.0, %v2191
      %v2193 = vpop.f32.mrf.mxu0
      %2194 = vmatprep.mubr.f32.mxu0 0.0
      %2195 = vmatmul.mubr.f32.gmra.mxu0 %v1989
      %v2196 = vpop.f32.mrf.mxu0
      %v2197 = vadd.f32 0.0, %v2196
      %v2198 = vpop.f32.mrf.mxu0
      %2199 = vmatprep.mubr.f32.mxu0 0.0
      %2200 = vmatmul.mubr.f32.gmra.mxu0 %v1990
      %v2201 = vpop.f32.mrf.mxu0
      %v2202 = vadd.f32 0.0, %v2201
      %v2203 = vpop.f32.mrf.mxu0
      %2204 = vmatprep.mubr.f32.mxu0 0.0
      %2205 = vmatmul.mubr.f32.gmra.mxu0 %v1991
      %v2206 = vpop.f32.mrf.mxu0
      %v2207 = vadd.f32 0.0, %v2206
      %v2208 = vpop.f32.mrf.mxu0
      %2209 = vmatprep.mubr.f32.mxu0 0.0
      %2210 = vmatmul.mubr.f32.gmra.mxu0 %v1992
      %v2211 = vpop.f32.mrf.mxu0
      %v2212 = vadd.f32 0.0, %v2211
      %v2213 = vpop.f32.mrf.mxu0
      %2214 = vmatprep.mubr.f32.mxu0 0.0
      %2215 = vmatmul.mubr.f32.gmra.mxu0 %v1993
      %v2216 = vpop.f32.mrf.mxu0
      %v2217 = vadd.f32 0.0, %v2216
      %v2218 = vpop.f32.mrf.mxu0
      %2219 = vmatprep.mubr.f32.mxu0 0.0
      %2220 = vmatmul.mubr.f32.gmra.mxu0 %v1994
      %v2221 = vpop.f32.mrf.mxu0
      %v2222 = vadd.f32 0.0, %v2221
      %v2223 = vpop.f32.mrf.mxu0
      %2224 = vmatprep.mubr.f32.mxu0 0.0
      %2225 = vmatmul.mubr.f32.gmra.mxu0 %v1995
      %v2226 = vpop.f32.mrf.mxu0
      %v2227 = vadd.f32 0.0, %v2226
      %v2228 = vpop.f32.mrf.mxu0
      %2229 = vmatprep.mubr.f32.mxu0 0.0
      %2230 = vmatmul.mubr.f32.gmra.mxu0 %v1996
      %v2231 = vpop.f32.mrf.mxu0
      %v2232 = vadd.f32 0.0, %v2231
      %v2233 = vpop.f32.mrf.mxu0
      %2234 = vmatprep.mubr.f32.mxu0 0.0
      %2235 = vmatmul.mubr.f32.gmra.mxu0 %v1997
      %v2236 = vpop.f32.mrf.mxu0
      %v2237 = vadd.f32 0.0, %v2236
      %v2238 = vpop.f32.mrf.mxu0
      %2239 = vmatprep.mubr.f32.mxu0 0.0
      %2240 = vmatmul.mubr.f32.gmra.mxu0 %v1998
      %v2241 = vpop.f32.mrf.mxu0
      %v2242 = vadd.f32 0.0, %v2241
      %v2243 = vpop.f32.mrf.mxu0
      %2244 = vmatprep.mubr.f32.mxu0 0.0
      %2245 = vmatmul.mubr.f32.gmra.mxu0 %v1999
      %v2246 = vpop.f32.mrf.mxu0
      %v2247 = vadd.f32 0.0, %v2246
      %v2248 = vpop.f32.mrf.mxu0
      %2249 = vmatprep.mubr.f32.mxu0 0.0
      %2250 = vmatmul.mubr.f32.gmra.mxu0 %v2000
      %v2251 = vpop.f32.mrf.mxu0
      %v2252 = vadd.f32 0.0, %v2251
      %v2253 = vpop.f32.mrf.mxu0
      %2254 = vmatprep.mubr.f32.mxu0 0.0
      %2255 = vmatmul.mubr.f32.gmra.mxu0 %v2001
      %v2256 = vpop.f32.mrf.mxu0
      %v2257 = vadd.f32 0.0, %v2256
      %v2258 = vpop.f32.mrf.mxu0
      %2259 = vmatprep.mubr.f32.mxu0 0.0
      %2260 = vmatmul.mubr.f32.gmra.mxu0 %v2002
      %v2261 = vpop.f32.mrf.mxu0
      %v2262 = vadd.f32 0.0, %v2261
      %v2263 = vpop.f32.mrf.mxu0
      %2264 = vdwg.mxu0
      %v2265 = vadd.f32 %v1789, %v2087
      %v2266 = vadd.f32 %v1794, %v2092
      %v2267 = vadd.f32 %v1799, %v2097
      %v2268 = vadd.f32 %v1804, %v2102
      %v2269 = vadd.f32 %v1809, %v2107
      %v2270 = vadd.f32 %v1814, %v2112
      %v2271 = vadd.f32 %v1819, %v2117
      %v2272 = vadd.f32 %v1824, %v2122
      %v2273 = vadd.f32 %v1829, %v2127
      %v2274 = vadd.f32 %v1834, %v2132
      %v2275 = vadd.f32 %v1839, %v2137
      %v2276 = vadd.f32 %v1844, %v2142
      %v2277 = vadd.f32 %v1849, %v2147
      %v2278 = vadd.f32 %v1854, %v2152
      %v2279 = vadd.f32 %v1859, %v2157
      %v2280 = vadd.f32 %v1864, %v2162
      %v2281 = vadd.f32 %v1869, %v2167
      %v2282 = vadd.f32 %v1874, %v2172
      %v2283 = vadd.f32 %v1879, %v2177
      %v2284 = vadd.f32 %v1884, %v2182
      %v2285 = vadd.f32 %v1889, %v2187
      %v2286 = vadd.f32 %v1894, %v2192
      %v2287 = vadd.f32 %v1899, %v2197
      %v2288 = vadd.f32 %v1904, %v2202
      %v2289 = vadd.f32 %v1909, %v2207
      %v2290 = vadd.f32 %v1914, %v2212
      %v2291 = vadd.f32 %v1919, %v2217
      %v2292 = vadd.f32 %v1924, %v2222
      %v2293 = vadd.f32 %v1929, %v2227
      %v2294 = vadd.f32 %v1934, %v2232
      %v2295 = vadd.f32 %v1939, %v2237
      %v2296 = vadd.f32 %v1944, %v2242
      %v2297 = vadd.f32 %v1949, %v2247
      %v2298 = vadd.f32 %v1954, %v2252
      %v2299 = vadd.f32 %v1959, %v2257
      %v2300 = vadd.f32 %v1964, %v2262
      %v2301 = vld [vmem:[#allocation2 + $0x12] sm:$0xff]
      %v2302 = vld [vmem:[#allocation2 + $0x1a] sm:$0xff]
      %v2303 = vld [vmem:[#allocation2 + $0x22] sm:$0xff]
      %v2304 = vld [vmem:[#allocation2 + $0x2a] sm:$0xff]
      %v2305 = vld [vmem:[#allocation2 + $0x32] sm:$0xff]
      %v2306 = vld [vmem:[#allocation2 + $0x3a] sm:$0xff]
      %v2307 = vld [vmem:[#allocation2 + $0x42] sm:$0xff]
      %v2308 = vld [vmem:[#allocation2 + $0x4a] sm:$0xff]
      %v2309 = vld [vmem:[#allocation2 + $0x52] sm:$0xff]
      %v2310 = vld [vmem:[#allocation2 + $0x5a] sm:$0xff]
      %v2311 = vld [vmem:[#allocation2 + $0x62] sm:$0xff]
      %v2312 = vld [vmem:[#allocation2 + $0x6a] sm:$0xff]
      %v2313 = vld [vmem:[#allocation2 + $0x72] sm:$0xff]
      %v2314 = vld [vmem:[#allocation2 + $0x7a] sm:$0xff]
      %v2315 = vld [vmem:[#allocation2 + $0x82] sm:$0xff]
      %v2316 = vld [vmem:[#allocation2 + $0x8a] sm:$0xff]
      %v2317 = vld [vmem:[#allocation2 + $0x92] sm:$0xff]
      %v2318 = vld [vmem:[#allocation2 + $0x9a] sm:$0xff]
      %v2319 = vld [vmem:[#allocation2 + $0xa2] sm:$0xff]
      %v2320 = vld [vmem:[#allocation2 + $0xaa] sm:$0xff]
      %v2321 = vld [vmem:[#allocation2 + $0xb2] sm:$0xff]
      %v2322 = vld [vmem:[#allocation2 + $0xba] sm:$0xff]
      %v2323 = vld [vmem:[#allocation2 + $0xc2] sm:$0xff]
      %v2324 = vld [vmem:[#allocation2 + $0xca] sm:$0xff]
      %v2325 = vld [vmem:[#allocation2 + $0xd2] sm:$0xff]
      %v2326 = vld [vmem:[#allocation2 + $0xda] sm:$0xff]
      %v2327 = vld [vmem:[#allocation2 + $0xe2] sm:$0xff]
      %v2328 = vld [vmem:[#allocation2 + $0xea] sm:$0xff]
      %v2329 = vld [vmem:[#allocation2 + $0xf2] sm:$0xff]
      %v2330 = vld [vmem:[#allocation2 + $0xfa] sm:$0xff]
      %v2331 = vld [vmem:[#allocation2 + $0x102] sm:$0xff]
      %v2332 = vld [vmem:[#allocation2 + $0x10a] sm:$0xff]
      %v2333 = vld [vmem:[#allocation2 + $0x112] sm:$0xff]
      %v2334 = vld [vmem:[#allocation2 + $0x11a] sm:$0xff]
      %v2335 = vld [vmem:[#allocation2 + $0x122] sm:$0xff]
      %v2336 = vld [vmem:[#allocation2 + $0x12a] sm:$0x3f]
      %s2337 = scalar_lea.vmem %s2, 384
      %v2338 = vld [vmem:[%s2337] sm:$0xff]
      %v2339 = vld [vmem:[%s2337 + $0x8] sm:$0xff]
      %v2340 = vld [vmem:[%s2337 + $0x10] sm:$0xff]
      %v2341 = vld [vmem:[%s2337 + $0x18] sm:$0xff]
      %v2342 = vld [vmem:[%s2337 + $0x20] sm:$0xff]
      %v2343 = vld [vmem:[%s2337 + $0x28] sm:$0xff]
      %v2344 = vld [vmem:[%s2337 + $0x30] sm:$0xff]
      %v2345 = vld [vmem:[%s2337 + $0x38] sm:$0xff]
      %v2346 = vld [vmem:[%s2337 + $0x40] sm:$0xff]
      %v2347 = vld [vmem:[%s2337 + $0x48] sm:$0xff]
      %v2348 = vld [vmem:[%s2337 + $0x50] sm:$0xff]
      %v2349 = vld [vmem:[%s2337 + $0x58] sm:$0xff]
      %v2350 = vld [vmem:[%s2337 + $0x60] sm:$0xff]
      %v2351 = vld [vmem:[%s2337 + $0x68] sm:$0xff]
      %v2352 = vld [vmem:[%s2337 + $0x70] sm:$0xff]
      %v2353 = vld [vmem:[%s2337 + $0x78] sm:$0xff]
      %2354 = vmatprep.subr.mxu0 0.0
      %2355 = vmatpush1.msra.mxu0 %v2353
      %2356 = vmatprep.subr.mxu0 0.0
      %2357 = vmatpush1.msra.mxu0 %v2352
      %2358 = vmatprep.subr.mxu0 0.0
      %2359 = vmatpush1.msra.mxu0 %v2351
      %2360 = vmatprep.subr.mxu0 0.0
      %2361 = vmatpush1.msra.mxu0 %v2350
      %2362 = vmatprep.subr.mxu0 0.0
      %2363 = vmatpush1.msra.mxu0 %v2349
      %2364 = vmatprep.subr.mxu0 0.0
      %2365 = vmatpush1.msra.mxu0 %v2348
      %2366 = vmatprep.subr.mxu0 0.0
      %2367 = vmatpush1.msra.mxu0 %v2347
      %2368 = vmatprep.subr.mxu0 0.0
      %2369 = vmatpush1.msra.mxu0 %v2346
      %2370 = vmatprep.subr.mxu0 0.0
      %2371 = vmatpush1.msra.mxu0 %v2345
      %2372 = vmatprep.subr.mxu0 0.0
      %2373 = vmatpush1.msra.mxu0 %v2344
      %2374 = vmatprep.subr.mxu0 0.0
      %2375 = vmatpush1.msra.mxu0 %v2343
      %2376 = vmatprep.subr.mxu0 0.0
      %2377 = vmatpush1.msra.mxu0 %v2342
      %2378 = vmatprep.subr.mxu0 0.0
      %2379 = vmatpush1.msra.mxu0 %v2341
      %2380 = vmatprep.subr.mxu0 0.0
      %2381 = vmatpush1.msra.mxu0 %v2340
      %2382 = vmatprep.subr.mxu0 0.0
      %2383 = vmatpush1.msra.mxu0 %v2339
      %2384 = vmatprep.subr.mxu0 0.0
      %2385 = vmatpush1.msra.mxu0 %v2338
      %2386 = vmatprep.subr.mxu0 0.0
      %2387 = vmatpush2.msra.mxu0 0.0
      %2388 = vmatprep.subr.mxu0 0.0
      %2389 = vmatpush2.msra.mxu0 0.0
      %2390 = vmatprep.subr.mxu0 0.0
      %2391 = vmatpush2.msra.mxu0 0.0
      %2392 = vmatprep.subr.mxu0 0.0
      %2393 = vmatpush2.msra.mxu0 0.0
      %2394 = vmatprep.subr.mxu0 0.0
      %2395 = vmatpush2.msra.mxu0 0.0
      %2396 = vmatprep.subr.mxu0 0.0
      %2397 = vmatpush2.msra.mxu0 0.0
      %2398 = vmatprep.subr.mxu0 0.0
      %2399 = vmatpush2.msra.mxu0 0.0
      %2400 = vmatprep.subr.mxu0 0.0
      %2401 = vmatpush2.msra.mxu0 0.0
      %2402 = vmatprep.subr.mxu0 0.0
      %2403 = vmatpush2.msra.mxu0 0.0
      %2404 = vmatprep.subr.mxu0 0.0
      %2405 = vmatpush2.msra.mxu0 0.0
      %2406 = vmatprep.subr.mxu0 0.0
      %2407 = vmatpush2.msra.mxu0 0.0
      %2408 = vmatprep.subr.mxu0 0.0
      %2409 = vmatpush2.msra.mxu0 0.0
      %2410 = vmatprep.subr.mxu0 0.0
      %2411 = vmatpush2.msra.mxu0 0.0
      %2412 = vmatprep.subr.mxu0 0.0
      %2413 = vmatpush2.msra.mxu0 0.0
      %2414 = vmatprep.subr.mxu0 0.0
      %2415 = vmatpush2.msra.mxu0 0.0
      %2416 = vmatprep.subr.mxu0 0.0
      %2417 = vmatpush2.msra.mxu0 0.0
      %2418 = vmatprep.mubr.f32.mxu0 0.0
      %2419 = vmatmul.mubr.f32.gmra.mxu0 %v2301
      %v2420 = vpop.f32.mrf.mxu0
      %v2421 = vadd.f32 0.0, %v2420
      %v2422 = vpop.f32.mrf.mxu0
      %2423 = vmatprep.mubr.f32.mxu0 0.0
      %2424 = vmatmul.mubr.f32.gmra.mxu0 %v2302
      %v2425 = vpop.f32.mrf.mxu0
      %v2426 = vadd.f32 0.0, %v2425
      %v2427 = vpop.f32.mrf.mxu0
      %2428 = vmatprep.mubr.f32.mxu0 0.0
      %2429 = vmatmul.mubr.f32.gmra.mxu0 %v2303
      %v2430 = vpop.f32.mrf.mxu0
      %v2431 = vadd.f32 0.0, %v2430
      %v2432 = vpop.f32.mrf.mxu0
      %2433 = vmatprep.mubr.f32.mxu0 0.0
      %2434 = vmatmul.mubr.f32.gmra.mxu0 %v2304
      %v2435 = vpop.f32.mrf.mxu0
      %v2436 = vadd.f32 0.0, %v2435
      %v2437 = vpop.f32.mrf.mxu0
      %2438 = vmatprep.mubr.f32.mxu0 0.0
      %2439 = vmatmul.mubr.f32.gmra.mxu0 %v2305
      %v2440 = vpop.f32.mrf.mxu0
      %v2441 = vadd.f32 0.0, %v2440
      %v2442 = vpop.f32.mrf.mxu0
      %2443 = vmatprep.mubr.f32.mxu0 0.0
      %2444 = vmatmul.mubr.f32.gmra.mxu0 %v2306
      %v2445 = vpop.f32.mrf.mxu0
      %v2446 = vadd.f32 0.0, %v2445
      %v2447 = vpop.f32.mrf.mxu0
      %2448 = vmatprep.mubr.f32.mxu0 0.0
      %2449 = vmatmul.mubr.f32.gmra.mxu0 %v2307
      %v2450 = vpop.f32.mrf.mxu0
      %v2451 = vadd.f32 0.0, %v2450
      %v2452 = vpop.f32.mrf.mxu0
      %2453 = vmatprep.mubr.f32.mxu0 0.0
      %2454 = vmatmul.mubr.f32.gmra.mxu0 %v2308
      %v2455 = vpop.f32.mrf.mxu0
      %v2456 = vadd.f32 0.0, %v2455
      %v2457 = vpop.f32.mrf.mxu0
      %2458 = vmatprep.mubr.f32.mxu0 0.0
      %2459 = vmatmul.mubr.f32.gmra.mxu0 %v2309
      %v2460 = vpop.f32.mrf.mxu0
      %v2461 = vadd.f32 0.0, %v2460
      %v2462 = vpop.f32.mrf.mxu0
      %2463 = vmatprep.mubr.f32.mxu0 0.0
      %2464 = vmatmul.mubr.f32.gmra.mxu0 %v2310
      %v2465 = vpop.f32.mrf.mxu0
      %v2466 = vadd.f32 0.0, %v2465
      %v2467 = vpop.f32.mrf.mxu0
      %2468 = vmatprep.mubr.f32.mxu0 0.0
      %2469 = vmatmul.mubr.f32.gmra.mxu0 %v2311
      %v2470 = vpop.f32.mrf.mxu0
      %v2471 = vadd.f32 0.0, %v2470
      %v2472 = vpop.f32.mrf.mxu0
      %2473 = vmatprep.mubr.f32.mxu0 0.0
      %2474 = vmatmul.mubr.f32.gmra.mxu0 %v2312
      %v2475 = vpop.f32.mrf.mxu0
      %v2476 = vadd.f32 0.0, %v2475
      %v2477 = vpop.f32.mrf.mxu0
      %2478 = vmatprep.mubr.f32.mxu0 0.0
      %2479 = vmatmul.mubr.f32.gmra.mxu0 %v2313
      %v2480 = vpop.f32.mrf.mxu0
      %v2481 = vadd.f32 0.0, %v2480
      %v2482 = vpop.f32.mrf.mxu0
      %2483 = vmatprep.mubr.f32.mxu0 0.0
      %2484 = vmatmul.mubr.f32.gmra.mxu0 %v2314
      %v2485 = vpop.f32.mrf.mxu0
      %v2486 = vadd.f32 0.0, %v2485
      %v2487 = vpop.f32.mrf.mxu0
      %2488 = vmatprep.mubr.f32.mxu0 0.0
      %2489 = vmatmul.mubr.f32.gmra.mxu0 %v2315
      %v2490 = vpop.f32.mrf.mxu0
      %v2491 = vadd.f32 0.0, %v2490
      %v2492 = vpop.f32.mrf.mxu0
      %2493 = vmatprep.mubr.f32.mxu0 0.0
      %2494 = vmatmul.mubr.f32.gmra.mxu0 %v2316
      %v2495 = vpop.f32.mrf.mxu0
      %v2496 = vadd.f32 0.0, %v2495
      %v2497 = vpop.f32.mrf.mxu0
      %2498 = vmatprep.mubr.f32.mxu0 0.0
      %2499 = vmatmul.mubr.f32.gmra.mxu0 %v2317
      %v2500 = vpop.f32.mrf.mxu0
      %v2501 = vadd.f32 0.0, %v2500
      %v2502 = vpop.f32.mrf.mxu0
      %2503 = vmatprep.mubr.f32.mxu0 0.0
      %2504 = vmatmul.mubr.f32.gmra.mxu0 %v2318
      %v2505 = vpop.f32.mrf.mxu0
      %v2506 = vadd.f32 0.0, %v2505
      %v2507 = vpop.f32.mrf.mxu0
      %2508 = vmatprep.mubr.f32.mxu0 0.0
      %2509 = vmatmul.mubr.f32.gmra.mxu0 %v2319
      %v2510 = vpop.f32.mrf.mxu0
      %v2511 = vadd.f32 0.0, %v2510
      %v2512 = vpop.f32.mrf.mxu0
      %2513 = vmatprep.mubr.f32.mxu0 0.0
      %2514 = vmatmul.mubr.f32.gmra.mxu0 %v2320
      %v2515 = vpop.f32.mrf.mxu0
      %v2516 = vadd.f32 0.0, %v2515
      %v2517 = vpop.f32.mrf.mxu0
      %2518 = vmatprep.mubr.f32.mxu0 0.0
      %2519 = vmatmul.mubr.f32.gmra.mxu0 %v2321
      %v2520 = vpop.f32.mrf.mxu0
      %v2521 = vadd.f32 0.0, %v2520
      %v2522 = vpop.f32.mrf.mxu0
      %2523 = vmatprep.mubr.f32.mxu0 0.0
      %2524 = vmatmul.mubr.f32.gmra.mxu0 %v2322
      %v2525 = vpop.f32.mrf.mxu0
      %v2526 = vadd.f32 0.0, %v2525
      %v2527 = vpop.f32.mrf.mxu0
      %2528 = vmatprep.mubr.f32.mxu0 0.0
      %2529 = vmatmul.mubr.f32.gmra.mxu0 %v2323
      %v2530 = vpop.f32.mrf.mxu0
      %v2531 = vadd.f32 0.0, %v2530
      %v2532 = vpop.f32.mrf.mxu0
      %2533 = vmatprep.mubr.f32.mxu0 0.0
      %2534 = vmatmul.mubr.f32.gmra.mxu0 %v2324
      %v2535 = vpop.f32.mrf.mxu0
      %v2536 = vadd.f32 0.0, %v2535
      %v2537 = vpop.f32.mrf.mxu0
      %2538 = vmatprep.mubr.f32.mxu0 0.0
      %2539 = vmatmul.mubr.f32.gmra.mxu0 %v2325
      %v2540 = vpop.f32.mrf.mxu0
      %v2541 = vadd.f32 0.0, %v2540
      %v2542 = vpop.f32.mrf.mxu0
      %2543 = vmatprep.mubr.f32.mxu0 0.0
      %2544 = vmatmul.mubr.f32.gmra.mxu0 %v2326
      %v2545 = vpop.f32.mrf.mxu0
      %v2546 = vadd.f32 0.0, %v2545
      %v2547 = vpop.f32.mrf.mxu0
      %2548 = vmatprep.mubr.f32.mxu0 0.0
      %2549 = vmatmul.mubr.f32.gmra.mxu0 %v2327
      %v2550 = vpop.f32.mrf.mxu0
      %v2551 = vadd.f32 0.0, %v2550
      %v2552 = vpop.f32.mrf.mxu0
      %2553 = vmatprep.mubr.f32.mxu0 0.0
      %2554 = vmatmul.mubr.f32.gmra.mxu0 %v2328
      %v2555 = vpop.f32.mrf.mxu0
      %v2556 = vadd.f32 0.0, %v2555
      %v2557 = vpop.f32.mrf.mxu0
      %2558 = vmatprep.mubr.f32.mxu0 0.0
      %2559 = vmatmul.mubr.f32.gmra.mxu0 %v2329
      %v2560 = vpop.f32.mrf.mxu0
      %v2561 = vadd.f32 0.0, %v2560
      %v2562 = vpop.f32.mrf.mxu0
      %2563 = vmatprep.mubr.f32.mxu0 0.0
      %2564 = vmatmul.mubr.f32.gmra.mxu0 %v2330
      %v2565 = vpop.f32.mrf.mxu0
      %v2566 = vadd.f32 0.0, %v2565
      %v2567 = vpop.f32.mrf.mxu0
      %2568 = vmatprep.mubr.f32.mxu0 0.0
      %2569 = vmatmul.mubr.f32.gmra.mxu0 %v2331
      %v2570 = vpop.f32.mrf.mxu0
      %v2571 = vadd.f32 0.0, %v2570
      %v2572 = vpop.f32.mrf.mxu0
      %2573 = vmatprep.mubr.f32.mxu0 0.0
      %2574 = vmatmul.mubr.f32.gmra.mxu0 %v2332
      %v2575 = vpop.f32.mrf.mxu0
      %v2576 = vadd.f32 0.0, %v2575
      %v2577 = vpop.f32.mrf.mxu0
      %2578 = vmatprep.mubr.f32.mxu0 0.0
      %2579 = vmatmul.mubr.f32.gmra.mxu0 %v2333
      %v2580 = vpop.f32.mrf.mxu0
      %v2581 = vadd.f32 0.0, %v2580
      %v2582 = vpop.f32.mrf.mxu0
      %2583 = vmatprep.mubr.f32.mxu0 0.0
      %2584 = vmatmul.mubr.f32.gmra.mxu0 %v2334
      %v2585 = vpop.f32.mrf.mxu0
      %v2586 = vadd.f32 0.0, %v2585
      %v2587 = vpop.f32.mrf.mxu0
      %2588 = vmatprep.mubr.f32.mxu0 0.0
      %2589 = vmatmul.mubr.f32.gmra.mxu0 %v2335
      %v2590 = vpop.f32.mrf.mxu0
      %v2591 = vadd.f32 0.0, %v2590
      %v2592 = vpop.f32.mrf.mxu0
      %2593 = vmatprep.mubr.f32.mxu0 0.0
      %2594 = vmatmul.mubr.f32.gmra.mxu0 %v2336
      %v2595 = vpop.f32.mrf.mxu0
      %v2596 = vadd.f32 0.0, %v2595
      %v2597 = vpop.f32.mrf.mxu0
      %2598 = vdwg.mxu0
      %v2599 = vadd.f32 %v2265, %v2421
      %v2600 = vadd.f32 %v2266, %v2426
      %v2601 = vadd.f32 %v2267, %v2431
      %v2602 = vadd.f32 %v2268, %v2436
      %v2603 = vadd.f32 %v2269, %v2441
      %v2604 = vadd.f32 %v2270, %v2446
      %v2605 = vadd.f32 %v2271, %v2451
      %v2606 = vadd.f32 %v2272, %v2456
      %v2607 = vadd.f32 %v2273, %v2461
      %v2608 = vadd.f32 %v2274, %v2466
      %v2609 = vadd.f32 %v2275, %v2471
      %v2610 = vadd.f32 %v2276, %v2476
      %v2611 = vadd.f32 %v2277, %v2481
      %v2612 = vadd.f32 %v2278, %v2486
      %v2613 = vadd.f32 %v2279, %v2491
      %v2614 = vadd.f32 %v2280, %v2496
      %v2615 = vadd.f32 %v2281, %v2501
      %v2616 = vadd.f32 %v2282, %v2506
      %v2617 = vadd.f32 %v2283, %v2511
      %v2618 = vadd.f32 %v2284, %v2516
      %v2619 = vadd.f32 %v2285, %v2521
      %v2620 = vadd.f32 %v2286, %v2526
      %v2621 = vadd.f32 %v2287, %v2531
      %v2622 = vadd.f32 %v2288, %v2536
      %v2623 = vadd.f32 %v2289, %v2541
      %v2624 = vadd.f32 %v2290, %v2546
      %v2625 = vadd.f32 %v2291, %v2551
      %v2626 = vadd.f32 %v2292, %v2556
      %v2627 = vadd.f32 %v2293, %v2561
      %v2628 = vadd.f32 %v2294, %v2566
      %v2629 = vadd.f32 %v2295, %v2571
      %v2630 = vadd.f32 %v2296, %v2576
      %v2631 = vadd.f32 %v2297, %v2581
      %v2632 = vadd.f32 %v2298, %v2586
      %v2633 = vadd.f32 %v2299, %v2591
      %v2634 = vadd.f32 %v2300, %v2596
      %v2635 = vld [vmem:[#allocation2 + $0x13] sm:$0xff]
      %v2636 = vld [vmem:[#allocation2 + $0x1b] sm:$0xff]
      %v2637 = vld [vmem:[#allocation2 + $0x23] sm:$0xff]
      %v2638 = vld [vmem:[#allocation2 + $0x2b] sm:$0xff]
      %v2639 = vld [vmem:[#allocation2 + $0x33] sm:$0xff]
      %v2640 = vld [vmem:[#allocation2 + $0x3b] sm:$0xff]
      %v2641 = vld [vmem:[#allocation2 + $0x43] sm:$0xff]
      %v2642 = vld [vmem:[#allocation2 + $0x4b] sm:$0xff]
      %v2643 = vld [vmem:[#allocation2 + $0x53] sm:$0xff]
      %v2644 = vld [vmem:[#allocation2 + $0x5b] sm:$0xff]
      %v2645 = vld [vmem:[#allocation2 + $0x63] sm:$0xff]
      %v2646 = vld [vmem:[#allocation2 + $0x6b] sm:$0xff]
      %v2647 = vld [vmem:[#allocation2 + $0x73] sm:$0xff]
      %v2648 = vld [vmem:[#allocation2 + $0x7b] sm:$0xff]
      %v2649 = vld [vmem:[#allocation2 + $0x83] sm:$0xff]
      %v2650 = vld [vmem:[#allocation2 + $0x8b] sm:$0xff]
      %v2651 = vld [vmem:[#allocation2 + $0x93] sm:$0xff]
      %v2652 = vld [vmem:[#allocation2 + $0x9b] sm:$0xff]
      %v2653 = vld [vmem:[#allocation2 + $0xa3] sm:$0xff]
      %v2654 = vld [vmem:[#allocation2 + $0xab] sm:$0xff]
      %v2655 = vld [vmem:[#allocation2 + $0xb3] sm:$0xff]
      %v2656 = vld [vmem:[#allocation2 + $0xbb] sm:$0xff]
      %v2657 = vld [vmem:[#allocation2 + $0xc3] sm:$0xff]
      %v2658 = vld [vmem:[#allocation2 + $0xcb] sm:$0xff]
      %v2659 = vld [vmem:[#allocation2 + $0xd3] sm:$0xff]
      %v2660 = vld [vmem:[#allocation2 + $0xdb] sm:$0xff]
      %v2661 = vld [vmem:[#allocation2 + $0xe3] sm:$0xff]
      %v2662 = vld [vmem:[#allocation2 + $0xeb] sm:$0xff]
      %v2663 = vld [vmem:[#allocation2 + $0xf3] sm:$0xff]
      %v2664 = vld [vmem:[#allocation2 + $0xfb] sm:$0xff]
      %v2665 = vld [vmem:[#allocation2 + $0x103] sm:$0xff]
      %v2666 = vld [vmem:[#allocation2 + $0x10b] sm:$0xff]
      %v2667 = vld [vmem:[#allocation2 + $0x113] sm:$0xff]
      %v2668 = vld [vmem:[#allocation2 + $0x11b] sm:$0xff]
      %v2669 = vld [vmem:[#allocation2 + $0x123] sm:$0xff]
      %v2670 = vld [vmem:[#allocation2 + $0x12b] sm:$0x3f]
      %s2671 = scalar_lea.vmem %s2, 512
      %v2672 = vld [vmem:[%s2671] sm:$0xff]
      %v2673 = vld [vmem:[%s2671 + $0x8] sm:$0xff]
      %v2674 = vld [vmem:[%s2671 + $0x10] sm:$0xff]
      %v2675 = vld [vmem:[%s2671 + $0x18] sm:$0xff]
      %v2676 = vld [vmem:[%s2671 + $0x20] sm:$0xff]
      %v2677 = vld [vmem:[%s2671 + $0x28] sm:$0xff]
      %v2678 = vld [vmem:[%s2671 + $0x30] sm:$0xff]
      %v2679 = vld [vmem:[%s2671 + $0x38] sm:$0xff]
      %v2680 = vld [vmem:[%s2671 + $0x40] sm:$0xff]
      %v2681 = vld [vmem:[%s2671 + $0x48] sm:$0xff]
      %v2682 = vld [vmem:[%s2671 + $0x50] sm:$0xff]
      %v2683 = vld [vmem:[%s2671 + $0x58] sm:$0xff]
      %v2684 = vld [vmem:[%s2671 + $0x60] sm:$0xff]
      %v2685 = vld [vmem:[%s2671 + $0x68] sm:$0xff]
      %v2686 = vld [vmem:[%s2671 + $0x70] sm:$0xff]
      %v2687 = vld [vmem:[%s2671 + $0x78] sm:$0xff]
      %2688 = vmatprep.subr.mxu0 0.0
      %2689 = vmatpush1.msra.mxu0 %v2687
      %2690 = vmatprep.subr.mxu0 0.0
      %2691 = vmatpush1.msra.mxu0 %v2686
      %2692 = vmatprep.subr.mxu0 0.0
      %2693 = vmatpush1.msra.mxu0 %v2685
      %2694 = vmatprep.subr.mxu0 0.0
      %2695 = vmatpush1.msra.mxu0 %v2684
      %2696 = vmatprep.subr.mxu0 0.0
      %2697 = vmatpush1.msra.mxu0 %v2683
      %2698 = vmatprep.subr.mxu0 0.0
      %2699 = vmatpush1.msra.mxu0 %v2682
      %2700 = vmatprep.subr.mxu0 0.0
      %2701 = vmatpush1.msra.mxu0 %v2681
      %2702 = vmatprep.subr.mxu0 0.0
      %2703 = vmatpush1.msra.mxu0 %v2680
      %2704 = vmatprep.subr.mxu0 0.0
      %2705 = vmatpush1.msra.mxu0 %v2679
      %2706 = vmatprep.subr.mxu0 0.0
      %2707 = vmatpush1.msra.mxu0 %v2678
      %2708 = vmatprep.subr.mxu0 0.0
      %2709 = vmatpush1.msra.mxu0 %v2677
      %2710 = vmatprep.subr.mxu0 0.0
      %2711 = vmatpush1.msra.mxu0 %v2676
      %2712 = vmatprep.subr.mxu0 0.0
      %2713 = vmatpush1.msra.mxu0 %v2675
      %2714 = vmatprep.subr.mxu0 0.0
      %2715 = vmatpush1.msra.mxu0 %v2674
      %2716 = vmatprep.subr.mxu0 0.0
      %2717 = vmatpush1.msra.mxu0 %v2673
      %2718 = vmatprep.subr.mxu0 0.0
      %2719 = vmatpush1.msra.mxu0 %v2672
      %2720 = vmatprep.subr.mxu0 0.0
      %2721 = vmatpush2.msra.mxu0 0.0
      %2722 = vmatprep.subr.mxu0 0.0
      %2723 = vmatpush2.msra.mxu0 0.0
      %2724 = vmatprep.subr.mxu0 0.0
      %2725 = vmatpush2.msra.mxu0 0.0
      %2726 = vmatprep.subr.mxu0 0.0
      %2727 = vmatpush2.msra.mxu0 0.0
      %2728 = vmatprep.subr.mxu0 0.0
      %2729 = vmatpush2.msra.mxu0 0.0
      %2730 = vmatprep.subr.mxu0 0.0
      %2731 = vmatpush2.msra.mxu0 0.0
      %2732 = vmatprep.subr.mxu0 0.0
      %2733 = vmatpush2.msra.mxu0 0.0
      %2734 = vmatprep.subr.mxu0 0.0
      %2735 = vmatpush2.msra.mxu0 0.0
      %2736 = vmatprep.subr.mxu0 0.0
      %2737 = vmatpush2.msra.mxu0 0.0
      %2738 = vmatprep.subr.mxu0 0.0
      %2739 = vmatpush2.msra.mxu0 0.0
      %2740 = vmatprep.subr.mxu0 0.0
      %2741 = vmatpush2.msra.mxu0 0.0
      %2742 = vmatprep.subr.mxu0 0.0
      %2743 = vmatpush2.msra.mxu0 0.0
      %2744 = vmatprep.subr.mxu0 0.0
      %2745 = vmatpush2.msra.mxu0 0.0
      %2746 = vmatprep.subr.mxu0 0.0
      %2747 = vmatpush2.msra.mxu0 0.0
      %2748 = vmatprep.subr.mxu0 0.0
      %2749 = vmatpush2.msra.mxu0 0.0
      %2750 = vmatprep.subr.mxu0 0.0
      %2751 = vmatpush2.msra.mxu0 0.0
      %2752 = vmatprep.mubr.f32.mxu0 0.0
      %2753 = vmatmul.mubr.f32.gmra.mxu0 %v2635
      %v2754 = vpop.f32.mrf.mxu0
      %v2755 = vadd.f32 0.0, %v2754
      %v2756 = vpop.f32.mrf.mxu0
      %2757 = vmatprep.mubr.f32.mxu0 0.0
      %2758 = vmatmul.mubr.f32.gmra.mxu0 %v2636
      %v2759 = vpop.f32.mrf.mxu0
      %v2760 = vadd.f32 0.0, %v2759
      %v2761 = vpop.f32.mrf.mxu0
      %2762 = vmatprep.mubr.f32.mxu0 0.0
      %2763 = vmatmul.mubr.f32.gmra.mxu0 %v2637
      %v2764 = vpop.f32.mrf.mxu0
      %v2765 = vadd.f32 0.0, %v2764
      %v2766 = vpop.f32.mrf.mxu0
      %2767 = vmatprep.mubr.f32.mxu0 0.0
      %2768 = vmatmul.mubr.f32.gmra.mxu0 %v2638
      %v2769 = vpop.f32.mrf.mxu0
      %v2770 = vadd.f32 0.0, %v2769
      %v2771 = vpop.f32.mrf.mxu0
      %2772 = vmatprep.mubr.f32.mxu0 0.0
      %2773 = vmatmul.mubr.f32.gmra.mxu0 %v2639
      %v2774 = vpop.f32.mrf.mxu0
      %v2775 = vadd.f32 0.0, %v2774
      %v2776 = vpop.f32.mrf.mxu0
      %2777 = vmatprep.mubr.f32.mxu0 0.0
      %2778 = vmatmul.mubr.f32.gmra.mxu0 %v2640
      %v2779 = vpop.f32.mrf.mxu0
      %v2780 = vadd.f32 0.0, %v2779
      %v2781 = vpop.f32.mrf.mxu0
      %2782 = vmatprep.mubr.f32.mxu0 0.0
      %2783 = vmatmul.mubr.f32.gmra.mxu0 %v2641
      %v2784 = vpop.f32.mrf.mxu0
      %v2785 = vadd.f32 0.0, %v2784
      %v2786 = vpop.f32.mrf.mxu0
      %2787 = vmatprep.mubr.f32.mxu0 0.0
      %2788 = vmatmul.mubr.f32.gmra.mxu0 %v2642
      %v2789 = vpop.f32.mrf.mxu0
      %v2790 = vadd.f32 0.0, %v2789
      %v2791 = vpop.f32.mrf.mxu0
      %2792 = vmatprep.mubr.f32.mxu0 0.0
      %2793 = vmatmul.mubr.f32.gmra.mxu0 %v2643
      %v2794 = vpop.f32.mrf.mxu0
      %v2795 = vadd.f32 0.0, %v2794
      %v2796 = vpop.f32.mrf.mxu0
      %2797 = vmatprep.mubr.f32.mxu0 0.0
      %2798 = vmatmul.mubr.f32.gmra.mxu0 %v2644
      %v2799 = vpop.f32.mrf.mxu0
      %v2800 = vadd.f32 0.0, %v2799
      %v2801 = vpop.f32.mrf.mxu0
      %2802 = vmatprep.mubr.f32.mxu0 0.0
      %2803 = vmatmul.mubr.f32.gmra.mxu0 %v2645
      %v2804 = vpop.f32.mrf.mxu0
      %v2805 = vadd.f32 0.0, %v2804
      %v2806 = vpop.f32.mrf.mxu0
      %2807 = vmatprep.mubr.f32.mxu0 0.0
      %2808 = vmatmul.mubr.f32.gmra.mxu0 %v2646
      %v2809 = vpop.f32.mrf.mxu0
      %v2810 = vadd.f32 0.0, %v2809
      %v2811 = vpop.f32.mrf.mxu0
      %2812 = vmatprep.mubr.f32.mxu0 0.0
      %2813 = vmatmul.mubr.f32.gmra.mxu0 %v2647
      %v2814 = vpop.f32.mrf.mxu0
      %v2815 = vadd.f32 0.0, %v2814
      %v2816 = vpop.f32.mrf.mxu0
      %2817 = vmatprep.mubr.f32.mxu0 0.0
      %2818 = vmatmul.mubr.f32.gmra.mxu0 %v2648
      %v2819 = vpop.f32.mrf.mxu0
      %v2820 = vadd.f32 0.0, %v2819
      %v2821 = vpop.f32.mrf.mxu0
      %2822 = vmatprep.mubr.f32.mxu0 0.0
      %2823 = vmatmul.mubr.f32.gmra.mxu0 %v2649
      %v2824 = vpop.f32.mrf.mxu0
      %v2825 = vadd.f32 0.0, %v2824
      %v2826 = vpop.f32.mrf.mxu0
      %2827 = vmatprep.mubr.f32.mxu0 0.0
      %2828 = vmatmul.mubr.f32.gmra.mxu0 %v2650
      %v2829 = vpop.f32.mrf.mxu0
      %v2830 = vadd.f32 0.0, %v2829
      %v2831 = vpop.f32.mrf.mxu0
      %2832 = vmatprep.mubr.f32.mxu0 0.0
      %2833 = vmatmul.mubr.f32.gmra.mxu0 %v2651
      %v2834 = vpop.f32.mrf.mxu0
      %v2835 = vadd.f32 0.0, %v2834
      %v2836 = vpop.f32.mrf.mxu0
      %2837 = vmatprep.mubr.f32.mxu0 0.0
      %2838 = vmatmul.mubr.f32.gmra.mxu0 %v2652
      %v2839 = vpop.f32.mrf.mxu0
      %v2840 = vadd.f32 0.0, %v2839
      %v2841 = vpop.f32.mrf.mxu0
      %2842 = vmatprep.mubr.f32.mxu0 0.0
      %2843 = vmatmul.mubr.f32.gmra.mxu0 %v2653
      %v2844 = vpop.f32.mrf.mxu0
      %v2845 = vadd.f32 0.0, %v2844
      %v2846 = vpop.f32.mrf.mxu0
      %2847 = vmatprep.mubr.f32.mxu0 0.0
      %2848 = vmatmul.mubr.f32.gmra.mxu0 %v2654
      %v2849 = vpop.f32.mrf.mxu0
      %v2850 = vadd.f32 0.0, %v2849
      %v2851 = vpop.f32.mrf.mxu0
      %2852 = vmatprep.mubr.f32.mxu0 0.0
      %2853 = vmatmul.mubr.f32.gmra.mxu0 %v2655
      %v2854 = vpop.f32.mrf.mxu0
      %v2855 = vadd.f32 0.0, %v2854
      %v2856 = vpop.f32.mrf.mxu0
      %2857 = vmatprep.mubr.f32.mxu0 0.0
      %2858 = vmatmul.mubr.f32.gmra.mxu0 %v2656
      %v2859 = vpop.f32.mrf.mxu0
      %v2860 = vadd.f32 0.0, %v2859
      %v2861 = vpop.f32.mrf.mxu0
      %2862 = vmatprep.mubr.f32.mxu0 0.0
      %2863 = vmatmul.mubr.f32.gmra.mxu0 %v2657
      %v2864 = vpop.f32.mrf.mxu0
      %v2865 = vadd.f32 0.0, %v2864
      %v2866 = vpop.f32.mrf.mxu0
      %2867 = vmatprep.mubr.f32.mxu0 0.0
      %2868 = vmatmul.mubr.f32.gmra.mxu0 %v2658
      %v2869 = vpop.f32.mrf.mxu0
      %v2870 = vadd.f32 0.0, %v2869
      %v2871 = vpop.f32.mrf.mxu0
      %2872 = vmatprep.mubr.f32.mxu0 0.0
      %2873 = vmatmul.mubr.f32.gmra.mxu0 %v2659
      %v2874 = vpop.f32.mrf.mxu0
      %v2875 = vadd.f32 0.0, %v2874
      %v2876 = vpop.f32.mrf.mxu0
      %2877 = vmatprep.mubr.f32.mxu0 0.0
      %2878 = vmatmul.mubr.f32.gmra.mxu0 %v2660
      %v2879 = vpop.f32.mrf.mxu0
      %v2880 = vadd.f32 0.0, %v2879
      %v2881 = vpop.f32.mrf.mxu0
      %2882 = vmatprep.mubr.f32.mxu0 0.0
      %2883 = vmatmul.mubr.f32.gmra.mxu0 %v2661
      %v2884 = vpop.f32.mrf.mxu0
      %v2885 = vadd.f32 0.0, %v2884
      %v2886 = vpop.f32.mrf.mxu0
      %2887 = vmatprep.mubr.f32.mxu0 0.0
      %2888 = vmatmul.mubr.f32.gmra.mxu0 %v2662
      %v2889 = vpop.f32.mrf.mxu0
      %v2890 = vadd.f32 0.0, %v2889
      %v2891 = vpop.f32.mrf.mxu0
      %2892 = vmatprep.mubr.f32.mxu0 0.0
      %2893 = vmatmul.mubr.f32.gmra.mxu0 %v2663
      %v2894 = vpop.f32.mrf.mxu0
      %v2895 = vadd.f32 0.0, %v2894
      %v2896 = vpop.f32.mrf.mxu0
      %2897 = vmatprep.mubr.f32.mxu0 0.0
      %2898 = vmatmul.mubr.f32.gmra.mxu0 %v2664
      %v2899 = vpop.f32.mrf.mxu0
      %v2900 = vadd.f32 0.0, %v2899
      %v2901 = vpop.f32.mrf.mxu0
      %2902 = vmatprep.mubr.f32.mxu0 0.0
      %2903 = vmatmul.mubr.f32.gmra.mxu0 %v2665
      %v2904 = vpop.f32.mrf.mxu0
      %v2905 = vadd.f32 0.0, %v2904
      %v2906 = vpop.f32.mrf.mxu0
      %2907 = vmatprep.mubr.f32.mxu0 0.0
      %2908 = vmatmul.mubr.f32.gmra.mxu0 %v2666
      %v2909 = vpop.f32.mrf.mxu0
      %v2910 = vadd.f32 0.0, %v2909
      %v2911 = vpop.f32.mrf.mxu0
      %2912 = vmatprep.mubr.f32.mxu0 0.0
      %2913 = vmatmul.mubr.f32.gmra.mxu0 %v2667
      %v2914 = vpop.f32.mrf.mxu0
      %v2915 = vadd.f32 0.0, %v2914
      %v2916 = vpop.f32.mrf.mxu0
      %2917 = vmatprep.mubr.f32.mxu0 0.0
      %2918 = vmatmul.mubr.f32.gmra.mxu0 %v2668
      %v2919 = vpop.f32.mrf.mxu0
      %v2920 = vadd.f32 0.0, %v2919
      %v2921 = vpop.f32.mrf.mxu0
      %2922 = vmatprep.mubr.f32.mxu0 0.0
      %2923 = vmatmul.mubr.f32.gmra.mxu0 %v2669
      %v2924 = vpop.f32.mrf.mxu0
      %v2925 = vadd.f32 0.0, %v2924
      %v2926 = vpop.f32.mrf.mxu0
      %2927 = vmatprep.mubr.f32.mxu0 0.0
      %2928 = vmatmul.mubr.f32.gmra.mxu0 %v2670
      %v2929 = vpop.f32.mrf.mxu0
      %v2930 = vadd.f32 0.0, %v2929
      %v2931 = vpop.f32.mrf.mxu0
      %2932 = vdwg.mxu0
      %v2933 = vadd.f32 %v2599, %v2755
      %v2934 = vadd.f32 %v2600, %v2760
      %v2935 = vadd.f32 %v2601, %v2765
      %v2936 = vadd.f32 %v2602, %v2770
      %v2937 = vadd.f32 %v2603, %v2775
      %v2938 = vadd.f32 %v2604, %v2780
      %v2939 = vadd.f32 %v2605, %v2785
      %v2940 = vadd.f32 %v2606, %v2790
      %v2941 = vadd.f32 %v2607, %v2795
      %v2942 = vadd.f32 %v2608, %v2800
      %v2943 = vadd.f32 %v2609, %v2805
      %v2944 = vadd.f32 %v2610, %v2810
      %v2945 = vadd.f32 %v2611, %v2815
      %v2946 = vadd.f32 %v2612, %v2820
      %v2947 = vadd.f32 %v2613, %v2825
      %v2948 = vadd.f32 %v2614, %v2830
      %v2949 = vadd.f32 %v2615, %v2835
      %v2950 = vadd.f32 %v2616, %v2840
      %v2951 = vadd.f32 %v2617, %v2845
      %v2952 = vadd.f32 %v2618, %v2850
      %v2953 = vadd.f32 %v2619, %v2855
      %v2954 = vadd.f32 %v2620, %v2860
      %v2955 = vadd.f32 %v2621, %v2865
      %v2956 = vadd.f32 %v2622, %v2870
      %v2957 = vadd.f32 %v2623, %v2875
      %v2958 = vadd.f32 %v2624, %v2880
      %v2959 = vadd.f32 %v2625, %v2885
      %v2960 = vadd.f32 %v2626, %v2890
      %v2961 = vadd.f32 %v2627, %v2895
      %v2962 = vadd.f32 %v2628, %v2900
      %v2963 = vadd.f32 %v2629, %v2905
      %v2964 = vadd.f32 %v2630, %v2910
      %v2965 = vadd.f32 %v2631, %v2915
      %v2966 = vadd.f32 %v2632, %v2920
      %v2967 = vadd.f32 %v2633, %v2925
      %v2968 = vadd.f32 %v2634, %v2930
      %v2969 = vld [vmem:[#allocation2 + $0x14] sm:$0xff]
      %v2970 = vld [vmem:[#allocation2 + $0x1c] sm:$0xff]
      %v2971 = vld [vmem:[#allocation2 + $0x24] sm:$0xff]
      %v2972 = vld [vmem:[#allocation2 + $0x2c] sm:$0xff]
      %v2973 = vld [vmem:[#allocation2 + $0x34] sm:$0xff]
      %v2974 = vld [vmem:[#allocation2 + $0x3c] sm:$0xff]
      %v2975 = vld [vmem:[#allocation2 + $0x44] sm:$0xff]
      %v2976 = vld [vmem:[#allocation2 + $0x4c] sm:$0xff]
      %v2977 = vld [vmem:[#allocation2 + $0x54] sm:$0xff]
      %v2978 = vld [vmem:[#allocation2 + $0x5c] sm:$0xff]
      %v2979 = vld [vmem:[#allocation2 + $0x64] sm:$0xff]
      %v2980 = vld [vmem:[#allocation2 + $0x6c] sm:$0xff]
      %v2981 = vld [vmem:[#allocation2 + $0x74] sm:$0xff]
      %v2982 = vld [vmem:[#allocation2 + $0x7c] sm:$0xff]
      %v2983 = vld [vmem:[#allocation2 + $0x84] sm:$0xff]
      %v2984 = vld [vmem:[#allocation2 + $0x8c] sm:$0xff]
      %v2985 = vld [vmem:[#allocation2 + $0x94] sm:$0xff]
      %v2986 = vld [vmem:[#allocation2 + $0x9c] sm:$0xff]
      %v2987 = vld [vmem:[#allocation2 + $0xa4] sm:$0xff]
      %v2988 = vld [vmem:[#allocation2 + $0xac] sm:$0xff]
      %v2989 = vld [vmem:[#allocation2 + $0xb4] sm:$0xff]
      %v2990 = vld [vmem:[#allocation2 + $0xbc] sm:$0xff]
      %v2991 = vld [vmem:[#allocation2 + $0xc4] sm:$0xff]
      %v2992 = vld [vmem:[#allocation2 + $0xcc] sm:$0xff]
      %v2993 = vld [vmem:[#allocation2 + $0xd4] sm:$0xff]
      %v2994 = vld [vmem:[#allocation2 + $0xdc] sm:$0xff]
      %v2995 = vld [vmem:[#allocation2 + $0xe4] sm:$0xff]
      %v2996 = vld [vmem:[#allocation2 + $0xec] sm:$0xff]
      %v2997 = vld [vmem:[#allocation2 + $0xf4] sm:$0xff]
      %v2998 = vld [vmem:[#allocation2 + $0xfc] sm:$0xff]
      %v2999 = vld [vmem:[#allocation2 + $0x104] sm:$0xff]
      %v3000 = vld [vmem:[#allocation2 + $0x10c] sm:$0xff]
      %v3001 = vld [vmem:[#allocation2 + $0x114] sm:$0xff]
      %v3002 = vld [vmem:[#allocation2 + $0x11c] sm:$0xff]
      %v3003 = vld [vmem:[#allocation2 + $0x124] sm:$0xff]
      %v3004 = vld [vmem:[#allocation2 + $0x12c] sm:$0x3f]
      %s3005 = scalar_lea.vmem %s2, 640
      %v3006 = vld [vmem:[%s3005] sm:$0xff]
      %v3007 = vld [vmem:[%s3005 + $0x8] sm:$0xff]
      %v3008 = vld [vmem:[%s3005 + $0x10] sm:$0xff]
      %v3009 = vld [vmem:[%s3005 + $0x18] sm:$0xff]
      %v3010 = vld [vmem:[%s3005 + $0x20] sm:$0xff]
      %v3011 = vld [vmem:[%s3005 + $0x28] sm:$0xff]
      %v3012 = vld [vmem:[%s3005 + $0x30] sm:$0xff]
      %v3013 = vld [vmem:[%s3005 + $0x38] sm:$0xff]
      %v3014 = vld [vmem:[%s3005 + $0x40] sm:$0xff]
      %v3015 = vld [vmem:[%s3005 + $0x48] sm:$0xff]
      %v3016 = vld [vmem:[%s3005 + $0x50] sm:$0xff]
      %v3017 = vld [vmem:[%s3005 + $0x58] sm:$0xff]
      %v3018 = vld [vmem:[%s3005 + $0x60] sm:$0xff]
      %v3019 = vld [vmem:[%s3005 + $0x68] sm:$0xff]
      %v3020 = vld [vmem:[%s3005 + $0x70] sm:$0xff]
      %v3021 = vld [vmem:[%s3005 + $0x78] sm:$0xff]
      %3022 = vmatprep.subr.mxu0 0.0
      %3023 = vmatpush1.msra.mxu0 %v3021
      %3024 = vmatprep.subr.mxu0 0.0
      %3025 = vmatpush1.msra.mxu0 %v3020
      %3026 = vmatprep.subr.mxu0 0.0
      %3027 = vmatpush1.msra.mxu0 %v3019
      %3028 = vmatprep.subr.mxu0 0.0
      %3029 = vmatpush1.msra.mxu0 %v3018
      %3030 = vmatprep.subr.mxu0 0.0
      %3031 = vmatpush1.msra.mxu0 %v3017
      %3032 = vmatprep.subr.mxu0 0.0
      %3033 = vmatpush1.msra.mxu0 %v3016
      %3034 = vmatprep.subr.mxu0 0.0
      %3035 = vmatpush1.msra.mxu0 %v3015
      %3036 = vmatprep.subr.mxu0 0.0
      %3037 = vmatpush1.msra.mxu0 %v3014
      %3038 = vmatprep.subr.mxu0 0.0
      %3039 = vmatpush1.msra.mxu0 %v3013
      %3040 = vmatprep.subr.mxu0 0.0
      %3041 = vmatpush1.msra.mxu0 %v3012
      %3042 = vmatprep.subr.mxu0 0.0
      %3043 = vmatpush1.msra.mxu0 %v3011
      %3044 = vmatprep.subr.mxu0 0.0
      %3045 = vmatpush1.msra.mxu0 %v3010
      %3046 = vmatprep.subr.mxu0 0.0
      %3047 = vmatpush1.msra.mxu0 %v3009
      %3048 = vmatprep.subr.mxu0 0.0
      %3049 = vmatpush1.msra.mxu0 %v3008
      %3050 = vmatprep.subr.mxu0 0.0
      %3051 = vmatpush1.msra.mxu0 %v3007
      %3052 = vmatprep.subr.mxu0 0.0
      %3053 = vmatpush1.msra.mxu0 %v3006
      %3054 = vmatprep.subr.mxu0 0.0
      %3055 = vmatpush2.msra.mxu0 0.0
      %3056 = vmatprep.subr.mxu0 0.0
      %3057 = vmatpush2.msra.mxu0 0.0
      %3058 = vmatprep.subr.mxu0 0.0
      %3059 = vmatpush2.msra.mxu0 0.0
      %3060 = vmatprep.subr.mxu0 0.0
      %3061 = vmatpush2.msra.mxu0 0.0
      %3062 = vmatprep.subr.mxu0 0.0
      %3063 = vmatpush2.msra.mxu0 0.0
      %3064 = vmatprep.subr.mxu0 0.0
      %3065 = vmatpush2.msra.mxu0 0.0
      %3066 = vmatprep.subr.mxu0 0.0
      %3067 = vmatpush2.msra.mxu0 0.0
      %3068 = vmatprep.subr.mxu0 0.0
      %3069 = vmatpush2.msra.mxu0 0.0
      %3070 = vmatprep.subr.mxu0 0.0
      %3071 = vmatpush2.msra.mxu0 0.0
      %3072 = vmatprep.subr.mxu0 0.0
      %3073 = vmatpush2.msra.mxu0 0.0
      %3074 = vmatprep.subr.mxu0 0.0
      %3075 = vmatpush2.msra.mxu0 0.0
      %3076 = vmatprep.subr.mxu0 0.0
      %3077 = vmatpush2.msra.mxu0 0.0
      %3078 = vmatprep.subr.mxu0 0.0
      %3079 = vmatpush2.msra.mxu0 0.0
      %3080 = vmatprep.subr.mxu0 0.0
      %3081 = vmatpush2.msra.mxu0 0.0
      %3082 = vmatprep.subr.mxu0 0.0
      %3083 = vmatpush2.msra.mxu0 0.0
      %3084 = vmatprep.subr.mxu0 0.0
      %3085 = vmatpush2.msra.mxu0 0.0
      %3086 = vmatprep.mubr.f32.mxu0 0.0
      %3087 = vmatmul.mubr.f32.gmra.mxu0 %v2969
      %v3088 = vpop.f32.mrf.mxu0
      %v3089 = vadd.f32 0.0, %v3088
      %v3090 = vpop.f32.mrf.mxu0
      %3091 = vmatprep.mubr.f32.mxu0 0.0
      %3092 = vmatmul.mubr.f32.gmra.mxu0 %v2970
      %v3093 = vpop.f32.mrf.mxu0
      %v3094 = vadd.f32 0.0, %v3093
      %v3095 = vpop.f32.mrf.mxu0
      %3096 = vmatprep.mubr.f32.mxu0 0.0
      %3097 = vmatmul.mubr.f32.gmra.mxu0 %v2971
      %v3098 = vpop.f32.mrf.mxu0
      %v3099 = vadd.f32 0.0, %v3098
      %v3100 = vpop.f32.mrf.mxu0
      %3101 = vmatprep.mubr.f32.mxu0 0.0
      %3102 = vmatmul.mubr.f32.gmra.mxu0 %v2972
      %v3103 = vpop.f32.mrf.mxu0
      %v3104 = vadd.f32 0.0, %v3103
      %v3105 = vpop.f32.mrf.mxu0
      %3106 = vmatprep.mubr.f32.mxu0 0.0
      %3107 = vmatmul.mubr.f32.gmra.mxu0 %v2973
      %v3108 = vpop.f32.mrf.mxu0
      %v3109 = vadd.f32 0.0, %v3108
      %v3110 = vpop.f32.mrf.mxu0
      %3111 = vmatprep.mubr.f32.mxu0 0.0
      %3112 = vmatmul.mubr.f32.gmra.mxu0 %v2974
      %v3113 = vpop.f32.mrf.mxu0
      %v3114 = vadd.f32 0.0, %v3113
      %v3115 = vpop.f32.mrf.mxu0
      %3116 = vmatprep.mubr.f32.mxu0 0.0
      %3117 = vmatmul.mubr.f32.gmra.mxu0 %v2975
      %v3118 = vpop.f32.mrf.mxu0
      %v3119 = vadd.f32 0.0, %v3118
      %v3120 = vpop.f32.mrf.mxu0
      %3121 = vmatprep.mubr.f32.mxu0 0.0
      %3122 = vmatmul.mubr.f32.gmra.mxu0 %v2976
      %v3123 = vpop.f32.mrf.mxu0
      %v3124 = vadd.f32 0.0, %v3123
      %v3125 = vpop.f32.mrf.mxu0
      %3126 = vmatprep.mubr.f32.mxu0 0.0
      %3127 = vmatmul.mubr.f32.gmra.mxu0 %v2977
      %v3128 = vpop.f32.mrf.mxu0
      %v3129 = vadd.f32 0.0, %v3128
      %v3130 = vpop.f32.mrf.mxu0
      %3131 = vmatprep.mubr.f32.mxu0 0.0
      %3132 = vmatmul.mubr.f32.gmra.mxu0 %v2978
      %v3133 = vpop.f32.mrf.mxu0
      %v3134 = vadd.f32 0.0, %v3133
      %v3135 = vpop.f32.mrf.mxu0
      %3136 = vmatprep.mubr.f32.mxu0 0.0
      %3137 = vmatmul.mubr.f32.gmra.mxu0 %v2979
      %v3138 = vpop.f32.mrf.mxu0
      %v3139 = vadd.f32 0.0, %v3138
      %v3140 = vpop.f32.mrf.mxu0
      %3141 = vmatprep.mubr.f32.mxu0 0.0
      %3142 = vmatmul.mubr.f32.gmra.mxu0 %v2980
      %v3143 = vpop.f32.mrf.mxu0
      %v3144 = vadd.f32 0.0, %v3143
      %v3145 = vpop.f32.mrf.mxu0
      %3146 = vmatprep.mubr.f32.mxu0 0.0
      %3147 = vmatmul.mubr.f32.gmra.mxu0 %v2981
      %v3148 = vpop.f32.mrf.mxu0
      %v3149 = vadd.f32 0.0, %v3148
      %v3150 = vpop.f32.mrf.mxu0
      %3151 = vmatprep.mubr.f32.mxu0 0.0
      %3152 = vmatmul.mubr.f32.gmra.mxu0 %v2982
      %v3153 = vpop.f32.mrf.mxu0
      %v3154 = vadd.f32 0.0, %v3153
      %v3155 = vpop.f32.mrf.mxu0
      %3156 = vmatprep.mubr.f32.mxu0 0.0
      %3157 = vmatmul.mubr.f32.gmra.mxu0 %v2983
      %v3158 = vpop.f32.mrf.mxu0
      %v3159 = vadd.f32 0.0, %v3158
      %v3160 = vpop.f32.mrf.mxu0
      %3161 = vmatprep.mubr.f32.mxu0 0.0
      %3162 = vmatmul.mubr.f32.gmra.mxu0 %v2984
      %v3163 = vpop.f32.mrf.mxu0
      %v3164 = vadd.f32 0.0, %v3163
      %v3165 = vpop.f32.mrf.mxu0
      %3166 = vmatprep.mubr.f32.mxu0 0.0
      %3167 = vmatmul.mubr.f32.gmra.mxu0 %v2985
      %v3168 = vpop.f32.mrf.mxu0
      %v3169 = vadd.f32 0.0, %v3168
      %v3170 = vpop.f32.mrf.mxu0
      %3171 = vmatprep.mubr.f32.mxu0 0.0
      %3172 = vmatmul.mubr.f32.gmra.mxu0 %v2986
      %v3173 = vpop.f32.mrf.mxu0
      %v3174 = vadd.f32 0.0, %v3173
      %v3175 = vpop.f32.mrf.mxu0
      %3176 = vmatprep.mubr.f32.mxu0 0.0
      %3177 = vmatmul.mubr.f32.gmra.mxu0 %v2987
      %v3178 = vpop.f32.mrf.mxu0
      %v3179 = vadd.f32 0.0, %v3178
      %v3180 = vpop.f32.mrf.mxu0
      %3181 = vmatprep.mubr.f32.mxu0 0.0
      %3182 = vmatmul.mubr.f32.gmra.mxu0 %v2988
      %v3183 = vpop.f32.mrf.mxu0
      %v3184 = vadd.f32 0.0, %v3183
      %v3185 = vpop.f32.mrf.mxu0
      %3186 = vmatprep.mubr.f32.mxu0 0.0
      %3187 = vmatmul.mubr.f32.gmra.mxu0 %v2989
      %v3188 = vpop.f32.mrf.mxu0
      %v3189 = vadd.f32 0.0, %v3188
      %v3190 = vpop.f32.mrf.mxu0
      %3191 = vmatprep.mubr.f32.mxu0 0.0
      %3192 = vmatmul.mubr.f32.gmra.mxu0 %v2990
      %v3193 = vpop.f32.mrf.mxu0
      %v3194 = vadd.f32 0.0, %v3193
      %v3195 = vpop.f32.mrf.mxu0
      %3196 = vmatprep.mubr.f32.mxu0 0.0
      %3197 = vmatmul.mubr.f32.gmra.mxu0 %v2991
      %v3198 = vpop.f32.mrf.mxu0
      %v3199 = vadd.f32 0.0, %v3198
      %v3200 = vpop.f32.mrf.mxu0
      %3201 = vmatprep.mubr.f32.mxu0 0.0
      %3202 = vmatmul.mubr.f32.gmra.mxu0 %v2992
      %v3203 = vpop.f32.mrf.mxu0
      %v3204 = vadd.f32 0.0, %v3203
      %v3205 = vpop.f32.mrf.mxu0
      %3206 = vmatprep.mubr.f32.mxu0 0.0
      %3207 = vmatmul.mubr.f32.gmra.mxu0 %v2993
      %v3208 = vpop.f32.mrf.mxu0
      %v3209 = vadd.f32 0.0, %v3208
      %v3210 = vpop.f32.mrf.mxu0
      %3211 = vmatprep.mubr.f32.mxu0 0.0
      %3212 = vmatmul.mubr.f32.gmra.mxu0 %v2994
      %v3213 = vpop.f32.mrf.mxu0
      %v3214 = vadd.f32 0.0, %v3213
      %v3215 = vpop.f32.mrf.mxu0
      %3216 = vmatprep.mubr.f32.mxu0 0.0
      %3217 = vmatmul.mubr.f32.gmra.mxu0 %v2995
      %v3218 = vpop.f32.mrf.mxu0
      %v3219 = vadd.f32 0.0, %v3218
      %v3220 = vpop.f32.mrf.mxu0
      %3221 = vmatprep.mubr.f32.mxu0 0.0
      %3222 = vmatmul.mubr.f32.gmra.mxu0 %v2996
      %v3223 = vpop.f32.mrf.mxu0
      %v3224 = vadd.f32 0.0, %v3223
      %v3225 = vpop.f32.mrf.mxu0
      %3226 = vmatprep.mubr.f32.mxu0 0.0
      %3227 = vmatmul.mubr.f32.gmra.mxu0 %v2997
      %v3228 = vpop.f32.mrf.mxu0
      %v3229 = vadd.f32 0.0, %v3228
      %v3230 = vpop.f32.mrf.mxu0
      %3231 = vmatprep.mubr.f32.mxu0 0.0
      %3232 = vmatmul.mubr.f32.gmra.mxu0 %v2998
      %v3233 = vpop.f32.mrf.mxu0
      %v3234 = vadd.f32 0.0, %v3233
      %v3235 = vpop.f32.mrf.mxu0
      %3236 = vmatprep.mubr.f32.mxu0 0.0
      %3237 = vmatmul.mubr.f32.gmra.mxu0 %v2999
      %v3238 = vpop.f32.mrf.mxu0
      %v3239 = vadd.f32 0.0, %v3238
      %v3240 = vpop.f32.mrf.mxu0
      %3241 = vmatprep.mubr.f32.mxu0 0.0
      %3242 = vmatmul.mubr.f32.gmra.mxu0 %v3000
      %v3243 = vpop.f32.mrf.mxu0
      %v3244 = vadd.f32 0.0, %v3243
      %v3245 = vpop.f32.mrf.mxu0
      %3246 = vmatprep.mubr.f32.mxu0 0.0
      %3247 = vmatmul.mubr.f32.gmra.mxu0 %v3001
      %v3248 = vpop.f32.mrf.mxu0
      %v3249 = vadd.f32 0.0, %v3248
      %v3250 = vpop.f32.mrf.mxu0
      %3251 = vmatprep.mubr.f32.mxu0 0.0
      %3252 = vmatmul.mubr.f32.gmra.mxu0 %v3002
      %v3253 = vpop.f32.mrf.mxu0
      %v3254 = vadd.f32 0.0, %v3253
      %v3255 = vpop.f32.mrf.mxu0
      %3256 = vmatprep.mubr.f32.mxu0 0.0
      %3257 = vmatmul.mubr.f32.gmra.mxu0 %v3003
      %v3258 = vpop.f32.mrf.mxu0
      %v3259 = vadd.f32 0.0, %v3258
      %v3260 = vpop.f32.mrf.mxu0
      %3261 = vmatprep.mubr.f32.mxu0 0.0
      %3262 = vmatmul.mubr.f32.gmra.mxu0 %v3004
      %v3263 = vpop.f32.mrf.mxu0
      %v3264 = vadd.f32 0.0, %v3263
      %v3265 = vpop.f32.mrf.mxu0
      %3266 = vdwg.mxu0
      %v3267 = vadd.f32 %v2933, %v3089
      %v3268 = vadd.f32 %v2934, %v3094
      %v3269 = vadd.f32 %v2935, %v3099
      %v3270 = vadd.f32 %v2936, %v3104
      %v3271 = vadd.f32 %v2937, %v3109
      %v3272 = vadd.f32 %v2938, %v3114
      %v3273 = vadd.f32 %v2939, %v3119
      %v3274 = vadd.f32 %v2940, %v3124
      %v3275 = vadd.f32 %v2941, %v3129
      %v3276 = vadd.f32 %v2942, %v3134
      %v3277 = vadd.f32 %v2943, %v3139
      %v3278 = vadd.f32 %v2944, %v3144
      %v3279 = vadd.f32 %v2945, %v3149
      %v3280 = vadd.f32 %v2946, %v3154
      %v3281 = vadd.f32 %v2947, %v3159
      %v3282 = vadd.f32 %v2948, %v3164
      %v3283 = vadd.f32 %v2949, %v3169
      %v3284 = vadd.f32 %v2950, %v3174
      %v3285 = vadd.f32 %v2951, %v3179
      %v3286 = vadd.f32 %v2952, %v3184
      %v3287 = vadd.f32 %v2953, %v3189
      %v3288 = vadd.f32 %v2954, %v3194
      %v3289 = vadd.f32 %v2955, %v3199
      %v3290 = vadd.f32 %v2956, %v3204
      %v3291 = vadd.f32 %v2957, %v3209
      %v3292 = vadd.f32 %v2958, %v3214
      %v3293 = vadd.f32 %v2959, %v3219
      %v3294 = vadd.f32 %v2960, %v3224
      %v3295 = vadd.f32 %v2961, %v3229
      %v3296 = vadd.f32 %v2962, %v3234
      %v3297 = vadd.f32 %v2963, %v3239
      %v3298 = vadd.f32 %v2964, %v3244
      %v3299 = vadd.f32 %v2965, %v3249
      %v3300 = vadd.f32 %v2966, %v3254
      %v3301 = vadd.f32 %v2967, %v3259
      %v3302 = vadd.f32 %v2968, %v3264
      %v3303 = vld [vmem:[#allocation2 + $0x24] sm:$0xff]
      %v3304 = vld [vmem:[#allocation2 + $0x2c] sm:$0xff]
      %v3305 = vld [vmem:[#allocation2 + $0x34] sm:$0xff]
      %v3306 = vld [vmem:[#allocation2 + $0x3c] sm:$0xff]
      %v3307 = vld [vmem:[#allocation2 + $0x44] sm:$0xff]
      %v3308 = vld [vmem:[#allocation2 + $0x4c] sm:$0xff]
      %v3309 = vld [vmem:[#allocation2 + $0x54] sm:$0xff]
      %v3310 = vld [vmem:[#allocation2 + $0x5c] sm:$0xff]
      %v3311 = vld [vmem:[#allocation2 + $0x64] sm:$0xff]
      %v3312 = vld [vmem:[#allocation2 + $0x6c] sm:$0xff]
      %v3313 = vld [vmem:[#allocation2 + $0x74] sm:$0xff]
      %v3314 = vld [vmem:[#allocation2 + $0x7c] sm:$0xff]
      %v3315 = vld [vmem:[#allocation2 + $0x84] sm:$0xff]
      %v3316 = vld [vmem:[#allocation2 + $0x8c] sm:$0xff]
      %v3317 = vld [vmem:[#allocation2 + $0x94] sm:$0xff]
      %v3318 = vld [vmem:[#allocation2 + $0x9c] sm:$0xff]
      %v3319 = vld [vmem:[#allocation2 + $0xa4] sm:$0xff]
      %v3320 = vld [vmem:[#allocation2 + $0xac] sm:$0xff]
      %v3321 = vld [vmem:[#allocation2 + $0xb4] sm:$0xff]
      %v3322 = vld [vmem:[#allocation2 + $0xbc] sm:$0xff]
      %v3323 = vld [vmem:[#allocation2 + $0xc4] sm:$0xff]
      %v3324 = vld [vmem:[#allocation2 + $0xcc] sm:$0xff]
      %v3325 = vld [vmem:[#allocation2 + $0xd4] sm:$0xff]
      %v3326 = vld [vmem:[#allocation2 + $0xdc] sm:$0xff]
      %v3327 = vld [vmem:[#allocation2 + $0xe4] sm:$0xff]
      %v3328 = vld [vmem:[#allocation2 + $0xec] sm:$0xff]
      %v3329 = vld [vmem:[#allocation2 + $0xf4] sm:$0xff]
      %v3330 = vld [vmem:[#allocation2 + $0xfc] sm:$0xff]
      %v3331 = vld [vmem:[#allocation2 + $0x104] sm:$0xff]
      %v3332 = vld [vmem:[#allocation2 + $0x10c] sm:$0xff]
      %v3333 = vld [vmem:[#allocation2 + $0x114] sm:$0xff]
      %v3334 = vld [vmem:[#allocation2 + $0x11c] sm:$0xff]
      %v3335 = vld [vmem:[#allocation2 + $0x124] sm:$0xff]
      %v3336 = vld [vmem:[#allocation2 + $0x12c] sm:$0xff]
      %v3337 = vld [vmem:[#allocation2 + $0x134] sm:$0xff]
      %v3338 = vld [vmem:[#allocation2 + $0x13c] sm:$0x3f]
      %s3339 = scalar_lea.vmem %s2, 768
      %v3340 = vld [vmem:[%s3339] sm:$0xff]
      %v3341 = vld [vmem:[%s3339 + $0x8] sm:$0xff]
      %v3342 = vld [vmem:[%s3339 + $0x10] sm:$0xff]
      %v3343 = vld [vmem:[%s3339 + $0x18] sm:$0xff]
      %v3344 = vld [vmem:[%s3339 + $0x20] sm:$0xff]
      %v3345 = vld [vmem:[%s3339 + $0x28] sm:$0xff]
      %v3346 = vld [vmem:[%s3339 + $0x30] sm:$0xff]
      %v3347 = vld [vmem:[%s3339 + $0x38] sm:$0xff]
      %v3348 = vld [vmem:[%s3339 + $0x40] sm:$0xff]
      %v3349 = vld [vmem:[%s3339 + $0x48] sm:$0xff]
      %v3350 = vld [vmem:[%s3339 + $0x50] sm:$0xff]
      %v3351 = vld [vmem:[%s3339 + $0x58] sm:$0xff]
      %v3352 = vld [vmem:[%s3339 + $0x60] sm:$0xff]
      %v3353 = vld [vmem:[%s3339 + $0x68] sm:$0xff]
      %v3354 = vld [vmem:[%s3339 + $0x70] sm:$0xff]
      %v3355 = vld [vmem:[%s3339 + $0x78] sm:$0xff]
      %3356 = vmatprep.subr.mxu0 0.0
      %3357 = vmatpush1.msra.mxu0 %v3355
      %3358 = vmatprep.subr.mxu0 0.0
      %3359 = vmatpush1.msra.mxu0 %v3354
      %3360 = vmatprep.subr.mxu0 0.0
      %3361 = vmatpush1.msra.mxu0 %v3353
      %3362 = vmatprep.subr.mxu0 0.0
      %3363 = vmatpush1.msra.mxu0 %v3352
      %3364 = vmatprep.subr.mxu0 0.0
      %3365 = vmatpush1.msra.mxu0 %v3351
      %3366 = vmatprep.subr.mxu0 0.0
      %3367 = vmatpush1.msra.mxu0 %v3350
      %3368 = vmatprep.subr.mxu0 0.0
      %3369 = vmatpush1.msra.mxu0 %v3349
      %3370 = vmatprep.subr.mxu0 0.0
      %3371 = vmatpush1.msra.mxu0 %v3348
      %3372 = vmatprep.subr.mxu0 0.0
      %3373 = vmatpush1.msra.mxu0 %v3347
      %3374 = vmatprep.subr.mxu0 0.0
      %3375 = vmatpush1.msra.mxu0 %v3346
      %3376 = vmatprep.subr.mxu0 0.0
      %3377 = vmatpush1.msra.mxu0 %v3345
      %3378 = vmatprep.subr.mxu0 0.0
      %3379 = vmatpush1.msra.mxu0 %v3344
      %3380 = vmatprep.subr.mxu0 0.0
      %3381 = vmatpush1.msra.mxu0 %v3343
      %3382 = vmatprep.subr.mxu0 0.0
      %3383 = vmatpush1.msra.mxu0 %v3342
      %3384 = vmatprep.subr.mxu0 0.0
      %3385 = vmatpush1.msra.mxu0 %v3341
      %3386 = vmatprep.subr.mxu0 0.0
      %3387 = vmatpush1.msra.mxu0 %v3340
      %3388 = vmatprep.subr.mxu0 0.0
      %3389 = vmatpush2.msra.mxu0 0.0
      %3390 = vmatprep.subr.mxu0 0.0
      %3391 = vmatpush2.msra.mxu0 0.0
      %3392 = vmatprep.subr.mxu0 0.0
      %3393 = vmatpush2.msra.mxu0 0.0
      %3394 = vmatprep.subr.mxu0 0.0
      %3395 = vmatpush2.msra.mxu0 0.0
      %3396 = vmatprep.subr.mxu0 0.0
      %3397 = vmatpush2.msra.mxu0 0.0
      %3398 = vmatprep.subr.mxu0 0.0
      %3399 = vmatpush2.msra.mxu0 0.0
      %3400 = vmatprep.subr.mxu0 0.0
      %3401 = vmatpush2.msra.mxu0 0.0
      %3402 = vmatprep.subr.mxu0 0.0
      %3403 = vmatpush2.msra.mxu0 0.0
      %3404 = vmatprep.subr.mxu0 0.0
      %3405 = vmatpush2.msra.mxu0 0.0
      %3406 = vmatprep.subr.mxu0 0.0
      %3407 = vmatpush2.msra.mxu0 0.0
      %3408 = vmatprep.subr.mxu0 0.0
      %3409 = vmatpush2.msra.mxu0 0.0
      %3410 = vmatprep.subr.mxu0 0.0
      %3411 = vmatpush2.msra.mxu0 0.0
      %3412 = vmatprep.subr.mxu0 0.0
      %3413 = vmatpush2.msra.mxu0 0.0
      %3414 = vmatprep.subr.mxu0 0.0
      %3415 = vmatpush2.msra.mxu0 0.0
      %3416 = vmatprep.subr.mxu0 0.0
      %3417 = vmatpush2.msra.mxu0 0.0
      %3418 = vmatprep.subr.mxu0 0.0
      %3419 = vmatpush2.msra.mxu0 0.0
      %3420 = vmatprep.mubr.f32.mxu0 0.0
      %3421 = vmatmul.mubr.f32.gmra.mxu0 %v3303
      %v3422 = vpop.f32.mrf.mxu0
      %v3423 = vadd.f32 0.0, %v3422
      %v3424 = vpop.f32.mrf.mxu0
      %3425 = vmatprep.mubr.f32.mxu0 0.0
      %3426 = vmatmul.mubr.f32.gmra.mxu0 %v3304
      %v3427 = vpop.f32.mrf.mxu0
      %v3428 = vadd.f32 0.0, %v3427
      %v3429 = vpop.f32.mrf.mxu0
      %3430 = vmatprep.mubr.f32.mxu0 0.0
      %3431 = vmatmul.mubr.f32.gmra.mxu0 %v3305
      %v3432 = vpop.f32.mrf.mxu0
      %v3433 = vadd.f32 0.0, %v3432
      %v3434 = vpop.f32.mrf.mxu0
      %3435 = vmatprep.mubr.f32.mxu0 0.0
      %3436 = vmatmul.mubr.f32.gmra.mxu0 %v3306
      %v3437 = vpop.f32.mrf.mxu0
      %v3438 = vadd.f32 0.0, %v3437
      %v3439 = vpop.f32.mrf.mxu0
      %3440 = vmatprep.mubr.f32.mxu0 0.0
      %3441 = vmatmul.mubr.f32.gmra.mxu0 %v3307
      %v3442 = vpop.f32.mrf.mxu0
      %v3443 = vadd.f32 0.0, %v3442
      %v3444 = vpop.f32.mrf.mxu0
      %3445 = vmatprep.mubr.f32.mxu0 0.0
      %3446 = vmatmul.mubr.f32.gmra.mxu0 %v3308
      %v3447 = vpop.f32.mrf.mxu0
      %v3448 = vadd.f32 0.0, %v3447
      %v3449 = vpop.f32.mrf.mxu0
      %3450 = vmatprep.mubr.f32.mxu0 0.0
      %3451 = vmatmul.mubr.f32.gmra.mxu0 %v3309
      %v3452 = vpop.f32.mrf.mxu0
      %v3453 = vadd.f32 0.0, %v3452
      %v3454 = vpop.f32.mrf.mxu0
      %3455 = vmatprep.mubr.f32.mxu0 0.0
      %3456 = vmatmul.mubr.f32.gmra.mxu0 %v3310
      %v3457 = vpop.f32.mrf.mxu0
      %v3458 = vadd.f32 0.0, %v3457
      %v3459 = vpop.f32.mrf.mxu0
      %3460 = vmatprep.mubr.f32.mxu0 0.0
      %3461 = vmatmul.mubr.f32.gmra.mxu0 %v3311
      %v3462 = vpop.f32.mrf.mxu0
      %v3463 = vadd.f32 0.0, %v3462
      %v3464 = vpop.f32.mrf.mxu0
      %3465 = vmatprep.mubr.f32.mxu0 0.0
      %3466 = vmatmul.mubr.f32.gmra.mxu0 %v3312
      %v3467 = vpop.f32.mrf.mxu0
      %v3468 = vadd.f32 0.0, %v3467
      %v3469 = vpop.f32.mrf.mxu0
      %3470 = vmatprep.mubr.f32.mxu0 0.0
      %3471 = vmatmul.mubr.f32.gmra.mxu0 %v3313
      %v3472 = vpop.f32.mrf.mxu0
      %v3473 = vadd.f32 0.0, %v3472
      %v3474 = vpop.f32.mrf.mxu0
      %3475 = vmatprep.mubr.f32.mxu0 0.0
      %3476 = vmatmul.mubr.f32.gmra.mxu0 %v3314
      %v3477 = vpop.f32.mrf.mxu0
      %v3478 = vadd.f32 0.0, %v3477
      %v3479 = vpop.f32.mrf.mxu0
      %3480 = vmatprep.mubr.f32.mxu0 0.0
      %3481 = vmatmul.mubr.f32.gmra.mxu0 %v3315
      %v3482 = vpop.f32.mrf.mxu0
      %v3483 = vadd.f32 0.0, %v3482
      %v3484 = vpop.f32.mrf.mxu0
      %3485 = vmatprep.mubr.f32.mxu0 0.0
      %3486 = vmatmul.mubr.f32.gmra.mxu0 %v3316
      %v3487 = vpop.f32.mrf.mxu0
      %v3488 = vadd.f32 0.0, %v3487
      %v3489 = vpop.f32.mrf.mxu0
      %3490 = vmatprep.mubr.f32.mxu0 0.0
      %3491 = vmatmul.mubr.f32.gmra.mxu0 %v3317
      %v3492 = vpop.f32.mrf.mxu0
      %v3493 = vadd.f32 0.0, %v3492
      %v3494 = vpop.f32.mrf.mxu0
      %3495 = vmatprep.mubr.f32.mxu0 0.0
      %3496 = vmatmul.mubr.f32.gmra.mxu0 %v3318
      %v3497 = vpop.f32.mrf.mxu0
      %v3498 = vadd.f32 0.0, %v3497
      %v3499 = vpop.f32.mrf.mxu0
      %3500 = vmatprep.mubr.f32.mxu0 0.0
      %3501 = vmatmul.mubr.f32.gmra.mxu0 %v3319
      %v3502 = vpop.f32.mrf.mxu0
      %v3503 = vadd.f32 0.0, %v3502
      %v3504 = vpop.f32.mrf.mxu0
      %3505 = vmatprep.mubr.f32.mxu0 0.0
      %3506 = vmatmul.mubr.f32.gmra.mxu0 %v3320
      %v3507 = vpop.f32.mrf.mxu0
      %v3508 = vadd.f32 0.0, %v3507
      %v3509 = vpop.f32.mrf.mxu0
      %3510 = vmatprep.mubr.f32.mxu0 0.0
      %3511 = vmatmul.mubr.f32.gmra.mxu0 %v3321
      %v3512 = vpop.f32.mrf.mxu0
      %v3513 = vadd.f32 0.0, %v3512
      %v3514 = vpop.f32.mrf.mxu0
      %3515 = vmatprep.mubr.f32.mxu0 0.0
      %3516 = vmatmul.mubr.f32.gmra.mxu0 %v3322
      %v3517 = vpop.f32.mrf.mxu0
      %v3518 = vadd.f32 0.0, %v3517
      %v3519 = vpop.f32.mrf.mxu0
      %3520 = vmatprep.mubr.f32.mxu0 0.0
      %3521 = vmatmul.mubr.f32.gmra.mxu0 %v3323
      %v3522 = vpop.f32.mrf.mxu0
      %v3523 = vadd.f32 0.0, %v3522
      %v3524 = vpop.f32.mrf.mxu0
      %3525 = vmatprep.mubr.f32.mxu0 0.0
      %3526 = vmatmul.mubr.f32.gmra.mxu0 %v3324
      %v3527 = vpop.f32.mrf.mxu0
      %v3528 = vadd.f32 0.0, %v3527
      %v3529 = vpop.f32.mrf.mxu0
      %3530 = vmatprep.mubr.f32.mxu0 0.0
      %3531 = vmatmul.mubr.f32.gmra.mxu0 %v3325
      %v3532 = vpop.f32.mrf.mxu0
      %v3533 = vadd.f32 0.0, %v3532
      %v3534 = vpop.f32.mrf.mxu0
      %3535 = vmatprep.mubr.f32.mxu0 0.0
      %3536 = vmatmul.mubr.f32.gmra.mxu0 %v3326
      %v3537 = vpop.f32.mrf.mxu0
      %v3538 = vadd.f32 0.0, %v3537
      %v3539 = vpop.f32.mrf.mxu0
      %3540 = vmatprep.mubr.f32.mxu0 0.0
      %3541 = vmatmul.mubr.f32.gmra.mxu0 %v3327
      %v3542 = vpop.f32.mrf.mxu0
      %v3543 = vadd.f32 0.0, %v3542
      %v3544 = vpop.f32.mrf.mxu0
      %3545 = vmatprep.mubr.f32.mxu0 0.0
      %3546 = vmatmul.mubr.f32.gmra.mxu0 %v3328
      %v3547 = vpop.f32.mrf.mxu0
      %v3548 = vadd.f32 0.0, %v3547
      %v3549 = vpop.f32.mrf.mxu0
      %3550 = vmatprep.mubr.f32.mxu0 0.0
      %3551 = vmatmul.mubr.f32.gmra.mxu0 %v3329
      %v3552 = vpop.f32.mrf.mxu0
      %v3553 = vadd.f32 0.0, %v3552
      %v3554 = vpop.f32.mrf.mxu0
      %3555 = vmatprep.mubr.f32.mxu0 0.0
      %3556 = vmatmul.mubr.f32.gmra.mxu0 %v3330
      %v3557 = vpop.f32.mrf.mxu0
      %v3558 = vadd.f32 0.0, %v3557
      %v3559 = vpop.f32.mrf.mxu0
      %3560 = vmatprep.mubr.f32.mxu0 0.0
      %3561 = vmatmul.mubr.f32.gmra.mxu0 %v3331
      %v3562 = vpop.f32.mrf.mxu0
      %v3563 = vadd.f32 0.0, %v3562
      %v3564 = vpop.f32.mrf.mxu0
      %3565 = vmatprep.mubr.f32.mxu0 0.0
      %3566 = vmatmul.mubr.f32.gmra.mxu0 %v3332
      %v3567 = vpop.f32.mrf.mxu0
      %v3568 = vadd.f32 0.0, %v3567
      %v3569 = vpop.f32.mrf.mxu0
      %3570 = vmatprep.mubr.f32.mxu0 0.0
      %3571 = vmatmul.mubr.f32.gmra.mxu0 %v3333
      %v3572 = vpop.f32.mrf.mxu0
      %v3573 = vadd.f32 0.0, %v3572
      %v3574 = vpop.f32.mrf.mxu0
      %3575 = vmatprep.mubr.f32.mxu0 0.0
      %3576 = vmatmul.mubr.f32.gmra.mxu0 %v3334
      %v3577 = vpop.f32.mrf.mxu0
      %v3578 = vadd.f32 0.0, %v3577
      %v3579 = vpop.f32.mrf.mxu0
      %3580 = vmatprep.mubr.f32.mxu0 0.0
      %3581 = vmatmul.mubr.f32.gmra.mxu0 %v3335
      %v3582 = vpop.f32.mrf.mxu0
      %v3583 = vadd.f32 0.0, %v3582
      %v3584 = vpop.f32.mrf.mxu0
      %3585 = vmatprep.mubr.f32.mxu0 0.0
      %3586 = vmatmul.mubr.f32.gmra.mxu0 %v3336
      %v3587 = vpop.f32.mrf.mxu0
      %v3588 = vadd.f32 0.0, %v3587
      %v3589 = vpop.f32.mrf.mxu0
      %3590 = vmatprep.mubr.f32.mxu0 0.0
      %3591 = vmatmul.mubr.f32.gmra.mxu0 %v3337
      %v3592 = vpop.f32.mrf.mxu0
      %v3593 = vadd.f32 0.0, %v3592
      %v3594 = vpop.f32.mrf.mxu0
      %3595 = vmatprep.mubr.f32.mxu0 0.0
      %3596 = vmatmul.mubr.f32.gmra.mxu0 %v3338
      %v3597 = vpop.f32.mrf.mxu0
      %v3598 = vadd.f32 0.0, %v3597
      %v3599 = vpop.f32.mrf.mxu0
      %3600 = vdwg.mxu0
      %v3601 = vadd.f32 %v3267, %v3423
      %v3602 = vadd.f32 %v3268, %v3428
      %v3603 = vadd.f32 %v3269, %v3433
      %v3604 = vadd.f32 %v3270, %v3438
      %v3605 = vadd.f32 %v3271, %v3443
      %v3606 = vadd.f32 %v3272, %v3448
      %v3607 = vadd.f32 %v3273, %v3453
      %v3608 = vadd.f32 %v3274, %v3458
      %v3609 = vadd.f32 %v3275, %v3463
      %v3610 = vadd.f32 %v3276, %v3468
      %v3611 = vadd.f32 %v3277, %v3473
      %v3612 = vadd.f32 %v3278, %v3478
      %v3613 = vadd.f32 %v3279, %v3483
      %v3614 = vadd.f32 %v3280, %v3488
      %v3615 = vadd.f32 %v3281, %v3493
      %v3616 = vadd.f32 %v3282, %v3498
      %v3617 = vadd.f32 %v3283, %v3503
      %v3618 = vadd.f32 %v3284, %v3508
      %v3619 = vadd.f32 %v3285, %v3513
      %v3620 = vadd.f32 %v3286, %v3518
      %v3621 = vadd.f32 %v3287, %v3523
      %v3622 = vadd.f32 %v3288, %v3528
      %v3623 = vadd.f32 %v3289, %v3533
      %v3624 = vadd.f32 %v3290, %v3538
      %v3625 = vadd.f32 %v3291, %v3543
      %v3626 = vadd.f32 %v3292, %v3548
      %v3627 = vadd.f32 %v3293, %v3553
      %v3628 = vadd.f32 %v3294, %v3558
      %v3629 = vadd.f32 %v3295, %v3563
      %v3630 = vadd.f32 %v3296, %v3568
      %v3631 = vadd.f32 %v3297, %v3573
      %v3632 = vadd.f32 %v3298, %v3578
      %v3633 = vadd.f32 %v3299, %v3583
      %v3634 = vadd.f32 %v3300, %v3588
      %v3635 = vadd.f32 %v3301, %v3593
      %v3636 = vadd.f32 %v3302, %v3598
      %v3637 = vld [vmem:[#allocation2 + $0x25] sm:$0xff]
      %v3638 = vld [vmem:[#allocation2 + $0x2d] sm:$0xff]
      %v3639 = vld [vmem:[#allocation2 + $0x35] sm:$0xff]
      %v3640 = vld [vmem:[#allocation2 + $0x3d] sm:$0xff]
      %v3641 = vld [vmem:[#allocation2 + $0x45] sm:$0xff]
      %v3642 = vld [vmem:[#allocation2 + $0x4d] sm:$0xff]
      %v3643 = vld [vmem:[#allocation2 + $0x55] sm:$0xff]
      %v3644 = vld [vmem:[#allocation2 + $0x5d] sm:$0xff]
      %v3645 = vld [vmem:[#allocation2 + $0x65] sm:$0xff]
      %v3646 = vld [vmem:[#allocation2 + $0x6d] sm:$0xff]
      %v3647 = vld [vmem:[#allocation2 + $0x75] sm:$0xff]
      %v3648 = vld [vmem:[#allocation2 + $0x7d] sm:$0xff]
      %v3649 = vld [vmem:[#allocation2 + $0x85] sm:$0xff]
      %v3650 = vld [vmem:[#allocation2 + $0x8d] sm:$0xff]
      %v3651 = vld [vmem:[#allocation2 + $0x95] sm:$0xff]
      %v3652 = vld [vmem:[#allocation2 + $0x9d] sm:$0xff]
      %v3653 = vld [vmem:[#allocation2 + $0xa5] sm:$0xff]
      %v3654 = vld [vmem:[#allocation2 + $0xad] sm:$0xff]
      %v3655 = vld [vmem:[#allocation2 + $0xb5] sm:$0xff]
      %v3656 = vld [vmem:[#allocation2 + $0xbd] sm:$0xff]
      %v3657 = vld [vmem:[#allocation2 + $0xc5] sm:$0xff]
      %v3658 = vld [vmem:[#allocation2 + $0xcd] sm:$0xff]
      %v3659 = vld [vmem:[#allocation2 + $0xd5] sm:$0xff]
      %v3660 = vld [vmem:[#allocation2 + $0xdd] sm:$0xff]
      %v3661 = vld [vmem:[#allocation2 + $0xe5] sm:$0xff]
      %v3662 = vld [vmem:[#allocation2 + $0xed] sm:$0xff]
      %v3663 = vld [vmem:[#allocation2 + $0xf5] sm:$0xff]
      %v3664 = vld [vmem:[#allocation2 + $0xfd] sm:$0xff]
      %v3665 = vld [vmem:[#allocation2 + $0x105] sm:$0xff]
      %v3666 = vld [vmem:[#allocation2 + $0x10d] sm:$0xff]
      %v3667 = vld [vmem:[#allocation2 + $0x115] sm:$0xff]
      %v3668 = vld [vmem:[#allocation2 + $0x11d] sm:$0xff]
      %v3669 = vld [vmem:[#allocation2 + $0x125] sm:$0xff]
      %v3670 = vld [vmem:[#allocation2 + $0x12d] sm:$0xff]
      %v3671 = vld [vmem:[#allocation2 + $0x135] sm:$0xff]
      %v3672 = vld [vmem:[#allocation2 + $0x13d] sm:$0x3f]
      %s3673 = scalar_lea.vmem %s2, 896
      %v3674 = vld [vmem:[%s3673] sm:$0xff]
      %v3675 = vld [vmem:[%s3673 + $0x8] sm:$0xff]
      %v3676 = vld [vmem:[%s3673 + $0x10] sm:$0xff]
      %v3677 = vld [vmem:[%s3673 + $0x18] sm:$0xff]
      %v3678 = vld [vmem:[%s3673 + $0x20] sm:$0xff]
      %v3679 = vld [vmem:[%s3673 + $0x28] sm:$0xff]
      %v3680 = vld [vmem:[%s3673 + $0x30] sm:$0xff]
      %v3681 = vld [vmem:[%s3673 + $0x38] sm:$0xff]
      %v3682 = vld [vmem:[%s3673 + $0x40] sm:$0xff]
      %v3683 = vld [vmem:[%s3673 + $0x48] sm:$0xff]
      %v3684 = vld [vmem:[%s3673 + $0x50] sm:$0xff]
      %v3685 = vld [vmem:[%s3673 + $0x58] sm:$0xff]
      %v3686 = vld [vmem:[%s3673 + $0x60] sm:$0xff]
      %v3687 = vld [vmem:[%s3673 + $0x68] sm:$0xff]
      %v3688 = vld [vmem:[%s3673 + $0x70] sm:$0xff]
      %v3689 = vld [vmem:[%s3673 + $0x78] sm:$0xff]
      %3690 = vmatprep.subr.mxu0 0.0
      %3691 = vmatpush1.msra.mxu0 %v3689
      %3692 = vmatprep.subr.mxu0 0.0
      %3693 = vmatpush1.msra.mxu0 %v3688
      %3694 = vmatprep.subr.mxu0 0.0
      %3695 = vmatpush1.msra.mxu0 %v3687
      %3696 = vmatprep.subr.mxu0 0.0
      %3697 = vmatpush1.msra.mxu0 %v3686
      %3698 = vmatprep.subr.mxu0 0.0
      %3699 = vmatpush1.msra.mxu0 %v3685
      %3700 = vmatprep.subr.mxu0 0.0
      %3701 = vmatpush1.msra.mxu0 %v3684
      %3702 = vmatprep.subr.mxu0 0.0
      %3703 = vmatpush1.msra.mxu0 %v3683
      %3704 = vmatprep.subr.mxu0 0.0
      %3705 = vmatpush1.msra.mxu0 %v3682
      %3706 = vmatprep.subr.mxu0 0.0
      %3707 = vmatpush1.msra.mxu0 %v3681
      %3708 = vmatprep.subr.mxu0 0.0
      %3709 = vmatpush1.msra.mxu0 %v3680
      %3710 = vmatprep.subr.mxu0 0.0
      %3711 = vmatpush1.msra.mxu0 %v3679
      %3712 = vmatprep.subr.mxu0 0.0
      %3713 = vmatpush1.msra.mxu0 %v3678
      %3714 = vmatprep.subr.mxu0 0.0
      %3715 = vmatpush1.msra.mxu0 %v3677
      %3716 = vmatprep.subr.mxu0 0.0
      %3717 = vmatpush1.msra.mxu0 %v3676
      %3718 = vmatprep.subr.mxu0 0.0
      %3719 = vmatpush1.msra.mxu0 %v3675
      %3720 = vmatprep.subr.mxu0 0.0
      %3721 = vmatpush1.msra.mxu0 %v3674
      %3722 = vmatprep.subr.mxu0 0.0
      %3723 = vmatpush2.msra.mxu0 0.0
      %3724 = vmatprep.subr.mxu0 0.0
      %3725 = vmatpush2.msra.mxu0 0.0
      %3726 = vmatprep.subr.mxu0 0.0
      %3727 = vmatpush2.msra.mxu0 0.0
      %3728 = vmatprep.subr.mxu0 0.0
      %3729 = vmatpush2.msra.mxu0 0.0
      %3730 = vmatprep.subr.mxu0 0.0
      %3731 = vmatpush2.msra.mxu0 0.0
      %3732 = vmatprep.subr.mxu0 0.0
      %3733 = vmatpush2.msra.mxu0 0.0
      %3734 = vmatprep.subr.mxu0 0.0
      %3735 = vmatpush2.msra.mxu0 0.0
      %3736 = vmatprep.subr.mxu0 0.0
      %3737 = vmatpush2.msra.mxu0 0.0
      %3738 = vmatprep.subr.mxu0 0.0
      %3739 = vmatpush2.msra.mxu0 0.0
      %3740 = vmatprep.subr.mxu0 0.0
      %3741 = vmatpush2.msra.mxu0 0.0
      %3742 = vmatprep.subr.mxu0 0.0
      %3743 = vmatpush2.msra.mxu0 0.0
      %3744 = vmatprep.subr.mxu0 0.0
      %3745 = vmatpush2.msra.mxu0 0.0
      %3746 = vmatprep.subr.mxu0 0.0
      %3747 = vmatpush2.msra.mxu0 0.0
      %3748 = vmatprep.subr.mxu0 0.0
      %3749 = vmatpush2.msra.mxu0 0.0
      %3750 = vmatprep.subr.mxu0 0.0
      %3751 = vmatpush2.msra.mxu0 0.0
      %3752 = vmatprep.subr.mxu0 0.0
      %3753 = vmatpush2.msra.mxu0 0.0
      %3754 = vmatprep.mubr.f32.mxu0 0.0
      %3755 = vmatmul.mubr.f32.gmra.mxu0 %v3637
      %v3756 = vpop.f32.mrf.mxu0
      %v3757 = vadd.f32 0.0, %v3756
      %v3758 = vpop.f32.mrf.mxu0
      %3759 = vmatprep.mubr.f32.mxu0 0.0
      %3760 = vmatmul.mubr.f32.gmra.mxu0 %v3638
      %v3761 = vpop.f32.mrf.mxu0
      %v3762 = vadd.f32 0.0, %v3761
      %v3763 = vpop.f32.mrf.mxu0
      %3764 = vmatprep.mubr.f32.mxu0 0.0
      %3765 = vmatmul.mubr.f32.gmra.mxu0 %v3639
      %v3766 = vpop.f32.mrf.mxu0
      %v3767 = vadd.f32 0.0, %v3766
      %v3768 = vpop.f32.mrf.mxu0
      %3769 = vmatprep.mubr.f32.mxu0 0.0
      %3770 = vmatmul.mubr.f32.gmra.mxu0 %v3640
      %v3771 = vpop.f32.mrf.mxu0
      %v3772 = vadd.f32 0.0, %v3771
      %v3773 = vpop.f32.mrf.mxu0
      %3774 = vmatprep.mubr.f32.mxu0 0.0
      %3775 = vmatmul.mubr.f32.gmra.mxu0 %v3641
      %v3776 = vpop.f32.mrf.mxu0
      %v3777 = vadd.f32 0.0, %v3776
      %v3778 = vpop.f32.mrf.mxu0
      %3779 = vmatprep.mubr.f32.mxu0 0.0
      %3780 = vmatmul.mubr.f32.gmra.mxu0 %v3642
      %v3781 = vpop.f32.mrf.mxu0
      %v3782 = vadd.f32 0.0, %v3781
      %v3783 = vpop.f32.mrf.mxu0
      %3784 = vmatprep.mubr.f32.mxu0 0.0
      %3785 = vmatmul.mubr.f32.gmra.mxu0 %v3643
      %v3786 = vpop.f32.mrf.mxu0
      %v3787 = vadd.f32 0.0, %v3786
      %v3788 = vpop.f32.mrf.mxu0
      %3789 = vmatprep.mubr.f32.mxu0 0.0
      %3790 = vmatmul.mubr.f32.gmra.mxu0 %v3644
      %v3791 = vpop.f32.mrf.mxu0
      %v3792 = vadd.f32 0.0, %v3791
      %v3793 = vpop.f32.mrf.mxu0
      %3794 = vmatprep.mubr.f32.mxu0 0.0
      %3795 = vmatmul.mubr.f32.gmra.mxu0 %v3645
      %v3796 = vpop.f32.mrf.mxu0
      %v3797 = vadd.f32 0.0, %v3796
      %v3798 = vpop.f32.mrf.mxu0
      %3799 = vmatprep.mubr.f32.mxu0 0.0
      %3800 = vmatmul.mubr.f32.gmra.mxu0 %v3646
      %v3801 = vpop.f32.mrf.mxu0
      %v3802 = vadd.f32 0.0, %v3801
      %v3803 = vpop.f32.mrf.mxu0
      %3804 = vmatprep.mubr.f32.mxu0 0.0
      %3805 = vmatmul.mubr.f32.gmra.mxu0 %v3647
      %v3806 = vpop.f32.mrf.mxu0
      %v3807 = vadd.f32 0.0, %v3806
      %v3808 = vpop.f32.mrf.mxu0
      %3809 = vmatprep.mubr.f32.mxu0 0.0
      %3810 = vmatmul.mubr.f32.gmra.mxu0 %v3648
      %v3811 = vpop.f32.mrf.mxu0
      %v3812 = vadd.f32 0.0, %v3811
      %v3813 = vpop.f32.mrf.mxu0
      %3814 = vmatprep.mubr.f32.mxu0 0.0
      %3815 = vmatmul.mubr.f32.gmra.mxu0 %v3649
      %v3816 = vpop.f32.mrf.mxu0
      %v3817 = vadd.f32 0.0, %v3816
      %v3818 = vpop.f32.mrf.mxu0
      %3819 = vmatprep.mubr.f32.mxu0 0.0
      %3820 = vmatmul.mubr.f32.gmra.mxu0 %v3650
      %v3821 = vpop.f32.mrf.mxu0
      %v3822 = vadd.f32 0.0, %v3821
      %v3823 = vpop.f32.mrf.mxu0
      %3824 = vmatprep.mubr.f32.mxu0 0.0
      %3825 = vmatmul.mubr.f32.gmra.mxu0 %v3651
      %v3826 = vpop.f32.mrf.mxu0
      %v3827 = vadd.f32 0.0, %v3826
      %v3828 = vpop.f32.mrf.mxu0
      %3829 = vmatprep.mubr.f32.mxu0 0.0
      %3830 = vmatmul.mubr.f32.gmra.mxu0 %v3652
      %v3831 = vpop.f32.mrf.mxu0
      %v3832 = vadd.f32 0.0, %v3831
      %v3833 = vpop.f32.mrf.mxu0
      %3834 = vmatprep.mubr.f32.mxu0 0.0
      %3835 = vmatmul.mubr.f32.gmra.mxu0 %v3653
      %v3836 = vpop.f32.mrf.mxu0
      %v3837 = vadd.f32 0.0, %v3836
      %v3838 = vpop.f32.mrf.mxu0
      %3839 = vmatprep.mubr.f32.mxu0 0.0
      %3840 = vmatmul.mubr.f32.gmra.mxu0 %v3654
      %v3841 = vpop.f32.mrf.mxu0
      %v3842 = vadd.f32 0.0, %v3841
      %v3843 = vpop.f32.mrf.mxu0
      %3844 = vmatprep.mubr.f32.mxu0 0.0
      %3845 = vmatmul.mubr.f32.gmra.mxu0 %v3655
      %v3846 = vpop.f32.mrf.mxu0
      %v3847 = vadd.f32 0.0, %v3846
      %v3848 = vpop.f32.mrf.mxu0
      %3849 = vmatprep.mubr.f32.mxu0 0.0
      %3850 = vmatmul.mubr.f32.gmra.mxu0 %v3656
      %v3851 = vpop.f32.mrf.mxu0
      %v3852 = vadd.f32 0.0, %v3851
      %v3853 = vpop.f32.mrf.mxu0
      %3854 = vmatprep.mubr.f32.mxu0 0.0
      %3855 = vmatmul.mubr.f32.gmra.mxu0 %v3657
      %v3856 = vpop.f32.mrf.mxu0
      %v3857 = vadd.f32 0.0, %v3856
      %v3858 = vpop.f32.mrf.mxu0
      %3859 = vmatprep.mubr.f32.mxu0 0.0
      %3860 = vmatmul.mubr.f32.gmra.mxu0 %v3658
      %v3861 = vpop.f32.mrf.mxu0
      %v3862 = vadd.f32 0.0, %v3861
      %v3863 = vpop.f32.mrf.mxu0
      %3864 = vmatprep.mubr.f32.mxu0 0.0
      %3865 = vmatmul.mubr.f32.gmra.mxu0 %v3659
      %v3866 = vpop.f32.mrf.mxu0
      %v3867 = vadd.f32 0.0, %v3866
      %v3868 = vpop.f32.mrf.mxu0
      %3869 = vmatprep.mubr.f32.mxu0 0.0
      %3870 = vmatmul.mubr.f32.gmra.mxu0 %v3660
      %v3871 = vpop.f32.mrf.mxu0
      %v3872 = vadd.f32 0.0, %v3871
      %v3873 = vpop.f32.mrf.mxu0
      %3874 = vmatprep.mubr.f32.mxu0 0.0
      %3875 = vmatmul.mubr.f32.gmra.mxu0 %v3661
      %v3876 = vpop.f32.mrf.mxu0
      %v3877 = vadd.f32 0.0, %v3876
      %v3878 = vpop.f32.mrf.mxu0
      %3879 = vmatprep.mubr.f32.mxu0 0.0
      %3880 = vmatmul.mubr.f32.gmra.mxu0 %v3662
      %v3881 = vpop.f32.mrf.mxu0
      %v3882 = vadd.f32 0.0, %v3881
      %v3883 = vpop.f32.mrf.mxu0
      %3884 = vmatprep.mubr.f32.mxu0 0.0
      %3885 = vmatmul.mubr.f32.gmra.mxu0 %v3663
      %v3886 = vpop.f32.mrf.mxu0
      %v3887 = vadd.f32 0.0, %v3886
      %v3888 = vpop.f32.mrf.mxu0
      %3889 = vmatprep.mubr.f32.mxu0 0.0
      %3890 = vmatmul.mubr.f32.gmra.mxu0 %v3664
      %v3891 = vpop.f32.mrf.mxu0
      %v3892 = vadd.f32 0.0, %v3891
      %v3893 = vpop.f32.mrf.mxu0
      %3894 = vmatprep.mubr.f32.mxu0 0.0
      %3895 = vmatmul.mubr.f32.gmra.mxu0 %v3665
      %v3896 = vpop.f32.mrf.mxu0
      %v3897 = vadd.f32 0.0, %v3896
      %v3898 = vpop.f32.mrf.mxu0
      %3899 = vmatprep.mubr.f32.mxu0 0.0
      %3900 = vmatmul.mubr.f32.gmra.mxu0 %v3666
      %v3901 = vpop.f32.mrf.mxu0
      %v3902 = vadd.f32 0.0, %v3901
      %v3903 = vpop.f32.mrf.mxu0
      %3904 = vmatprep.mubr.f32.mxu0 0.0
      %3905 = vmatmul.mubr.f32.gmra.mxu0 %v3667
      %v3906 = vpop.f32.mrf.mxu0
      %v3907 = vadd.f32 0.0, %v3906
      %v3908 = vpop.f32.mrf.mxu0
      %3909 = vmatprep.mubr.f32.mxu0 0.0
      %3910 = vmatmul.mubr.f32.gmra.mxu0 %v3668
      %v3911 = vpop.f32.mrf.mxu0
      %v3912 = vadd.f32 0.0, %v3911
      %v3913 = vpop.f32.mrf.mxu0
      %3914 = vmatprep.mubr.f32.mxu0 0.0
      %3915 = vmatmul.mubr.f32.gmra.mxu0 %v3669
      %v3916 = vpop.f32.mrf.mxu0
      %v3917 = vadd.f32 0.0, %v3916
      %v3918 = vpop.f32.mrf.mxu0
      %3919 = vmatprep.mubr.f32.mxu0 0.0
      %3920 = vmatmul.mubr.f32.gmra.mxu0 %v3670
      %v3921 = vpop.f32.mrf.mxu0
      %v3922 = vadd.f32 0.0, %v3921
      %v3923 = vpop.f32.mrf.mxu0
      %3924 = vmatprep.mubr.f32.mxu0 0.0
      %3925 = vmatmul.mubr.f32.gmra.mxu0 %v3671
      %v3926 = vpop.f32.mrf.mxu0
      %v3927 = vadd.f32 0.0, %v3926
      %v3928 = vpop.f32.mrf.mxu0
      %3929 = vmatprep.mubr.f32.mxu0 0.0
      %3930 = vmatmul.mubr.f32.gmra.mxu0 %v3672
      %v3931 = vpop.f32.mrf.mxu0
      %v3932 = vadd.f32 0.0, %v3931
      %v3933 = vpop.f32.mrf.mxu0
      %3934 = vdwg.mxu0
      %v3935 = vadd.f32 %v3601, %v3757
      %v3936 = vadd.f32 %v3602, %v3762
      %v3937 = vadd.f32 %v3603, %v3767
      %v3938 = vadd.f32 %v3604, %v3772
      %v3939 = vadd.f32 %v3605, %v3777
      %v3940 = vadd.f32 %v3606, %v3782
      %v3941 = vadd.f32 %v3607, %v3787
      %v3942 = vadd.f32 %v3608, %v3792
      %v3943 = vadd.f32 %v3609, %v3797
      %v3944 = vadd.f32 %v3610, %v3802
      %v3945 = vadd.f32 %v3611, %v3807
      %v3946 = vadd.f32 %v3612, %v3812
      %v3947 = vadd.f32 %v3613, %v3817
      %v3948 = vadd.f32 %v3614, %v3822
      %v3949 = vadd.f32 %v3615, %v3827
      %v3950 = vadd.f32 %v3616, %v3832
      %v3951 = vadd.f32 %v3617, %v3837
      %v3952 = vadd.f32 %v3618, %v3842
      %v3953 = vadd.f32 %v3619, %v3847
      %v3954 = vadd.f32 %v3620, %v3852
      %v3955 = vadd.f32 %v3621, %v3857
      %v3956 = vadd.f32 %v3622, %v3862
      %v3957 = vadd.f32 %v3623, %v3867
      %v3958 = vadd.f32 %v3624, %v3872
      %v3959 = vadd.f32 %v3625, %v3877
      %v3960 = vadd.f32 %v3626, %v3882
      %v3961 = vadd.f32 %v3627, %v3887
      %v3962 = vadd.f32 %v3628, %v3892
      %v3963 = vadd.f32 %v3629, %v3897
      %v3964 = vadd.f32 %v3630, %v3902
      %v3965 = vadd.f32 %v3631, %v3907
      %v3966 = vadd.f32 %v3632, %v3912
      %v3967 = vadd.f32 %v3633, %v3917
      %v3968 = vadd.f32 %v3634, %v3922
      %v3969 = vadd.f32 %v3635, %v3927
      %v3970 = vadd.f32 %v3636, %v3932
      %v3971 = vld [vmem:[#allocation2 + $0x26] sm:$0xff]
      %v3972 = vld [vmem:[#allocation2 + $0x2e] sm:$0xff]
      %v3973 = vld [vmem:[#allocation2 + $0x36] sm:$0xff]
      %v3974 = vld [vmem:[#allocation2 + $0x3e] sm:$0xff]
      %v3975 = vld [vmem:[#allocation2 + $0x46] sm:$0xff]
      %v3976 = vld [vmem:[#allocation2 + $0x4e] sm:$0xff]
      %v3977 = vld [vmem:[#allocation2 + $0x56] sm:$0xff]
      %v3978 = vld [vmem:[#allocation2 + $0x5e] sm:$0xff]
      %v3979 = vld [vmem:[#allocation2 + $0x66] sm:$0xff]
      %v3980 = vld [vmem:[#allocation2 + $0x6e] sm:$0xff]
      %v3981 = vld [vmem:[#allocation2 + $0x76] sm:$0xff]
      %v3982 = vld [vmem:[#allocation2 + $0x7e] sm:$0xff]
      %v3983 = vld [vmem:[#allocation2 + $0x86] sm:$0xff]
      %v3984 = vld [vmem:[#allocation2 + $0x8e] sm:$0xff]
      %v3985 = vld [vmem:[#allocation2 + $0x96] sm:$0xff]
      %v3986 = vld [vmem:[#allocation2 + $0x9e] sm:$0xff]
      %v3987 = vld [vmem:[#allocation2 + $0xa6] sm:$0xff]
      %v3988 = vld [vmem:[#allocation2 + $0xae] sm:$0xff]
      %v3989 = vld [vmem:[#allocation2 + $0xb6] sm:$0xff]
      %v3990 = vld [vmem:[#allocation2 + $0xbe] sm:$0xff]
      %v3991 = vld [vmem:[#allocation2 + $0xc6] sm:$0xff]
      %v3992 = vld [vmem:[#allocation2 + $0xce] sm:$0xff]
      %v3993 = vld [vmem:[#allocation2 + $0xd6] sm:$0xff]
      %v3994 = vld [vmem:[#allocation2 + $0xde] sm:$0xff]
      %v3995 = vld [vmem:[#allocation2 + $0xe6] sm:$0xff]
      %v3996 = vld [vmem:[#allocation2 + $0xee] sm:$0xff]
      %v3997 = vld [vmem:[#allocation2 + $0xf6] sm:$0xff]
      %v3998 = vld [vmem:[#allocation2 + $0xfe] sm:$0xff]
      %v3999 = vld [vmem:[#allocation2 + $0x106] sm:$0xff]
      %v4000 = vld [vmem:[#allocation2 + $0x10e] sm:$0xff]
      %v4001 = vld [vmem:[#allocation2 + $0x116] sm:$0xff]
      %v4002 = vld [vmem:[#allocation2 + $0x11e] sm:$0xff]
      %v4003 = vld [vmem:[#allocation2 + $0x126] sm:$0xff]
      %v4004 = vld [vmem:[#allocation2 + $0x12e] sm:$0xff]
      %v4005 = vld [vmem:[#allocation2 + $0x136] sm:$0xff]
      %v4006 = vld [vmem:[#allocation2 + $0x13e] sm:$0x3f]
      %s4007 = scalar_lea.vmem %s2, 1024
      %v4008 = vld [vmem:[%s4007] sm:$0xff]
      %v4009 = vld [vmem:[%s4007 + $0x8] sm:$0xff]
      %v4010 = vld [vmem:[%s4007 + $0x10] sm:$0xff]
      %v4011 = vld [vmem:[%s4007 + $0x18] sm:$0xff]
      %v4012 = vld [vmem:[%s4007 + $0x20] sm:$0xff]
      %v4013 = vld [vmem:[%s4007 + $0x28] sm:$0xff]
      %v4014 = vld [vmem:[%s4007 + $0x30] sm:$0xff]
      %v4015 = vld [vmem:[%s4007 + $0x38] sm:$0xff]
      %v4016 = vld [vmem:[%s4007 + $0x40] sm:$0xff]
      %v4017 = vld [vmem:[%s4007 + $0x48] sm:$0xff]
      %v4018 = vld [vmem:[%s4007 + $0x50] sm:$0xff]
      %v4019 = vld [vmem:[%s4007 + $0x58] sm:$0xff]
      %v4020 = vld [vmem:[%s4007 + $0x60] sm:$0xff]
      %v4021 = vld [vmem:[%s4007 + $0x68] sm:$0xff]
      %v4022 = vld [vmem:[%s4007 + $0x70] sm:$0xff]
      %v4023 = vld [vmem:[%s4007 + $0x78] sm:$0xff]
      %4024 = vmatprep.subr.mxu0 0.0
      %4025 = vmatpush1.msra.mxu0 %v4023
      %4026 = vmatprep.subr.mxu0 0.0
      %4027 = vmatpush1.msra.mxu0 %v4022
      %4028 = vmatprep.subr.mxu0 0.0
      %4029 = vmatpush1.msra.mxu0 %v4021
      %4030 = vmatprep.subr.mxu0 0.0
      %4031 = vmatpush1.msra.mxu0 %v4020
      %4032 = vmatprep.subr.mxu0 0.0
      %4033 = vmatpush1.msra.mxu0 %v4019
      %4034 = vmatprep.subr.mxu0 0.0
      %4035 = vmatpush1.msra.mxu0 %v4018
      %4036 = vmatprep.subr.mxu0 0.0
      %4037 = vmatpush1.msra.mxu0 %v4017
      %4038 = vmatprep.subr.mxu0 0.0
      %4039 = vmatpush1.msra.mxu0 %v4016
      %4040 = vmatprep.subr.mxu0 0.0
      %4041 = vmatpush1.msra.mxu0 %v4015
      %4042 = vmatprep.subr.mxu0 0.0
      %4043 = vmatpush1.msra.mxu0 %v4014
      %4044 = vmatprep.subr.mxu0 0.0
      %4045 = vmatpush1.msra.mxu0 %v4013
      %4046 = vmatprep.subr.mxu0 0.0
      %4047 = vmatpush1.msra.mxu0 %v4012
      %4048 = vmatprep.subr.mxu0 0.0
      %4049 = vmatpush1.msra.mxu0 %v4011
      %4050 = vmatprep.subr.mxu0 0.0
      %4051 = vmatpush1.msra.mxu0 %v4010
      %4052 = vmatprep.subr.mxu0 0.0
      %4053 = vmatpush1.msra.mxu0 %v4009
      %4054 = vmatprep.subr.mxu0 0.0
      %4055 = vmatpush1.msra.mxu0 %v4008
      %4056 = vmatprep.subr.mxu0 0.0
      %4057 = vmatpush2.msra.mxu0 0.0
      %4058 = vmatprep.subr.mxu0 0.0
      %4059 = vmatpush2.msra.mxu0 0.0
      %4060 = vmatprep.subr.mxu0 0.0
      %4061 = vmatpush2.msra.mxu0 0.0
      %4062 = vmatprep.subr.mxu0 0.0
      %4063 = vmatpush2.msra.mxu0 0.0
      %4064 = vmatprep.subr.mxu0 0.0
      %4065 = vmatpush2.msra.mxu0 0.0
      %4066 = vmatprep.subr.mxu0 0.0
      %4067 = vmatpush2.msra.mxu0 0.0
      %4068 = vmatprep.subr.mxu0 0.0
      %4069 = vmatpush2.msra.mxu0 0.0
      %4070 = vmatprep.subr.mxu0 0.0
      %4071 = vmatpush2.msra.mxu0 0.0
      %4072 = vmatprep.subr.mxu0 0.0
      %4073 = vmatpush2.msra.mxu0 0.0
      %4074 = vmatprep.subr.mxu0 0.0
      %4075 = vmatpush2.msra.mxu0 0.0
      %4076 = vmatprep.subr.mxu0 0.0
      %4077 = vmatpush2.msra.mxu0 0.0
      %4078 = vmatprep.subr.mxu0 0.0
      %4079 = vmatpush2.msra.mxu0 0.0
      %4080 = vmatprep.subr.mxu0 0.0
      %4081 = vmatpush2.msra.mxu0 0.0
      %4082 = vmatprep.subr.mxu0 0.0
      %4083 = vmatpush2.msra.mxu0 0.0
      %4084 = vmatprep.subr.mxu0 0.0
      %4085 = vmatpush2.msra.mxu0 0.0
      %4086 = vmatprep.subr.mxu0 0.0
      %4087 = vmatpush2.msra.mxu0 0.0
      %4088 = vmatprep.mubr.f32.mxu0 0.0
      %4089 = vmatmul.mubr.f32.gmra.mxu0 %v3971
      %v4090 = vpop.f32.mrf.mxu0
      %v4091 = vadd.f32 0.0, %v4090
      %v4092 = vpop.f32.mrf.mxu0
      %4093 = vmatprep.mubr.f32.mxu0 0.0
      %4094 = vmatmul.mubr.f32.gmra.mxu0 %v3972
      %v4095 = vpop.f32.mrf.mxu0
      %v4096 = vadd.f32 0.0, %v4095
      %v4097 = vpop.f32.mrf.mxu0
      %4098 = vmatprep.mubr.f32.mxu0 0.0
      %4099 = vmatmul.mubr.f32.gmra.mxu0 %v3973
      %v4100 = vpop.f32.mrf.mxu0
      %v4101 = vadd.f32 0.0, %v4100
      %v4102 = vpop.f32.mrf.mxu0
      %4103 = vmatprep.mubr.f32.mxu0 0.0
      %4104 = vmatmul.mubr.f32.gmra.mxu0 %v3974
      %v4105 = vpop.f32.mrf.mxu0
      %v4106 = vadd.f32 0.0, %v4105
      %v4107 = vpop.f32.mrf.mxu0
      %4108 = vmatprep.mubr.f32.mxu0 0.0
      %4109 = vmatmul.mubr.f32.gmra.mxu0 %v3975
      %v4110 = vpop.f32.mrf.mxu0
      %v4111 = vadd.f32 0.0, %v4110
      %v4112 = vpop.f32.mrf.mxu0
      %4113 = vmatprep.mubr.f32.mxu0 0.0
      %4114 = vmatmul.mubr.f32.gmra.mxu0 %v3976
      %v4115 = vpop.f32.mrf.mxu0
      %v4116 = vadd.f32 0.0, %v4115
      %v4117 = vpop.f32.mrf.mxu0
      %4118 = vmatprep.mubr.f32.mxu0 0.0
      %4119 = vmatmul.mubr.f32.gmra.mxu0 %v3977
      %v4120 = vpop.f32.mrf.mxu0
      %v4121 = vadd.f32 0.0, %v4120
      %v4122 = vpop.f32.mrf.mxu0
      %4123 = vmatprep.mubr.f32.mxu0 0.0
      %4124 = vmatmul.mubr.f32.gmra.mxu0 %v3978
      %v4125 = vpop.f32.mrf.mxu0
      %v4126 = vadd.f32 0.0, %v4125
      %v4127 = vpop.f32.mrf.mxu0
      %4128 = vmatprep.mubr.f32.mxu0 0.0
      %4129 = vmatmul.mubr.f32.gmra.mxu0 %v3979
      %v4130 = vpop.f32.mrf.mxu0
      %v4131 = vadd.f32 0.0, %v4130
      %v4132 = vpop.f32.mrf.mxu0
      %4133 = vmatprep.mubr.f32.mxu0 0.0
      %4134 = vmatmul.mubr.f32.gmra.mxu0 %v3980
      %v4135 = vpop.f32.mrf.mxu0
      %v4136 = vadd.f32 0.0, %v4135
      %v4137 = vpop.f32.mrf.mxu0
      %4138 = vmatprep.mubr.f32.mxu0 0.0
      %4139 = vmatmul.mubr.f32.gmra.mxu0 %v3981
      %v4140 = vpop.f32.mrf.mxu0
      %v4141 = vadd.f32 0.0, %v4140
      %v4142 = vpop.f32.mrf.mxu0
      %4143 = vmatprep.mubr.f32.mxu0 0.0
      %4144 = vmatmul.mubr.f32.gmra.mxu0 %v3982
      %v4145 = vpop.f32.mrf.mxu0
      %v4146 = vadd.f32 0.0, %v4145
      %v4147 = vpop.f32.mrf.mxu0
      %4148 = vmatprep.mubr.f32.mxu0 0.0
      %4149 = vmatmul.mubr.f32.gmra.mxu0 %v3983
      %v4150 = vpop.f32.mrf.mxu0
      %v4151 = vadd.f32 0.0, %v4150
      %v4152 = vpop.f32.mrf.mxu0
      %4153 = vmatprep.mubr.f32.mxu0 0.0
      %4154 = vmatmul.mubr.f32.gmra.mxu0 %v3984
      %v4155 = vpop.f32.mrf.mxu0
      %v4156 = vadd.f32 0.0, %v4155
      %v4157 = vpop.f32.mrf.mxu0
      %4158 = vmatprep.mubr.f32.mxu0 0.0
      %4159 = vmatmul.mubr.f32.gmra.mxu0 %v3985
      %v4160 = vpop.f32.mrf.mxu0
      %v4161 = vadd.f32 0.0, %v4160
      %v4162 = vpop.f32.mrf.mxu0
      %4163 = vmatprep.mubr.f32.mxu0 0.0
      %4164 = vmatmul.mubr.f32.gmra.mxu0 %v3986
      %v4165 = vpop.f32.mrf.mxu0
      %v4166 = vadd.f32 0.0, %v4165
      %v4167 = vpop.f32.mrf.mxu0
      %4168 = vmatprep.mubr.f32.mxu0 0.0
      %4169 = vmatmul.mubr.f32.gmra.mxu0 %v3987
      %v4170 = vpop.f32.mrf.mxu0
      %v4171 = vadd.f32 0.0, %v4170
      %v4172 = vpop.f32.mrf.mxu0
      %4173 = vmatprep.mubr.f32.mxu0 0.0
      %4174 = vmatmul.mubr.f32.gmra.mxu0 %v3988
      %v4175 = vpop.f32.mrf.mxu0
      %v4176 = vadd.f32 0.0, %v4175
      %v4177 = vpop.f32.mrf.mxu0
      %4178 = vmatprep.mubr.f32.mxu0 0.0
      %4179 = vmatmul.mubr.f32.gmra.mxu0 %v3989
      %v4180 = vpop.f32.mrf.mxu0
      %v4181 = vadd.f32 0.0, %v4180
      %v4182 = vpop.f32.mrf.mxu0
      %4183 = vmatprep.mubr.f32.mxu0 0.0
      %4184 = vmatmul.mubr.f32.gmra.mxu0 %v3990
      %v4185 = vpop.f32.mrf.mxu0
      %v4186 = vadd.f32 0.0, %v4185
      %v4187 = vpop.f32.mrf.mxu0
      %4188 = vmatprep.mubr.f32.mxu0 0.0
      %4189 = vmatmul.mubr.f32.gmra.mxu0 %v3991
      %v4190 = vpop.f32.mrf.mxu0
      %v4191 = vadd.f32 0.0, %v4190
      %v4192 = vpop.f32.mrf.mxu0
      %4193 = vmatprep.mubr.f32.mxu0 0.0
      %4194 = vmatmul.mubr.f32.gmra.mxu0 %v3992
      %v4195 = vpop.f32.mrf.mxu0
      %v4196 = vadd.f32 0.0, %v4195
      %v4197 = vpop.f32.mrf.mxu0
      %4198 = vmatprep.mubr.f32.mxu0 0.0
      %4199 = vmatmul.mubr.f32.gmra.mxu0 %v3993
      %v4200 = vpop.f32.mrf.mxu0
      %v4201 = vadd.f32 0.0, %v4200
      %v4202 = vpop.f32.mrf.mxu0
      %4203 = vmatprep.mubr.f32.mxu0 0.0
      %4204 = vmatmul.mubr.f32.gmra.mxu0 %v3994
      %v4205 = vpop.f32.mrf.mxu0
      %v4206 = vadd.f32 0.0, %v4205
      %v4207 = vpop.f32.mrf.mxu0
      %4208 = vmatprep.mubr.f32.mxu0 0.0
      %4209 = vmatmul.mubr.f32.gmra.mxu0 %v3995
      %v4210 = vpop.f32.mrf.mxu0
      %v4211 = vadd.f32 0.0, %v4210
      %v4212 = vpop.f32.mrf.mxu0
      %4213 = vmatprep.mubr.f32.mxu0 0.0
      %4214 = vmatmul.mubr.f32.gmra.mxu0 %v3996
      %v4215 = vpop.f32.mrf.mxu0
      %v4216 = vadd.f32 0.0, %v4215
      %v4217 = vpop.f32.mrf.mxu0
      %4218 = vmatprep.mubr.f32.mxu0 0.0
      %4219 = vmatmul.mubr.f32.gmra.mxu0 %v3997
      %v4220 = vpop.f32.mrf.mxu0
      %v4221 = vadd.f32 0.0, %v4220
      %v4222 = vpop.f32.mrf.mxu0
      %4223 = vmatprep.mubr.f32.mxu0 0.0
      %4224 = vmatmul.mubr.f32.gmra.mxu0 %v3998
      %v4225 = vpop.f32.mrf.mxu0
      %v4226 = vadd.f32 0.0, %v4225
      %v4227 = vpop.f32.mrf.mxu0
      %4228 = vmatprep.mubr.f32.mxu0 0.0
      %4229 = vmatmul.mubr.f32.gmra.mxu0 %v3999
      %v4230 = vpop.f32.mrf.mxu0
      %v4231 = vadd.f32 0.0, %v4230
      %v4232 = vpop.f32.mrf.mxu0
      %4233 = vmatprep.mubr.f32.mxu0 0.0
      %4234 = vmatmul.mubr.f32.gmra.mxu0 %v4000
      %v4235 = vpop.f32.mrf.mxu0
      %v4236 = vadd.f32 0.0, %v4235
      %v4237 = vpop.f32.mrf.mxu0
      %4238 = vmatprep.mubr.f32.mxu0 0.0
      %4239 = vmatmul.mubr.f32.gmra.mxu0 %v4001
      %v4240 = vpop.f32.mrf.mxu0
      %v4241 = vadd.f32 0.0, %v4240
      %v4242 = vpop.f32.mrf.mxu0
      %4243 = vmatprep.mubr.f32.mxu0 0.0
      %4244 = vmatmul.mubr.f32.gmra.mxu0 %v4002
      %v4245 = vpop.f32.mrf.mxu0
      %v4246 = vadd.f32 0.0, %v4245
      %v4247 = vpop.f32.mrf.mxu0
      %4248 = vmatprep.mubr.f32.mxu0 0.0
      %4249 = vmatmul.mubr.f32.gmra.mxu0 %v4003
      %v4250 = vpop.f32.mrf.mxu0
      %v4251 = vadd.f32 0.0, %v4250
      %v4252 = vpop.f32.mrf.mxu0
      %4253 = vmatprep.mubr.f32.mxu0 0.0
      %4254 = vmatmul.mubr.f32.gmra.mxu0 %v4004
      %v4255 = vpop.f32.mrf.mxu0
      %v4256 = vadd.f32 0.0, %v4255
      %v4257 = vpop.f32.mrf.mxu0
      %4258 = vmatprep.mubr.f32.mxu0 0.0
      %4259 = vmatmul.mubr.f32.gmra.mxu0 %v4005
      %v4260 = vpop.f32.mrf.mxu0
      %v4261 = vadd.f32 0.0, %v4260
      %v4262 = vpop.f32.mrf.mxu0
      %4263 = vmatprep.mubr.f32.mxu0 0.0
      %4264 = vmatmul.mubr.f32.gmra.mxu0 %v4006
      %v4265 = vpop.f32.mrf.mxu0
      %v4266 = vadd.f32 0.0, %v4265
      %v4267 = vpop.f32.mrf.mxu0
      %4268 = vdwg.mxu0
      %v4269 = vadd.f32 %v3935, %v4091
      %v4270 = vadd.f32 %v3936, %v4096
      %v4271 = vadd.f32 %v3937, %v4101
      %v4272 = vadd.f32 %v3938, %v4106
      %v4273 = vadd.f32 %v3939, %v4111
      %v4274 = vadd.f32 %v3940, %v4116
      %v4275 = vadd.f32 %v3941, %v4121
      %v4276 = vadd.f32 %v3942, %v4126
      %v4277 = vadd.f32 %v3943, %v4131
      %v4278 = vadd.f32 %v3944, %v4136
      %v4279 = vadd.f32 %v3945, %v4141
      %v4280 = vadd.f32 %v3946, %v4146
      %v4281 = vadd.f32 %v3947, %v4151
      %v4282 = vadd.f32 %v3948, %v4156
      %v4283 = vadd.f32 %v3949, %v4161
      %v4284 = vadd.f32 %v3950, %v4166
      %v4285 = vadd.f32 %v3951, %v4171
      %v4286 = vadd.f32 %v3952, %v4176
      %v4287 = vadd.f32 %v3953, %v4181
      %v4288 = vadd.f32 %v3954, %v4186
      %v4289 = vadd.f32 %v3955, %v4191
      %v4290 = vadd.f32 %v3956, %v4196
      %v4291 = vadd.f32 %v3957, %v4201
      %v4292 = vadd.f32 %v3958, %v4206
      %v4293 = vadd.f32 %v3959, %v4211
      %v4294 = vadd.f32 %v3960, %v4216
      %v4295 = vadd.f32 %v3961, %v4221
      %v4296 = vadd.f32 %v3962, %v4226
      %v4297 = vadd.f32 %v3963, %v4231
      %v4298 = vadd.f32 %v3964, %v4236
      %v4299 = vadd.f32 %v3965, %v4241
      %v4300 = vadd.f32 %v3966, %v4246
      %v4301 = vadd.f32 %v3967, %v4251
      %v4302 = vadd.f32 %v3968, %v4256
      %v4303 = vadd.f32 %v3969, %v4261
      %v4304 = vadd.f32 %v3970, %v4266
      %v4305 = vld [vmem:[%s3 + $0x1] sm:$0x1]
      %v4306 = vlaneseq
      %v4307 = vshrl.u32 %v4306, 7
      %v4308 = vsub.s32 0, %v4307
      %v4309 = vrot.slane %v4305, %v4308
      %v4310 = vmul.f32 %v4269, %v4309
      %v4311 = vmul.f32 %v4270, %v4309
      %v4312 = vmul.f32 %v4271, %v4309
      %v4313 = vmul.f32 %v4272, %v4309
      %v4314 = vmul.f32 %v4273, %v4309
      %v4315 = vmul.f32 %v4274, %v4309
      %v4316 = vmul.f32 %v4275, %v4309
      %v4317 = vmul.f32 %v4276, %v4309
      %v4318 = vmul.f32 %v4277, %v4309
      %v4319 = vmul.f32 %v4278, %v4309
      %v4320 = vmul.f32 %v4279, %v4309
      %v4321 = vmul.f32 %v4280, %v4309
      %v4322 = vmul.f32 %v4281, %v4309
      %v4323 = vmul.f32 %v4282, %v4309
      %v4324 = vmul.f32 %v4283, %v4309
      %v4325 = vmul.f32 %v4284, %v4309
      %v4326 = vmul.f32 %v4285, %v4309
      %v4327 = vmul.f32 %v4286, %v4309
      %v4328 = vmul.f32 %v4287, %v4309
      %v4329 = vmul.f32 %v4288, %v4309
      %v4330 = vmul.f32 %v4289, %v4309
      %v4331 = vmul.f32 %v4290, %v4309
      %v4332 = vmul.f32 %v4291, %v4309
      %v4333 = vmul.f32 %v4292, %v4309
      %v4334 = vmul.f32 %v4293, %v4309
      %v4335 = vmul.f32 %v4294, %v4309
      %v4336 = vmul.f32 %v4295, %v4309
      %v4337 = vmul.f32 %v4296, %v4309
      %v4338 = vmul.f32 %v4297, %v4309
      %v4339 = vmul.f32 %v4298, %v4309
      %v4340 = vmul.f32 %v4299, %v4309
      %v4341 = vmul.f32 %v4300, %v4309
      %v4342 = vmul.f32 %v4301, %v4309
      %v4343 = vmul.f32 %v4302, %v4309
      %v4344 = vmul.f32 %v4303, %v4309
      %v4345 = vmul.f32 %v4304, %v4309
      %v4346 = vld [vmem:[%s4 + $0x1] sm:$0x1]
      %v4347 = vlaneseq
      %v4348 = vshrl.u32 %v4347, 7
      %v4349 = vsub.s32 0, %v4348
      %v4350 = vrot.slane %v4346, %v4349
      %v4351 = vadd.f32 %v4310, %v4350
      %v4352 = vadd.f32 %v4311, %v4350
      %v4353 = vadd.f32 %v4312, %v4350
      %v4354 = vadd.f32 %v4313, %v4350
      %v4355 = vadd.f32 %v4314, %v4350
      %v4356 = vadd.f32 %v4315, %v4350
      %v4357 = vadd.f32 %v4316, %v4350
      %v4358 = vadd.f32 %v4317, %v4350
      %v4359 = vadd.f32 %v4318, %v4350
      %v4360 = vadd.f32 %v4319, %v4350
      %v4361 = vadd.f32 %v4320, %v4350
      %v4362 = vadd.f32 %v4321, %v4350
      %v4363 = vadd.f32 %v4322, %v4350
      %v4364 = vadd.f32 %v4323, %v4350
      %v4365 = vadd.f32 %v4324, %v4350
      %v4366 = vadd.f32 %v4325, %v4350
      %v4367 = vadd.f32 %v4326, %v4350
      %v4368 = vadd.f32 %v4327, %v4350
      %v4369 = vadd.f32 %v4328, %v4350
      %v4370 = vadd.f32 %v4329, %v4350
      %v4371 = vadd.f32 %v4330, %v4350
      %v4372 = vadd.f32 %v4331, %v4350
      %v4373 = vadd.f32 %v4332, %v4350
      %v4374 = vadd.f32 %v4333, %v4350
      %v4375 = vadd.f32 %v4334, %v4350
      %v4376 = vadd.f32 %v4335, %v4350
      %v4377 = vadd.f32 %v4336, %v4350
      %v4378 = vadd.f32 %v4337, %v4350
      %v4379 = vadd.f32 %v4338, %v4350
      %v4380 = vadd.f32 %v4339, %v4350
      %v4381 = vadd.f32 %v4340, %v4350
      %v4382 = vadd.f32 %v4341, %v4350
      %v4383 = vadd.f32 %v4342, %v4350
      %v4384 = vadd.f32 %v4343, %v4350
      %v4385 = vadd.f32 %v4344, %v4350
      %v4386 = vadd.f32 %v4345, %v4350
      %vm4387 = vcmp.gt.f32.partialorder %v4351, 0.0
      %vm4388 = vcmp.gt.f32.partialorder %v4352, 0.0
      %vm4389 = vcmp.gt.f32.partialorder %v4353, 0.0
      %vm4390 = vcmp.gt.f32.partialorder %v4354, 0.0
      %vm4391 = vcmp.gt.f32.partialorder %v4355, 0.0
      %vm4392 = vcmp.gt.f32.partialorder %v4356, 0.0
      %vm4393 = vcmp.gt.f32.partialorder %v4357, 0.0
      %vm4394 = vcmp.gt.f32.partialorder %v4358, 0.0
      %vm4395 = vcmp.gt.f32.partialorder %v4359, 0.0
      %vm4396 = vcmp.gt.f32.partialorder %v4360, 0.0
      %vm4397 = vcmp.gt.f32.partialorder %v4361, 0.0
      %vm4398 = vcmp.gt.f32.partialorder %v4362, 0.0
      %vm4399 = vcmp.gt.f32.partialorder %v4363, 0.0
      %vm4400 = vcmp.gt.f32.partialorder %v4364, 0.0
      %vm4401 = vcmp.gt.f32.partialorder %v4365, 0.0
      %vm4402 = vcmp.gt.f32.partialorder %v4366, 0.0
      %vm4403 = vcmp.gt.f32.partialorder %v4367, 0.0
      %vm4404 = vcmp.gt.f32.partialorder %v4368, 0.0
      %vm4405 = vcmp.gt.f32.partialorder %v4369, 0.0
      %vm4406 = vcmp.gt.f32.partialorder %v4370, 0.0
      %vm4407 = vcmp.gt.f32.partialorder %v4371, 0.0
      %vm4408 = vcmp.gt.f32.partialorder %v4372, 0.0
      %vm4409 = vcmp.gt.f32.partialorder %v4373, 0.0
      %vm4410 = vcmp.gt.f32.partialorder %v4374, 0.0
      %vm4411 = vcmp.gt.f32.partialorder %v4375, 0.0
      %vm4412 = vcmp.gt.f32.partialorder %v4376, 0.0
      %vm4413 = vcmp.gt.f32.partialorder %v4377, 0.0
      %vm4414 = vcmp.gt.f32.partialorder %v4378, 0.0
      %vm4415 = vcmp.gt.f32.partialorder %v4379, 0.0
      %vm4416 = vcmp.gt.f32.partialorder %v4380, 0.0
      %vm4417 = vcmp.gt.f32.partialorder %v4381, 0.0
      %vm4418 = vcmp.gt.f32.partialorder %v4382, 0.0
      %vm4419 = vcmp.gt.f32.partialorder %v4383, 0.0
      %vm4420 = vcmp.gt.f32.partialorder %v4384, 0.0
      %vm4421 = vcmp.gt.f32.partialorder %v4385, 0.0
      %vm4422 = vcmp.gt.f32.partialorder %v4386, 0.0
      %v4423 = vld [vmem:[%s5 + $0x1] sm:$0x1]
      %v4424 = vlaneseq
      %v4425 = vshrl.u32 %v4424, 7
      %v4426 = vsub.s32 0, %v4425
      %v4427 = vrot.slane %v4423, %v4426
      %v4428 = vmul.f32 %v4427, %v4351
      %v4429 = vmul.f32 %v4427, %v4352
      %v4430 = vmul.f32 %v4427, %v4353
      %v4431 = vmul.f32 %v4427, %v4354
      %v4432 = vmul.f32 %v4427, %v4355
      %v4433 = vmul.f32 %v4427, %v4356
      %v4434 = vmul.f32 %v4427, %v4357
      %v4435 = vmul.f32 %v4427, %v4358
      %v4436 = vmul.f32 %v4427, %v4359
      %v4437 = vmul.f32 %v4427, %v4360
      %v4438 = vmul.f32 %v4427, %v4361
      %v4439 = vmul.f32 %v4427, %v4362
      %v4440 = vmul.f32 %v4427, %v4363
      %v4441 = vmul.f32 %v4427, %v4364
      %v4442 = vmul.f32 %v4427, %v4365
      %v4443 = vmul.f32 %v4427, %v4366
      %v4444 = vmul.f32 %v4427, %v4367
      %v4445 = vmul.f32 %v4427, %v4368
      %v4446 = vmul.f32 %v4427, %v4369
      %v4447 = vmul.f32 %v4427, %v4370
      %v4448 = vmul.f32 %v4427, %v4371
      %v4449 = vmul.f32 %v4427, %v4372
      %v4450 = vmul.f32 %v4427, %v4373
      %v4451 = vmul.f32 %v4427, %v4374
      %v4452 = vmul.f32 %v4427, %v4375
      %v4453 = vmul.f32 %v4427, %v4376
      %v4454 = vmul.f32 %v4427, %v4377
      %v4455 = vmul.f32 %v4427, %v4378
      %v4456 = vmul.f32 %v4427, %v4379
      %v4457 = vmul.f32 %v4427, %v4380
      %v4458 = vmul.f32 %v4427, %v4381
      %v4459 = vmul.f32 %v4427, %v4382
      %v4460 = vmul.f32 %v4427, %v4383
      %v4461 = vmul.f32 %v4427, %v4384
      %v4462 = vmul.f32 %v4427, %v4385
      %v4463 = vmul.f32 %v4427, %v4386
      %v4464 = vsel %vm4387, %v4351, %v4428
      %v4465 = vsel %vm4388, %v4352, %v4429
      %v4466 = vsel %vm4389, %v4353, %v4430
      %v4467 = vsel %vm4390, %v4354, %v4431
      %v4468 = vsel %vm4391, %v4355, %v4432
      %v4469 = vsel %vm4392, %v4356, %v4433
      %v4470 = vsel %vm4393, %v4357, %v4434
      %v4471 = vsel %vm4394, %v4358, %v4435
      %v4472 = vsel %vm4395, %v4359, %v4436
      %v4473 = vsel %vm4396, %v4360, %v4437
      %v4474 = vsel %vm4397, %v4361, %v4438
      %v4475 = vsel %vm4398, %v4362, %v4439
      %v4476 = vsel %vm4399, %v4363, %v4440
      %v4477 = vsel %vm4400, %v4364, %v4441
      %v4478 = vsel %vm4401, %v4365, %v4442
      %v4479 = vsel %vm4402, %v4366, %v4443
      %v4480 = vsel %vm4403, %v4367, %v4444
      %v4481 = vsel %vm4404, %v4368, %v4445
      %v4482 = vsel %vm4405, %v4369, %v4446
      %v4483 = vsel %vm4406, %v4370, %v4447
      %v4484 = vsel %vm4407, %v4371, %v4448
      %v4485 = vsel %vm4408, %v4372, %v4449
      %v4486 = vsel %vm4409, %v4373, %v4450
      %v4487 = vsel %vm4410, %v4374, %v4451
      %v4488 = vsel %vm4411, %v4375, %v4452
      %v4489 = vsel %vm4412, %v4376, %v4453
      %v4490 = vsel %vm4413, %v4377, %v4454
      %v4491 = vsel %vm4414, %v4378, %v4455
      %v4492 = vsel %vm4415, %v4379, %v4456
      %v4493 = vsel %vm4416, %v4380, %v4457
      %v4494 = vsel %vm4417, %v4381, %v4458
      %v4495 = vsel %vm4418, %v4382, %v4459
      %v4496 = vsel %vm4419, %v4383, %v4460
      %v4497 = vsel %vm4420, %v4384, %v4461
      %v4498 = vsel %vm4421, %v4385, %v4462
      %v4499 = vsel %vm4422, %v4386, %v4463
      %v4500 = vld [vmem:[%s7] sm:$0xff]
      %v4501 = vld [vmem:[%s7 + $0x8] sm:$0xff]
      %v4502 = vld [vmem:[%s7 + $0x10] sm:$0xff]
      %v4503 = vld [vmem:[%s7 + $0x18] sm:$0xff]
      %v4504 = vld [vmem:[%s7 + $0x20] sm:$0xff]
      %v4505 = vld [vmem:[%s7 + $0x28] sm:$0xff]
      %v4506 = vld [vmem:[%s7 + $0x30] sm:$0xff]
      %v4507 = vld [vmem:[%s7 + $0x38] sm:$0xff]
      %v4508 = vld [vmem:[%s7 + $0x40] sm:$0xff]
      %v4509 = vld [vmem:[%s7 + $0x48] sm:$0xff]
      %v4510 = vld [vmem:[%s7 + $0x50] sm:$0xff]
      %v4511 = vld [vmem:[%s7 + $0x58] sm:$0xff]
      %v4512 = vld [vmem:[%s7 + $0x60] sm:$0xff]
      %v4513 = vld [vmem:[%s7 + $0x68] sm:$0xff]
      %v4514 = vld [vmem:[%s7 + $0x70] sm:$0xff]
      %v4515 = vld [vmem:[%s7 + $0x78] sm:$0xff]
      %v4516 = vld [vmem:[%s7 + $0x80] sm:$0xff]
      %v4517 = vld [vmem:[%s7 + $0x88] sm:$0xff]
      %v4518 = vld [vmem:[%s7 + $0x90] sm:$0xff]
      %v4519 = vld [vmem:[%s7 + $0x98] sm:$0xff]
      %v4520 = vld [vmem:[%s7 + $0xa0] sm:$0xff]
      %v4521 = vld [vmem:[%s7 + $0xa8] sm:$0xff]
      %v4522 = vld [vmem:[%s7 + $0xb0] sm:$0xff]
      %v4523 = vld [vmem:[%s7 + $0xb8] sm:$0xff]
      %v4524 = vld [vmem:[%s7 + $0xc0] sm:$0xff]
      %v4525 = vld [vmem:[%s7 + $0xc8] sm:$0xff]
      %v4526 = vld [vmem:[%s7 + $0xd0] sm:$0xff]
      %v4527 = vld [vmem:[%s7 + $0xd8] sm:$0xff]
      %v4528 = vld [vmem:[%s7 + $0xe0] sm:$0xff]
      %v4529 = vld [vmem:[%s7 + $0xe8] sm:$0xff]
      %v4530 = vld [vmem:[%s7 + $0xf0] sm:$0xff]
      %v4531 = vld [vmem:[%s7 + $0xf8] sm:$0xff]
      %v4532 = vld [vmem:[%s7 + $0x100] sm:$0xff]
      %v4533 = vld [vmem:[%s7 + $0x108] sm:$0xff]
      %v4534 = vld [vmem:[%s7 + $0x110] sm:$0xff]
      %v4535 = vld [vmem:[%s7 + $0x118] sm:$0xff]
      %v4536 = vld [vmem:[%s7 + $0x120] sm:$0xf]
      %v4537 = vld [vmem:[%s7 + $0x128] sm:$0xf]
      %v4538 = vld [vmem:[%s7 + $0x130] sm:$0xf]
      %vm4539 = vcmask 244736
      %v4541 = vsel %vm4539, %v4502, 0
      %v4544 = vsel %vm4539, %v4505, 0
      %v4547 = vsel %vm4539, %v4508, 0
      %v4550 = vsel %vm4539, %v4511, 0
      %v4553 = vsel %vm4539, %v4514, 0
      %v4556 = vsel %vm4539, %v4517, 0
      %v4559 = vsel %vm4539, %v4520, 0
      %v4562 = vsel %vm4539, %v4523, 0
      %v4565 = vsel %vm4539, %v4526, 0
      %v4568 = vsel %vm4539, %v4529, 0
      %v4571 = vsel %vm4539, %v4532, 0
      %v4574 = vsel %vm4539, %v4535, 0
      %v4577 = vsel %vm4539, %v4538, 0
      %vm4579 = vcmask 1045504
      %v4581 = vsel %vm4579, %v4499, 0
      %4583 = vmatprep.subr.mxu0 0.0
      %4584 = vmatpush1.msra.mxu0 %v4479
      %4585 = vmatprep.subr.mxu0 0.0
      %4586 = vmatpush1.msra.mxu0 %v4478
      %4587 = vmatprep.subr.mxu0 0.0
      %4588 = vmatpush1.msra.mxu0 %v4477
      %4589 = vmatprep.subr.mxu0 0.0
      %4590 = vmatpush1.msra.mxu0 %v4476
      %4591 = vmatprep.subr.mxu0 0.0
      %4592 = vmatpush1.msra.mxu0 %v4475
      %4593 = vmatprep.subr.mxu0 0.0
      %4594 = vmatpush1.msra.mxu0 %v4474
      %4595 = vmatprep.subr.mxu0 0.0
      %4596 = vmatpush1.msra.mxu0 %v4473
      %4597 = vmatprep.subr.mxu0 0.0
      %4598 = vmatpush1.msra.mxu0 %v4472
      %4599 = vmatprep.subr.mxu0 0.0
      %4600 = vmatpush1.msra.mxu0 %v4471
      %4601 = vmatprep.subr.mxu0 0.0
      %4602 = vmatpush1.msra.mxu0 %v4470
      %4603 = vmatprep.subr.mxu0 0.0
      %4604 = vmatpush1.msra.mxu0 %v4469
      %4605 = vmatprep.subr.mxu0 0.0
      %4606 = vmatpush1.msra.mxu0 %v4468
      %4607 = vmatprep.subr.mxu0 0.0
      %4608 = vmatpush1.msra.mxu0 %v4467
      %4609 = vmatprep.subr.mxu0 0.0
      %4610 = vmatpush1.msra.mxu0 %v4466
      %4611 = vmatprep.subr.mxu0 0.0
      %4612 = vmatpush1.msra.mxu0 %v4465
      %4613 = vmatprep.subr.mxu0 0.0
      %4614 = vmatpush1.msra.mxu0 %v4464
      %4615 = vmatprep.subr.mxu0 0.0
      %4616 = vmatpush2.msra.mxu0 %v4495
      %4617 = vmatprep.subr.mxu0 0.0
      %4618 = vmatpush2.msra.mxu0 %v4494
      %4619 = vmatprep.subr.mxu0 0.0
      %4620 = vmatpush2.msra.mxu0 %v4493
      %4621 = vmatprep.subr.mxu0 0.0
      %4622 = vmatpush2.msra.mxu0 %v4492
      %4623 = vmatprep.subr.mxu0 0.0
      %4624 = vmatpush2.msra.mxu0 %v4491
      %4625 = vmatprep.subr.mxu0 0.0
      %4626 = vmatpush2.msra.mxu0 %v4490
      %4627 = vmatprep.subr.mxu0 0.0
      %4628 = vmatpush2.msra.mxu0 %v4489
      %4629 = vmatprep.subr.mxu0 0.0
      %4630 = vmatpush2.msra.mxu0 %v4488
      %4631 = vmatprep.subr.mxu0 0.0
      %4632 = vmatpush2.msra.mxu0 %v4487
      %4633 = vmatprep.subr.mxu0 0.0
      %4634 = vmatpush2.msra.mxu0 %v4486
      %4635 = vmatprep.subr.mxu0 0.0
      %4636 = vmatpush2.msra.mxu0 %v4485
      %4637 = vmatprep.subr.mxu0 0.0
      %4638 = vmatpush2.msra.mxu0 %v4484
      %4639 = vmatprep.subr.mxu0 0.0
      %4640 = vmatpush2.msra.mxu0 %v4483
      %4641 = vmatprep.subr.mxu0 0.0
      %4642 = vmatpush2.msra.mxu0 %v4482
      %4643 = vmatprep.subr.mxu0 0.0
      %4644 = vmatpush2.msra.mxu0 %v4481
      %4645 = vmatprep.subr.mxu0 0.0
      %4646 = vmatpush2.msra.mxu0 %v4480
      %4647 = vmatprep.mubr.f32.mxu0 %v4501
      %4648 = vmatmul.mubr.f32.gmra.mxu0 %v4500
      %v4649 = vpop.f32.mrf.mxu0
      %v4650 = vadd.f32 0.0, %v4649
      %v4651 = vpop.f32.mrf.mxu0
      %4652 = vmatprep.mubr.f32.mxu0 %v4504
      %4653 = vmatmul.mubr.f32.gmra.mxu0 %v4503
      %v4654 = vpop.f32.mrf.mxu0
      %v4655 = vadd.f32 0.0, %v4654
      %v4656 = vpop.f32.mrf.mxu0
      %4657 = vmatprep.mubr.f32.mxu0 %v4507
      %4658 = vmatmul.mubr.f32.gmra.mxu0 %v4506
      %v4659 = vpop.f32.mrf.mxu0
      %v4660 = vadd.f32 0.0, %v4659
      %v4661 = vpop.f32.mrf.mxu0
      %4662 = vmatprep.mubr.f32.mxu0 %v4510
      %4663 = vmatmul.mubr.f32.gmra.mxu0 %v4509
      %v4664 = vpop.f32.mrf.mxu0
      %v4665 = vadd.f32 0.0, %v4664
      %v4666 = vpop.f32.mrf.mxu0
      %4667 = vmatprep.mubr.f32.mxu0 %v4513
      %4668 = vmatmul.mubr.f32.gmra.mxu0 %v4512
      %v4669 = vpop.f32.mrf.mxu0
      %v4670 = vadd.f32 0.0, %v4669
      %v4671 = vpop.f32.mrf.mxu0
      %4672 = vmatprep.mubr.f32.mxu0 %v4516
      %4673 = vmatmul.mubr.f32.gmra.mxu0 %v4515
      %v4674 = vpop.f32.mrf.mxu0
      %v4675 = vadd.f32 0.0, %v4674
      %v4676 = vpop.f32.mrf.mxu0
      %4677 = vmatprep.mubr.f32.mxu0 %v4519
      %4678 = vmatmul.mubr.f32.gmra.mxu0 %v4518
      %v4679 = vpop.f32.mrf.mxu0
      %v4680 = vadd.f32 0.0, %v4679
      %v4681 = vpop.f32.mrf.mxu0
      %4682 = vmatprep.mubr.f32.mxu0 %v4522
      %4683 = vmatmul.mubr.f32.gmra.mxu0 %v4521
      %v4684 = vpop.f32.mrf.mxu0
      %v4685 = vadd.f32 0.0, %v4684
      %v4686 = vpop.f32.mrf.mxu0
      %4687 = vmatprep.mubr.f32.mxu0 %v4525
      %4688 = vmatmul.mubr.f32.gmra.mxu0 %v4524
      %v4689 = vpop.f32.mrf.mxu0
      %v4690 = vadd.f32 0.0, %v4689
      %v4691 = vpop.f32.mrf.mxu0
      %4692 = vmatprep.mubr.f32.mxu0 %v4528
      %4693 = vmatmul.mubr.f32.gmra.mxu0 %v4527
      %v4694 = vpop.f32.mrf.mxu0
      %v4695 = vadd.f32 0.0, %v4694
      %v4696 = vpop.f32.mrf.mxu0
      %4697 = vmatprep.mubr.f32.mxu0 %v4531
      %4698 = vmatmul.mubr.f32.gmra.mxu0 %v4530
      %v4699 = vpop.f32.mrf.mxu0
      %v4700 = vadd.f32 0.0, %v4699
      %v4701 = vpop.f32.mrf.mxu0
      %4702 = vmatprep.mubr.f32.mxu0 %v4534
      %4703 = vmatmul.mubr.f32.gmra.mxu0 %v4533
      %v4704 = vpop.f32.mrf.mxu0
      %v4705 = vadd.f32 0.0, %v4704
      %v4706 = vpop.f32.mrf.mxu0
      %4707 = vmatprep.mubr.f32.mxu0 %v4537
      %4708 = vmatmul.mubr.f32.gmra.mxu0 %v4536
      %v4709 = vpop.f32.mrf.mxu0
      %v4710 = vadd.f32 0.0, %v4709
      %v4711 = vpop.f32.mrf.mxu0
      %4712 = vdwg.mxu0
      %4713 = vmatprep.subr.mxu0 0.0
      %4714 = vmatpush1.msra.mxu0 0.0
      %4715 = vmatprep.subr.mxu0 0.0
      %4716 = vmatpush1.msra.mxu0 0.0
      %4717 = vmatprep.subr.mxu0 0.0
      %4718 = vmatpush1.msra.mxu0 0.0
      %4719 = vmatprep.subr.mxu0 0.0
      %4720 = vmatpush1.msra.mxu0 0.0
      %4721 = vmatprep.subr.mxu0 0.0
      %4722 = vmatpush1.msra.mxu0 0.0
      %4723 = vmatprep.subr.mxu0 0.0
      %4724 = vmatpush1.msra.mxu0 0.0
      %4725 = vmatprep.subr.mxu0 0.0
      %4726 = vmatpush1.msra.mxu0 0.0
      %4727 = vmatprep.subr.mxu0 0.0
      %4728 = vmatpush1.msra.mxu0 0.0
      %4729 = vmatprep.subr.mxu0 0.0
      %4730 = vmatpush1.msra.mxu0 0.0
      %4731 = vmatprep.subr.mxu0 0.0
      %4732 = vmatpush1.msra.mxu0 0.0
      %4733 = vmatprep.subr.mxu0 0.0
      %4734 = vmatpush1.msra.mxu0 0.0
      %4735 = vmatprep.subr.mxu0 0.0
      %4736 = vmatpush1.msra.mxu0 0.0
      %4737 = vmatprep.subr.mxu0 0.0
      %4738 = vmatpush1.msra.mxu0 %v4581
      %4739 = vmatprep.subr.mxu0 0.0
      %4740 = vmatpush1.msra.mxu0 %v4498
      %4741 = vmatprep.subr.mxu0 0.0
      %4742 = vmatpush1.msra.mxu0 %v4497
      %4743 = vmatprep.subr.mxu0 0.0
      %4744 = vmatpush1.msra.mxu0 %v4496
      %4745 = vmatprep.subr.mxu0 0.0
      %4746 = vmatpush2.msra.mxu0 0.0
      %4747 = vmatprep.subr.mxu0 0.0
      %4748 = vmatpush2.msra.mxu0 0.0
      %4749 = vmatprep.subr.mxu0 0.0
      %4750 = vmatpush2.msra.mxu0 0.0
      %4751 = vmatprep.subr.mxu0 0.0
      %4752 = vmatpush2.msra.mxu0 0.0
      %4753 = vmatprep.subr.mxu0 0.0
      %4754 = vmatpush2.msra.mxu0 0.0
      %4755 = vmatprep.subr.mxu0 0.0
      %4756 = vmatpush2.msra.mxu0 0.0
      %4757 = vmatprep.subr.mxu0 0.0
      %4758 = vmatpush2.msra.mxu0 0.0
      %4759 = vmatprep.subr.mxu0 0.0
      %4760 = vmatpush2.msra.mxu0 0.0
      %4761 = vmatprep.subr.mxu0 0.0
      %4762 = vmatpush2.msra.mxu0 0.0
      %4763 = vmatprep.subr.mxu0 0.0
      %4764 = vmatpush2.msra.mxu0 0.0
      %4765 = vmatprep.subr.mxu0 0.0
      %4766 = vmatpush2.msra.mxu0 0.0
      %4767 = vmatprep.subr.mxu0 0.0
      %4768 = vmatpush2.msra.mxu0 0.0
      %4769 = vmatprep.subr.mxu0 0.0
      %4770 = vmatpush2.msra.mxu0 0.0
      %4771 = vmatprep.subr.mxu0 0.0
      %4772 = vmatpush2.msra.mxu0 0.0
      %4773 = vmatprep.subr.mxu0 0.0
      %4774 = vmatpush2.msra.mxu0 0.0
      %4775 = vmatprep.subr.mxu0 0.0
      %4776 = vmatpush2.msra.mxu0 0.0
      %4777 = vmatprep.mubr.f32.mxu0 0.0
      %4778 = vmatmul.mubr.f32.gmra.mxu0 %v4541
      %v4779 = vpop.f32.mrf.mxu0
      %v4780 = vadd.f32 %v4650, %v4779
      %v4781 = vpop.f32.mrf.mxu0
      %4782 = vmatprep.mubr.f32.mxu0 0.0
      %4783 = vmatmul.mubr.f32.gmra.mxu0 %v4544
      %v4784 = vpop.f32.mrf.mxu0
      %v4785 = vadd.f32 %v4655, %v4784
      %v4786 = vpop.f32.mrf.mxu0
      %4787 = vmatprep.mubr.f32.mxu0 0.0
      %4788 = vmatmul.mubr.f32.gmra.mxu0 %v4547
      %v4789 = vpop.f32.mrf.mxu0
      %v4790 = vadd.f32 %v4660, %v4789
      %v4791 = vpop.f32.mrf.mxu0
      %4792 = vmatprep.mubr.f32.mxu0 0.0
      %4793 = vmatmul.mubr.f32.gmra.mxu0 %v4550
      %v4794 = vpop.f32.mrf.mxu0
      %v4795 = vadd.f32 %v4665, %v4794
      %v4796 = vpop.f32.mrf.mxu0
      %4797 = vmatprep.mubr.f32.mxu0 0.0
      %4798 = vmatmul.mubr.f32.gmra.mxu0 %v4553
      %v4799 = vpop.f32.mrf.mxu0
      %v4800 = vadd.f32 %v4670, %v4799
      %v4801 = vpop.f32.mrf.mxu0
      %4802 = vmatprep.mubr.f32.mxu0 0.0
      %4803 = vmatmul.mubr.f32.gmra.mxu0 %v4556
      %v4804 = vpop.f32.mrf.mxu0
      %v4805 = vadd.f32 %v4675, %v4804
      %v4806 = vpop.f32.mrf.mxu0
      %4807 = vmatprep.mubr.f32.mxu0 0.0
      %4808 = vmatmul.mubr.f32.gmra.mxu0 %v4559
      %v4809 = vpop.f32.mrf.mxu0
      %v4810 = vadd.f32 %v4680, %v4809
      %v4811 = vpop.f32.mrf.mxu0
      %4812 = vmatprep.mubr.f32.mxu0 0.0
      %4813 = vmatmul.mubr.f32.gmra.mxu0 %v4562
      %v4814 = vpop.f32.mrf.mxu0
      %v4815 = vadd.f32 %v4685, %v4814
      %v4816 = vpop.f32.mrf.mxu0
      %4817 = vmatprep.mubr.f32.mxu0 0.0
      %4818 = vmatmul.mubr.f32.gmra.mxu0 %v4565
      %v4819 = vpop.f32.mrf.mxu0
      %v4820 = vadd.f32 %v4690, %v4819
      %v4821 = vpop.f32.mrf.mxu0
      %4822 = vmatprep.mubr.f32.mxu0 0.0
      %4823 = vmatmul.mubr.f32.gmra.mxu0 %v4568
      %v4824 = vpop.f32.mrf.mxu0
      %v4825 = vadd.f32 %v4695, %v4824
      %v4826 = vpop.f32.mrf.mxu0
      %4827 = vmatprep.mubr.f32.mxu0 0.0
      %4828 = vmatmul.mubr.f32.gmra.mxu0 %v4571
      %v4829 = vpop.f32.mrf.mxu0
      %v4830 = vadd.f32 %v4700, %v4829
      %v4831 = vpop.f32.mrf.mxu0
      %4832 = vmatprep.mubr.f32.mxu0 0.0
      %4833 = vmatmul.mubr.f32.gmra.mxu0 %v4574
      %v4834 = vpop.f32.mrf.mxu0
      %v4835 = vadd.f32 %v4705, %v4834
      %v4836 = vpop.f32.mrf.mxu0
      %4837 = vmatprep.mubr.f32.mxu0 0.0
      %4838 = vmatmul.mubr.f32.gmra.mxu0 %v4577
      %v4839 = vpop.f32.mrf.mxu0
      %v4840 = vadd.f32 %v4710, %v4839
      %v4841 = vpop.f32.mrf.mxu0
      %4842 = vdwg.mxu0
      %4843 = vst [vmem:[#allocation2] sm:$0xff] %v4780
      %4844 = vst [vmem:[#allocation2 + $0x8] sm:$0xff] %v4785
      %4845 = vst [vmem:[#allocation2 + $0x10] sm:$0xff] %v4790
      %4846 = vst [vmem:[#allocation2 + $0x18] sm:$0xff] %v4795
      %4847 = vst [vmem:[#allocation2 + $0x20] sm:$0xff] %v4800
      %4848 = vst [vmem:[#allocation2 + $0x28] sm:$0xff] %v4805
      %4849 = vst [vmem:[#allocation2 + $0x30] sm:$0xff] %v4810
      %4850 = vst [vmem:[#allocation2 + $0x38] sm:$0xff] %v4815
      %4851 = vst [vmem:[#allocation2 + $0x40] sm:$0xff] %v4820
      %4852 = vst [vmem:[#allocation2 + $0x48] sm:$0xff] %v4825
      %4853 = vst [vmem:[#allocation2 + $0x50] sm:$0xff] %v4830
      %4854 = vst [vmem:[#allocation2 + $0x58] sm:$0xff] %v4835
      %4855 = vst [vmem:[#allocation2 + $0x60] sm:$0xf] %v4840
      %v4856 = vld [vmem:[#allocation2] sm:$0xff]
      %v4857 = vld [vmem:[#allocation2 + $0x8] sm:$0xff]
      %v4858 = vld [vmem:[#allocation2 + $0x10] sm:$0xff]
      %v4859 = vld [vmem:[#allocation2 + $0x18] sm:$0xff]
      %v4860 = vld [vmem:[#allocation2 + $0x20] sm:$0xff]
      %v4861 = vld [vmem:[#allocation2 + $0x28] sm:$0xff]
      %v4862 = vld [vmem:[#allocation2 + $0x30] sm:$0xff]
      %v4863 = vld [vmem:[#allocation2 + $0x38] sm:$0xff]
      %v4864 = vld [vmem:[#allocation2 + $0x40] sm:$0xff]
      %v4865 = vld [vmem:[#allocation2 + $0x48] sm:$0x3f]
      %s4866 = scalar_lea.vmem %s2, 1152
      %v4867 = vld [vmem:[%s4866] sm:$0xff]
      %v4868 = vld [vmem:[%s4866 + $0x8] sm:$0xff]
      %v4869 = vld [vmem:[%s4866 + $0x10] sm:$0xff]
      %v4870 = vld [vmem:[%s4866 + $0x18] sm:$0xff]
      %v4871 = vld [vmem:[%s4866 + $0x20] sm:$0xff]
      %v4872 = vld [vmem:[%s4866 + $0x28] sm:$0xff]
      %v4873 = vld [vmem:[%s4866 + $0x30] sm:$0xff]
      %v4874 = vld [vmem:[%s4866 + $0x38] sm:$0xff]
      %v4875 = vld [vmem:[%s4866 + $0x40] sm:$0xff]
      %v4876 = vld [vmem:[%s4866 + $0x48] sm:$0xff]
      %v4877 = vld [vmem:[%s4866 + $0x50] sm:$0xff]
      %v4878 = vld [vmem:[%s4866 + $0x58] sm:$0xff]
      %v4879 = vld [vmem:[%s4866 + $0x60] sm:$0xff]
      %v4880 = vld [vmem:[%s4866 + $0x68] sm:$0xff]
      %v4881 = vld [vmem:[%s4866 + $0x70] sm:$0xff]
      %v4882 = vld [vmem:[%s4866 + $0x78] sm:$0xff]
      %v4883 = vld [vmem:[#allocation2 + $0x1] sm:$0xff]
      %v4884 = vld [vmem:[#allocation2 + $0x9] sm:$0xff]
      %v4885 = vld [vmem:[#allocation2 + $0x11] sm:$0xff]
      %v4886 = vld [vmem:[#allocation2 + $0x19] sm:$0xff]
      %v4887 = vld [vmem:[#allocation2 + $0x21] sm:$0xff]
      %v4888 = vld [vmem:[#allocation2 + $0x29] sm:$0xff]
      %v4889 = vld [vmem:[#allocation2 + $0x31] sm:$0xff]
      %v4890 = vld [vmem:[#allocation2 + $0x39] sm:$0xff]
      %v4891 = vld [vmem:[#allocation2 + $0x41] sm:$0xff]
      %v4892 = vld [vmem:[#allocation2 + $0x49] sm:$0x3f]
      %s4893 = scalar_lea.vmem %s2, 1280
      %v4894 = vld [vmem:[%s4893] sm:$0xff]
      %v4895 = vld [vmem:[%s4893 + $0x8] sm:$0xff]
      %v4896 = vld [vmem:[%s4893 + $0x10] sm:$0xff]
      %v4897 = vld [vmem:[%s4893 + $0x18] sm:$0xff]
      %v4898 = vld [vmem:[%s4893 + $0x20] sm:$0xff]
      %v4899 = vld [vmem:[%s4893 + $0x28] sm:$0xff]
      %v4900 = vld [vmem:[%s4893 + $0x30] sm:$0xff]
      %v4901 = vld [vmem:[%s4893 + $0x38] sm:$0xff]
      %v4902 = vld [vmem:[%s4893 + $0x40] sm:$0xff]
      %v4903 = vld [vmem:[%s4893 + $0x48] sm:$0xff]
      %v4904 = vld [vmem:[%s4893 + $0x50] sm:$0xff]
      %v4905 = vld [vmem:[%s4893 + $0x58] sm:$0xff]
      %v4906 = vld [vmem:[%s4893 + $0x60] sm:$0xff]
      %v4907 = vld [vmem:[%s4893 + $0x68] sm:$0xff]
      %v4908 = vld [vmem:[%s4893 + $0x70] sm:$0xff]
      %v4909 = vld [vmem:[%s4893 + $0x78] sm:$0xff]
      %4910 = vmatprep.subr.mxu0 0.0
      %4911 = vmatpush1.msra.mxu0 %v4909
      %4912 = vmatprep.subr.mxu0 0.0
      %4913 = vmatpush1.msra.mxu0 %v4908
      %4914 = vmatprep.subr.mxu0 0.0
      %4915 = vmatpush1.msra.mxu0 %v4907
      %4916 = vmatprep.subr.mxu0 0.0
      %4917 = vmatpush1.msra.mxu0 %v4906
      %4918 = vmatprep.subr.mxu0 0.0
      %4919 = vmatpush1.msra.mxu0 %v4905
      %4920 = vmatprep.subr.mxu0 0.0
      %4921 = vmatpush1.msra.mxu0 %v4904
      %4922 = vmatprep.subr.mxu0 0.0
      %4923 = vmatpush1.msra.mxu0 %v4903
      %4924 = vmatprep.subr.mxu0 0.0
      %4925 = vmatpush1.msra.mxu0 %v4902
      %4926 = vmatprep.subr.mxu0 0.0
      %4927 = vmatpush1.msra.mxu0 %v4901
      %4928 = vmatprep.subr.mxu0 0.0
      %4929 = vmatpush1.msra.mxu0 %v4900
      %4930 = vmatprep.subr.mxu0 0.0
      %4931 = vmatpush1.msra.mxu0 %v4899
      %4932 = vmatprep.subr.mxu0 0.0
      %4933 = vmatpush1.msra.mxu0 %v4898
      %4934 = vmatprep.subr.mxu0 0.0
      %4935 = vmatpush1.msra.mxu0 %v4897
      %4936 = vmatprep.subr.mxu0 0.0
      %4937 = vmatpush1.msra.mxu0 %v4896
      %4938 = vmatprep.subr.mxu0 0.0
      %4939 = vmatpush1.msra.mxu0 %v4895
      %4940 = vmatprep.subr.mxu0 0.0
      %4941 = vmatpush1.msra.mxu0 %v4894
      %4942 = vmatprep.subr.mxu0 0.0
      %4943 = vmatpush2.msra.mxu0 0.0
      %4944 = vmatprep.subr.mxu0 0.0
      %4945 = vmatpush2.msra.mxu0 0.0
      %4946 = vmatprep.subr.mxu0 0.0
      %4947 = vmatpush2.msra.mxu0 0.0
      %4948 = vmatprep.subr.mxu0 0.0
      %4949 = vmatpush2.msra.mxu0 0.0
      %4950 = vmatprep.subr.mxu0 0.0
      %4951 = vmatpush2.msra.mxu0 0.0
      %4952 = vmatprep.subr.mxu0 0.0
      %4953 = vmatpush2.msra.mxu0 0.0
      %4954 = vmatprep.subr.mxu0 0.0
      %4955 = vmatpush2.msra.mxu0 0.0
      %4956 = vmatprep.subr.mxu0 0.0
      %4957 = vmatpush2.msra.mxu0 0.0
      %4958 = vmatprep.subr.mxu0 0.0
      %4959 = vmatpush2.msra.mxu0 0.0
      %4960 = vmatprep.subr.mxu0 0.0
      %4961 = vmatpush2.msra.mxu0 0.0
      %4962 = vmatprep.subr.mxu0 0.0
      %4963 = vmatpush2.msra.mxu0 0.0
      %4964 = vmatprep.subr.mxu0 0.0
      %4965 = vmatpush2.msra.mxu0 0.0
      %4966 = vmatprep.subr.mxu0 0.0
      %4967 = vmatpush2.msra.mxu0 0.0
      %4968 = vmatprep.subr.mxu0 0.0
      %4969 = vmatpush2.msra.mxu0 0.0
      %4970 = vmatprep.subr.mxu0 0.0
      %4971 = vmatpush2.msra.mxu0 0.0
      %4972 = vmatprep.subr.mxu0 0.0
      %4973 = vmatpush2.msra.mxu0 0.0
      %4974 = vmatprep.mubr.f32.mxu0 0.0
      %4975 = vmatmul.mubr.f32.gmra.mxu0 %v4883
      %v4976 = vpop.f32.mrf.mxu0
      %v4977 = vadd.f32 0.0, %v4976
      %v4978 = vpop.f32.mrf.mxu0
      %4979 = vmatprep.mubr.f32.mxu0 0.0
      %4980 = vmatmul.mubr.f32.gmra.mxu0 %v4884
      %v4981 = vpop.f32.mrf.mxu0
      %v4982 = vadd.f32 0.0, %v4981
      %v4983 = vpop.f32.mrf.mxu0
      %4984 = vmatprep.mubr.f32.mxu0 0.0
      %4985 = vmatmul.mubr.f32.gmra.mxu0 %v4885
      %v4986 = vpop.f32.mrf.mxu0
      %v4987 = vadd.f32 0.0, %v4986
      %v4988 = vpop.f32.mrf.mxu0
      %4989 = vmatprep.mubr.f32.mxu0 0.0
      %4990 = vmatmul.mubr.f32.gmra.mxu0 %v4886
      %v4991 = vpop.f32.mrf.mxu0
      %v4992 = vadd.f32 0.0, %v4991
      %v4993 = vpop.f32.mrf.mxu0
      %4994 = vmatprep.mubr.f32.mxu0 0.0
      %4995 = vmatmul.mubr.f32.gmra.mxu0 %v4887
      %v4996 = vpop.f32.mrf.mxu0
      %v4997 = vadd.f32 0.0, %v4996
      %v4998 = vpop.f32.mrf.mxu0
      %4999 = vmatprep.mubr.f32.mxu0 0.0
      %5000 = vmatmul.mubr.f32.gmra.mxu0 %v4888
      %v5001 = vpop.f32.mrf.mxu0
      %v5002 = vadd.f32 0.0, %v5001
      %v5003 = vpop.f32.mrf.mxu0
      %5004 = vmatprep.mubr.f32.mxu0 0.0
      %5005 = vmatmul.mubr.f32.gmra.mxu0 %v4889
      %v5006 = vpop.f32.mrf.mxu0
      %v5007 = vadd.f32 0.0, %v5006
      %v5008 = vpop.f32.mrf.mxu0
      %5009 = vmatprep.mubr.f32.mxu0 0.0
      %5010 = vmatmul.mubr.f32.gmra.mxu0 %v4890
      %v5011 = vpop.f32.mrf.mxu0
      %v5012 = vadd.f32 0.0, %v5011
      %v5013 = vpop.f32.mrf.mxu0
      %5014 = vmatprep.mubr.f32.mxu0 0.0
      %5015 = vmatmul.mubr.f32.gmra.mxu0 %v4891
      %v5016 = vpop.f32.mrf.mxu0
      %v5017 = vadd.f32 0.0, %v5016
      %v5018 = vpop.f32.mrf.mxu0
      %5019 = vmatprep.mubr.f32.mxu0 0.0
      %5020 = vmatmul.mubr.f32.gmra.mxu0 %v4892
      %v5021 = vpop.f32.mrf.mxu0
      %v5022 = vadd.f32 0.0, %v5021
      %v5023 = vpop.f32.mrf.mxu0
      %5024 = vdwg.mxu0
      %5025 = vmatprep.subr.mxu0 0.0
      %5026 = vmatpush1.msra.mxu0 %v4882
      %5027 = vmatprep.subr.mxu0 0.0
      %5028 = vmatpush1.msra.mxu0 %v4881
      %5029 = vmatprep.subr.mxu0 0.0
      %5030 = vmatpush1.msra.mxu0 %v4880
      %5031 = vmatprep.subr.mxu0 0.0
      %5032 = vmatpush1.msra.mxu0 %v4879
      %5033 = vmatprep.subr.mxu0 0.0
      %5034 = vmatpush1.msra.mxu0 %v4878
      %5035 = vmatprep.subr.mxu0 0.0
      %5036 = vmatpush1.msra.mxu0 %v4877
      %5037 = vmatprep.subr.mxu0 0.0
      %5038 = vmatpush1.msra.mxu0 %v4876
      %5039 = vmatprep.subr.mxu0 0.0
      %5040 = vmatpush1.msra.mxu0 %v4875
      %5041 = vmatprep.subr.mxu0 0.0
      %5042 = vmatpush1.msra.mxu0 %v4874
      %5043 = vmatprep.subr.mxu0 0.0
      %5044 = vmatpush1.msra.mxu0 %v4873
      %5045 = vmatprep.subr.mxu0 0.0
      %5046 = vmatpush1.msra.mxu0 %v4872
      %5047 = vmatprep.subr.mxu0 0.0
      %5048 = vmatpush1.msra.mxu0 %v4871
      %5049 = vmatprep.subr.mxu0 0.0
      %5050 = vmatpush1.msra.mxu0 %v4870
      %5051 = vmatprep.subr.mxu0 0.0
      %5052 = vmatpush1.msra.mxu0 %v4869
      %5053 = vmatprep.subr.mxu0 0.0
      %5054 = vmatpush1.msra.mxu0 %v4868
      %5055 = vmatprep.subr.mxu0 0.0
      %5056 = vmatpush1.msra.mxu0 %v4867
      %5057 = vmatprep.subr.mxu0 0.0
      %5058 = vmatpush2.msra.mxu0 0.0
      %5059 = vmatprep.subr.mxu0 0.0
      %5060 = vmatpush2.msra.mxu0 0.0
      %5061 = vmatprep.subr.mxu0 0.0
      %5062 = vmatpush2.msra.mxu0 0.0
      %5063 = vmatprep.subr.mxu0 0.0
      %5064 = vmatpush2.msra.mxu0 0.0
      %5065 = vmatprep.subr.mxu0 0.0
      %5066 = vmatpush2.msra.mxu0 0.0
      %5067 = vmatprep.subr.mxu0 0.0
      %5068 = vmatpush2.msra.mxu0 0.0
      %5069 = vmatprep.subr.mxu0 0.0
      %5070 = vmatpush2.msra.mxu0 0.0
      %5071 = vmatprep.subr.mxu0 0.0
      %5072 = vmatpush2.msra.mxu0 0.0
      %5073 = vmatprep.subr.mxu0 0.0
      %5074 = vmatpush2.msra.mxu0 0.0
      %5075 = vmatprep.subr.mxu0 0.0
      %5076 = vmatpush2.msra.mxu0 0.0
      %5077 = vmatprep.subr.mxu0 0.0
      %5078 = vmatpush2.msra.mxu0 0.0
      %5079 = vmatprep.subr.mxu0 0.0
      %5080 = vmatpush2.msra.mxu0 0.0
      %5081 = vmatprep.subr.mxu0 0.0
      %5082 = vmatpush2.msra.mxu0 0.0
      %5083 = vmatprep.subr.mxu0 0.0
      %5084 = vmatpush2.msra.mxu0 0.0
      %5085 = vmatprep.subr.mxu0 0.0
      %5086 = vmatpush2.msra.mxu0 0.0
      %5087 = vmatprep.subr.mxu0 0.0
      %5088 = vmatpush2.msra.mxu0 0.0
      %5089 = vmatprep.mubr.f32.mxu0 0.0
      %5090 = vmatmul.mubr.f32.gmra.mxu0 %v4856
      %v5091 = vpop.f32.mrf.mxu0
      %v5092 = vadd.f32 %v4977, %v5091
      %v5093 = vpop.f32.mrf.mxu0
      %5094 = vmatprep.mubr.f32.mxu0 0.0
      %5095 = vmatmul.mubr.f32.gmra.mxu0 %v4857
      %v5096 = vpop.f32.mrf.mxu0
      %v5097 = vadd.f32 %v4982, %v5096
      %v5098 = vpop.f32.mrf.mxu0
      %5099 = vmatprep.mubr.f32.mxu0 0.0
      %5100 = vmatmul.mubr.f32.gmra.mxu0 %v4858
      %v5101 = vpop.f32.mrf.mxu0
      %v5102 = vadd.f32 %v4987, %v5101
      %v5103 = vpop.f32.mrf.mxu0
      %5104 = vmatprep.mubr.f32.mxu0 0.0
      %5105 = vmatmul.mubr.f32.gmra.mxu0 %v4859
      %v5106 = vpop.f32.mrf.mxu0
      %v5107 = vadd.f32 %v4992, %v5106
      %v5108 = vpop.f32.mrf.mxu0
      %5109 = vmatprep.mubr.f32.mxu0 0.0
      %5110 = vmatmul.mubr.f32.gmra.mxu0 %v4860
      %v5111 = vpop.f32.mrf.mxu0
      %v5112 = vadd.f32 %v4997, %v5111
      %v5113 = vpop.f32.mrf.mxu0
      %5114 = vmatprep.mubr.f32.mxu0 0.0
      %5115 = vmatmul.mubr.f32.gmra.mxu0 %v4861
      %v5116 = vpop.f32.mrf.mxu0
      %v5117 = vadd.f32 %v5002, %v5116
      %v5118 = vpop.f32.mrf.mxu0
      %5119 = vmatprep.mubr.f32.mxu0 0.0
      %5120 = vmatmul.mubr.f32.gmra.mxu0 %v4862
      %v5121 = vpop.f32.mrf.mxu0
      %v5122 = vadd.f32 %v5007, %v5121
      %v5123 = vpop.f32.mrf.mxu0
      %5124 = vmatprep.mubr.f32.mxu0 0.0
      %5125 = vmatmul.mubr.f32.gmra.mxu0 %v4863
      %v5126 = vpop.f32.mrf.mxu0
      %v5127 = vadd.f32 %v5012, %v5126
      %v5128 = vpop.f32.mrf.mxu0
      %5129 = vmatprep.mubr.f32.mxu0 0.0
      %5130 = vmatmul.mubr.f32.gmra.mxu0 %v4864
      %v5131 = vpop.f32.mrf.mxu0
      %v5132 = vadd.f32 %v5017, %v5131
      %v5133 = vpop.f32.mrf.mxu0
      %5134 = vmatprep.mubr.f32.mxu0 0.0
      %5135 = vmatmul.mubr.f32.gmra.mxu0 %v4865
      %v5136 = vpop.f32.mrf.mxu0
      %v5137 = vadd.f32 %v5022, %v5136
      %v5138 = vpop.f32.mrf.mxu0
      %5139 = vdwg.mxu0
      %v5140 = vld [vmem:[#allocation2 + $0x2] sm:$0xff]
      %v5141 = vld [vmem:[#allocation2 + $0xa] sm:$0xff]
      %v5142 = vld [vmem:[#allocation2 + $0x12] sm:$0xff]
      %v5143 = vld [vmem:[#allocation2 + $0x1a] sm:$0xff]
      %v5144 = vld [vmem:[#allocation2 + $0x22] sm:$0xff]
      %v5145 = vld [vmem:[#allocation2 + $0x2a] sm:$0xff]
      %v5146 = vld [vmem:[#allocation2 + $0x32] sm:$0xff]
      %v5147 = vld [vmem:[#allocation2 + $0x3a] sm:$0xff]
      %v5148 = vld [vmem:[#allocation2 + $0x42] sm:$0xff]
      %v5149 = vld [vmem:[#allocation2 + $0x4a] sm:$0x3f]
      %s5150 = scalar_lea.vmem %s2, 1408
      %v5151 = vld [vmem:[%s5150] sm:$0xff]
      %v5152 = vld [vmem:[%s5150 + $0x8] sm:$0xff]
      %v5153 = vld [vmem:[%s5150 + $0x10] sm:$0xff]
      %v5154 = vld [vmem:[%s5150 + $0x18] sm:$0xff]
      %v5155 = vld [vmem:[%s5150 + $0x20] sm:$0xff]
      %v5156 = vld [vmem:[%s5150 + $0x28] sm:$0xff]
      %v5157 = vld [vmem:[%s5150 + $0x30] sm:$0xff]
      %v5158 = vld [vmem:[%s5150 + $0x38] sm:$0xff]
      %v5159 = vld [vmem:[%s5150 + $0x40] sm:$0xff]
      %v5160 = vld [vmem:[%s5150 + $0x48] sm:$0xff]
      %v5161 = vld [vmem:[%s5150 + $0x50] sm:$0xff]
      %v5162 = vld [vmem:[%s5150 + $0x58] sm:$0xff]
      %v5163 = vld [vmem:[%s5150 + $0x60] sm:$0xff]
      %v5164 = vld [vmem:[%s5150 + $0x68] sm:$0xff]
      %v5165 = vld [vmem:[%s5150 + $0x70] sm:$0xff]
      %v5166 = vld [vmem:[%s5150 + $0x78] sm:$0xff]
      %5167 = vmatprep.subr.mxu0 0.0
      %5168 = vmatpush1.msra.mxu0 %v5166
      %5169 = vmatprep.subr.mxu0 0.0
      %5170 = vmatpush1.msra.mxu0 %v5165
      %5171 = vmatprep.subr.mxu0 0.0
      %5172 = vmatpush1.msra.mxu0 %v5164
      %5173 = vmatprep.subr.mxu0 0.0
      %5174 = vmatpush1.msra.mxu0 %v5163
      %5175 = vmatprep.subr.mxu0 0.0
      %5176 = vmatpush1.msra.mxu0 %v5162
      %5177 = vmatprep.subr.mxu0 0.0
      %5178 = vmatpush1.msra.mxu0 %v5161
      %5179 = vmatprep.subr.mxu0 0.0
      %5180 = vmatpush1.msra.mxu0 %v5160
      %5181 = vmatprep.subr.mxu0 0.0
      %5182 = vmatpush1.msra.mxu0 %v5159
      %5183 = vmatprep.subr.mxu0 0.0
      %5184 = vmatpush1.msra.mxu0 %v5158
      %5185 = vmatprep.subr.mxu0 0.0
      %5186 = vmatpush1.msra.mxu0 %v5157
      %5187 = vmatprep.subr.mxu0 0.0
      %5188 = vmatpush1.msra.mxu0 %v5156
      %5189 = vmatprep.subr.mxu0 0.0
      %5190 = vmatpush1.msra.mxu0 %v5155
      %5191 = vmatprep.subr.mxu0 0.0
      %5192 = vmatpush1.msra.mxu0 %v5154
      %5193 = vmatprep.subr.mxu0 0.0
      %5194 = vmatpush1.msra.mxu0 %v5153
      %5195 = vmatprep.subr.mxu0 0.0
      %5196 = vmatpush1.msra.mxu0 %v5152
      %5197 = vmatprep.subr.mxu0 0.0
      %5198 = vmatpush1.msra.mxu0 %v5151
      %5199 = vmatprep.subr.mxu0 0.0
      %5200 = vmatpush2.msra.mxu0 0.0
      %5201 = vmatprep.subr.mxu0 0.0
      %5202 = vmatpush2.msra.mxu0 0.0
      %5203 = vmatprep.subr.mxu0 0.0
      %5204 = vmatpush2.msra.mxu0 0.0
      %5205 = vmatprep.subr.mxu0 0.0
      %5206 = vmatpush2.msra.mxu0 0.0
      %5207 = vmatprep.subr.mxu0 0.0
      %5208 = vmatpush2.msra.mxu0 0.0
      %5209 = vmatprep.subr.mxu0 0.0
      %5210 = vmatpush2.msra.mxu0 0.0
      %5211 = vmatprep.subr.mxu0 0.0
      %5212 = vmatpush2.msra.mxu0 0.0
      %5213 = vmatprep.subr.mxu0 0.0
      %5214 = vmatpush2.msra.mxu0 0.0
      %5215 = vmatprep.subr.mxu0 0.0
      %5216 = vmatpush2.msra.mxu0 0.0
      %5217 = vmatprep.subr.mxu0 0.0
      %5218 = vmatpush2.msra.mxu0 0.0
      %5219 = vmatprep.subr.mxu0 0.0
      %5220 = vmatpush2.msra.mxu0 0.0
      %5221 = vmatprep.subr.mxu0 0.0
      %5222 = vmatpush2.msra.mxu0 0.0
      %5223 = vmatprep.subr.mxu0 0.0
      %5224 = vmatpush2.msra.mxu0 0.0
      %5225 = vmatprep.subr.mxu0 0.0
      %5226 = vmatpush2.msra.mxu0 0.0
      %5227 = vmatprep.subr.mxu0 0.0
      %5228 = vmatpush2.msra.mxu0 0.0
      %5229 = vmatprep.subr.mxu0 0.0
      %5230 = vmatpush2.msra.mxu0 0.0
      %5231 = vmatprep.mubr.f32.mxu0 0.0
      %5232 = vmatmul.mubr.f32.gmra.mxu0 %v5140
      %v5233 = vpop.f32.mrf.mxu0
      %v5234 = vadd.f32 0.0, %v5233
      %v5235 = vpop.f32.mrf.mxu0
      %5236 = vmatprep.mubr.f32.mxu0 0.0
      %5237 = vmatmul.mubr.f32.gmra.mxu0 %v5141
      %v5238 = vpop.f32.mrf.mxu0
      %v5239 = vadd.f32 0.0, %v5238
      %v5240 = vpop.f32.mrf.mxu0
      %5241 = vmatprep.mubr.f32.mxu0 0.0
      %5242 = vmatmul.mubr.f32.gmra.mxu0 %v5142
      %v5243 = vpop.f32.mrf.mxu0
      %v5244 = vadd.f32 0.0, %v5243
      %v5245 = vpop.f32.mrf.mxu0
      %5246 = vmatprep.mubr.f32.mxu0 0.0
      %5247 = vmatmul.mubr.f32.gmra.mxu0 %v5143
      %v5248 = vpop.f32.mrf.mxu0
      %v5249 = vadd.f32 0.0, %v5248
      %v5250 = vpop.f32.mrf.mxu0
      %5251 = vmatprep.mubr.f32.mxu0 0.0
      %5252 = vmatmul.mubr.f32.gmra.mxu0 %v5144
      %v5253 = vpop.f32.mrf.mxu0
      %v5254 = vadd.f32 0.0, %v5253
      %v5255 = vpop.f32.mrf.mxu0
      %5256 = vmatprep.mubr.f32.mxu0 0.0
      %5257 = vmatmul.mubr.f32.gmra.mxu0 %v5145
      %v5258 = vpop.f32.mrf.mxu0
      %v5259 = vadd.f32 0.0, %v5258
      %v5260 = vpop.f32.mrf.mxu0
      %5261 = vmatprep.mubr.f32.mxu0 0.0
      %5262 = vmatmul.mubr.f32.gmra.mxu0 %v5146
      %v5263 = vpop.f32.mrf.mxu0
      %v5264 = vadd.f32 0.0, %v5263
      %v5265 = vpop.f32.mrf.mxu0
      %5266 = vmatprep.mubr.f32.mxu0 0.0
      %5267 = vmatmul.mubr.f32.gmra.mxu0 %v5147
      %v5268 = vpop.f32.mrf.mxu0
      %v5269 = vadd.f32 0.0, %v5268
      %v5270 = vpop.f32.mrf.mxu0
      %5271 = vmatprep.mubr.f32.mxu0 0.0
      %5272 = vmatmul.mubr.f32.gmra.mxu0 %v5148
      %v5273 = vpop.f32.mrf.mxu0
      %v5274 = vadd.f32 0.0, %v5273
      %v5275 = vpop.f32.mrf.mxu0
      %5276 = vmatprep.mubr.f32.mxu0 0.0
      %5277 = vmatmul.mubr.f32.gmra.mxu0 %v5149
      %v5278 = vpop.f32.mrf.mxu0
      %v5279 = vadd.f32 0.0, %v5278
      %v5280 = vpop.f32.mrf.mxu0
      %5281 = vdwg.mxu0
      %v5282 = vadd.f32 %v5092, %v5234
      %v5283 = vadd.f32 %v5097, %v5239
      %v5284 = vadd.f32 %v5102, %v5244
      %v5285 = vadd.f32 %v5107, %v5249
      %v5286 = vadd.f32 %v5112, %v5254
      %v5287 = vadd.f32 %v5117, %v5259
      %v5288 = vadd.f32 %v5122, %v5264
      %v5289 = vadd.f32 %v5127, %v5269
      %v5290 = vadd.f32 %v5132, %v5274
      %v5291 = vadd.f32 %v5137, %v5279
      %v5292 = vld [vmem:[#allocation2 + $0xa] sm:$0xff]
      %v5293 = vld [vmem:[#allocation2 + $0x12] sm:$0xff]
      %v5294 = vld [vmem:[#allocation2 + $0x1a] sm:$0xff]
      %v5295 = vld [vmem:[#allocation2 + $0x22] sm:$0xff]
      %v5296 = vld [vmem:[#allocation2 + $0x2a] sm:$0xff]
      %v5297 = vld [vmem:[#allocation2 + $0x32] sm:$0xff]
      %v5298 = vld [vmem:[#allocation2 + $0x3a] sm:$0xff]
      %v5299 = vld [vmem:[#allocation2 + $0x42] sm:$0xff]
      %v5300 = vld [vmem:[#allocation2 + $0x4a] sm:$0xff]
      %v5301 = vld [vmem:[#allocation2 + $0x52] sm:$0x3f]
      %s5302 = scalar_lea.vmem %s2, 1536
      %v5303 = vld [vmem:[%s5302] sm:$0xff]
      %v5304 = vld [vmem:[%s5302 + $0x8] sm:$0xff]
      %v5305 = vld [vmem:[%s5302 + $0x10] sm:$0xff]
      %v5306 = vld [vmem:[%s5302 + $0x18] sm:$0xff]
      %v5307 = vld [vmem:[%s5302 + $0x20] sm:$0xff]
      %v5308 = vld [vmem:[%s5302 + $0x28] sm:$0xff]
      %v5309 = vld [vmem:[%s5302 + $0x30] sm:$0xff]
      %v5310 = vld [vmem:[%s5302 + $0x38] sm:$0xff]
      %v5311 = vld [vmem:[%s5302 + $0x40] sm:$0xff]
      %v5312 = vld [vmem:[%s5302 + $0x48] sm:$0xff]
      %v5313 = vld [vmem:[%s5302 + $0x50] sm:$0xff]
      %v5314 = vld [vmem:[%s5302 + $0x58] sm:$0xff]
      %v5315 = vld [vmem:[%s5302 + $0x60] sm:$0xff]
      %v5316 = vld [vmem:[%s5302 + $0x68] sm:$0xff]
      %v5317 = vld [vmem:[%s5302 + $0x70] sm:$0xff]
      %v5318 = vld [vmem:[%s5302 + $0x78] sm:$0xff]
      %5319 = vmatprep.subr.mxu0 0.0
      %5320 = vmatpush1.msra.mxu0 %v5318
      %5321 = vmatprep.subr.mxu0 0.0
      %5322 = vmatpush1.msra.mxu0 %v5317
      %5323 = vmatprep.subr.mxu0 0.0
      %5324 = vmatpush1.msra.mxu0 %v5316
      %5325 = vmatprep.subr.mxu0 0.0
      %5326 = vmatpush1.msra.mxu0 %v5315
      %5327 = vmatprep.subr.mxu0 0.0
      %5328 = vmatpush1.msra.mxu0 %v5314
      %5329 = vmatprep.subr.mxu0 0.0
      %5330 = vmatpush1.msra.mxu0 %v5313
      %5331 = vmatprep.subr.mxu0 0.0
      %5332 = vmatpush1.msra.mxu0 %v5312
      %5333 = vmatprep.subr.mxu0 0.0
      %5334 = vmatpush1.msra.mxu0 %v5311
      %5335 = vmatprep.subr.mxu0 0.0
      %5336 = vmatpush1.msra.mxu0 %v5310
      %5337 = vmatprep.subr.mxu0 0.0
      %5338 = vmatpush1.msra.mxu0 %v5309
      %5339 = vmatprep.subr.mxu0 0.0
      %5340 = vmatpush1.msra.mxu0 %v5308
      %5341 = vmatprep.subr.mxu0 0.0
      %5342 = vmatpush1.msra.mxu0 %v5307
      %5343 = vmatprep.subr.mxu0 0.0
      %5344 = vmatpush1.msra.mxu0 %v5306
      %5345 = vmatprep.subr.mxu0 0.0
      %5346 = vmatpush1.msra.mxu0 %v5305
      %5347 = vmatprep.subr.mxu0 0.0
      %5348 = vmatpush1.msra.mxu0 %v5304
      %5349 = vmatprep.subr.mxu0 0.0
      %5350 = vmatpush1.msra.mxu0 %v5303
      %5351 = vmatprep.subr.mxu0 0.0
      %5352 = vmatpush2.msra.mxu0 0.0
      %5353 = vmatprep.subr.mxu0 0.0
      %5354 = vmatpush2.msra.mxu0 0.0
      %5355 = vmatprep.subr.mxu0 0.0
      %5356 = vmatpush2.msra.mxu0 0.0
      %5357 = vmatprep.subr.mxu0 0.0
      %5358 = vmatpush2.msra.mxu0 0.0
      %5359 = vmatprep.subr.mxu0 0.0
      %5360 = vmatpush2.msra.mxu0 0.0
      %5361 = vmatprep.subr.mxu0 0.0
      %5362 = vmatpush2.msra.mxu0 0.0
      %5363 = vmatprep.subr.mxu0 0.0
      %5364 = vmatpush2.msra.mxu0 0.0
      %5365 = vmatprep.subr.mxu0 0.0
      %5366 = vmatpush2.msra.mxu0 0.0
      %5367 = vmatprep.subr.mxu0 0.0
      %5368 = vmatpush2.msra.mxu0 0.0
      %5369 = vmatprep.subr.mxu0 0.0
      %5370 = vmatpush2.msra.mxu0 0.0
      %5371 = vmatprep.subr.mxu0 0.0
      %5372 = vmatpush2.msra.mxu0 0.0
      %5373 = vmatprep.subr.mxu0 0.0
      %5374 = vmatpush2.msra.mxu0 0.0
      %5375 = vmatprep.subr.mxu0 0.0
      %5376 = vmatpush2.msra.mxu0 0.0
      %5377 = vmatprep.subr.mxu0 0.0
      %5378 = vmatpush2.msra.mxu0 0.0
      %5379 = vmatprep.subr.mxu0 0.0
      %5380 = vmatpush2.msra.mxu0 0.0
      %5381 = vmatprep.subr.mxu0 0.0
      %5382 = vmatpush2.msra.mxu0 0.0
      %5383 = vmatprep.mubr.f32.mxu0 0.0
      %5384 = vmatmul.mubr.f32.gmra.mxu0 %v5292
      %v5385 = vpop.f32.mrf.mxu0
      %v5386 = vadd.f32 0.0, %v5385
      %v5387 = vpop.f32.mrf.mxu0
      %5388 = vmatprep.mubr.f32.mxu0 0.0
      %5389 = vmatmul.mubr.f32.gmra.mxu0 %v5293
      %v5390 = vpop.f32.mrf.mxu0
      %v5391 = vadd.f32 0.0, %v5390
      %v5392 = vpop.f32.mrf.mxu0
      %5393 = vmatprep.mubr.f32.mxu0 0.0
      %5394 = vmatmul.mubr.f32.gmra.mxu0 %v5294
      %v5395 = vpop.f32.mrf.mxu0
      %v5396 = vadd.f32 0.0, %v5395
      %v5397 = vpop.f32.mrf.mxu0
      %5398 = vmatprep.mubr.f32.mxu0 0.0
      %5399 = vmatmul.mubr.f32.gmra.mxu0 %v5295
      %v5400 = vpop.f32.mrf.mxu0
      %v5401 = vadd.f32 0.0, %v5400
      %v5402 = vpop.f32.mrf.mxu0
      %5403 = vmatprep.mubr.f32.mxu0 0.0
      %5404 = vmatmul.mubr.f32.gmra.mxu0 %v5296
      %v5405 = vpop.f32.mrf.mxu0
      %v5406 = vadd.f32 0.0, %v5405
      %v5407 = vpop.f32.mrf.mxu0
      %5408 = vmatprep.mubr.f32.mxu0 0.0
      %5409 = vmatmul.mubr.f32.gmra.mxu0 %v5297
      %v5410 = vpop.f32.mrf.mxu0
      %v5411 = vadd.f32 0.0, %v5410
      %v5412 = vpop.f32.mrf.mxu0
      %5413 = vmatprep.mubr.f32.mxu0 0.0
      %5414 = vmatmul.mubr.f32.gmra.mxu0 %v5298
      %v5415 = vpop.f32.mrf.mxu0
      %v5416 = vadd.f32 0.0, %v5415
      %v5417 = vpop.f32.mrf.mxu0
      %5418 = vmatprep.mubr.f32.mxu0 0.0
      %5419 = vmatmul.mubr.f32.gmra.mxu0 %v5299
      %v5420 = vpop.f32.mrf.mxu0
      %v5421 = vadd.f32 0.0, %v5420
      %v5422 = vpop.f32.mrf.mxu0
      %5423 = vmatprep.mubr.f32.mxu0 0.0
      %5424 = vmatmul.mubr.f32.gmra.mxu0 %v5300
      %v5425 = vpop.f32.mrf.mxu0
      %v5426 = vadd.f32 0.0, %v5425
      %v5427 = vpop.f32.mrf.mxu0
      %5428 = vmatprep.mubr.f32.mxu0 0.0
      %5429 = vmatmul.mubr.f32.gmra.mxu0 %v5301
      %v5430 = vpop.f32.mrf.mxu0
      %v5431 = vadd.f32 0.0, %v5430
      %v5432 = vpop.f32.mrf.mxu0
      %5433 = vdwg.mxu0
      %v5434 = vadd.f32 %v5282, %v5386
      %v5435 = vadd.f32 %v5283, %v5391
      %v5436 = vadd.f32 %v5284, %v5396
      %v5437 = vadd.f32 %v5285, %v5401
      %v5438 = vadd.f32 %v5286, %v5406
      %v5439 = vadd.f32 %v5287, %v5411
      %v5440 = vadd.f32 %v5288, %v5416
      %v5441 = vadd.f32 %v5289, %v5421
      %v5442 = vadd.f32 %v5290, %v5426
      %v5443 = vadd.f32 %v5291, %v5431
      %v5444 = vld [vmem:[#allocation2 + $0xb] sm:$0xff]
      %v5445 = vld [vmem:[#allocation2 + $0x13] sm:$0xff]
      %v5446 = vld [vmem:[#allocation2 + $0x1b] sm:$0xff]
      %v5447 = vld [vmem:[#allocation2 + $0x23] sm:$0xff]
      %v5448 = vld [vmem:[#allocation2 + $0x2b] sm:$0xff]
      %v5449 = vld [vmem:[#allocation2 + $0x33] sm:$0xff]
      %v5450 = vld [vmem:[#allocation2 + $0x3b] sm:$0xff]
      %v5451 = vld [vmem:[#allocation2 + $0x43] sm:$0xff]
      %v5452 = vld [vmem:[#allocation2 + $0x4b] sm:$0xff]
      %v5453 = vld [vmem:[#allocation2 + $0x53] sm:$0x3f]
      %s5454 = scalar_lea.vmem %s2, 1664
      %v5455 = vld [vmem:[%s5454] sm:$0xff]
      %v5456 = vld [vmem:[%s5454 + $0x8] sm:$0xff]
      %v5457 = vld [vmem:[%s5454 + $0x10] sm:$0xff]
      %v5458 = vld [vmem:[%s5454 + $0x18] sm:$0xff]
      %v5459 = vld [vmem:[%s5454 + $0x20] sm:$0xff]
      %v5460 = vld [vmem:[%s5454 + $0x28] sm:$0xff]
      %v5461 = vld [vmem:[%s5454 + $0x30] sm:$0xff]
      %v5462 = vld [vmem:[%s5454 + $0x38] sm:$0xff]
      %v5463 = vld [vmem:[%s5454 + $0x40] sm:$0xff]
      %v5464 = vld [vmem:[%s5454 + $0x48] sm:$0xff]
      %v5465 = vld [vmem:[%s5454 + $0x50] sm:$0xff]
      %v5466 = vld [vmem:[%s5454 + $0x58] sm:$0xff]
      %v5467 = vld [vmem:[%s5454 + $0x60] sm:$0xff]
      %v5468 = vld [vmem:[%s5454 + $0x68] sm:$0xff]
      %v5469 = vld [vmem:[%s5454 + $0x70] sm:$0xff]
      %v5470 = vld [vmem:[%s5454 + $0x78] sm:$0xff]
      %5471 = vmatprep.subr.mxu0 0.0
      %5472 = vmatpush1.msra.mxu0 %v5470
      %5473 = vmatprep.subr.mxu0 0.0
      %5474 = vmatpush1.msra.mxu0 %v5469
      %5475 = vmatprep.subr.mxu0 0.0
      %5476 = vmatpush1.msra.mxu0 %v5468
      %5477 = vmatprep.subr.mxu0 0.0
      %5478 = vmatpush1.msra.mxu0 %v5467
      %5479 = vmatprep.subr.mxu0 0.0
      %5480 = vmatpush1.msra.mxu0 %v5466
      %5481 = vmatprep.subr.mxu0 0.0
      %5482 = vmatpush1.msra.mxu0 %v5465
      %5483 = vmatprep.subr.mxu0 0.0
      %5484 = vmatpush1.msra.mxu0 %v5464
      %5485 = vmatprep.subr.mxu0 0.0
      %5486 = vmatpush1.msra.mxu0 %v5463
      %5487 = vmatprep.subr.mxu0 0.0
      %5488 = vmatpush1.msra.mxu0 %v5462
      %5489 = vmatprep.subr.mxu0 0.0
      %5490 = vmatpush1.msra.mxu0 %v5461
      %5491 = vmatprep.subr.mxu0 0.0
      %5492 = vmatpush1.msra.mxu0 %v5460
      %5493 = vmatprep.subr.mxu0 0.0
      %5494 = vmatpush1.msra.mxu0 %v5459
      %5495 = vmatprep.subr.mxu0 0.0
      %5496 = vmatpush1.msra.mxu0 %v5458
      %5497 = vmatprep.subr.mxu0 0.0
      %5498 = vmatpush1.msra.mxu0 %v5457
      %5499 = vmatprep.subr.mxu0 0.0
      %5500 = vmatpush1.msra.mxu0 %v5456
      %5501 = vmatprep.subr.mxu0 0.0
      %5502 = vmatpush1.msra.mxu0 %v5455
      %5503 = vmatprep.subr.mxu0 0.0
      %5504 = vmatpush2.msra.mxu0 0.0
      %5505 = vmatprep.subr.mxu0 0.0
      %5506 = vmatpush2.msra.mxu0 0.0
      %5507 = vmatprep.subr.mxu0 0.0
      %5508 = vmatpush2.msra.mxu0 0.0
      %5509 = vmatprep.subr.mxu0 0.0
      %5510 = vmatpush2.msra.mxu0 0.0
      %5511 = vmatprep.subr.mxu0 0.0
      %5512 = vmatpush2.msra.mxu0 0.0
      %5513 = vmatprep.subr.mxu0 0.0
      %5514 = vmatpush2.msra.mxu0 0.0
      %5515 = vmatprep.subr.mxu0 0.0
      %5516 = vmatpush2.msra.mxu0 0.0
      %5517 = vmatprep.subr.mxu0 0.0
      %5518 = vmatpush2.msra.mxu0 0.0
      %5519 = vmatprep.subr.mxu0 0.0
      %5520 = vmatpush2.msra.mxu0 0.0
      %5521 = vmatprep.subr.mxu0 0.0
      %5522 = vmatpush2.msra.mxu0 0.0
      %5523 = vmatprep.subr.mxu0 0.0
      %5524 = vmatpush2.msra.mxu0 0.0
      %5525 = vmatprep.subr.mxu0 0.0
      %5526 = vmatpush2.msra.mxu0 0.0
      %5527 = vmatprep.subr.mxu0 0.0
      %5528 = vmatpush2.msra.mxu0 0.0
      %5529 = vmatprep.subr.mxu0 0.0
      %5530 = vmatpush2.msra.mxu0 0.0
      %5531 = vmatprep.subr.mxu0 0.0
      %5532 = vmatpush2.msra.mxu0 0.0
      %5533 = vmatprep.subr.mxu0 0.0
      %5534 = vmatpush2.msra.mxu0 0.0
      %5535 = vmatprep.mubr.f32.mxu0 0.0
      %5536 = vmatmul.mubr.f32.gmra.mxu0 %v5444
      %v5537 = vpop.f32.mrf.mxu0
      %v5538 = vadd.f32 0.0, %v5537
      %v5539 = vpop.f32.mrf.mxu0
      %5540 = vmatprep.mubr.f32.mxu0 0.0
      %5541 = vmatmul.mubr.f32.gmra.mxu0 %v5445
      %v5542 = vpop.f32.mrf.mxu0
      %v5543 = vadd.f32 0.0, %v5542
      %v5544 = vpop.f32.mrf.mxu0
      %5545 = vmatprep.mubr.f32.mxu0 0.0
      %5546 = vmatmul.mubr.f32.gmra.mxu0 %v5446
      %v5547 = vpop.f32.mrf.mxu0
      %v5548 = vadd.f32 0.0, %v5547
      %v5549 = vpop.f32.mrf.mxu0
      %5550 = vmatprep.mubr.f32.mxu0 0.0
      %5551 = vmatmul.mubr.f32.gmra.mxu0 %v5447
      %v5552 = vpop.f32.mrf.mxu0
      %v5553 = vadd.f32 0.0, %v5552
      %v5554 = vpop.f32.mrf.mxu0
      %5555 = vmatprep.mubr.f32.mxu0 0.0
      %5556 = vmatmul.mubr.f32.gmra.mxu0 %v5448
      %v5557 = vpop.f32.mrf.mxu0
      %v5558 = vadd.f32 0.0, %v5557
      %v5559 = vpop.f32.mrf.mxu0
      %5560 = vmatprep.mubr.f32.mxu0 0.0
      %5561 = vmatmul.mubr.f32.gmra.mxu0 %v5449
      %v5562 = vpop.f32.mrf.mxu0
      %v5563 = vadd.f32 0.0, %v5562
      %v5564 = vpop.f32.mrf.mxu0
      %5565 = vmatprep.mubr.f32.mxu0 0.0
      %5566 = vmatmul.mubr.f32.gmra.mxu0 %v5450
      %v5567 = vpop.f32.mrf.mxu0
      %v5568 = vadd.f32 0.0, %v5567
      %v5569 = vpop.f32.mrf.mxu0
      %5570 = vmatprep.mubr.f32.mxu0 0.0
      %5571 = vmatmul.mubr.f32.gmra.mxu0 %v5451
      %v5572 = vpop.f32.mrf.mxu0
      %v5573 = vadd.f32 0.0, %v5572
      %v5574 = vpop.f32.mrf.mxu0
      %5575 = vmatprep.mubr.f32.mxu0 0.0
      %5576 = vmatmul.mubr.f32.gmra.mxu0 %v5452
      %v5577 = vpop.f32.mrf.mxu0
      %v5578 = vadd.f32 0.0, %v5577
      %v5579 = vpop.f32.mrf.mxu0
      %5580 = vmatprep.mubr.f32.mxu0 0.0
      %5581 = vmatmul.mubr.f32.gmra.mxu0 %v5453
      %v5582 = vpop.f32.mrf.mxu0
      %v5583 = vadd.f32 0.0, %v5582
      %v5584 = vpop.f32.mrf.mxu0
      %5585 = vdwg.mxu0
      %v5586 = vadd.f32 %v5434, %v5538
      %v5587 = vadd.f32 %v5435, %v5543
      %v5588 = vadd.f32 %v5436, %v5548
      %v5589 = vadd.f32 %v5437, %v5553
      %v5590 = vadd.f32 %v5438, %v5558
      %v5591 = vadd.f32 %v5439, %v5563
      %v5592 = vadd.f32 %v5440, %v5568
      %v5593 = vadd.f32 %v5441, %v5573
      %v5594 = vadd.f32 %v5442, %v5578
      %v5595 = vadd.f32 %v5443, %v5583
      %v5596 = vld [vmem:[#allocation2 + $0xc] sm:$0xff]
      %v5597 = vld [vmem:[#allocation2 + $0x14] sm:$0xff]
      %v5598 = vld [vmem:[#allocation2 + $0x1c] sm:$0xff]
      %v5599 = vld [vmem:[#allocation2 + $0x24] sm:$0xff]
      %v5600 = vld [vmem:[#allocation2 + $0x2c] sm:$0xff]
      %v5601 = vld [vmem:[#allocation2 + $0x34] sm:$0xff]
      %v5602 = vld [vmem:[#allocation2 + $0x3c] sm:$0xff]
      %v5603 = vld [vmem:[#allocation2 + $0x44] sm:$0xff]
      %v5604 = vld [vmem:[#allocation2 + $0x4c] sm:$0xff]
      %v5605 = vld [vmem:[#allocation2 + $0x54] sm:$0x3f]
      %s5606 = scalar_lea.vmem %s2, 1792
      %v5607 = vld [vmem:[%s5606] sm:$0xff]
      %v5608 = vld [vmem:[%s5606 + $0x8] sm:$0xff]
      %v5609 = vld [vmem:[%s5606 + $0x10] sm:$0xff]
      %v5610 = vld [vmem:[%s5606 + $0x18] sm:$0xff]
      %v5611 = vld [vmem:[%s5606 + $0x20] sm:$0xff]
      %v5612 = vld [vmem:[%s5606 + $0x28] sm:$0xff]
      %v5613 = vld [vmem:[%s5606 + $0x30] sm:$0xff]
      %v5614 = vld [vmem:[%s5606 + $0x38] sm:$0xff]
      %v5615 = vld [vmem:[%s5606 + $0x40] sm:$0xff]
      %v5616 = vld [vmem:[%s5606 + $0x48] sm:$0xff]
      %v5617 = vld [vmem:[%s5606 + $0x50] sm:$0xff]
      %v5618 = vld [vmem:[%s5606 + $0x58] sm:$0xff]
      %v5619 = vld [vmem:[%s5606 + $0x60] sm:$0xff]
      %v5620 = vld [vmem:[%s5606 + $0x68] sm:$0xff]
      %v5621 = vld [vmem:[%s5606 + $0x70] sm:$0xff]
      %v5622 = vld [vmem:[%s5606 + $0x78] sm:$0xff]
      %5623 = vmatprep.subr.mxu0 0.0
      %5624 = vmatpush1.msra.mxu0 %v5622
      %5625 = vmatprep.subr.mxu0 0.0
      %5626 = vmatpush1.msra.mxu0 %v5621
      %5627 = vmatprep.subr.mxu0 0.0
      %5628 = vmatpush1.msra.mxu0 %v5620
      %5629 = vmatprep.subr.mxu0 0.0
      %5630 = vmatpush1.msra.mxu0 %v5619
      %5631 = vmatprep.subr.mxu0 0.0
      %5632 = vmatpush1.msra.mxu0 %v5618
      %5633 = vmatprep.subr.mxu0 0.0
      %5634 = vmatpush1.msra.mxu0 %v5617
      %5635 = vmatprep.subr.mxu0 0.0
      %5636 = vmatpush1.msra.mxu0 %v5616
      %5637 = vmatprep.subr.mxu0 0.0
      %5638 = vmatpush1.msra.mxu0 %v5615
      %5639 = vmatprep.subr.mxu0 0.0
      %5640 = vmatpush1.msra.mxu0 %v5614
      %5641 = vmatprep.subr.mxu0 0.0
      %5642 = vmatpush1.msra.mxu0 %v5613
      %5643 = vmatprep.subr.mxu0 0.0
      %5644 = vmatpush1.msra.mxu0 %v5612
      %5645 = vmatprep.subr.mxu0 0.0
      %5646 = vmatpush1.msra.mxu0 %v5611
      %5647 = vmatprep.subr.mxu0 0.0
      %5648 = vmatpush1.msra.mxu0 %v5610
      %5649 = vmatprep.subr.mxu0 0.0
      %5650 = vmatpush1.msra.mxu0 %v5609
      %5651 = vmatprep.subr.mxu0 0.0
      %5652 = vmatpush1.msra.mxu0 %v5608
      %5653 = vmatprep.subr.mxu0 0.0
      %5654 = vmatpush1.msra.mxu0 %v5607
      %5655 = vmatprep.subr.mxu0 0.0
      %5656 = vmatpush2.msra.mxu0 0.0
      %5657 = vmatprep.subr.mxu0 0.0
      %5658 = vmatpush2.msra.mxu0 0.0
      %5659 = vmatprep.subr.mxu0 0.0
      %5660 = vmatpush2.msra.mxu0 0.0
      %5661 = vmatprep.subr.mxu0 0.0
      %5662 = vmatpush2.msra.mxu0 0.0
      %5663 = vmatprep.subr.mxu0 0.0
      %5664 = vmatpush2.msra.mxu0 0.0
      %5665 = vmatprep.subr.mxu0 0.0
      %5666 = vmatpush2.msra.mxu0 0.0
      %5667 = vmatprep.subr.mxu0 0.0
      %5668 = vmatpush2.msra.mxu0 0.0
      %5669 = vmatprep.subr.mxu0 0.0
      %5670 = vmatpush2.msra.mxu0 0.0
      %5671 = vmatprep.subr.mxu0 0.0
      %5672 = vmatpush2.msra.mxu0 0.0
      %5673 = vmatprep.subr.mxu0 0.0
      %5674 = vmatpush2.msra.mxu0 0.0
      %5675 = vmatprep.subr.mxu0 0.0
      %5676 = vmatpush2.msra.mxu0 0.0
      %5677 = vmatprep.subr.mxu0 0.0
      %5678 = vmatpush2.msra.mxu0 0.0
      %5679 = vmatprep.subr.mxu0 0.0
      %5680 = vmatpush2.msra.mxu0 0.0
      %5681 = vmatprep.subr.mxu0 0.0
      %5682 = vmatpush2.msra.mxu0 0.0
      %5683 = vmatprep.subr.mxu0 0.0
      %5684 = vmatpush2.msra.mxu0 0.0
      %5685 = vmatprep.subr.mxu0 0.0
      %5686 = vmatpush2.msra.mxu0 0.0
      %5687 = vmatprep.mubr.f32.mxu0 0.0
      %5688 = vmatmul.mubr.f32.gmra.mxu0 %v5596
      %v5689 = vpop.f32.mrf.mxu0
      %v5690 = vadd.f32 0.0, %v5689
      %v5691 = vpop.f32.mrf.mxu0
      %5692 = vmatprep.mubr.f32.mxu0 0.0
      %5693 = vmatmul.mubr.f32.gmra.mxu0 %v5597
      %v5694 = vpop.f32.mrf.mxu0
      %v5695 = vadd.f32 0.0, %v5694
      %v5696 = vpop.f32.mrf.mxu0
      %5697 = vmatprep.mubr.f32.mxu0 0.0
      %5698 = vmatmul.mubr.f32.gmra.mxu0 %v5598
      %v5699 = vpop.f32.mrf.mxu0
      %v5700 = vadd.f32 0.0, %v5699
      %v5701 = vpop.f32.mrf.mxu0
      %5702 = vmatprep.mubr.f32.mxu0 0.0
      %5703 = vmatmul.mubr.f32.gmra.mxu0 %v5599
      %v5704 = vpop.f32.mrf.mxu0
      %v5705 = vadd.f32 0.0, %v5704
      %v5706 = vpop.f32.mrf.mxu0
      %5707 = vmatprep.mubr.f32.mxu0 0.0
      %5708 = vmatmul.mubr.f32.gmra.mxu0 %v5600
      %v5709 = vpop.f32.mrf.mxu0
      %v5710 = vadd.f32 0.0, %v5709
      %v5711 = vpop.f32.mrf.mxu0
      %5712 = vmatprep.mubr.f32.mxu0 0.0
      %5713 = vmatmul.mubr.f32.gmra.mxu0 %v5601
      %v5714 = vpop.f32.mrf.mxu0
      %v5715 = vadd.f32 0.0, %v5714
      %v5716 = vpop.f32.mrf.mxu0
      %5717 = vmatprep.mubr.f32.mxu0 0.0
      %5718 = vmatmul.mubr.f32.gmra.mxu0 %v5602
      %v5719 = vpop.f32.mrf.mxu0
      %v5720 = vadd.f32 0.0, %v5719
      %v5721 = vpop.f32.mrf.mxu0
      %5722 = vmatprep.mubr.f32.mxu0 0.0
      %5723 = vmatmul.mubr.f32.gmra.mxu0 %v5603
      %v5724 = vpop.f32.mrf.mxu0
      %v5725 = vadd.f32 0.0, %v5724
      %v5726 = vpop.f32.mrf.mxu0
      %5727 = vmatprep.mubr.f32.mxu0 0.0
      %5728 = vmatmul.mubr.f32.gmra.mxu0 %v5604
      %v5729 = vpop.f32.mrf.mxu0
      %v5730 = vadd.f32 0.0, %v5729
      %v5731 = vpop.f32.mrf.mxu0
      %5732 = vmatprep.mubr.f32.mxu0 0.0
      %5733 = vmatmul.mubr.f32.gmra.mxu0 %v5605
      %v5734 = vpop.f32.mrf.mxu0
      %v5735 = vadd.f32 0.0, %v5734
      %v5736 = vpop.f32.mrf.mxu0
      %5737 = vdwg.mxu0
      %v5738 = vadd.f32 %v5586, %v5690
      %v5739 = vadd.f32 %v5587, %v5695
      %v5740 = vadd.f32 %v5588, %v5700
      %v5741 = vadd.f32 %v5589, %v5705
      %v5742 = vadd.f32 %v5590, %v5710
      %v5743 = vadd.f32 %v5591, %v5715
      %v5744 = vadd.f32 %v5592, %v5720
      %v5745 = vadd.f32 %v5593, %v5725
      %v5746 = vadd.f32 %v5594, %v5730
      %v5747 = vadd.f32 %v5595, %v5735
      %v5748 = vld [vmem:[#allocation2 + $0x14] sm:$0xff]
      %v5749 = vld [vmem:[#allocation2 + $0x1c] sm:$0xff]
      %v5750 = vld [vmem:[#allocation2 + $0x24] sm:$0xff]
      %v5751 = vld [vmem:[#allocation2 + $0x2c] sm:$0xff]
      %v5752 = vld [vmem:[#allocation2 + $0x34] sm:$0xff]
      %v5753 = vld [vmem:[#allocation2 + $0x3c] sm:$0xff]
      %v5754 = vld [vmem:[#allocation2 + $0x44] sm:$0xff]
      %v5755 = vld [vmem:[#allocation2 + $0x4c] sm:$0xff]
      %v5756 = vld [vmem:[#allocation2 + $0x54] sm:$0xff]
      %v5757 = vld [vmem:[#allocation2 + $0x5c] sm:$0x3f]
      %s5758 = scalar_lea.vmem %s2, 1920
      %v5759 = vld [vmem:[%s5758] sm:$0xff]
      %v5760 = vld [vmem:[%s5758 + $0x8] sm:$0xff]
      %v5761 = vld [vmem:[%s5758 + $0x10] sm:$0xff]
      %v5762 = vld [vmem:[%s5758 + $0x18] sm:$0xff]
      %v5763 = vld [vmem:[%s5758 + $0x20] sm:$0xff]
      %v5764 = vld [vmem:[%s5758 + $0x28] sm:$0xff]
      %v5765 = vld [vmem:[%s5758 + $0x30] sm:$0xff]
      %v5766 = vld [vmem:[%s5758 + $0x38] sm:$0xff]
      %v5767 = vld [vmem:[%s5758 + $0x40] sm:$0xff]
      %v5768 = vld [vmem:[%s5758 + $0x48] sm:$0xff]
      %v5769 = vld [vmem:[%s5758 + $0x50] sm:$0xff]
      %v5770 = vld [vmem:[%s5758 + $0x58] sm:$0xff]
      %v5771 = vld [vmem:[%s5758 + $0x60] sm:$0xff]
      %v5772 = vld [vmem:[%s5758 + $0x68] sm:$0xff]
      %v5773 = vld [vmem:[%s5758 + $0x70] sm:$0xff]
      %v5774 = vld [vmem:[%s5758 + $0x78] sm:$0xff]
      %5775 = vmatprep.subr.mxu0 0.0
      %5776 = vmatpush1.msra.mxu0 %v5774
      %5777 = vmatprep.subr.mxu0 0.0
      %5778 = vmatpush1.msra.mxu0 %v5773
      %5779 = vmatprep.subr.mxu0 0.0
      %5780 = vmatpush1.msra.mxu0 %v5772
      %5781 = vmatprep.subr.mxu0 0.0
      %5782 = vmatpush1.msra.mxu0 %v5771
      %5783 = vmatprep.subr.mxu0 0.0
      %5784 = vmatpush1.msra.mxu0 %v5770
      %5785 = vmatprep.subr.mxu0 0.0
      %5786 = vmatpush1.msra.mxu0 %v5769
      %5787 = vmatprep.subr.mxu0 0.0
      %5788 = vmatpush1.msra.mxu0 %v5768
      %5789 = vmatprep.subr.mxu0 0.0
      %5790 = vmatpush1.msra.mxu0 %v5767
      %5791 = vmatprep.subr.mxu0 0.0
      %5792 = vmatpush1.msra.mxu0 %v5766
      %5793 = vmatprep.subr.mxu0 0.0
      %5794 = vmatpush1.msra.mxu0 %v5765
      %5795 = vmatprep.subr.mxu0 0.0
      %5796 = vmatpush1.msra.mxu0 %v5764
      %5797 = vmatprep.subr.mxu0 0.0
      %5798 = vmatpush1.msra.mxu0 %v5763
      %5799 = vmatprep.subr.mxu0 0.0
      %5800 = vmatpush1.msra.mxu0 %v5762
      %5801 = vmatprep.subr.mxu0 0.0
      %5802 = vmatpush1.msra.mxu0 %v5761
      %5803 = vmatprep.subr.mxu0 0.0
      %5804 = vmatpush1.msra.mxu0 %v5760
      %5805 = vmatprep.subr.mxu0 0.0
      %5806 = vmatpush1.msra.mxu0 %v5759
      %5807 = vmatprep.subr.mxu0 0.0
      %5808 = vmatpush2.msra.mxu0 0.0
      %5809 = vmatprep.subr.mxu0 0.0
      %5810 = vmatpush2.msra.mxu0 0.0
      %5811 = vmatprep.subr.mxu0 0.0
      %5812 = vmatpush2.msra.mxu0 0.0
      %5813 = vmatprep.subr.mxu0 0.0
      %5814 = vmatpush2.msra.mxu0 0.0
      %5815 = vmatprep.subr.mxu0 0.0
      %5816 = vmatpush2.msra.mxu0 0.0
      %5817 = vmatprep.subr.mxu0 0.0
      %5818 = vmatpush2.msra.mxu0 0.0
      %5819 = vmatprep.subr.mxu0 0.0
      %5820 = vmatpush2.msra.mxu0 0.0
      %5821 = vmatprep.subr.mxu0 0.0
      %5822 = vmatpush2.msra.mxu0 0.0
      %5823 = vmatprep.subr.mxu0 0.0
      %5824 = vmatpush2.msra.mxu0 0.0
      %5825 = vmatprep.subr.mxu0 0.0
      %5826 = vmatpush2.msra.mxu0 0.0
      %5827 = vmatprep.subr.mxu0 0.0
      %5828 = vmatpush2.msra.mxu0 0.0
      %5829 = vmatprep.subr.mxu0 0.0
      %5830 = vmatpush2.msra.mxu0 0.0
      %5831 = vmatprep.subr.mxu0 0.0
      %5832 = vmatpush2.msra.mxu0 0.0
      %5833 = vmatprep.subr.mxu0 0.0
      %5834 = vmatpush2.msra.mxu0 0.0
      %5835 = vmatprep.subr.mxu0 0.0
      %5836 = vmatpush2.msra.mxu0 0.0
      %5837 = vmatprep.subr.mxu0 0.0
      %5838 = vmatpush2.msra.mxu0 0.0
      %5839 = vmatprep.mubr.f32.mxu0 0.0
      %5840 = vmatmul.mubr.f32.gmra.mxu0 %v5748
      %v5841 = vpop.f32.mrf.mxu0
      %v5842 = vadd.f32 0.0, %v5841
      %v5843 = vpop.f32.mrf.mxu0
      %5844 = vmatprep.mubr.f32.mxu0 0.0
      %5845 = vmatmul.mubr.f32.gmra.mxu0 %v5749
      %v5846 = vpop.f32.mrf.mxu0
      %v5847 = vadd.f32 0.0, %v5846
      %v5848 = vpop.f32.mrf.mxu0
      %5849 = vmatprep.mubr.f32.mxu0 0.0
      %5850 = vmatmul.mubr.f32.gmra.mxu0 %v5750
      %v5851 = vpop.f32.mrf.mxu0
      %v5852 = vadd.f32 0.0, %v5851
      %v5853 = vpop.f32.mrf.mxu0
      %5854 = vmatprep.mubr.f32.mxu0 0.0
      %5855 = vmatmul.mubr.f32.gmra.mxu0 %v5751
      %v5856 = vpop.f32.mrf.mxu0
      %v5857 = vadd.f32 0.0, %v5856
      %v5858 = vpop.f32.mrf.mxu0
      %5859 = vmatprep.mubr.f32.mxu0 0.0
      %5860 = vmatmul.mubr.f32.gmra.mxu0 %v5752
      %v5861 = vpop.f32.mrf.mxu0
      %v5862 = vadd.f32 0.0, %v5861
      %v5863 = vpop.f32.mrf.mxu0
      %5864 = vmatprep.mubr.f32.mxu0 0.0
      %5865 = vmatmul.mubr.f32.gmra.mxu0 %v5753
      %v5866 = vpop.f32.mrf.mxu0
      %v5867 = vadd.f32 0.0, %v5866
      %v5868 = vpop.f32.mrf.mxu0
      %5869 = vmatprep.mubr.f32.mxu0 0.0
      %5870 = vmatmul.mubr.f32.gmra.mxu0 %v5754
      %v5871 = vpop.f32.mrf.mxu0
      %v5872 = vadd.f32 0.0, %v5871
      %v5873 = vpop.f32.mrf.mxu0
      %5874 = vmatprep.mubr.f32.mxu0 0.0
      %5875 = vmatmul.mubr.f32.gmra.mxu0 %v5755
      %v5876 = vpop.f32.mrf.mxu0
      %v5877 = vadd.f32 0.0, %v5876
      %v5878 = vpop.f32.mrf.mxu0
      %5879 = vmatprep.mubr.f32.mxu0 0.0
      %5880 = vmatmul.mubr.f32.gmra.mxu0 %v5756
      %v5881 = vpop.f32.mrf.mxu0
      %v5882 = vadd.f32 0.0, %v5881
      %v5883 = vpop.f32.mrf.mxu0
      %5884 = vmatprep.mubr.f32.mxu0 0.0
      %5885 = vmatmul.mubr.f32.gmra.mxu0 %v5757
      %v5886 = vpop.f32.mrf.mxu0
      %v5887 = vadd.f32 0.0, %v5886
      %v5888 = vpop.f32.mrf.mxu0
      %5889 = vdwg.mxu0
      %v5890 = vadd.f32 %v5738, %v5842
      %v5891 = vadd.f32 %v5739, %v5847
      %v5892 = vadd.f32 %v5740, %v5852
      %v5893 = vadd.f32 %v5741, %v5857
      %v5894 = vadd.f32 %v5742, %v5862
      %v5895 = vadd.f32 %v5743, %v5867
      %v5896 = vadd.f32 %v5744, %v5872
      %v5897 = vadd.f32 %v5745, %v5877
      %v5898 = vadd.f32 %v5746, %v5882
      %v5899 = vadd.f32 %v5747, %v5887
      %v5900 = vld [vmem:[#allocation2 + $0x15] sm:$0xff]
      %v5901 = vld [vmem:[#allocation2 + $0x1d] sm:$0xff]
      %v5902 = vld [vmem:[#allocation2 + $0x25] sm:$0xff]
      %v5903 = vld [vmem:[#allocation2 + $0x2d] sm:$0xff]
      %v5904 = vld [vmem:[#allocation2 + $0x35] sm:$0xff]
      %v5905 = vld [vmem:[#allocation2 + $0x3d] sm:$0xff]
      %v5906 = vld [vmem:[#allocation2 + $0x45] sm:$0xff]
      %v5907 = vld [vmem:[#allocation2 + $0x4d] sm:$0xff]
      %v5908 = vld [vmem:[#allocation2 + $0x55] sm:$0xff]
      %v5909 = vld [vmem:[#allocation2 + $0x5d] sm:$0x3f]
      %s5910 = scalar_lea.vmem %s2, 2048
      %v5911 = vld [vmem:[%s5910] sm:$0xff]
      %v5912 = vld [vmem:[%s5910 + $0x8] sm:$0xff]
      %v5913 = vld [vmem:[%s5910 + $0x10] sm:$0xff]
      %v5914 = vld [vmem:[%s5910 + $0x18] sm:$0xff]
      %v5915 = vld [vmem:[%s5910 + $0x20] sm:$0xff]
      %v5916 = vld [vmem:[%s5910 + $0x28] sm:$0xff]
      %v5917 = vld [vmem:[%s5910 + $0x30] sm:$0xff]
      %v5918 = vld [vmem:[%s5910 + $0x38] sm:$0xff]
      %v5919 = vld [vmem:[%s5910 + $0x40] sm:$0xff]
      %v5920 = vld [vmem:[%s5910 + $0x48] sm:$0xff]
      %v5921 = vld [vmem:[%s5910 + $0x50] sm:$0xff]
      %v5922 = vld [vmem:[%s5910 + $0x58] sm:$0xff]
      %v5923 = vld [vmem:[%s5910 + $0x60] sm:$0xff]
      %v5924 = vld [vmem:[%s5910 + $0x68] sm:$0xff]
      %v5925 = vld [vmem:[%s5910 + $0x70] sm:$0xff]
      %v5926 = vld [vmem:[%s5910 + $0x78] sm:$0xff]
      %5927 = vmatprep.subr.mxu0 0.0
      %5928 = vmatpush1.msra.mxu0 %v5926
      %5929 = vmatprep.subr.mxu0 0.0
      %5930 = vmatpush1.msra.mxu0 %v5925
      %5931 = vmatprep.subr.mxu0 0.0
      %5932 = vmatpush1.msra.mxu0 %v5924
      %5933 = vmatprep.subr.mxu0 0.0
      %5934 = vmatpush1.msra.mxu0 %v5923
      %5935 = vmatprep.subr.mxu0 0.0
      %5936 = vmatpush1.msra.mxu0 %v5922
      %5937 = vmatprep.subr.mxu0 0.0
      %5938 = vmatpush1.msra.mxu0 %v5921
      %5939 = vmatprep.subr.mxu0 0.0
      %5940 = vmatpush1.msra.mxu0 %v5920
      %5941 = vmatprep.subr.mxu0 0.0
      %5942 = vmatpush1.msra.mxu0 %v5919
      %5943 = vmatprep.subr.mxu0 0.0
      %5944 = vmatpush1.msra.mxu0 %v5918
      %5945 = vmatprep.subr.mxu0 0.0
      %5946 = vmatpush1.msra.mxu0 %v5917
      %5947 = vmatprep.subr.mxu0 0.0
      %5948 = vmatpush1.msra.mxu0 %v5916
      %5949 = vmatprep.subr.mxu0 0.0
      %5950 = vmatpush1.msra.mxu0 %v5915
      %5951 = vmatprep.subr.mxu0 0.0
      %5952 = vmatpush1.msra.mxu0 %v5914
      %5953 = vmatprep.subr.mxu0 0.0
      %5954 = vmatpush1.msra.mxu0 %v5913
      %5955 = vmatprep.subr.mxu0 0.0
      %5956 = vmatpush1.msra.mxu0 %v5912
      %5957 = vmatprep.subr.mxu0 0.0
      %5958 = vmatpush1.msra.mxu0 %v5911
      %5959 = vmatprep.subr.mxu0 0.0
      %5960 = vmatpush2.msra.mxu0 0.0
      %5961 = vmatprep.subr.mxu0 0.0
      %5962 = vmatpush2.msra.mxu0 0.0
      %5963 = vmatprep.subr.mxu0 0.0
      %5964 = vmatpush2.msra.mxu0 0.0
      %5965 = vmatprep.subr.mxu0 0.0
      %5966 = vmatpush2.msra.mxu0 0.0
      %5967 = vmatprep.subr.mxu0 0.0
      %5968 = vmatpush2.msra.mxu0 0.0
      %5969 = vmatprep.subr.mxu0 0.0
      %5970 = vmatpush2.msra.mxu0 0.0
      %5971 = vmatprep.subr.mxu0 0.0
      %5972 = vmatpush2.msra.mxu0 0.0
      %5973 = vmatprep.subr.mxu0 0.0
      %5974 = vmatpush2.msra.mxu0 0.0
      %5975 = vmatprep.subr.mxu0 0.0
      %5976 = vmatpush2.msra.mxu0 0.0
      %5977 = vmatprep.subr.mxu0 0.0
      %5978 = vmatpush2.msra.mxu0 0.0
      %5979 = vmatprep.subr.mxu0 0.0
      %5980 = vmatpush2.msra.mxu0 0.0
      %5981 = vmatprep.subr.mxu0 0.0
      %5982 = vmatpush2.msra.mxu0 0.0
      %5983 = vmatprep.subr.mxu0 0.0
      %5984 = vmatpush2.msra.mxu0 0.0
      %5985 = vmatprep.subr.mxu0 0.0
      %5986 = vmatpush2.msra.mxu0 0.0
      %5987 = vmatprep.subr.mxu0 0.0
      %5988 = vmatpush2.msra.mxu0 0.0
      %5989 = vmatprep.subr.mxu0 0.0
      %5990 = vmatpush2.msra.mxu0 0.0
      %5991 = vmatprep.mubr.f32.mxu0 0.0
      %5992 = vmatmul.mubr.f32.gmra.mxu0 %v5900
      %v5993 = vpop.f32.mrf.mxu0
      %v5994 = vadd.f32 0.0, %v5993
      %v5995 = vpop.f32.mrf.mxu0
      %5996 = vmatprep.mubr.f32.mxu0 0.0
      %5997 = vmatmul.mubr.f32.gmra.mxu0 %v5901
      %v5998 = vpop.f32.mrf.mxu0
      %v5999 = vadd.f32 0.0, %v5998
      %v6000 = vpop.f32.mrf.mxu0
      %6001 = vmatprep.mubr.f32.mxu0 0.0
      %6002 = vmatmul.mubr.f32.gmra.mxu0 %v5902
      %v6003 = vpop.f32.mrf.mxu0
      %v6004 = vadd.f32 0.0, %v6003
      %v6005 = vpop.f32.mrf.mxu0
      %6006 = vmatprep.mubr.f32.mxu0 0.0
      %6007 = vmatmul.mubr.f32.gmra.mxu0 %v5903
      %v6008 = vpop.f32.mrf.mxu0
      %v6009 = vadd.f32 0.0, %v6008
      %v6010 = vpop.f32.mrf.mxu0
      %6011 = vmatprep.mubr.f32.mxu0 0.0
      %6012 = vmatmul.mubr.f32.gmra.mxu0 %v5904
      %v6013 = vpop.f32.mrf.mxu0
      %v6014 = vadd.f32 0.0, %v6013
      %v6015 = vpop.f32.mrf.mxu0
      %6016 = vmatprep.mubr.f32.mxu0 0.0
      %6017 = vmatmul.mubr.f32.gmra.mxu0 %v5905
      %v6018 = vpop.f32.mrf.mxu0
      %v6019 = vadd.f32 0.0, %v6018
      %v6020 = vpop.f32.mrf.mxu0
      %6021 = vmatprep.mubr.f32.mxu0 0.0
      %6022 = vmatmul.mubr.f32.gmra.mxu0 %v5906
      %v6023 = vpop.f32.mrf.mxu0
      %v6024 = vadd.f32 0.0, %v6023
      %v6025 = vpop.f32.mrf.mxu0
      %6026 = vmatprep.mubr.f32.mxu0 0.0
      %6027 = vmatmul.mubr.f32.gmra.mxu0 %v5907
      %v6028 = vpop.f32.mrf.mxu0
      %v6029 = vadd.f32 0.0, %v6028
      %v6030 = vpop.f32.mrf.mxu0
      %6031 = vmatprep.mubr.f32.mxu0 0.0
      %6032 = vmatmul.mubr.f32.gmra.mxu0 %v5908
      %v6033 = vpop.f32.mrf.mxu0
      %v6034 = vadd.f32 0.0, %v6033
      %v6035 = vpop.f32.mrf.mxu0
      %6036 = vmatprep.mubr.f32.mxu0 0.0
      %6037 = vmatmul.mubr.f32.gmra.mxu0 %v5909
      %v6038 = vpop.f32.mrf.mxu0
      %v6039 = vadd.f32 0.0, %v6038
      %v6040 = vpop.f32.mrf.mxu0
      %6041 = vdwg.mxu0
      %v6042 = vadd.f32 %v5890, %v5994
      %v6043 = vadd.f32 %v5891, %v5999
      %v6044 = vadd.f32 %v5892, %v6004
      %v6045 = vadd.f32 %v5893, %v6009
      %v6046 = vadd.f32 %v5894, %v6014
      %v6047 = vadd.f32 %v5895, %v6019
      %v6048 = vadd.f32 %v5896, %v6024
      %v6049 = vadd.f32 %v5897, %v6029
      %v6050 = vadd.f32 %v5898, %v6034
      %v6051 = vadd.f32 %v5899, %v6039
      %v6052 = vld [vmem:[#allocation2 + $0x16] sm:$0xff]
      %v6053 = vld [vmem:[#allocation2 + $0x1e] sm:$0xff]
      %v6054 = vld [vmem:[#allocation2 + $0x26] sm:$0xff]
      %v6055 = vld [vmem:[#allocation2 + $0x2e] sm:$0xff]
      %v6056 = vld [vmem:[#allocation2 + $0x36] sm:$0xff]
      %v6057 = vld [vmem:[#allocation2 + $0x3e] sm:$0xff]
      %v6058 = vld [vmem:[#allocation2 + $0x46] sm:$0xff]
      %v6059 = vld [vmem:[#allocation2 + $0x4e] sm:$0xff]
      %v6060 = vld [vmem:[#allocation2 + $0x56] sm:$0xff]
      %v6061 = vld [vmem:[#allocation2 + $0x5e] sm:$0x3f]
      %s6062 = scalar_lea.vmem %s2, 2176
      %v6063 = vld [vmem:[%s6062] sm:$0xff]
      %v6064 = vld [vmem:[%s6062 + $0x8] sm:$0xff]
      %v6065 = vld [vmem:[%s6062 + $0x10] sm:$0xff]
      %v6066 = vld [vmem:[%s6062 + $0x18] sm:$0xff]
      %v6067 = vld [vmem:[%s6062 + $0x20] sm:$0xff]
      %v6068 = vld [vmem:[%s6062 + $0x28] sm:$0xff]
      %v6069 = vld [vmem:[%s6062 + $0x30] sm:$0xff]
      %v6070 = vld [vmem:[%s6062 + $0x38] sm:$0xff]
      %v6071 = vld [vmem:[%s6062 + $0x40] sm:$0xff]
      %v6072 = vld [vmem:[%s6062 + $0x48] sm:$0xff]
      %v6073 = vld [vmem:[%s6062 + $0x50] sm:$0xff]
      %v6074 = vld [vmem:[%s6062 + $0x58] sm:$0xff]
      %v6075 = vld [vmem:[%s6062 + $0x60] sm:$0xff]
      %v6076 = vld [vmem:[%s6062 + $0x68] sm:$0xff]
      %v6077 = vld [vmem:[%s6062 + $0x70] sm:$0xff]
      %v6078 = vld [vmem:[%s6062 + $0x78] sm:$0xff]
      %6079 = vmatprep.subr.mxu0 0.0
      %6080 = vmatpush1.msra.mxu0 %v6078
      %6081 = vmatprep.subr.mxu0 0.0
      %6082 = vmatpush1.msra.mxu0 %v6077
      %6083 = vmatprep.subr.mxu0 0.0
      %6084 = vmatpush1.msra.mxu0 %v6076
      %6085 = vmatprep.subr.mxu0 0.0
      %6086 = vmatpush1.msra.mxu0 %v6075
      %6087 = vmatprep.subr.mxu0 0.0
      %6088 = vmatpush1.msra.mxu0 %v6074
      %6089 = vmatprep.subr.mxu0 0.0
      %6090 = vmatpush1.msra.mxu0 %v6073
      %6091 = vmatprep.subr.mxu0 0.0
      %6092 = vmatpush1.msra.mxu0 %v6072
      %6093 = vmatprep.subr.mxu0 0.0
      %6094 = vmatpush1.msra.mxu0 %v6071
      %6095 = vmatprep.subr.mxu0 0.0
      %6096 = vmatpush1.msra.mxu0 %v6070
      %6097 = vmatprep.subr.mxu0 0.0
      %6098 = vmatpush1.msra.mxu0 %v6069
      %6099 = vmatprep.subr.mxu0 0.0
      %6100 = vmatpush1.msra.mxu0 %v6068
      %6101 = vmatprep.subr.mxu0 0.0
      %6102 = vmatpush1.msra.mxu0 %v6067
      %6103 = vmatprep.subr.mxu0 0.0
      %6104 = vmatpush1.msra.mxu0 %v6066
      %6105 = vmatprep.subr.mxu0 0.0
      %6106 = vmatpush1.msra.mxu0 %v6065
      %6107 = vmatprep.subr.mxu0 0.0
      %6108 = vmatpush1.msra.mxu0 %v6064
      %6109 = vmatprep.subr.mxu0 0.0
      %6110 = vmatpush1.msra.mxu0 %v6063
      %6111 = vmatprep.subr.mxu0 0.0
      %6112 = vmatpush2.msra.mxu0 0.0
      %6113 = vmatprep.subr.mxu0 0.0
      %6114 = vmatpush2.msra.mxu0 0.0
      %6115 = vmatprep.subr.mxu0 0.0
      %6116 = vmatpush2.msra.mxu0 0.0
      %6117 = vmatprep.subr.mxu0 0.0
      %6118 = vmatpush2.msra.mxu0 0.0
      %6119 = vmatprep.subr.mxu0 0.0
      %6120 = vmatpush2.msra.mxu0 0.0
      %6121 = vmatprep.subr.mxu0 0.0
      %6122 = vmatpush2.msra.mxu0 0.0
      %6123 = vmatprep.subr.mxu0 0.0
      %6124 = vmatpush2.msra.mxu0 0.0
      %6125 = vmatprep.subr.mxu0 0.0
      %6126 = vmatpush2.msra.mxu0 0.0
      %6127 = vmatprep.subr.mxu0 0.0
      %6128 = vmatpush2.msra.mxu0 0.0
      %6129 = vmatprep.subr.mxu0 0.0
      %6130 = vmatpush2.msra.mxu0 0.0
      %6131 = vmatprep.subr.mxu0 0.0
      %6132 = vmatpush2.msra.mxu0 0.0
      %6133 = vmatprep.subr.mxu0 0.0
      %6134 = vmatpush2.msra.mxu0 0.0
      %6135 = vmatprep.subr.mxu0 0.0
      %6136 = vmatpush2.msra.mxu0 0.0
      %6137 = vmatprep.subr.mxu0 0.0
      %6138 = vmatpush2.msra.mxu0 0.0
      %6139 = vmatprep.subr.mxu0 0.0
      %6140 = vmatpush2.msra.mxu0 0.0
      %6141 = vmatprep.subr.mxu0 0.0
      %6142 = vmatpush2.msra.mxu0 0.0
      %6143 = vmatprep.mubr.f32.mxu0 0.0
      %6144 = vmatmul.mubr.f32.gmra.mxu0 %v6052
      %v6145 = vpop.f32.mrf.mxu0
      %v6146 = vadd.f32 0.0, %v6145
      %v6147 = vpop.f32.mrf.mxu0
      %6148 = vmatprep.mubr.f32.mxu0 0.0
      %6149 = vmatmul.mubr.f32.gmra.mxu0 %v6053
      %v6150 = vpop.f32.mrf.mxu0
      %v6151 = vadd.f32 0.0, %v6150
      %v6152 = vpop.f32.mrf.mxu0
      %6153 = vmatprep.mubr.f32.mxu0 0.0
      %6154 = vmatmul.mubr.f32.gmra.mxu0 %v6054
      %v6155 = vpop.f32.mrf.mxu0
      %v6156 = vadd.f32 0.0, %v6155
      %v6157 = vpop.f32.mrf.mxu0
      %6158 = vmatprep.mubr.f32.mxu0 0.0
      %6159 = vmatmul.mubr.f32.gmra.mxu0 %v6055
      %v6160 = vpop.f32.mrf.mxu0
      %v6161 = vadd.f32 0.0, %v6160
      %v6162 = vpop.f32.mrf.mxu0
      %6163 = vmatprep.mubr.f32.mxu0 0.0
      %6164 = vmatmul.mubr.f32.gmra.mxu0 %v6056
      %v6165 = vpop.f32.mrf.mxu0
      %v6166 = vadd.f32 0.0, %v6165
      %v6167 = vpop.f32.mrf.mxu0
      %6168 = vmatprep.mubr.f32.mxu0 0.0
      %6169 = vmatmul.mubr.f32.gmra.mxu0 %v6057
      %v6170 = vpop.f32.mrf.mxu0
      %v6171 = vadd.f32 0.0, %v6170
      %v6172 = vpop.f32.mrf.mxu0
      %6173 = vmatprep.mubr.f32.mxu0 0.0
      %6174 = vmatmul.mubr.f32.gmra.mxu0 %v6058
      %v6175 = vpop.f32.mrf.mxu0
      %v6176 = vadd.f32 0.0, %v6175
      %v6177 = vpop.f32.mrf.mxu0
      %6178 = vmatprep.mubr.f32.mxu0 0.0
      %6179 = vmatmul.mubr.f32.gmra.mxu0 %v6059
      %v6180 = vpop.f32.mrf.mxu0
      %v6181 = vadd.f32 0.0, %v6180
      %v6182 = vpop.f32.mrf.mxu0
      %6183 = vmatprep.mubr.f32.mxu0 0.0
      %6184 = vmatmul.mubr.f32.gmra.mxu0 %v6060
      %v6185 = vpop.f32.mrf.mxu0
      %v6186 = vadd.f32 0.0, %v6185
      %v6187 = vpop.f32.mrf.mxu0
      %6188 = vmatprep.mubr.f32.mxu0 0.0
      %6189 = vmatmul.mubr.f32.gmra.mxu0 %v6061
      %v6190 = vpop.f32.mrf.mxu0
      %v6191 = vadd.f32 0.0, %v6190
      %v6192 = vpop.f32.mrf.mxu0
      %6193 = vdwg.mxu0
      %v6194 = vadd.f32 %v6042, %v6146
      %v6195 = vadd.f32 %v6043, %v6151
      %v6196 = vadd.f32 %v6044, %v6156
      %v6197 = vadd.f32 %v6045, %v6161
      %v6198 = vadd.f32 %v6046, %v6166
      %v6199 = vadd.f32 %v6047, %v6171
      %v6200 = vadd.f32 %v6048, %v6176
      %v6201 = vadd.f32 %v6049, %v6181
      %v6202 = vadd.f32 %v6050, %v6186
      %v6203 = vadd.f32 %v6051, %v6191
      %v6204 = vld [vmem:[%s3 + $0x2] sm:$0x1]
      %v6205 = vlaneseq
      %v6206 = vshrl.u32 %v6205, 7
      %v6207 = vsub.s32 0, %v6206
      %v6208 = vrot.slane %v6204, %v6207
      %v6209 = vmul.f32 %v6194, %v6208
      %v6210 = vmul.f32 %v6195, %v6208
      %v6211 = vmul.f32 %v6196, %v6208
      %v6212 = vmul.f32 %v6197, %v6208
      %v6213 = vmul.f32 %v6198, %v6208
      %v6214 = vmul.f32 %v6199, %v6208
      %v6215 = vmul.f32 %v6200, %v6208
      %v6216 = vmul.f32 %v6201, %v6208
      %v6217 = vmul.f32 %v6202, %v6208
      %v6218 = vmul.f32 %v6203, %v6208
      %v6219 = vld [vmem:[%s4 + $0x2] sm:$0x1]
      %v6220 = vlaneseq
      %v6221 = vshrl.u32 %v6220, 7
      %v6222 = vsub.s32 0, %v6221
      %v6223 = vrot.slane %v6219, %v6222
      %v6224 = vadd.f32 %v6209, %v6223
      %v6225 = vadd.f32 %v6210, %v6223
      %v6226 = vadd.f32 %v6211, %v6223
      %v6227 = vadd.f32 %v6212, %v6223
      %v6228 = vadd.f32 %v6213, %v6223
      %v6229 = vadd.f32 %v6214, %v6223
      %v6230 = vadd.f32 %v6215, %v6223
      %v6231 = vadd.f32 %v6216, %v6223
      %v6232 = vadd.f32 %v6217, %v6223
      %v6233 = vadd.f32 %v6218, %v6223
      %vm6234 = vcmp.gt.f32.partialorder %v6224, 0.0
      %vm6235 = vcmp.gt.f32.partialorder %v6225, 0.0
      %vm6236 = vcmp.gt.f32.partialorder %v6226, 0.0
      %vm6237 = vcmp.gt.f32.partialorder %v6227, 0.0
      %vm6238 = vcmp.gt.f32.partialorder %v6228, 0.0
      %vm6239 = vcmp.gt.f32.partialorder %v6229, 0.0
      %vm6240 = vcmp.gt.f32.partialorder %v6230, 0.0
      %vm6241 = vcmp.gt.f32.partialorder %v6231, 0.0
      %vm6242 = vcmp.gt.f32.partialorder %v6232, 0.0
      %vm6243 = vcmp.gt.f32.partialorder %v6233, 0.0
      %v6244 = vld [vmem:[%s5 + $0x2] sm:$0x1]
      %v6245 = vlaneseq
      %v6246 = vshrl.u32 %v6245, 7
      %v6247 = vsub.s32 0, %v6246
      %v6248 = vrot.slane %v6244, %v6247
      %v6249 = vmul.f32 %v6248, %v6224
      %v6250 = vmul.f32 %v6248, %v6225
      %v6251 = vmul.f32 %v6248, %v6226
      %v6252 = vmul.f32 %v6248, %v6227
      %v6253 = vmul.f32 %v6248, %v6228
      %v6254 = vmul.f32 %v6248, %v6229
      %v6255 = vmul.f32 %v6248, %v6230
      %v6256 = vmul.f32 %v6248, %v6231
      %v6257 = vmul.f32 %v6248, %v6232
      %v6258 = vmul.f32 %v6248, %v6233
      %v6259 = vsel %vm6234, %v6224, %v6249
      %v6260 = vsel %vm6235, %v6225, %v6250
      %v6261 = vsel %vm6236, %v6226, %v6251
      %v6262 = vsel %vm6237, %v6227, %v6252
      %v6263 = vsel %vm6238, %v6228, %v6253
      %v6264 = vsel %vm6239, %v6229, %v6254
      %v6265 = vsel %vm6240, %v6230, %v6255
      %v6266 = vsel %vm6241, %v6231, %v6256
      %v6267 = vsel %vm6242, %v6232, %v6257
      %v6268 = vsel %vm6243, %v6233, %v6258
      %v6269 = vld [vmem:[%s8] sm:$0xff]
      %v6270 = vld [vmem:[%s8 + $0x8] sm:$0xff]
      %v6271 = vld [vmem:[%s8 + $0x10] sm:$0xff]
      %v6272 = vld [vmem:[%s8 + $0x18] sm:$0xff]
      %v6273 = vld [vmem:[%s8 + $0x20] sm:$0xf]
      %vm6274 = vcmask 637952
      %v6276 = vsel %vm6274, %v6269, 0
      %v6279 = vsel %vm6274, %v6270, 0
      %v6282 = vsel %vm6274, %v6271, 0
      %v6285 = vsel %vm6274, %v6272, 0
      %v6288 = vsel %vm6274, %v6273, 0
      %v6291 = vsel %vm4579, %v6268, 0
      %6293 = vmatprep.subr.mxu0 0.0
      %6294 = vmatpush1.msra.mxu0 0.0
      %6295 = vmatprep.subr.mxu0 0.0
      %6296 = vmatpush1.msra.mxu0 0.0
      %6297 = vmatprep.subr.mxu0 0.0
      %6298 = vmatpush1.msra.mxu0 0.0
      %6299 = vmatprep.subr.mxu0 0.0
      %6300 = vmatpush1.msra.mxu0 0.0
      %6301 = vmatprep.subr.mxu0 0.0
      %6302 = vmatpush1.msra.mxu0 0.0
      %6303 = vmatprep.subr.mxu0 0.0
      %6304 = vmatpush1.msra.mxu0 0.0
      %6305 = vmatprep.subr.mxu0 0.0
      %6306 = vmatpush1.msra.mxu0 %v6291
      %6307 = vmatprep.subr.mxu0 0.0
      %6308 = vmatpush1.msra.mxu0 %v6267
      %6309 = vmatprep.subr.mxu0 0.0
      %6310 = vmatpush1.msra.mxu0 %v6266
      %6311 = vmatprep.subr.mxu0 0.0
      %6312 = vmatpush1.msra.mxu0 %v6265
      %6313 = vmatprep.subr.mxu0 0.0
      %6314 = vmatpush1.msra.mxu0 %v6264
      %6315 = vmatprep.subr.mxu0 0.0
      %6316 = vmatpush1.msra.mxu0 %v6263
      %6317 = vmatprep.subr.mxu0 0.0
      %6318 = vmatpush1.msra.mxu0 %v6262
      %6319 = vmatprep.subr.mxu0 0.0
      %6320 = vmatpush1.msra.mxu0 %v6261
      %6321 = vmatprep.subr.mxu0 0.0
      %6322 = vmatpush1.msra.mxu0 %v6260
      %6323 = vmatprep.subr.mxu0 0.0
      %6324 = vmatpush1.msra.mxu0 %v6259
      %6325 = vmatprep.subr.mxu0 0.0
      %6326 = vmatpush2.msra.mxu0 0.0
      %6327 = vmatprep.subr.mxu0 0.0
      %6328 = vmatpush2.msra.mxu0 0.0
      %6329 = vmatprep.subr.mxu0 0.0
      %6330 = vmatpush2.msra.mxu0 0.0
      %6331 = vmatprep.subr.mxu0 0.0
      %6332 = vmatpush2.msra.mxu0 0.0
      %6333 = vmatprep.subr.mxu0 0.0
      %6334 = vmatpush2.msra.mxu0 0.0
      %6335 = vmatprep.subr.mxu0 0.0
      %6336 = vmatpush2.msra.mxu0 0.0
      %6337 = vmatprep.subr.mxu0 0.0
      %6338 = vmatpush2.msra.mxu0 0.0
      %6339 = vmatprep.subr.mxu0 0.0
      %6340 = vmatpush2.msra.mxu0 0.0
      %6341 = vmatprep.subr.mxu0 0.0
      %6342 = vmatpush2.msra.mxu0 0.0
      %6343 = vmatprep.subr.mxu0 0.0
      %6344 = vmatpush2.msra.mxu0 0.0
      %6345 = vmatprep.subr.mxu0 0.0
      %6346 = vmatpush2.msra.mxu0 0.0
      %6347 = vmatprep.subr.mxu0 0.0
      %6348 = vmatpush2.msra.mxu0 0.0
      %6349 = vmatprep.subr.mxu0 0.0
      %6350 = vmatpush2.msra.mxu0 0.0
      %6351 = vmatprep.subr.mxu0 0.0
      %6352 = vmatpush2.msra.mxu0 0.0
      %6353 = vmatprep.subr.mxu0 0.0
      %6354 = vmatpush2.msra.mxu0 0.0
      %6355 = vmatprep.subr.mxu0 0.0
      %6356 = vmatpush2.msra.mxu0 0.0
      %6357 = vmatprep.mubr.f32.mxu0 0.0
      %6358 = vmatmul.mubr.f32.gmra.mxu0 %v6276
      %v6359 = vpop.f32.mrf.mxu0
      %v6360 = vadd.f32 0.0, %v6359
      %v6361 = vpop.f32.mrf.mxu0
      %6362 = vmatprep.mubr.f32.mxu0 0.0
      %6363 = vmatmul.mubr.f32.gmra.mxu0 %v6279
      %v6364 = vpop.f32.mrf.mxu0
      %v6365 = vadd.f32 0.0, %v6364
      %v6366 = vpop.f32.mrf.mxu0
      %6367 = vmatprep.mubr.f32.mxu0 0.0
      %6368 = vmatmul.mubr.f32.gmra.mxu0 %v6282
      %v6369 = vpop.f32.mrf.mxu0
      %v6370 = vadd.f32 0.0, %v6369
      %v6371 = vpop.f32.mrf.mxu0
      %6372 = vmatprep.mubr.f32.mxu0 0.0
      %6373 = vmatmul.mubr.f32.gmra.mxu0 %v6285
      %v6374 = vpop.f32.mrf.mxu0
      %v6375 = vadd.f32 0.0, %v6374
      %v6376 = vpop.f32.mrf.mxu0
      %6377 = vmatprep.mubr.f32.mxu0 0.0
      %6378 = vmatmul.mubr.f32.gmra.mxu0 %v6288
      %v6379 = vpop.f32.mrf.mxu0
      %v6380 = vadd.f32 0.0, %v6379
      %v6381 = vpop.f32.mrf.mxu0
      %6382 = vdwg.mxu0
      %6383 = vst [vmem:[#allocation2] sm:$0xff] %v6360
      %6384 = vst [vmem:[#allocation2 + $0x8] sm:$0xff] %v6365
      %6385 = vst [vmem:[#allocation2 + $0x10] sm:$0xff] %v6370
      %6386 = vst [vmem:[#allocation2 + $0x18] sm:$0xff] %v6375
      %6387 = vst [vmem:[#allocation2 + $0x20] sm:$0xf] %v6380
      %v6388 = vld [vmem:[#allocation2] sm:$0xff]
      %v6389 = vld [vmem:[#allocation2 + $0x8] sm:$0xff]
      %v6390 = vld [vmem:[#allocation2 + $0x10] sm:$0x3f]
      %s6391 = scalar_lea.vmem %s2, 2304
      %v6392 = vld [vmem:[%s6391] sm:$0xff]
      %v6393 = vld [vmem:[%s6391 + $0x8] sm:$0xff]
      %v6394 = vld [vmem:[%s6391 + $0x10] sm:$0xff]
      %v6395 = vld [vmem:[%s6391 + $0x18] sm:$0xff]
      %v6396 = vld [vmem:[%s6391 + $0x20] sm:$0xff]
      %v6397 = vld [vmem:[%s6391 + $0x28] sm:$0xff]
      %v6398 = vld [vmem:[%s6391 + $0x30] sm:$0xff]
      %v6399 = vld [vmem:[%s6391 + $0x38] sm:$0xff]
      %v6400 = vld [vmem:[%s6391 + $0x40] sm:$0xff]
      %v6401 = vld [vmem:[%s6391 + $0x48] sm:$0xff]
      %v6402 = vld [vmem:[%s6391 + $0x50] sm:$0xff]
      %v6403 = vld [vmem:[%s6391 + $0x58] sm:$0xff]
      %v6404 = vld [vmem:[%s6391 + $0x60] sm:$0xff]
      %v6405 = vld [vmem:[%s6391 + $0x68] sm:$0xff]
      %v6406 = vld [vmem:[%s6391 + $0x70] sm:$0xff]
      %v6407 = vld [vmem:[%s6391 + $0x78] sm:$0xff]
      %v6408 = vld [vmem:[#allocation2 + $0x1] sm:$0xff]
      %v6409 = vld [vmem:[#allocation2 + $0x9] sm:$0xff]
      %v6410 = vld [vmem:[#allocation2 + $0x11] sm:$0x3f]
      %s6411 = scalar_lea.vmem %s2, 2432
      %v6412 = vld [vmem:[%s6411] sm:$0xff]
      %v6413 = vld [vmem:[%s6411 + $0x8] sm:$0xff]
      %v6414 = vld [vmem:[%s6411 + $0x10] sm:$0xff]
      %v6415 = vld [vmem:[%s6411 + $0x18] sm:$0xff]
      %v6416 = vld [vmem:[%s6411 + $0x20] sm:$0xff]
      %v6417 = vld [vmem:[%s6411 + $0x28] sm:$0xff]
      %v6418 = vld [vmem:[%s6411 + $0x30] sm:$0xff]
      %v6419 = vld [vmem:[%s6411 + $0x38] sm:$0xff]
      %v6420 = vld [vmem:[%s6411 + $0x40] sm:$0xff]
      %v6421 = vld [vmem:[%s6411 + $0x48] sm:$0xff]
      %v6422 = vld [vmem:[%s6411 + $0x50] sm:$0xff]
      %v6423 = vld [vmem:[%s6411 + $0x58] sm:$0xff]
      %v6424 = vld [vmem:[%s6411 + $0x60] sm:$0xff]
      %v6425 = vld [vmem:[%s6411 + $0x68] sm:$0xff]
      %v6426 = vld [vmem:[%s6411 + $0x70] sm:$0xff]
      %v6427 = vld [vmem:[%s6411 + $0x78] sm:$0xff]
      %6428 = vmatprep.subr.mxu0 0.0
      %6429 = vmatpush1.msra.mxu0 %v6427
      %6430 = vmatprep.subr.mxu0 0.0
      %6431 = vmatpush1.msra.mxu0 %v6426
      %6432 = vmatprep.subr.mxu0 0.0
      %6433 = vmatpush1.msra.mxu0 %v6425
      %6434 = vmatprep.subr.mxu0 0.0
      %6435 = vmatpush1.msra.mxu0 %v6424
      %6436 = vmatprep.subr.mxu0 0.0
      %6437 = vmatpush1.msra.mxu0 %v6423
      %6438 = vmatprep.subr.mxu0 0.0
      %6439 = vmatpush1.msra.mxu0 %v6422
      %6440 = vmatprep.subr.mxu0 0.0
      %6441 = vmatpush1.msra.mxu0 %v6421
      %6442 = vmatprep.subr.mxu0 0.0
      %6443 = vmatpush1.msra.mxu0 %v6420
      %6444 = vmatprep.subr.mxu0 0.0
      %6445 = vmatpush1.msra.mxu0 %v6419
      %6446 = vmatprep.subr.mxu0 0.0
      %6447 = vmatpush1.msra.mxu0 %v6418
      %6448 = vmatprep.subr.mxu0 0.0
      %6449 = vmatpush1.msra.mxu0 %v6417
      %6450 = vmatprep.subr.mxu0 0.0
      %6451 = vmatpush1.msra.mxu0 %v6416
      %6452 = vmatprep.subr.mxu0 0.0
      %6453 = vmatpush1.msra.mxu0 %v6415
      %6454 = vmatprep.subr.mxu0 0.0
      %6455 = vmatpush1.msra.mxu0 %v6414
      %6456 = vmatprep.subr.mxu0 0.0
      %6457 = vmatpush1.msra.mxu0 %v6413
      %6458 = vmatprep.subr.mxu0 0.0
      %6459 = vmatpush1.msra.mxu0 %v6412
      %6460 = vmatprep.subr.mxu0 0.0
      %6461 = vmatpush2.msra.mxu0 0.0
      %6462 = vmatprep.subr.mxu0 0.0
      %6463 = vmatpush2.msra.mxu0 0.0
      %6464 = vmatprep.subr.mxu0 0.0
      %6465 = vmatpush2.msra.mxu0 0.0
      %6466 = vmatprep.subr.mxu0 0.0
      %6467 = vmatpush2.msra.mxu0 0.0
      %6468 = vmatprep.subr.mxu0 0.0
      %6469 = vmatpush2.msra.mxu0 0.0
      %6470 = vmatprep.subr.mxu0 0.0
      %6471 = vmatpush2.msra.mxu0 0.0
      %6472 = vmatprep.subr.mxu0 0.0
      %6473 = vmatpush2.msra.mxu0 0.0
      %6474 = vmatprep.subr.mxu0 0.0
      %6475 = vmatpush2.msra.mxu0 0.0
      %6476 = vmatprep.subr.mxu0 0.0
      %6477 = vmatpush2.msra.mxu0 0.0
      %6478 = vmatprep.subr.mxu0 0.0
      %6479 = vmatpush2.msra.mxu0 0.0
      %6480 = vmatprep.subr.mxu0 0.0
      %6481 = vmatpush2.msra.mxu0 0.0
      %6482 = vmatprep.subr.mxu0 0.0
      %6483 = vmatpush2.msra.mxu0 0.0
      %6484 = vmatprep.subr.mxu0 0.0
      %6485 = vmatpush2.msra.mxu0 0.0
      %6486 = vmatprep.subr.mxu0 0.0
      %6487 = vmatpush2.msra.mxu0 0.0
      %6488 = vmatprep.subr.mxu0 0.0
      %6489 = vmatpush2.msra.mxu0 0.0
      %6490 = vmatprep.subr.mxu0 0.0
      %6491 = vmatpush2.msra.mxu0 0.0
      %6492 = vmatprep.mubr.f32.mxu0 0.0
      %6493 = vmatmul.mubr.f32.gmra.mxu0 %v6408
      %v6494 = vpop.f32.mrf.mxu0
      %v6495 = vadd.f32 0.0, %v6494
      %v6496 = vpop.f32.mrf.mxu0
      %6497 = vmatprep.mubr.f32.mxu0 0.0
      %6498 = vmatmul.mubr.f32.gmra.mxu0 %v6409
      %v6499 = vpop.f32.mrf.mxu0
      %v6500 = vadd.f32 0.0, %v6499
      %v6501 = vpop.f32.mrf.mxu0
      %6502 = vmatprep.mubr.f32.mxu0 0.0
      %6503 = vmatmul.mubr.f32.gmra.mxu0 %v6410
      %v6504 = vpop.f32.mrf.mxu0
      %v6505 = vadd.f32 0.0, %v6504
      %v6506 = vpop.f32.mrf.mxu0
      %6507 = vdwg.mxu0
      %6508 = vmatprep.subr.mxu0 0.0
      %6509 = vmatpush1.msra.mxu0 %v6407
      %6510 = vmatprep.subr.mxu0 0.0
      %6511 = vmatpush1.msra.mxu0 %v6406
      %6512 = vmatprep.subr.mxu0 0.0
      %6513 = vmatpush1.msra.mxu0 %v6405
      %6514 = vmatprep.subr.mxu0 0.0
      %6515 = vmatpush1.msra.mxu0 %v6404
      %6516 = vmatprep.subr.mxu0 0.0
      %6517 = vmatpush1.msra.mxu0 %v6403
      %6518 = vmatprep.subr.mxu0 0.0
      %6519 = vmatpush1.msra.mxu0 %v6402
      %6520 = vmatprep.subr.mxu0 0.0
      %6521 = vmatpush1.msra.mxu0 %v6401
      %6522 = vmatprep.subr.mxu0 0.0
      %6523 = vmatpush1.msra.mxu0 %v6400
      %6524 = vmatprep.subr.mxu0 0.0
      %6525 = vmatpush1.msra.mxu0 %v6399
      %6526 = vmatprep.subr.mxu0 0.0
      %6527 = vmatpush1.msra.mxu0 %v6398
      %6528 = vmatprep.subr.mxu0 0.0
      %6529 = vmatpush1.msra.mxu0 %v6397
      %6530 = vmatprep.subr.mxu0 0.0
      %6531 = vmatpush1.msra.mxu0 %v6396
      %6532 = vmatprep.subr.mxu0 0.0
      %6533 = vmatpush1.msra.mxu0 %v6395
      %6534 = vmatprep.subr.mxu0 0.0
      %6535 = vmatpush1.msra.mxu0 %v6394
      %6536 = vmatprep.subr.mxu0 0.0
      %6537 = vmatpush1.msra.mxu0 %v6393
      %6538 = vmatprep.subr.mxu0 0.0
      %6539 = vmatpush1.msra.mxu0 %v6392
      %6540 = vmatprep.subr.mxu0 0.0
      %6541 = vmatpush2.msra.mxu0 0.0
      %6542 = vmatprep.subr.mxu0 0.0
      %6543 = vmatpush2.msra.mxu0 0.0
      %6544 = vmatprep.subr.mxu0 0.0
      %6545 = vmatpush2.msra.mxu0 0.0
      %6546 = vmatprep.subr.mxu0 0.0
      %6547 = vmatpush2.msra.mxu0 0.0
      %6548 = vmatprep.subr.mxu0 0.0
      %6549 = vmatpush2.msra.mxu0 0.0
      %6550 = vmatprep.subr.mxu0 0.0
      %6551 = vmatpush2.msra.mxu0 0.0
      %6552 = vmatprep.subr.mxu0 0.0
      %6553 = vmatpush2.msra.mxu0 0.0
      %6554 = vmatprep.subr.mxu0 0.0
      %6555 = vmatpush2.msra.mxu0 0.0
      %6556 = vmatprep.subr.mxu0 0.0
      %6557 = vmatpush2.msra.mxu0 0.0
      %6558 = vmatprep.subr.mxu0 0.0
      %6559 = vmatpush2.msra.mxu0 0.0
      %6560 = vmatprep.subr.mxu0 0.0
      %6561 = vmatpush2.msra.mxu0 0.0
      %6562 = vmatprep.subr.mxu0 0.0
      %6563 = vmatpush2.msra.mxu0 0.0
      %6564 = vmatprep.subr.mxu0 0.0
      %6565 = vmatpush2.msra.mxu0 0.0
      %6566 = vmatprep.subr.mxu0 0.0
      %6567 = vmatpush2.msra.mxu0 0.0
      %6568 = vmatprep.subr.mxu0 0.0
      %6569 = vmatpush2.msra.mxu0 0.0
      %6570 = vmatprep.subr.mxu0 0.0
      %6571 = vmatpush2.msra.mxu0 0.0
      %6572 = vmatprep.mubr.f32.mxu0 0.0
      %6573 = vmatmul.mubr.f32.gmra.mxu0 %v6388
      %v6574 = vpop.f32.mrf.mxu0
      %v6575 = vadd.f32 %v6495, %v6574
      %v6576 = vpop.f32.mrf.mxu0
      %6577 = vmatprep.mubr.f32.mxu0 0.0
      %6578 = vmatmul.mubr.f32.gmra.mxu0 %v6389
      %v6579 = vpop.f32.mrf.mxu0
      %v6580 = vadd.f32 %v6500, %v6579
      %v6581 = vpop.f32.mrf.mxu0
      %6582 = vmatprep.mubr.f32.mxu0 0.0
      %6583 = vmatmul.mubr.f32.gmra.mxu0 %v6390
      %v6584 = vpop.f32.mrf.mxu0
      %v6585 = vadd.f32 %v6505, %v6584
      %v6586 = vpop.f32.mrf.mxu0
      %6587 = vdwg.mxu0
      %v6588 = vld [vmem:[#allocation2 + $0x2] sm:$0xff]
      %v6589 = vld [vmem:[#allocation2 + $0xa] sm:$0xff]
      %v6590 = vld [vmem:[#allocation2 + $0x12] sm:$0x3f]
      %s6591 = scalar_lea.vmem %s2, 2560
      %v6592 = vld [vmem:[%s6591] sm:$0xff]
      %v6593 = vld [vmem:[%s6591 + $0x8] sm:$0xff]
      %v6594 = vld [vmem:[%s6591 + $0x10] sm:$0xff]
      %v6595 = vld [vmem:[%s6591 + $0x18] sm:$0xff]
      %v6596 = vld [vmem:[%s6591 + $0x20] sm:$0xff]
      %v6597 = vld [vmem:[%s6591 + $0x28] sm:$0xff]
      %v6598 = vld [vmem:[%s6591 + $0x30] sm:$0xff]
      %v6599 = vld [vmem:[%s6591 + $0x38] sm:$0xff]
      %v6600 = vld [vmem:[%s6591 + $0x40] sm:$0xff]
      %v6601 = vld [vmem:[%s6591 + $0x48] sm:$0xff]
      %v6602 = vld [vmem:[%s6591 + $0x50] sm:$0xff]
      %v6603 = vld [vmem:[%s6591 + $0x58] sm:$0xff]
      %v6604 = vld [vmem:[%s6591 + $0x60] sm:$0xff]
      %v6605 = vld [vmem:[%s6591 + $0x68] sm:$0xff]
      %v6606 = vld [vmem:[%s6591 + $0x70] sm:$0xff]
      %v6607 = vld [vmem:[%s6591 + $0x78] sm:$0xff]
      %6608 = vmatprep.subr.mxu0 0.0
      %6609 = vmatpush1.msra.mxu0 %v6607
      %6610 = vmatprep.subr.mxu0 0.0
      %6611 = vmatpush1.msra.mxu0 %v6606
      %6612 = vmatprep.subr.mxu0 0.0
      %6613 = vmatpush1.msra.mxu0 %v6605
      %6614 = vmatprep.subr.mxu0 0.0
      %6615 = vmatpush1.msra.mxu0 %v6604
      %6616 = vmatprep.subr.mxu0 0.0
      %6617 = vmatpush1.msra.mxu0 %v6603
      %6618 = vmatprep.subr.mxu0 0.0
      %6619 = vmatpush1.msra.mxu0 %v6602
      %6620 = vmatprep.subr.mxu0 0.0
      %6621 = vmatpush1.msra.mxu0 %v6601
      %6622 = vmatprep.subr.mxu0 0.0
      %6623 = vmatpush1.msra.mxu0 %v6600
      %6624 = vmatprep.subr.mxu0 0.0
      %6625 = vmatpush1.msra.mxu0 %v6599
      %6626 = vmatprep.subr.mxu0 0.0
      %6627 = vmatpush1.msra.mxu0 %v6598
      %6628 = vmatprep.subr.mxu0 0.0
      %6629 = vmatpush1.msra.mxu0 %v6597
      %6630 = vmatprep.subr.mxu0 0.0
      %6631 = vmatpush1.msra.mxu0 %v6596
      %6632 = vmatprep.subr.mxu0 0.0
      %6633 = vmatpush1.msra.mxu0 %v6595
      %6634 = vmatprep.subr.mxu0 0.0
      %6635 = vmatpush1.msra.mxu0 %v6594
      %6636 = vmatprep.subr.mxu0 0.0
      %6637 = vmatpush1.msra.mxu0 %v6593
      %6638 = vmatprep.subr.mxu0 0.0
      %6639 = vmatpush1.msra.mxu0 %v6592
      %6640 = vmatprep.subr.mxu0 0.0
      %6641 = vmatpush2.msra.mxu0 0.0
      %6642 = vmatprep.subr.mxu0 0.0
      %6643 = vmatpush2.msra.mxu0 0.0
      %6644 = vmatprep.subr.mxu0 0.0
      %6645 = vmatpush2.msra.mxu0 0.0
      %6646 = vmatprep.subr.mxu0 0.0
      %6647 = vmatpush2.msra.mxu0 0.0
      %6648 = vmatprep.subr.mxu0 0.0
      %6649 = vmatpush2.msra.mxu0 0.0
      %6650 = vmatprep.subr.mxu0 0.0
      %6651 = vmatpush2.msra.mxu0 0.0
      %6652 = vmatprep.subr.mxu0 0.0
      %6653 = vmatpush2.msra.mxu0 0.0
      %6654 = vmatprep.subr.mxu0 0.0
      %6655 = vmatpush2.msra.mxu0 0.0
      %6656 = vmatprep.subr.mxu0 0.0
      %6657 = vmatpush2.msra.mxu0 0.0
      %6658 = vmatprep.subr.mxu0 0.0
      %6659 = vmatpush2.msra.mxu0 0.0
      %6660 = vmatprep.subr.mxu0 0.0
      %6661 = vmatpush2.msra.mxu0 0.0
      %6662 = vmatprep.subr.mxu0 0.0
      %6663 = vmatpush2.msra.mxu0 0.0
      %6664 = vmatprep.subr.mxu0 0.0
      %6665 = vmatpush2.msra.mxu0 0.0
      %6666 = vmatprep.subr.mxu0 0.0
      %6667 = vmatpush2.msra.mxu0 0.0
      %6668 = vmatprep.subr.mxu0 0.0
      %6669 = vmatpush2.msra.mxu0 0.0
      %6670 = vmatprep.subr.mxu0 0.0
      %6671 = vmatpush2.msra.mxu0 0.0
      %6672 = vmatprep.mubr.f32.mxu0 0.0
      %6673 = vmatmul.mubr.f32.gmra.mxu0 %v6588
      %v6674 = vpop.f32.mrf.mxu0
      %v6675 = vadd.f32 0.0, %v6674
      %v6676 = vpop.f32.mrf.mxu0
      %6677 = vmatprep.mubr.f32.mxu0 0.0
      %6678 = vmatmul.mubr.f32.gmra.mxu0 %v6589
      %v6679 = vpop.f32.mrf.mxu0
      %v6680 = vadd.f32 0.0, %v6679
      %v6681 = vpop.f32.mrf.mxu0
      %6682 = vmatprep.mubr.f32.mxu0 0.0
      %6683 = vmatmul.mubr.f32.gmra.mxu0 %v6590
      %v6684 = vpop.f32.mrf.mxu0
      %v6685 = vadd.f32 0.0, %v6684
      %v6686 = vpop.f32.mrf.mxu0
      %6687 = vdwg.mxu0
      %v6688 = vadd.f32 %v6575, %v6675
      %v6689 = vadd.f32 %v6580, %v6680
      %v6690 = vadd.f32 %v6585, %v6685
      %v6691 = vld [vmem:[#allocation2 + $0x6] sm:$0xff]
      %v6692 = vld [vmem:[#allocation2 + $0xe] sm:$0xff]
      %v6693 = vld [vmem:[#allocation2 + $0x16] sm:$0x3f]
      %s6694 = scalar_lea.vmem %s2, 2688
      %v6695 = vld [vmem:[%s6694] sm:$0xff]
      %v6696 = vld [vmem:[%s6694 + $0x8] sm:$0xff]
      %v6697 = vld [vmem:[%s6694 + $0x10] sm:$0xff]
      %v6698 = vld [vmem:[%s6694 + $0x18] sm:$0xff]
      %v6699 = vld [vmem:[%s6694 + $0x20] sm:$0xff]
      %v6700 = vld [vmem:[%s6694 + $0x28] sm:$0xff]
      %v6701 = vld [vmem:[%s6694 + $0x30] sm:$0xff]
      %v6702 = vld [vmem:[%s6694 + $0x38] sm:$0xff]
      %v6703 = vld [vmem:[%s6694 + $0x40] sm:$0xff]
      %v6704 = vld [vmem:[%s6694 + $0x48] sm:$0xff]
      %v6705 = vld [vmem:[%s6694 + $0x50] sm:$0xff]
      %v6706 = vld [vmem:[%s6694 + $0x58] sm:$0xff]
      %v6707 = vld [vmem:[%s6694 + $0x60] sm:$0xff]
      %v6708 = vld [vmem:[%s6694 + $0x68] sm:$0xff]
      %v6709 = vld [vmem:[%s6694 + $0x70] sm:$0xff]
      %v6710 = vld [vmem:[%s6694 + $0x78] sm:$0xff]
      %6711 = vmatprep.subr.mxu0 0.0
      %6712 = vmatpush1.msra.mxu0 %v6710
      %6713 = vmatprep.subr.mxu0 0.0
      %6714 = vmatpush1.msra.mxu0 %v6709
      %6715 = vmatprep.subr.mxu0 0.0
      %6716 = vmatpush1.msra.mxu0 %v6708
      %6717 = vmatprep.subr.mxu0 0.0
      %6718 = vmatpush1.msra.mxu0 %v6707
      %6719 = vmatprep.subr.mxu0 0.0
      %6720 = vmatpush1.msra.mxu0 %v6706
      %6721 = vmatprep.subr.mxu0 0.0
      %6722 = vmatpush1.msra.mxu0 %v6705
      %6723 = vmatprep.subr.mxu0 0.0
      %6724 = vmatpush1.msra.mxu0 %v6704
      %6725 = vmatprep.subr.mxu0 0.0
      %6726 = vmatpush1.msra.mxu0 %v6703
      %6727 = vmatprep.subr.mxu0 0.0
      %6728 = vmatpush1.msra.mxu0 %v6702
      %6729 = vmatprep.subr.mxu0 0.0
      %6730 = vmatpush1.msra.mxu0 %v6701
      %6731 = vmatprep.subr.mxu0 0.0
      %6732 = vmatpush1.msra.mxu0 %v6700
      %6733 = vmatprep.subr.mxu0 0.0
      %6734 = vmatpush1.msra.mxu0 %v6699
      %6735 = vmatprep.subr.mxu0 0.0
      %6736 = vmatpush1.msra.mxu0 %v6698
      %6737 = vmatprep.subr.mxu0 0.0
      %6738 = vmatpush1.msra.mxu0 %v6697
      %6739 = vmatprep.subr.mxu0 0.0
      %6740 = vmatpush1.msra.mxu0 %v6696
      %6741 = vmatprep.subr.mxu0 0.0
      %6742 = vmatpush1.msra.mxu0 %v6695
      %6743 = vmatprep.subr.mxu0 0.0
      %6744 = vmatpush2.msra.mxu0 0.0
      %6745 = vmatprep.subr.mxu0 0.0
      %6746 = vmatpush2.msra.mxu0 0.0
      %6747 = vmatprep.subr.mxu0 0.0
      %6748 = vmatpush2.msra.mxu0 0.0
      %6749 = vmatprep.subr.mxu0 0.0
      %6750 = vmatpush2.msra.mxu0 0.0
      %6751 = vmatprep.subr.mxu0 0.0
      %6752 = vmatpush2.msra.mxu0 0.0
      %6753 = vmatprep.subr.mxu0 0.0
      %6754 = vmatpush2.msra.mxu0 0.0
      %6755 = vmatprep.subr.mxu0 0.0
      %6756 = vmatpush2.msra.mxu0 0.0
      %6757 = vmatprep.subr.mxu0 0.0
      %6758 = vmatpush2.msra.mxu0 0.0
      %6759 = vmatprep.subr.mxu0 0.0
      %6760 = vmatpush2.msra.mxu0 0.0
      %6761 = vmatprep.subr.mxu0 0.0
      %6762 = vmatpush2.msra.mxu0 0.0
      %6763 = vmatprep.subr.mxu0 0.0
      %6764 = vmatpush2.msra.mxu0 0.0
      %6765 = vmatprep.subr.mxu0 0.0
      %6766 = vmatpush2.msra.mxu0 0.0
      %6767 = vmatprep.subr.mxu0 0.0
      %6768 = vmatpush2.msra.mxu0 0.0
      %6769 = vmatprep.subr.mxu0 0.0
      %6770 = vmatpush2.msra.mxu0 0.0
      %6771 = vmatprep.subr.mxu0 0.0
      %6772 = vmatpush2.msra.mxu0 0.0
      %6773 = vmatprep.subr.mxu0 0.0
      %6774 = vmatpush2.msra.mxu0 0.0
      %6775 = vmatprep.mubr.f32.mxu0 0.0
      %6776 = vmatmul.mubr.f32.gmra.mxu0 %v6691
      %v6777 = vpop.f32.mrf.mxu0
      %v6778 = vadd.f32 0.0, %v6777
      %v6779 = vpop.f32.mrf.mxu0
      %6780 = vmatprep.mubr.f32.mxu0 0.0
      %6781 = vmatmul.mubr.f32.gmra.mxu0 %v6692
      %v6782 = vpop.f32.mrf.mxu0
      %v6783 = vadd.f32 0.0, %v6782
      %v6784 = vpop.f32.mrf.mxu0
      %6785 = vmatprep.mubr.f32.mxu0 0.0
      %6786 = vmatmul.mubr.f32.gmra.mxu0 %v6693
      %v6787 = vpop.f32.mrf.mxu0
      %v6788 = vadd.f32 0.0, %v6787
      %v6789 = vpop.f32.mrf.mxu0
      %6790 = vdwg.mxu0
      %v6791 = vadd.f32 %v6688, %v6778
      %v6792 = vadd.f32 %v6689, %v6783
      %v6793 = vadd.f32 %v6690, %v6788
      %v6794 = vld [vmem:[#allocation2 + $0x7] sm:$0xff]
      %v6795 = vld [vmem:[#allocation2 + $0xf] sm:$0xff]
      %v6796 = vld [vmem:[#allocation2 + $0x17] sm:$0x3f]
      %s6797 = scalar_lea.vmem %s2, 2816
      %v6798 = vld [vmem:[%s6797] sm:$0xff]
      %v6799 = vld [vmem:[%s6797 + $0x8] sm:$0xff]
      %v6800 = vld [vmem:[%s6797 + $0x10] sm:$0xff]
      %v6801 = vld [vmem:[%s6797 + $0x18] sm:$0xff]
      %v6802 = vld [vmem:[%s6797 + $0x20] sm:$0xff]
      %v6803 = vld [vmem:[%s6797 + $0x28] sm:$0xff]
      %v6804 = vld [vmem:[%s6797 + $0x30] sm:$0xff]
      %v6805 = vld [vmem:[%s6797 + $0x38] sm:$0xff]
      %v6806 = vld [vmem:[%s6797 + $0x40] sm:$0xff]
      %v6807 = vld [vmem:[%s6797 + $0x48] sm:$0xff]
      %v6808 = vld [vmem:[%s6797 + $0x50] sm:$0xff]
      %v6809 = vld [vmem:[%s6797 + $0x58] sm:$0xff]
      %v6810 = vld [vmem:[%s6797 + $0x60] sm:$0xff]
      %v6811 = vld [vmem:[%s6797 + $0x68] sm:$0xff]
      %v6812 = vld [vmem:[%s6797 + $0x70] sm:$0xff]
      %v6813 = vld [vmem:[%s6797 + $0x78] sm:$0xff]
      %6814 = vmatprep.subr.mxu0 0.0
      %6815 = vmatpush1.msra.mxu0 %v6813
      %6816 = vmatprep.subr.mxu0 0.0
      %6817 = vmatpush1.msra.mxu0 %v6812
      %6818 = vmatprep.subr.mxu0 0.0
      %6819 = vmatpush1.msra.mxu0 %v6811
      %6820 = vmatprep.subr.mxu0 0.0
      %6821 = vmatpush1.msra.mxu0 %v6810
      %6822 = vmatprep.subr.mxu0 0.0
      %6823 = vmatpush1.msra.mxu0 %v6809
      %6824 = vmatprep.subr.mxu0 0.0
      %6825 = vmatpush1.msra.mxu0 %v6808
      %6826 = vmatprep.subr.mxu0 0.0
      %6827 = vmatpush1.msra.mxu0 %v6807
      %6828 = vmatprep.subr.mxu0 0.0
      %6829 = vmatpush1.msra.mxu0 %v6806
      %6830 = vmatprep.subr.mxu0 0.0
      %6831 = vmatpush1.msra.mxu0 %v6805
      %6832 = vmatprep.subr.mxu0 0.0
      %6833 = vmatpush1.msra.mxu0 %v6804
      %6834 = vmatprep.subr.mxu0 0.0
      %6835 = vmatpush1.msra.mxu0 %v6803
      %6836 = vmatprep.subr.mxu0 0.0
      %6837 = vmatpush1.msra.mxu0 %v6802
      %6838 = vmatprep.subr.mxu0 0.0
      %6839 = vmatpush1.msra.mxu0 %v6801
      %6840 = vmatprep.subr.mxu0 0.0
      %6841 = vmatpush1.msra.mxu0 %v6800
      %6842 = vmatprep.subr.mxu0 0.0
      %6843 = vmatpush1.msra.mxu0 %v6799
      %6844 = vmatprep.subr.mxu0 0.0
      %6845 = vmatpush1.msra.mxu0 %v6798
      %6846 = vmatprep.subr.mxu0 0.0
      %6847 = vmatpush2.msra.mxu0 0.0
      %6848 = vmatprep.subr.mxu0 0.0
      %6849 = vmatpush2.msra.mxu0 0.0
      %6850 = vmatprep.subr.mxu0 0.0
      %6851 = vmatpush2.msra.mxu0 0.0
      %6852 = vmatprep.subr.mxu0 0.0
      %6853 = vmatpush2.msra.mxu0 0.0
      %6854 = vmatprep.subr.mxu0 0.0
      %6855 = vmatpush2.msra.mxu0 0.0
      %6856 = vmatprep.subr.mxu0 0.0
      %6857 = vmatpush2.msra.mxu0 0.0
      %6858 = vmatprep.subr.mxu0 0.0
      %6859 = vmatpush2.msra.mxu0 0.0
      %6860 = vmatprep.subr.mxu0 0.0
      %6861 = vmatpush2.msra.mxu0 0.0
      %6862 = vmatprep.subr.mxu0 0.0
      %6863 = vmatpush2.msra.mxu0 0.0
      %6864 = vmatprep.subr.mxu0 0.0
      %6865 = vmatpush2.msra.mxu0 0.0
      %6866 = vmatprep.subr.mxu0 0.0
      %6867 = vmatpush2.msra.mxu0 0.0
      %6868 = vmatprep.subr.mxu0 0.0
      %6869 = vmatpush2.msra.mxu0 0.0
      %6870 = vmatprep.subr.mxu0 0.0
      %6871 = vmatpush2.msra.mxu0 0.0
      %6872 = vmatprep.subr.mxu0 0.0
      %6873 = vmatpush2.msra.mxu0 0.0
      %6874 = vmatprep.subr.mxu0 0.0
      %6875 = vmatpush2.msra.mxu0 0.0
      %6876 = vmatprep.subr.mxu0 0.0
      %6877 = vmatpush2.msra.mxu0 0.0
      %6878 = vmatprep.mubr.f32.mxu0 0.0
      %6879 = vmatmul.mubr.f32.gmra.mxu0 %v6794
      %v6880 = vpop.f32.mrf.mxu0
      %v6881 = vadd.f32 0.0, %v6880
      %v6882 = vpop.f32.mrf.mxu0
      %6883 = vmatprep.mubr.f32.mxu0 0.0
      %6884 = vmatmul.mubr.f32.gmra.mxu0 %v6795
      %v6885 = vpop.f32.mrf.mxu0
      %v6886 = vadd.f32 0.0, %v6885
      %v6887 = vpop.f32.mrf.mxu0
      %6888 = vmatprep.mubr.f32.mxu0 0.0
      %6889 = vmatmul.mubr.f32.gmra.mxu0 %v6796
      %v6890 = vpop.f32.mrf.mxu0
      %v6891 = vadd.f32 0.0, %v6890
      %v6892 = vpop.f32.mrf.mxu0
      %6893 = vdwg.mxu0
      %v6894 = vadd.f32 %v6791, %v6881
      %v6895 = vadd.f32 %v6792, %v6886
      %v6896 = vadd.f32 %v6793, %v6891
      %v6897 = vld [vmem:[#allocation2 + $0x8] sm:$0xff]
      %v6898 = vld [vmem:[#allocation2 + $0x10] sm:$0xff]
      %v6899 = vld [vmem:[#allocation2 + $0x18] sm:$0x3f]
      %s6900 = scalar_lea.vmem %s2, 2944
      %v6901 = vld [vmem:[%s6900] sm:$0xff]
      %v6902 = vld [vmem:[%s6900 + $0x8] sm:$0xff]
      %v6903 = vld [vmem:[%s6900 + $0x10] sm:$0xff]
      %v6904 = vld [vmem:[%s6900 + $0x18] sm:$0xff]
      %v6905 = vld [vmem:[%s6900 + $0x20] sm:$0xff]
      %v6906 = vld [vmem:[%s6900 + $0x28] sm:$0xff]
      %v6907 = vld [vmem:[%s6900 + $0x30] sm:$0xff]
      %v6908 = vld [vmem:[%s6900 + $0x38] sm:$0xff]
      %v6909 = vld [vmem:[%s6900 + $0x40] sm:$0xff]
      %v6910 = vld [vmem:[%s6900 + $0x48] sm:$0xff]
      %v6911 = vld [vmem:[%s6900 + $0x50] sm:$0xff]
      %v6912 = vld [vmem:[%s6900 + $0x58] sm:$0xff]
      %v6913 = vld [vmem:[%s6900 + $0x60] sm:$0xff]
      %v6914 = vld [vmem:[%s6900 + $0x68] sm:$0xff]
      %v6915 = vld [vmem:[%s6900 + $0x70] sm:$0xff]
      %v6916 = vld [vmem:[%s6900 + $0x78] sm:$0xff]
      %6917 = vmatprep.subr.mxu0 0.0
      %6918 = vmatpush1.msra.mxu0 %v6916
      %6919 = vmatprep.subr.mxu0 0.0
      %6920 = vmatpush1.msra.mxu0 %v6915
      %6921 = vmatprep.subr.mxu0 0.0
      %6922 = vmatpush1.msra.mxu0 %v6914
      %6923 = vmatprep.subr.mxu0 0.0
      %6924 = vmatpush1.msra.mxu0 %v6913
      %6925 = vmatprep.subr.mxu0 0.0
      %6926 = vmatpush1.msra.mxu0 %v6912
      %6927 = vmatprep.subr.mxu0 0.0
      %6928 = vmatpush1.msra.mxu0 %v6911
      %6929 = vmatprep.subr.mxu0 0.0
      %6930 = vmatpush1.msra.mxu0 %v6910
      %6931 = vmatprep.subr.mxu0 0.0
      %6932 = vmatpush1.msra.mxu0 %v6909
      %6933 = vmatprep.subr.mxu0 0.0
      %6934 = vmatpush1.msra.mxu0 %v6908
      %6935 = vmatprep.subr.mxu0 0.0
      %6936 = vmatpush1.msra.mxu0 %v6907
      %6937 = vmatprep.subr.mxu0 0.0
      %6938 = vmatpush1.msra.mxu0 %v6906
      %6939 = vmatprep.subr.mxu0 0.0
      %6940 = vmatpush1.msra.mxu0 %v6905
      %6941 = vmatprep.subr.mxu0 0.0
      %6942 = vmatpush1.msra.mxu0 %v6904
      %6943 = vmatprep.subr.mxu0 0.0
      %6944 = vmatpush1.msra.mxu0 %v6903
      %6945 = vmatprep.subr.mxu0 0.0
      %6946 = vmatpush1.msra.mxu0 %v6902
      %6947 = vmatprep.subr.mxu0 0.0
      %6948 = vmatpush1.msra.mxu0 %v6901
      %6949 = vmatprep.subr.mxu0 0.0
      %6950 = vmatpush2.msra.mxu0 0.0
      %6951 = vmatprep.subr.mxu0 0.0
      %6952 = vmatpush2.msra.mxu0 0.0
      %6953 = vmatprep.subr.mxu0 0.0
      %6954 = vmatpush2.msra.mxu0 0.0
      %6955 = vmatprep.subr.mxu0 0.0
      %6956 = vmatpush2.msra.mxu0 0.0
      %6957 = vmatprep.subr.mxu0 0.0
      %6958 = vmatpush2.msra.mxu0 0.0
      %6959 = vmatprep.subr.mxu0 0.0
      %6960 = vmatpush2.msra.mxu0 0.0
      %6961 = vmatprep.subr.mxu0 0.0
      %6962 = vmatpush2.msra.mxu0 0.0
      %6963 = vmatprep.subr.mxu0 0.0
      %6964 = vmatpush2.msra.mxu0 0.0
      %6965 = vmatprep.subr.mxu0 0.0
      %6966 = vmatpush2.msra.mxu0 0.0
      %6967 = vmatprep.subr.mxu0 0.0
      %6968 = vmatpush2.msra.mxu0 0.0
      %6969 = vmatprep.subr.mxu0 0.0
      %6970 = vmatpush2.msra.mxu0 0.0
      %6971 = vmatprep.subr.mxu0 0.0
      %6972 = vmatpush2.msra.mxu0 0.0
      %6973 = vmatprep.subr.mxu0 0.0
      %6974 = vmatpush2.msra.mxu0 0.0
      %6975 = vmatprep.subr.mxu0 0.0
      %6976 = vmatpush2.msra.mxu0 0.0
      %6977 = vmatprep.subr.mxu0 0.0
      %6978 = vmatpush2.msra.mxu0 0.0
      %6979 = vmatprep.subr.mxu0 0.0
      %6980 = vmatpush2.msra.mxu0 0.0
      %6981 = vmatprep.mubr.f32.mxu0 0.0
      %6982 = vmatmul.mubr.f32.gmra.mxu0 %v6897
      %v6983 = vpop.f32.mrf.mxu0
      %v6984 = vadd.f32 0.0, %v6983
      %v6985 = vpop.f32.mrf.mxu0
      %6986 = vmatprep.mubr.f32.mxu0 0.0
      %6987 = vmatmul.mubr.f32.gmra.mxu0 %v6898
      %v6988 = vpop.f32.mrf.mxu0
      %v6989 = vadd.f32 0.0, %v6988
      %v6990 = vpop.f32.mrf.mxu0
      %6991 = vmatprep.mubr.f32.mxu0 0.0
      %6992 = vmatmul.mubr.f32.gmra.mxu0 %v6899
      %v6993 = vpop.f32.mrf.mxu0
      %v6994 = vadd.f32 0.0, %v6993
      %v6995 = vpop.f32.mrf.mxu0
      %6996 = vdwg.mxu0
      %v6997 = vadd.f32 %v6894, %v6984
      %v6998 = vadd.f32 %v6895, %v6989
      %v6999 = vadd.f32 %v6896, %v6994
      %v7000 = vld [vmem:[#allocation2 + $0xc] sm:$0xff]
      %v7001 = vld [vmem:[#allocation2 + $0x14] sm:$0xff]
      %v7002 = vld [vmem:[#allocation2 + $0x1c] sm:$0x3f]
      %s7003 = scalar_lea.vmem %s2, 3072
      %v7004 = vld [vmem:[%s7003] sm:$0xff]
      %v7005 = vld [vmem:[%s7003 + $0x8] sm:$0xff]
      %v7006 = vld [vmem:[%s7003 + $0x10] sm:$0xff]
      %v7007 = vld [vmem:[%s7003 + $0x18] sm:$0xff]
      %v7008 = vld [vmem:[%s7003 + $0x20] sm:$0xff]
      %v7009 = vld [vmem:[%s7003 + $0x28] sm:$0xff]
      %v7010 = vld [vmem:[%s7003 + $0x30] sm:$0xff]
      %v7011 = vld [vmem:[%s7003 + $0x38] sm:$0xff]
      %v7012 = vld [vmem:[%s7003 + $0x40] sm:$0xff]
      %v7013 = vld [vmem:[%s7003 + $0x48] sm:$0xff]
      %v7014 = vld [vmem:[%s7003 + $0x50] sm:$0xff]
      %v7015 = vld [vmem:[%s7003 + $0x58] sm:$0xff]
      %v7016 = vld [vmem:[%s7003 + $0x60] sm:$0xff]
      %v7017 = vld [vmem:[%s7003 + $0x68] sm:$0xff]
      %v7018 = vld [vmem:[%s7003 + $0x70] sm:$0xff]
      %v7019 = vld [vmem:[%s7003 + $0x78] sm:$0xff]
      %7020 = vmatprep.subr.mxu0 0.0
      %7021 = vmatpush1.msra.mxu0 %v7019
      %7022 = vmatprep.subr.mxu0 0.0
      %7023 = vmatpush1.msra.mxu0 %v7018
      %7024 = vmatprep.subr.mxu0 0.0
      %7025 = vmatpush1.msra.mxu0 %v7017
      %7026 = vmatprep.subr.mxu0 0.0
      %7027 = vmatpush1.msra.mxu0 %v7016
      %7028 = vmatprep.subr.mxu0 0.0
      %7029 = vmatpush1.msra.mxu0 %v7015
      %7030 = vmatprep.subr.mxu0 0.0
      %7031 = vmatpush1.msra.mxu0 %v7014
      %7032 = vmatprep.subr.mxu0 0.0
      %7033 = vmatpush1.msra.mxu0 %v7013
      %7034 = vmatprep.subr.mxu0 0.0
      %7035 = vmatpush1.msra.mxu0 %v7012
      %7036 = vmatprep.subr.mxu0 0.0
      %7037 = vmatpush1.msra.mxu0 %v7011
      %7038 = vmatprep.subr.mxu0 0.0
      %7039 = vmatpush1.msra.mxu0 %v7010
      %7040 = vmatprep.subr.mxu0 0.0
      %7041 = vmatpush1.msra.mxu0 %v7009
      %7042 = vmatprep.subr.mxu0 0.0
      %7043 = vmatpush1.msra.mxu0 %v7008
      %7044 = vmatprep.subr.mxu0 0.0
      %7045 = vmatpush1.msra.mxu0 %v7007
      %7046 = vmatprep.subr.mxu0 0.0
      %7047 = vmatpush1.msra.mxu0 %v7006
      %7048 = vmatprep.subr.mxu0 0.0
      %7049 = vmatpush1.msra.mxu0 %v7005
      %7050 = vmatprep.subr.mxu0 0.0
      %7051 = vmatpush1.msra.mxu0 %v7004
      %7052 = vmatprep.subr.mxu0 0.0
      %7053 = vmatpush2.msra.mxu0 0.0
      %7054 = vmatprep.subr.mxu0 0.0
      %7055 = vmatpush2.msra.mxu0 0.0
      %7056 = vmatprep.subr.mxu0 0.0
      %7057 = vmatpush2.msra.mxu0 0.0
      %7058 = vmatprep.subr.mxu0 0.0
      %7059 = vmatpush2.msra.mxu0 0.0
      %7060 = vmatprep.subr.mxu0 0.0
      %7061 = vmatpush2.msra.mxu0 0.0
      %7062 = vmatprep.subr.mxu0 0.0
      %7063 = vmatpush2.msra.mxu0 0.0
      %7064 = vmatprep.subr.mxu0 0.0
      %7065 = vmatpush2.msra.mxu0 0.0
      %7066 = vmatprep.subr.mxu0 0.0
      %7067 = vmatpush2.msra.mxu0 0.0
      %7068 = vmatprep.subr.mxu0 0.0
      %7069 = vmatpush2.msra.mxu0 0.0
      %7070 = vmatprep.subr.mxu0 0.0
      %7071 = vmatpush2.msra.mxu0 0.0
      %7072 = vmatprep.subr.mxu0 0.0
      %7073 = vmatpush2.msra.mxu0 0.0
      %7074 = vmatprep.subr.mxu0 0.0
      %7075 = vmatpush2.msra.mxu0 0.0
      %7076 = vmatprep.subr.mxu0 0.0
      %7077 = vmatpush2.msra.mxu0 0.0
      %7078 = vmatprep.subr.mxu0 0.0
      %7079 = vmatpush2.msra.mxu0 0.0
      %7080 = vmatprep.subr.mxu0 0.0
      %7081 = vmatpush2.msra.mxu0 0.0
      %7082 = vmatprep.subr.mxu0 0.0
      %7083 = vmatpush2.msra.mxu0 0.0
      %7084 = vmatprep.mubr.f32.mxu0 0.0
      %7085 = vmatmul.mubr.f32.gmra.mxu0 %v7000
      %v7086 = vpop.f32.mrf.mxu0
      %v7087 = vadd.f32 0.0, %v7086
      %v7088 = vpop.f32.mrf.mxu0
      %7089 = vmatprep.mubr.f32.mxu0 0.0
      %7090 = vmatmul.mubr.f32.gmra.mxu0 %v7001
      %v7091 = vpop.f32.mrf.mxu0
      %v7092 = vadd.f32 0.0, %v7091
      %v7093 = vpop.f32.mrf.mxu0
      %7094 = vmatprep.mubr.f32.mxu0 0.0
      %7095 = vmatmul.mubr.f32.gmra.mxu0 %v7002
      %v7096 = vpop.f32.mrf.mxu0
      %v7097 = vadd.f32 0.0, %v7096
      %v7098 = vpop.f32.mrf.mxu0
      %7099 = vdwg.mxu0
      %v7100 = vadd.f32 %v6997, %v7087
      %v7101 = vadd.f32 %v6998, %v7092
      %v7102 = vadd.f32 %v6999, %v7097
      %v7103 = vld [vmem:[#allocation2 + $0xd] sm:$0xff]
      %v7104 = vld [vmem:[#allocation2 + $0x15] sm:$0xff]
      %v7105 = vld [vmem:[#allocation2 + $0x1d] sm:$0x3f]
      %s7106 = scalar_lea.vmem %s2, 3200
      %v7107 = vld [vmem:[%s7106] sm:$0xff]
      %v7108 = vld [vmem:[%s7106 + $0x8] sm:$0xff]
      %v7109 = vld [vmem:[%s7106 + $0x10] sm:$0xff]
      %v7110 = vld [vmem:[%s7106 + $0x18] sm:$0xff]
      %v7111 = vld [vmem:[%s7106 + $0x20] sm:$0xff]
      %v7112 = vld [vmem:[%s7106 + $0x28] sm:$0xff]
      %v7113 = vld [vmem:[%s7106 + $0x30] sm:$0xff]
      %v7114 = vld [vmem:[%s7106 + $0x38] sm:$0xff]
      %v7115 = vld [vmem:[%s7106 + $0x40] sm:$0xff]
      %v7116 = vld [vmem:[%s7106 + $0x48] sm:$0xff]
      %v7117 = vld [vmem:[%s7106 + $0x50] sm:$0xff]
      %v7118 = vld [vmem:[%s7106 + $0x58] sm:$0xff]
      %v7119 = vld [vmem:[%s7106 + $0x60] sm:$0xff]
      %v7120 = vld [vmem:[%s7106 + $0x68] sm:$0xff]
      %v7121 = vld [vmem:[%s7106 + $0x70] sm:$0xff]
      %v7122 = vld [vmem:[%s7106 + $0x78] sm:$0xff]
      %7123 = vmatprep.subr.mxu0 0.0
      %7124 = vmatpush1.msra.mxu0 %v7122
      %7125 = vmatprep.subr.mxu0 0.0
      %7126 = vmatpush1.msra.mxu0 %v7121
      %7127 = vmatprep.subr.mxu0 0.0
      %7128 = vmatpush1.msra.mxu0 %v7120
      %7129 = vmatprep.subr.mxu0 0.0
      %7130 = vmatpush1.msra.mxu0 %v7119
      %7131 = vmatprep.subr.mxu0 0.0
      %7132 = vmatpush1.msra.mxu0 %v7118
      %7133 = vmatprep.subr.mxu0 0.0
      %7134 = vmatpush1.msra.mxu0 %v7117
      %7135 = vmatprep.subr.mxu0 0.0
      %7136 = vmatpush1.msra.mxu0 %v7116
      %7137 = vmatprep.subr.mxu0 0.0
      %7138 = vmatpush1.msra.mxu0 %v7115
      %7139 = vmatprep.subr.mxu0 0.0
      %7140 = vmatpush1.msra.mxu0 %v7114
      %7141 = vmatprep.subr.mxu0 0.0
      %7142 = vmatpush1.msra.mxu0 %v7113
      %7143 = vmatprep.subr.mxu0 0.0
      %7144 = vmatpush1.msra.mxu0 %v7112
      %7145 = vmatprep.subr.mxu0 0.0
      %7146 = vmatpush1.msra.mxu0 %v7111
      %7147 = vmatprep.subr.mxu0 0.0
      %7148 = vmatpush1.msra.mxu0 %v7110
      %7149 = vmatprep.subr.mxu0 0.0
      %7150 = vmatpush1.msra.mxu0 %v7109
      %7151 = vmatprep.subr.mxu0 0.0
      %7152 = vmatpush1.msra.mxu0 %v7108
      %7153 = vmatprep.subr.mxu0 0.0
      %7154 = vmatpush1.msra.mxu0 %v7107
      %7155 = vmatprep.subr.mxu0 0.0
      %7156 = vmatpush2.msra.mxu0 0.0
      %7157 = vmatprep.subr.mxu0 0.0
      %7158 = vmatpush2.msra.mxu0 0.0
      %7159 = vmatprep.subr.mxu0 0.0
      %7160 = vmatpush2.msra.mxu0 0.0
      %7161 = vmatprep.subr.mxu0 0.0
      %7162 = vmatpush2.msra.mxu0 0.0
      %7163 = vmatprep.subr.mxu0 0.0
      %7164 = vmatpush2.msra.mxu0 0.0
      %7165 = vmatprep.subr.mxu0 0.0
      %7166 = vmatpush2.msra.mxu0 0.0
      %7167 = vmatprep.subr.mxu0 0.0
      %7168 = vmatpush2.msra.mxu0 0.0
      %7169 = vmatprep.subr.mxu0 0.0
      %7170 = vmatpush2.msra.mxu0 0.0
      %7171 = vmatprep.subr.mxu0 0.0
      %7172 = vmatpush2.msra.mxu0 0.0
      %7173 = vmatprep.subr.mxu0 0.0
      %7174 = vmatpush2.msra.mxu0 0.0
      %7175 = vmatprep.subr.mxu0 0.0
      %7176 = vmatpush2.msra.mxu0 0.0
      %7177 = vmatprep.subr.mxu0 0.0
      %7178 = vmatpush2.msra.mxu0 0.0
      %7179 = vmatprep.subr.mxu0 0.0
      %7180 = vmatpush2.msra.mxu0 0.0
      %7181 = vmatprep.subr.mxu0 0.0
      %7182 = vmatpush2.msra.mxu0 0.0
      %7183 = vmatprep.subr.mxu0 0.0
      %7184 = vmatpush2.msra.mxu0 0.0
      %7185 = vmatprep.subr.mxu0 0.0
      %7186 = vmatpush2.msra.mxu0 0.0
      %7187 = vmatprep.mubr.f32.mxu0 0.0
      %7188 = vmatmul.mubr.f32.gmra.mxu0 %v7103
      %v7189 = vpop.f32.mrf.mxu0
      %v7190 = vadd.f32 0.0, %v7189
      %v7191 = vpop.f32.mrf.mxu0
      %7192 = vmatprep.mubr.f32.mxu0 0.0
      %7193 = vmatmul.mubr.f32.gmra.mxu0 %v7104
      %v7194 = vpop.f32.mrf.mxu0
      %v7195 = vadd.f32 0.0, %v7194
      %v7196 = vpop.f32.mrf.mxu0
      %7197 = vmatprep.mubr.f32.mxu0 0.0
      %7198 = vmatmul.mubr.f32.gmra.mxu0 %v7105
      %v7199 = vpop.f32.mrf.mxu0
      %v7200 = vadd.f32 0.0, %v7199
      %v7201 = vpop.f32.mrf.mxu0
      %7202 = vdwg.mxu0
      %v7203 = vadd.f32 %v7100, %v7190
      %v7204 = vadd.f32 %v7101, %v7195
      %v7205 = vadd.f32 %v7102, %v7200
      %v7206 = vld [vmem:[#allocation2 + $0xe] sm:$0xff]
      %v7207 = vld [vmem:[#allocation2 + $0x16] sm:$0xff]
      %v7208 = vld [vmem:[#allocation2 + $0x1e] sm:$0x3f]
      %s7209 = scalar_lea.vmem %s2, 3328
      %v7210 = vld [vmem:[%s7209] sm:$0xff]
      %v7211 = vld [vmem:[%s7209 + $0x8] sm:$0xff]
      %v7212 = vld [vmem:[%s7209 + $0x10] sm:$0xff]
      %v7213 = vld [vmem:[%s7209 + $0x18] sm:$0xff]
      %v7214 = vld [vmem:[%s7209 + $0x20] sm:$0xff]
      %v7215 = vld [vmem:[%s7209 + $0x28] sm:$0xff]
      %v7216 = vld [vmem:[%s7209 + $0x30] sm:$0xff]
      %v7217 = vld [vmem:[%s7209 + $0x38] sm:$0xff]
      %v7218 = vld [vmem:[%s7209 + $0x40] sm:$0xff]
      %v7219 = vld [vmem:[%s7209 + $0x48] sm:$0xff]
      %v7220 = vld [vmem:[%s7209 + $0x50] sm:$0xff]
      %v7221 = vld [vmem:[%s7209 + $0x58] sm:$0xff]
      %v7222 = vld [vmem:[%s7209 + $0x60] sm:$0xff]
      %v7223 = vld [vmem:[%s7209 + $0x68] sm:$0xff]
      %v7224 = vld [vmem:[%s7209 + $0x70] sm:$0xff]
      %v7225 = vld [vmem:[%s7209 + $0x78] sm:$0xff]
      %7226 = vmatprep.subr.mxu0 0.0
      %7227 = vmatpush1.msra.mxu0 %v7225
      %7228 = vmatprep.subr.mxu0 0.0
      %7229 = vmatpush1.msra.mxu0 %v7224
      %7230 = vmatprep.subr.mxu0 0.0
      %7231 = vmatpush1.msra.mxu0 %v7223
      %7232 = vmatprep.subr.mxu0 0.0
      %7233 = vmatpush1.msra.mxu0 %v7222
      %7234 = vmatprep.subr.mxu0 0.0
      %7235 = vmatpush1.msra.mxu0 %v7221
      %7236 = vmatprep.subr.mxu0 0.0
      %7237 = vmatpush1.msra.mxu0 %v7220
      %7238 = vmatprep.subr.mxu0 0.0
      %7239 = vmatpush1.msra.mxu0 %v7219
      %7240 = vmatprep.subr.mxu0 0.0
      %7241 = vmatpush1.msra.mxu0 %v7218
      %7242 = vmatprep.subr.mxu0 0.0
      %7243 = vmatpush1.msra.mxu0 %v7217
      %7244 = vmatprep.subr.mxu0 0.0
      %7245 = vmatpush1.msra.mxu0 %v7216
      %7246 = vmatprep.subr.mxu0 0.0
      %7247 = vmatpush1.msra.mxu0 %v7215
      %7248 = vmatprep.subr.mxu0 0.0
      %7249 = vmatpush1.msra.mxu0 %v7214
      %7250 = vmatprep.subr.mxu0 0.0
      %7251 = vmatpush1.msra.mxu0 %v7213
      %7252 = vmatprep.subr.mxu0 0.0
      %7253 = vmatpush1.msra.mxu0 %v7212
      %7254 = vmatprep.subr.mxu0 0.0
      %7255 = vmatpush1.msra.mxu0 %v7211
      %7256 = vmatprep.subr.mxu0 0.0
      %7257 = vmatpush1.msra.mxu0 %v7210
      %7258 = vmatprep.subr.mxu0 0.0
      %7259 = vmatpush2.msra.mxu0 0.0
      %7260 = vmatprep.subr.mxu0 0.0
      %7261 = vmatpush2.msra.mxu0 0.0
      %7262 = vmatprep.subr.mxu0 0.0
      %7263 = vmatpush2.msra.mxu0 0.0
      %7264 = vmatprep.subr.mxu0 0.0
      %7265 = vmatpush2.msra.mxu0 0.0
      %7266 = vmatprep.subr.mxu0 0.0
      %7267 = vmatpush2.msra.mxu0 0.0
      %7268 = vmatprep.subr.mxu0 0.0
      %7269 = vmatpush2.msra.mxu0 0.0
      %7270 = vmatprep.subr.mxu0 0.0
      %7271 = vmatpush2.msra.mxu0 0.0
      %7272 = vmatprep.subr.mxu0 0.0
      %7273 = vmatpush2.msra.mxu0 0.0
      %7274 = vmatprep.subr.mxu0 0.0
      %7275 = vmatpush2.msra.mxu0 0.0
      %7276 = vmatprep.subr.mxu0 0.0
      %7277 = vmatpush2.msra.mxu0 0.0
      %7278 = vmatprep.subr.mxu0 0.0
      %7279 = vmatpush2.msra.mxu0 0.0
      %7280 = vmatprep.subr.mxu0 0.0
      %7281 = vmatpush2.msra.mxu0 0.0
      %7282 = vmatprep.subr.mxu0 0.0
      %7283 = vmatpush2.msra.mxu0 0.0
      %7284 = vmatprep.subr.mxu0 0.0
      %7285 = vmatpush2.msra.mxu0 0.0
      %7286 = vmatprep.subr.mxu0 0.0
      %7287 = vmatpush2.msra.mxu0 0.0
      %7288 = vmatprep.subr.mxu0 0.0
      %7289 = vmatpush2.msra.mxu0 0.0
      %7290 = vmatprep.mubr.f32.mxu0 0.0
      %7291 = vmatmul.mubr.f32.gmra.mxu0 %v7206
      %v7292 = vpop.f32.mrf.mxu0
      %v7293 = vadd.f32 0.0, %v7292
      %v7294 = vpop.f32.mrf.mxu0
      %7295 = vmatprep.mubr.f32.mxu0 0.0
      %7296 = vmatmul.mubr.f32.gmra.mxu0 %v7207
      %v7297 = vpop.f32.mrf.mxu0
      %v7298 = vadd.f32 0.0, %v7297
      %v7299 = vpop.f32.mrf.mxu0
      %7300 = vmatprep.mubr.f32.mxu0 0.0
      %7301 = vmatmul.mubr.f32.gmra.mxu0 %v7208
      %v7302 = vpop.f32.mrf.mxu0
      %v7303 = vadd.f32 0.0, %v7302
      %v7304 = vpop.f32.mrf.mxu0
      %7305 = vdwg.mxu0
      %v7306 = vadd.f32 %v7203, %v7293
      %v7307 = vadd.f32 %v7204, %v7298
      %v7308 = vadd.f32 %v7205, %v7303
      %v7309 = vld [vmem:[%s3 + $0x3] sm:$0x1]
      %v7310 = vlaneseq
      %v7311 = vshrl.u32 %v7310, 7
      %v7312 = vsub.s32 0, %v7311
      %v7313 = vrot.slane %v7309, %v7312
      %v7314 = vmul.f32 %v7306, %v7313
      %v7315 = vmul.f32 %v7307, %v7313
      %v7316 = vmul.f32 %v7308, %v7313
      %v7317 = vld [vmem:[%s4 + $0x3] sm:$0x1]
      %v7318 = vlaneseq
      %v7319 = vshrl.u32 %v7318, 7
      %v7320 = vsub.s32 0, %v7319
      %v7321 = vrot.slane %v7317, %v7320
      %v7322 = vadd.f32 %v7314, %v7321
      %v7323 = vadd.f32 %v7315, %v7321
      %v7324 = vadd.f32 %v7316, %v7321
      %vm7325 = vcmp.gt.f32.partialorder %v7322, 0.0
      %vm7326 = vcmp.gt.f32.partialorder %v7323, 0.0
      %vm7327 = vcmp.gt.f32.partialorder %v7324, 0.0
      %v7328 = vld [vmem:[%s5 + $0x3] sm:$0x1]
      %v7329 = vlaneseq
      %v7330 = vshrl.u32 %v7329, 7
      %v7331 = vsub.s32 0, %v7330
      %v7332 = vrot.slane %v7328, %v7331
      %v7333 = vmul.f32 %v7332, %v7322
      %v7334 = vmul.f32 %v7332, %v7323
      %v7335 = vmul.f32 %v7332, %v7324
      %v7336 = vsel %vm7325, %v7322, %v7333
      %v7337 = vsel %vm7326, %v7323, %v7334
      %v7338 = vsel %vm7327, %v7324, %v7335
      %v7339 = vld [vmem:[%s9] sm:$0x1]
      %vm7340 = vcmask 179200
      %v7342 = vsel %vm7340, %v7339, 0
      %v7345 = vsel %vm4579, %v7338, 0
      %7347 = vmatprep.subr.mxu0 0.0
      %7348 = vmatpush1.msra.mxu0 0.0
      %7349 = vmatprep.subr.mxu0 0.0
      %7350 = vmatpush1.msra.mxu0 0.0
      %7351 = vmatprep.subr.mxu0 0.0
      %7352 = vmatpush1.msra.mxu0 0.0
      %7353 = vmatprep.subr.mxu0 0.0
      %7354 = vmatpush1.msra.mxu0 0.0
      %7355 = vmatprep.subr.mxu0 0.0
      %7356 = vmatpush1.msra.mxu0 0.0
      %7357 = vmatprep.subr.mxu0 0.0
      %7358 = vmatpush1.msra.mxu0 0.0
      %7359 = vmatprep.subr.mxu0 0.0
      %7360 = vmatpush1.msra.mxu0 0.0
      %7361 = vmatprep.subr.mxu0 0.0
      %7362 = vmatpush1.msra.mxu0 0.0
      %7363 = vmatprep.subr.mxu0 0.0
      %7364 = vmatpush1.msra.mxu0 0.0
      %7365 = vmatprep.subr.mxu0 0.0
      %7366 = vmatpush1.msra.mxu0 0.0
      %7367 = vmatprep.subr.mxu0 0.0
      %7368 = vmatpush1.msra.mxu0 0.0
      %7369 = vmatprep.subr.mxu0 0.0
      %7370 = vmatpush1.msra.mxu0 0.0
      %7371 = vmatprep.subr.mxu0 0.0
      %7372 = vmatpush1.msra.mxu0 0.0
      %7373 = vmatprep.subr.mxu0 0.0
      %7374 = vmatpush1.msra.mxu0 %v7345
      %7375 = vmatprep.subr.mxu0 0.0
      %7376 = vmatpush1.msra.mxu0 %v7337
      %7377 = vmatprep.subr.mxu0 0.0
      %7378 = vmatpush1.msra.mxu0 %v7336
      %7379 = vmatprep.subr.mxu0 0.0
      %7380 = vmatpush2.msra.mxu0 0.0
      %7381 = vmatprep.subr.mxu0 0.0
      %7382 = vmatpush2.msra.mxu0 0.0
      %7383 = vmatprep.subr.mxu0 0.0
      %7384 = vmatpush2.msra.mxu0 0.0
      %7385 = vmatprep.subr.mxu0 0.0
      %7386 = vmatpush2.msra.mxu0 0.0
      %7387 = vmatprep.subr.mxu0 0.0
      %7388 = vmatpush2.msra.mxu0 0.0
      %7389 = vmatprep.subr.mxu0 0.0
      %7390 = vmatpush2.msra.mxu0 0.0
      %7391 = vmatprep.subr.mxu0 0.0
      %7392 = vmatpush2.msra.mxu0 0.0
      %7393 = vmatprep.subr.mxu0 0.0
      %7394 = vmatpush2.msra.mxu0 0.0
      %7395 = vmatprep.subr.mxu0 0.0
      %7396 = vmatpush2.msra.mxu0 0.0
      %7397 = vmatprep.subr.mxu0 0.0
      %7398 = vmatpush2.msra.mxu0 0.0
      %7399 = vmatprep.subr.mxu0 0.0
      %7400 = vmatpush2.msra.mxu0 0.0
      %7401 = vmatprep.subr.mxu0 0.0
      %7402 = vmatpush2.msra.mxu0 0.0
      %7403 = vmatprep.subr.mxu0 0.0
      %7404 = vmatpush2.msra.mxu0 0.0
      %7405 = vmatprep.subr.mxu0 0.0
      %7406 = vmatpush2.msra.mxu0 0.0
      %7407 = vmatprep.subr.mxu0 0.0
      %7408 = vmatpush2.msra.mxu0 0.0
      %7409 = vmatprep.subr.mxu0 0.0
      %7410 = vmatpush2.msra.mxu0 0.0
      %7411 = vmatprep.mubr.f32.mxu0 0.0
      %7412 = vmatmul.mubr.f32.gmra.mxu0 %v7342
      %v7413 = vpop.f32.mrf.mxu0
      %v7414 = vadd.f32 0.0, %v7413
      %v7415 = vpop.f32.mrf.mxu0
      %7416 = vdwg.mxu0
      %v7417 = vld [vmem:[%s10] sm:$0xff]
      %v7418 = vld [vmem:[%s10 + $0x8] sm:$0xff]
      %v7419 = vld [vmem:[%s10 + $0x10] sm:$0xff]
      %v7420 = vld [vmem:[%s10 + $0x18] sm:$0xff]
      %v7421 = vld [vmem:[%s10 + $0x20] sm:$0xff]
      %v7422 = vld [vmem:[%s10 + $0x28] sm:$0xff]
      %v7423 = vld [vmem:[%s10 + $0x30] sm:$0xff]
      %v7424 = vld [vmem:[%s10 + $0x38] sm:$0xff]
      %v7425 = vld [vmem:[%s10 + $0x40] sm:$0xff]
      %v7426 = vld [vmem:[%s10 + $0x48] sm:$0xff]
      %v7427 = vld [vmem:[%s10 + $0x50] sm:$0xff]
      %v7428 = vld [vmem:[%s10 + $0x58] sm:$0xff]
      %v7429 = vld [vmem:[%s10 + $0x60] sm:$0xff]
      %v7430 = vld [vmem:[%s10 + $0x68] sm:$0xff]
      %v7431 = vld [vmem:[%s10 + $0x70] sm:$0xff]
      %v7432 = vld [vmem:[%s10 + $0x78] sm:$0xff]
      %v7433 = vld [vmem:[%s11] sm:$0x1]
      %7434 = vmatprep.subr.mxu0 0.0
      %7435 = vmatpush1.msra.mxu0 %v7432
      %7436 = vmatprep.subr.mxu0 0.0
      %7437 = vmatpush1.msra.mxu0 %v7431
      %7438 = vmatprep.subr.mxu0 0.0
      %7439 = vmatpush1.msra.mxu0 %v7430
      %7440 = vmatprep.subr.mxu0 0.0
      %7441 = vmatpush1.msra.mxu0 %v7429
      %7442 = vmatprep.subr.mxu0 0.0
      %7443 = vmatpush1.msra.mxu0 %v7428
      %7444 = vmatprep.subr.mxu0 0.0
      %7445 = vmatpush1.msra.mxu0 %v7427
      %7446 = vmatprep.subr.mxu0 0.0
      %7447 = vmatpush1.msra.mxu0 %v7426
      %7448 = vmatprep.subr.mxu0 0.0
      %7449 = vmatpush1.msra.mxu0 %v7425
      %7450 = vmatprep.subr.mxu0 0.0
      %7451 = vmatpush1.msra.mxu0 %v7424
      %7452 = vmatprep.subr.mxu0 0.0
      %7453 = vmatpush1.msra.mxu0 %v7423
      %7454 = vmatprep.subr.mxu0 0.0
      %7455 = vmatpush1.msra.mxu0 %v7422
      %7456 = vmatprep.subr.mxu0 0.0
      %7457 = vmatpush1.msra.mxu0 %v7421
      %7458 = vmatprep.subr.mxu0 0.0
      %7459 = vmatpush1.msra.mxu0 %v7420
      %7460 = vmatprep.subr.mxu0 0.0
      %7461 = vmatpush1.msra.mxu0 %v7419
      %7462 = vmatprep.subr.mxu0 0.0
      %7463 = vmatpush1.msra.mxu0 %v7418
      %7464 = vmatprep.subr.mxu0 0.0
      %7465 = vmatpush1.msra.mxu0 %v7417
      %7466 = vmatprep.subr.mxu0 0.0
      %7467 = vmatpush2.msra.mxu0 0.0
      %7468 = vmatprep.subr.mxu0 0.0
      %7469 = vmatpush2.msra.mxu0 0.0
      %7470 = vmatprep.subr.mxu0 0.0
      %7471 = vmatpush2.msra.mxu0 0.0
      %7472 = vmatprep.subr.mxu0 0.0
      %7473 = vmatpush2.msra.mxu0 0.0
      %7474 = vmatprep.subr.mxu0 0.0
      %7475 = vmatpush2.msra.mxu0 0.0
      %7476 = vmatprep.subr.mxu0 0.0
      %7477 = vmatpush2.msra.mxu0 0.0
      %7478 = vmatprep.subr.mxu0 0.0
      %7479 = vmatpush2.msra.mxu0 0.0
      %7480 = vmatprep.subr.mxu0 0.0
      %7481 = vmatpush2.msra.mxu0 0.0
      %7482 = vmatprep.subr.mxu0 0.0
      %7483 = vmatpush2.msra.mxu0 0.0
      %7484 = vmatprep.subr.mxu0 0.0
      %7485 = vmatpush2.msra.mxu0 0.0
      %7486 = vmatprep.subr.mxu0 0.0
      %7487 = vmatpush2.msra.mxu0 0.0
      %7488 = vmatprep.subr.mxu0 0.0
      %7489 = vmatpush2.msra.mxu0 0.0
      %7490 = vmatprep.subr.mxu0 0.0
      %7491 = vmatpush2.msra.mxu0 0.0
      %7492 = vmatprep.subr.mxu0 0.0
      %7493 = vmatpush2.msra.mxu0 0.0
      %7494 = vmatprep.subr.mxu0 0.0
      %7495 = vmatpush2.msra.mxu0 0.0
      %7496 = vmatprep.subr.mxu0 0.0
      %7497 = vmatpush2.msra.mxu0 0.0
      %7498 = vmatprep.mubr.f32.mxu0 0.0
      %7499 = vmatmul.mubr.f32.gmra.mxu0 %v7414
      %v7500 = vpop.f32.mrf.mxu0
      %v7501 = vadd.f32 %v7433, %v7500
      %v7502 = vpop.f32.mrf.mxu0
      %7503 = vdwg.mxu0
      %v7504 = vmax.f32 %v7501, 0.0
      %v7505 = vmul.f32 %v7504, %v7504
      %vm7506 = vcmask 1040384
      %v7507 = vsel %vm7506, %v7505, 0.0
      %7508 = vadd.xlane.f32.xlu0 %v7507
      %v7509 = vpop.xlane.xlu0 %7508
      %v7510 = vmax.f32 %v7509, 1e-24
      %v7511 = vrsqrt.pop %v7510
      %v7512 = vmul.f32 %v7504, %v7511
      %7513 = vst [vmem:[%s442] sm:$0x1] %v7512
      %s7514 = scalar_lea.vmem %s10, 128
      %v7515 = vld [vmem:[%s7514] sm:$0xff]
      %v7516 = vld [vmem:[%s7514 + $0x8] sm:$0xff]
      %v7517 = vld [vmem:[%s7514 + $0x10] sm:$0xff]
      %v7518 = vld [vmem:[%s7514 + $0x18] sm:$0xff]
      %v7519 = vld [vmem:[%s7514 + $0x20] sm:$0xff]
      %v7520 = vld [vmem:[%s7514 + $0x28] sm:$0xff]
      %v7521 = vld [vmem:[%s7514 + $0x30] sm:$0xff]
      %v7522 = vld [vmem:[%s7514 + $0x38] sm:$0xff]
      %v7523 = vld [vmem:[%s7514 + $0x40] sm:$0xff]
      %v7524 = vld [vmem:[%s7514 + $0x48] sm:$0xff]
      %v7525 = vld [vmem:[%s7514 + $0x50] sm:$0xff]
      %v7526 = vld [vmem:[%s7514 + $0x58] sm:$0xff]
      %v7527 = vld [vmem:[%s7514 + $0x60] sm:$0xff]
      %v7528 = vld [vmem:[%s7514 + $0x68] sm:$0xff]
      %v7529 = vld [vmem:[%s7514 + $0x70] sm:$0xff]
      %v7530 = vld [vmem:[%s7514 + $0x78] sm:$0xff]
      %v7531 = vld [vmem:[%s11 + $0x1] sm:$0x1]
      %7532 = vmatprep.subr.mxu0 0.0
      %7533 = vmatpush1.msra.mxu0 %v7530
      %7534 = vmatprep.subr.mxu0 0.0
      %7535 = vmatpush1.msra.mxu0 %v7529
      %7536 = vmatprep.subr.mxu0 0.0
      %7537 = vmatpush1.msra.mxu0 %v7528
      %7538 = vmatprep.subr.mxu0 0.0
      %7539 = vmatpush1.msra.mxu0 %v7527
      %7540 = vmatprep.subr.mxu0 0.0
      %7541 = vmatpush1.msra.mxu0 %v7526
      %7542 = vmatprep.subr.mxu0 0.0
      %7543 = vmatpush1.msra.mxu0 %v7525
      %7544 = vmatprep.subr.mxu0 0.0
      %7545 = vmatpush1.msra.mxu0 %v7524
      %7546 = vmatprep.subr.mxu0 0.0
      %7547 = vmatpush1.msra.mxu0 %v7523
      %7548 = vmatprep.subr.mxu0 0.0
      %7549 = vmatpush1.msra.mxu0 %v7522
      %7550 = vmatprep.subr.mxu0 0.0
      %7551 = vmatpush1.msra.mxu0 %v7521
      %7552 = vmatprep.subr.mxu0 0.0
      %7553 = vmatpush1.msra.mxu0 %v7520
      %7554 = vmatprep.subr.mxu0 0.0
      %7555 = vmatpush1.msra.mxu0 %v7519
      %7556 = vmatprep.subr.mxu0 0.0
      %7557 = vmatpush1.msra.mxu0 %v7518
      %7558 = vmatprep.subr.mxu0 0.0
      %7559 = vmatpush1.msra.mxu0 %v7517
      %7560 = vmatprep.subr.mxu0 0.0
      %7561 = vmatpush1.msra.mxu0 %v7516
      %7562 = vmatprep.subr.mxu0 0.0
      %7563 = vmatpush1.msra.mxu0 %v7515
      %7564 = vmatprep.subr.mxu0 0.0
      %7565 = vmatpush2.msra.mxu0 0.0
      %7566 = vmatprep.subr.mxu0 0.0
      %7567 = vmatpush2.msra.mxu0 0.0
      %7568 = vmatprep.subr.mxu0 0.0
      %7569 = vmatpush2.msra.mxu0 0.0
      %7570 = vmatprep.subr.mxu0 0.0
      %7571 = vmatpush2.msra.mxu0 0.0
      %7572 = vmatprep.subr.mxu0 0.0
      %7573 = vmatpush2.msra.mxu0 0.0
      %7574 = vmatprep.subr.mxu0 0.0
      %7575 = vmatpush2.msra.mxu0 0.0
      %7576 = vmatprep.subr.mxu0 0.0
      %7577 = vmatpush2.msra.mxu0 0.0
      %7578 = vmatprep.subr.mxu0 0.0
      %7579 = vmatpush2.msra.mxu0 0.0
      %7580 = vmatprep.subr.mxu0 0.0
      %7581 = vmatpush2.msra.mxu0 0.0
      %7582 = vmatprep.subr.mxu0 0.0
      %7583 = vmatpush2.msra.mxu0 0.0
      %7584 = vmatprep.subr.mxu0 0.0
      %7585 = vmatpush2.msra.mxu0 0.0
      %7586 = vmatprep.subr.mxu0 0.0
      %7587 = vmatpush2.msra.mxu0 0.0
      %7588 = vmatprep.subr.mxu0 0.0
      %7589 = vmatpush2.msra.mxu0 0.0
      %7590 = vmatprep.subr.mxu0 0.0
      %7591 = vmatpush2.msra.mxu0 0.0
      %7592 = vmatprep.subr.mxu0 0.0
      %7593 = vmatpush2.msra.mxu0 0.0
      %7594 = vmatprep.subr.mxu0 0.0
      %7595 = vmatpush2.msra.mxu0 0.0
      %7596 = vmatprep.mubr.f32.mxu0 0.0
      %7597 = vmatmul.mubr.f32.gmra.mxu0 %v7512
      %v7598 = vpop.f32.mrf.mxu0
      %v7599 = vadd.f32 %v7531, %v7598
      %v7600 = vpop.f32.mrf.mxu0
      %7601 = vdwg.mxu0
      %vm7602 = vcmp.gt.f32.partialorder %v7599, 0.0
      %v7603 = vld [vmem:[%s5 + $0x4] sm:$0x1]
      %v7604 = vmul.f32 %v7603, %v7599
      %v7605 = vsel %vm7602, %v7599, %v7604
      %s7606 = scalar_lea.vmem %s10, 256
      %v7607 = vld [vmem:[%s7606] sm:$0xff]
      %v7608 = vld [vmem:[%s7606 + $0x8] sm:$0xff]
      %v7609 = vld [vmem:[%s7606 + $0x10] sm:$0xff]
      %v7610 = vld [vmem:[%s7606 + $0x18] sm:$0xff]
      %v7611 = vld [vmem:[%s7606 + $0x20] sm:$0xff]
      %v7612 = vld [vmem:[%s7606 + $0x28] sm:$0xff]
      %v7613 = vld [vmem:[%s7606 + $0x30] sm:$0xff]
      %v7614 = vld [vmem:[%s7606 + $0x38] sm:$0xff]
      %v7615 = vld [vmem:[%s7606 + $0x40] sm:$0xff]
      %v7616 = vld [vmem:[%s7606 + $0x48] sm:$0xff]
      %v7617 = vld [vmem:[%s7606 + $0x50] sm:$0xff]
      %v7618 = vld [vmem:[%s7606 + $0x58] sm:$0xff]
      %v7619 = vld [vmem:[%s7606 + $0x60] sm:$0xff]
      %v7620 = vld [vmem:[%s7606 + $0x68] sm:$0xff]
      %v7621 = vld [vmem:[%s7606 + $0x70] sm:$0xff]
      %v7622 = vld [vmem:[%s7606 + $0x78] sm:$0xff]
      %v7623 = vld [vmem:[%s11 + $0x2] sm:$0x1]
      %7624 = vmatprep.subr.mxu0 0.0
      %7625 = vmatpush1.msra.mxu0 %v7622
      %7626 = vmatprep.subr.mxu0 0.0
      %7627 = vmatpush1.msra.mxu0 %v7621
      %7628 = vmatprep.subr.mxu0 0.0
      %7629 = vmatpush1.msra.mxu0 %v7620
      %7630 = vmatprep.subr.mxu0 0.0
      %7631 = vmatpush1.msra.mxu0 %v7619
      %7632 = vmatprep.subr.mxu0 0.0
      %7633 = vmatpush1.msra.mxu0 %v7618
      %7634 = vmatprep.subr.mxu0 0.0
      %7635 = vmatpush1.msra.mxu0 %v7617
      %7636 = vmatprep.subr.mxu0 0.0
      %7637 = vmatpush1.msra.mxu0 %v7616
      %7638 = vmatprep.subr.mxu0 0.0
      %7639 = vmatpush1.msra.mxu0 %v7615
      %7640 = vmatprep.subr.mxu0 0.0
      %7641 = vmatpush1.msra.mxu0 %v7614
      %7642 = vmatprep.subr.mxu0 0.0
      %7643 = vmatpush1.msra.mxu0 %v7613
      %7644 = vmatprep.subr.mxu0 0.0
      %7645 = vmatpush1.msra.mxu0 %v7612
      %7646 = vmatprep.subr.mxu0 0.0
      %7647 = vmatpush1.msra.mxu0 %v7611
      %7648 = vmatprep.subr.mxu0 0.0
      %7649 = vmatpush1.msra.mxu0 %v7610
      %7650 = vmatprep.subr.mxu0 0.0
      %7651 = vmatpush1.msra.mxu0 %v7609
      %7652 = vmatprep.subr.mxu0 0.0
      %7653 = vmatpush1.msra.mxu0 %v7608
      %7654 = vmatprep.subr.mxu0 0.0
      %7655 = vmatpush1.msra.mxu0 %v7607
      %7656 = vmatprep.subr.mxu0 0.0
      %7657 = vmatpush2.msra.mxu0 0.0
      %7658 = vmatprep.subr.mxu0 0.0
      %7659 = vmatpush2.msra.mxu0 0.0
      %7660 = vmatprep.subr.mxu0 0.0
      %7661 = vmatpush2.msra.mxu0 0.0
      %7662 = vmatprep.subr.mxu0 0.0
      %7663 = vmatpush2.msra.mxu0 0.0
      %7664 = vmatprep.subr.mxu0 0.0
      %7665 = vmatpush2.msra.mxu0 0.0
      %7666 = vmatprep.subr.mxu0 0.0
      %7667 = vmatpush2.msra.mxu0 0.0
      %7668 = vmatprep.subr.mxu0 0.0
      %7669 = vmatpush2.msra.mxu0 0.0
      %7670 = vmatprep.subr.mxu0 0.0
      %7671 = vmatpush2.msra.mxu0 0.0
      %7672 = vmatprep.subr.mxu0 0.0
      %7673 = vmatpush2.msra.mxu0 0.0
      %7674 = vmatprep.subr.mxu0 0.0
      %7675 = vmatpush2.msra.mxu0 0.0
      %7676 = vmatprep.subr.mxu0 0.0
      %7677 = vmatpush2.msra.mxu0 0.0
      %7678 = vmatprep.subr.mxu0 0.0
      %7679 = vmatpush2.msra.mxu0 0.0
      %7680 = vmatprep.subr.mxu0 0.0
      %7681 = vmatpush2.msra.mxu0 0.0
      %7682 = vmatprep.subr.mxu0 0.0
      %7683 = vmatpush2.msra.mxu0 0.0
      %7684 = vmatprep.subr.mxu0 0.0
      %7685 = vmatpush2.msra.mxu0 0.0
      %7686 = vmatprep.subr.mxu0 0.0
      %7687 = vmatpush2.msra.mxu0 0.0
      %7688 = vmatprep.mubr.f32.mxu0 0.0
      %7689 = vmatmul.mubr.f32.gmra.mxu0 %v7605
      %v7690 = vpop.f32.mrf.mxu0
      %v7691 = vadd.f32 %v7623, %v7690
      %v7692 = vpop.f32.mrf.mxu0
      %7693 = vdwg.mxu0
      %7694 = vst [vmem:[%s445] sm:$0x1] %v7691
      %p7695 = scmp.lt.s32.totalorder %s25, 3
      %s7696 = scalar_select %p7695, %s25, 3
      %s7697 = scalar_lea.vmem %s12, %s7696
      %p7698 = scmp.lt.s32.totalorder %s25, 3
      %s7699 = scalar_select %p7698, %s25, 3
      %s7700 = scalar_lea.vmem %s13, %s7699
      // Predicated region
      $region69: #{sterling_forward.1} parent=67 // pred_check
        %p7701 = pneg %p300
      $region70: #{sterling_forward.1} parent=67 // pred_check_branch
        %7703 = sbr.rel (%p7701) target = $region72
      $region71: #{sterling_forward.1} parent=67 // pred_region
        _
      $region72: #{sterling_forward.1} parent=67 // pred_fallthru
        _
      // Predicated region
      $region73: #{sterling_forward.1} parent=67 // pred_check
        %p7704 = pneg %p326
      $region74: #{sterling_forward.1} parent=67 // pred_check_branch
        %7706 = sbr.rel (%p7704) target = $region76
      $region75: #{sterling_forward.1} parent=67 // pred_region
        _
      $region76: #{sterling_forward.1} parent=67 // pred_fallthru
        _
    $region68: #{sterling_forward.1} parent=5 // pred_fallthru
      _
    %p7707 = scmp.le.s32.totalorder 2, %s20
    // Predicated region
    $region77: #{sterling_forward.1} parent=5 // pred_check
      %p7708 = pneg %p7707
    $region78: #{sterling_forward.1} parent=5 // pred_check_branch
      %7710 = sbr.rel (%p7708) target = $region80
    $region79: #{sterling_forward.1} parent=5 // pred_region
      %s7711 = ssub.s32 %s20, 2
      // Predicated region
      $region81: #{sterling_forward.1} parent=79 // pred_check
        %p7712 = pneg %p306
      $region82: #{sterling_forward.1} parent=79 // pred_check_branch
        %7714 = sbr.rel (%p7712) target = $region84
      $region83: #{sterling_forward.1} parent=79 // pred_region
        %p7715 = scmp.lt.s32.totalorder %s26, 3
        %s7716 = scalar_select %p7715, %s26, 3
        %s7717 = scalar_lea.vmem %s12, %s7716
      $region84: #{sterling_forward.1} parent=79 // pred_fallthru
        _
      // Predicated region
      $region85: #{sterling_forward.1} parent=79 // pred_check
        %p7718 = pneg %p332
      $region86: #{sterling_forward.1} parent=79 // pred_check_branch
        %7720 = sbr.rel (%p7718) target = $region88
      $region87: #{sterling_forward.1} parent=79 // pred_region
        %p7721 = scmp.lt.s32.totalorder %s26, 3
        %s7722 = scalar_select %p7721, %s26, 3
        %s7723 = scalar_lea.vmem %s13, %s7722
      $region88: #{sterling_forward.1} parent=79 // pred_fallthru
        _
    $region80: #{sterling_forward.1} parent=5 // pred_fallthru
      _
  $region6: #{sterling_forward.1} parent=0 // loop_footer
    %s24 = sadd.s32 1, %s20
  $region7: #{sterling_forward.1} parent=0 // loop_footer_branch
    %19 = sbr.rel target = $region3
  $region8: #{sterling_forward.1} parent=0 // loop_exit
    _

</llo_original>
